<compile_context>
chip_gen: v5e
topology: v5e:2x2
jax: 0.10.0
libtpu: 0.0.40
codegen_flags: <defaults>
</compile_context>

<pallas_src>
import functools

import jax
import jax.numpy as jnp
from jax.experimental import pallas as pl
from jax.experimental.pallas import tpu as pltpu

EPS = 1e-5
LANE = 128


def _round_up(x, m):
    return (x + m - 1) // m * m


def _pad_last(a, target):
    pad = target - a.shape[-1]
    if pad == 0:
        return a
    return jnp.pad(a, [(0, 0)] * (a.ndim - 1) + [(0, pad)])


@functools.lru_cache(maxsize=None)
def _vmem_limit_bytes():
    # v5e/v6e: 128 MiB physical VMEM, v7x: 64 MiB -> budget half of physical,
    # capped, with a conservative fallback if the query is unavailable.
    try:
        cap = int(pltpu.get_tpu_info().vmem_capacity_bytes)
        return max(16 * 1024 * 1024, min(cap // 2, 64 * 1024 * 1024))
    except Exception:
        return 32 * 1024 * 1024


def _row_tile(ho, wo):
    # acc is (th*wo, 128) f32; keep it <= ~128 KB so it stays near-vreg.
    return max(1, min(ho, 256 // max(1, wo)))


# ----------------------------- phase-1 kernels -------------------------------
# 3x3 conv (pad=1) as 9 shifted-window matmuls per output-row tile, with the
# per-channel BN sum / sum-of-squares computed in the same tile epilogue.
# Statistics are written as per-image partials so the batch grid axis can be
# "parallel" (v7x megacore); the wrapper reduces them.

def _conv3x3_kernel(x_ref, w_ref, y_ref, stats_ref, *, stride, th):
    ho, wo, cout = y_ref.shape
    ssum = jnp.zeros((1, cout), jnp.float32)
    sssq = jnp.zeros((1, cout), jnp.float32)
    for r0 in range(0, ho, th):
        rows = min(th, ho - r0)
        acc = jnp.zeros((rows * wo, cout), jnp.float32)
        for kh in range(3):
            for kw in range(3):
                if stride == 1:
                    tap = x_ref[pl.ds(r0 + kh, rows), pl.ds(kw, wo), :]
                else:
                    tap = x_ref[pl.ds(r0 * stride + kh, rows, stride=stride),
                                pl.ds(kw, wo, stride=stride), :]
                acc = acc + jnp.dot(tap.reshape(rows * wo, -1),
                                    w_ref[kh * 3 + kw],
                                    preferred_element_type=jnp.float32)
        ssum = ssum + jnp.sum(acc, axis=0, keepdims=True)
        sssq = sssq + jnp.sum(acc * acc, axis=0, keepdims=True)
        y_ref[pl.ds(r0, rows), :, :] = (
            acc.reshape(rows, wo, cout).astype(y_ref.dtype))
    stats_ref[0:1, :] = ssum
    stats_ref[1:2, :] = sssq


def _conv3x3_proj_kernel(x_ref, w_ref, ws_ref, y_ref, ysc_ref, stats_ref,
                         *, stride, th):
    """conv1 fused with the 1x1 projection shortcut (fed by the center tap)."""
    ho, wo, cout = y_ref.shape
    ssum = jnp.zeros((1, cout), jnp.float32)
    sssq = jnp.zeros((1, cout), jnp.float32)
    ssum_s = jnp.zeros((1, cout), jnp.float32)
    sssq_s = jnp.zeros((1, cout), jnp.float32)
    ws = ws_ref[...]
    for r0 in range(0, ho, th):
        rows = min(th, ho - r0)
        acc = jnp.zeros((rows * wo, cout), jnp.float32)
        center = None
        for kh in range(3):
            for kw in range(3):
                if stride == 1:
                    tap = x_ref[pl.ds(r0 + kh, rows), pl.ds(kw, wo), :]
                else:
                    tap = x_ref[pl.ds(r0 * stride + kh, rows, stride=stride),
                                pl.ds(kw, wo, stride=stride), :]
                tap = tap.reshape(rows * wo, -1)
                if kh == 1 and kw == 1:
                    center = tap        # == the stride-strided input window
                acc = acc + jnp.dot(tap, w_ref[kh * 3 + kw],
                                    preferred_element_type=jnp.float32)
        ysc = jnp.dot(center, ws, preferred_element_type=jnp.float32)
        ssum = ssum + jnp.sum(acc, axis=0, keepdims=True)
        sssq = sssq + jnp.sum(acc * acc, axis=0, keepdims=True)
        ssum_s = ssum_s + jnp.sum(ysc, axis=0, keepdims=True)
        sssq_s = sssq_s + jnp.sum(ysc * ysc, axis=0, keepdims=True)
        y_ref[pl.ds(r0, rows), :, :] = (
            acc.reshape(rows, wo, cout).astype(y_ref.dtype))
        ysc_ref[pl.ds(r0, rows), :, :] = (
            ysc.reshape(rows, wo, cout).astype(ysc_ref.dtype))
    stats_ref[0:1, :] = ssum
    stats_ref[1:2, :] = sssq
    stats_ref[2:3, :] = ssum_s
    stats_ref[3:4, :] = sssq_s


def _conv3x3_phase1(xp, w9, ho, wo, stride, *, ws=None):
    """Grid=(N,) (fully parallel) 3x3 conv; bf16 outputs + per-image BN stats."""
    n, hp, wp, cin = xp.shape
    cout = w9.shape[-1]
    th = _row_tile(ho, wo)

    flops = 2 * n * ho * wo * 9 * cin * cout
    bytes_accessed = (xp.size + w9.size) * 2 + n * ho * wo * cout * 2

    if ws is None:
        kernel = functools.partial(_conv3x3_kernel, stride=stride, th=th)
        in_specs = [
            pl.BlockSpec((None, hp, wp, cin), lambda i: (i, 0, 0, 0)),
            pl.BlockSpec((9, cin, cout), lambda i: (0, 0, 0)),
        ]
        args = (xp, w9)
        out_shape = (jax.ShapeDtypeStruct((n, ho, wo, cout), jnp.bfloat16),
                     jax.ShapeDtypeStruct((n, 2, cout), jnp.float32))
        out_specs = (pl.BlockSpec((None, ho, wo, cout), lambda i: (i, 0, 0, 0)),
                     pl.BlockSpec((None, 2, cout), lambda i: (i, 0, 0)))
    else:
        kernel = functools.partial(_conv3x3_proj_kernel, stride=stride, th=th)
        in_specs = [
            pl.BlockSpec((None, hp, wp, cin), lambda i: (i, 0, 0, 0)),
            pl.BlockSpec((9, cin, cout), lambda i: (0, 0, 0)),
            pl.BlockSpec((cin, cout), lambda i: (0, 0)),
        ]
        args = (xp, w9, ws)
        out_shape = (jax.ShapeDtypeStruct((n, ho, wo, cout), jnp.bfloat16),
                     jax.ShapeDtypeStruct((n, ho, wo, cout), jnp.bfloat16),
                     jax.ShapeDtypeStruct((n, 4, cout), jnp.float32))
        out_specs = (pl.BlockSpec((None, ho, wo, cout), lambda i: (i, 0, 0, 0)),
                     pl.BlockSpec((None, ho, wo, cout), lambda i: (i, 0, 0, 0)),
                     pl.BlockSpec((None, 4, cout), lambda i: (i, 0, 0)))
        flops += 2 * n * ho * wo * cin * cout
        bytes_accessed += ws.size * 2 + n * ho * wo * cout * 2

    return pl.pallas_call(
        kernel,
        grid=(n,),
        in_specs=in_specs,
        out_shape=out_shape,
        out_specs=out_specs,
        compiler_params=pltpu.CompilerParams(
            dimension_semantics=("parallel",),   # per-image partial BN stats
            vmem_limit_bytes=_vmem_limit_bytes()),
        cost_estimate=pl.CostEstimate(
            flops=flops, transcendentals=0, bytes_accessed=bytes_accessed),
    )(*args)


# ----------------------------- phase-2 kernels -------------------------------
# M-tiled, lane-dense elementwise passes: apply BN scale/bias, residual, ReLU.

def _bn_relu_kernel(y_ref, s_ref, b_ref, o_ref):
    y = y_ref[...].astype(jnp.float32)
    o_ref[...] = jnp.maximum(y * s_ref[...] + b_ref[...], 0.0).astype(o_ref.dtype)


def _bn_add_relu_kernel(y_ref, s_ref, b_ref, res_ref, o_ref):
    y = y_ref[...].astype(jnp.float32)
    r = res_ref[...].astype(jnp.float32)
    o_ref[...] = jnp.maximum(y * s_ref[...] + b_ref[...] + r, 0.0
                             ).astype(o_ref.dtype)


def _bn_bn_add_relu_kernel(y_ref, s_ref, b_ref, ys_ref, ss_ref, bs_ref, o_ref):
    main = y_ref[...].astype(jnp.float32) * s_ref[...] + b_ref[...]
    short = ys_ref[...].astype(jnp.float32) * ss_ref[...] + bs_ref[...]
    o_ref[...] = jnp.maximum(main + short, 0.0).astype(o_ref.dtype)


def _tiled_pointwise(kernel, m, c, out_dtype, tm, *inputs):
    """Inputs are (m, c) tensors tiled over M, or (1, c) resident vectors."""
    tm = min(tm, m)
    in_specs = []
    for a in inputs:
        if a.shape[0] == 1:
            in_specs.append(pl.BlockSpec((1, c), lambda i: (0, 0)))
        else:
            in_specs.append(pl.BlockSpec((tm, c), lambda i: (i, 0)))
    return pl.pallas_call(
        kernel,
        grid=(pl.cdiv(m, tm),),
        in_specs=in_specs,
        out_shape=jax.ShapeDtypeStruct((m, c), out_dtype),
        out_specs=pl.BlockSpec((tm, c), lambda i: (i, 0)),
        compiler_params=pltpu.CompilerParams(
            dimension_semantics=("parallel",),    # shard M tiles across TCs
            vmem_limit_bytes=_vmem_limit_bytes()),
    )(*inputs)


def _bn_scale_bias(stat_sum, stat_ssq, count, gamma, beta, c_pad):
    """Finalize training-mode BN stats into per-channel scale/bias (f32)."""
    g = _pad_last(gamma.reshape(1, -1).astype(jnp.float32), c_pad)
    b = _pad_last(beta.reshape(1, -1).astype(jnp.float32), c_pad)
    mean = stat_sum.reshape(1, -1) / count
    # Clamp to guard against tiny negative variance from E[x^2]-E[x]^2 in f32.
    var = jnp.maximum(stat_ssq.reshape(1, -1) / count - mean * mean, 0.0)
    scale = g * jax.lax.rsqrt(var + EPS)
    return scale, b - mean * scale


# ------------------------------ public forward -------------------------------

def basic_block_forward(x_nchw, params, stride=1, tm=2048):
    """Pallas implementation of BasicBlock.forward.  Input/output are NCHW."""
    x = jnp.transpose(x_nchw, (0, 2, 3, 1))                       # -> NHWC
    n, h, w, cin = x.shape
    planes = params["w1"].shape[-1]

    cin_p = _round_up(cin, LANE)
    cmid_p = _round_up(planes, LANE)
    ho = (h - 1) // stride + 1
    wo = (w - 1) // stride + 1
    m = n * ho * wo

    # Single pad op per conv input: 1-px spatial halo + channel pad, in bf16.
    xp1 = jnp.pad(x.astype(jnp.bfloat16),
                  ((0, 0), (1, 1), (1, 1), (0, cin_p - cin)))

    w1 = jnp.pad(params["w1"],
                 ((0, 0), (0, 0), (0, cin_p - cin), (0, cmid_p - planes)))
    w1 = w1.reshape(9, cin_p, cmid_p).astype(jnp.bfloat16)

    # ---- conv1 (3x3, stride) [+ fused 1x1 projection shortcut] (phase 1) ----
    if "ws" in params:
        ws = jnp.pad(params["ws"], ((0, cin_p - cin), (0, cmid_p - planes))
                     ).astype(jnp.bfloat16)
        y1, ysc, stats1n = _conv3x3_phase1(xp1, w1, ho, wo, stride, ws=ws)
    else:
        ysc = None
        y1, stats1n = _conv3x3_phase1(xp1, w1, ho, wo, stride)
    stats1 = jnp.sum(stats1n, axis=0)            # reduce per-image partials

    # ---- bn1 + relu (phase 2, M-tiled, lane-dense, bf16 out) ----
    scale1, bias1 = _bn_scale_bias(stats1[0], stats1[1], m,
                                   params["g1"], params["b1"], cmid_p)
    a1 = _tiled_pointwise(_bn_relu_kernel, m, cmid_p, jnp.bfloat16, tm,
                          y1.reshape(m, cmid_p), scale1, bias1)

    # ---- conv2 (3x3, stride 1) (phase 1) ----
    xp2 = jnp.pad(a1.reshape(n, ho, wo, cmid_p),
                  ((0, 0), (1, 1), (1, 1), (0, 0)))
    w2 = jnp.pad(params["w2"],
                 ((0, 0), (0, 0), (0, cmid_p - planes), (0, cmid_p - planes)))
    w2 = w2.reshape(9, cmid_p, cmid_p).astype(jnp.bfloat16)
    y2, stats2n = _conv3x3_phase1(xp2, w2, ho, wo, 1)
    stats2 = jnp.sum(stats2n, axis=0)

    scale2, bias2 = _bn_scale_bias(stats2[0], stats2[1], m,
                                   params["g2"], params["b2"], cmid_p)

    # ---- bn2 + shortcut + relu (phase 2) ----
    if "ws" in params:       # projection shortcut: 1x1 conv (stride) + BN
        scales, biass = _bn_scale_bias(stats1[2], stats1[3], m,
                                       params["gs"], params["bs"], cmid_p)
        out_flat = _tiled_pointwise(
            _bn_bn_add_relu_kernel, m, cmid_p, jnp.float32, tm,
            y2.reshape(m, cmid_p), scale2, bias2,
            ysc.reshape(m, cmid_p), scales, biass)
    else:                    # identity shortcut (stride == 1, cin == planes)
        # residual is x itself; reuse the already padded+cast xp1 center.
        res = xp1[:, 1:1 + ho, 1:1 + wo, :].reshape(m, cin_p)
        out_flat = _tiled_pointwise(
            _bn_add_relu_kernel, m, cmid_p, jnp.float32, tm,
            y2.reshape(m, cmid_p), scale2, bias2, res)

    out = out_flat.reshape(n, ho, wo, cmid_p)[..., :planes]
    return jnp.transpose(out, (0, 3, 1, 2))                       # -> NCHW


# ----------------------------- pure-JAX reference ----------------------------

def _bn_train_ref(y, gamma, beta):
    mean = jnp.mean(y, axis=(0, 1, 2), keepdims=True)
    var = jnp.mean((y - mean) ** 2, axis=(0, 1, 2), keepdims=True)
    return ((y - mean) * jax.lax.rsqrt(var + EPS)
            * gamma.reshape(1, 1, 1, -1) + beta.reshape(1, 1, 1, -1))


def basic_block_ref(x_nchw, params, stride=1):
    x = jnp.transpose(x_nchw, (0, 2, 3, 1)).astype(jnp.float32)

    def conv3(a, w, s):
        return jax.lax.conv_general_dilated(
            a, w, (s, s), ((1, 1), (1, 1)),
            dimension_numbers=("NHWC", "HWIO", "NHWC"),
            precision=jax.lax.Precision.HIGHEST)

    out = jax.nn.relu(_bn_train_ref(conv3(x, params["w1"], stride),
                                    params["g1"], params["b1"]))
    out = _bn_train_ref(conv3(out, params["w2"], 1), params["g2"], params["b2"])
    if "ws" in params:
        ws = params["ws"].reshape(1, 1, *params["ws"].shape)
        sc = jax.lax.conv_general_dilated(
            x, ws, (stride, stride), "VALID",
            dimension_numbers=("NHWC", "HWIO", "NHWC"),
            precision=jax.lax.Precision.HIGHEST)
        sc = _bn_train_ref(sc, params["gs"], params["bs"])
    else:
        sc = x[:, ::stride, ::stride, :]
    out = jax.nn.relu(out + sc)
    return jnp.transpose(out, (0, 3, 1, 2))


# ------------------------------------ main -----------------------------------

def _make_params(key, cin, planes, with_shortcut):
    ks = jax.random.split(key, 9)
    p = {
        "w1": 0.3 * jax.random.normal(ks[0], (3, 3, cin, planes), jnp.float32),
        "g1": 1.0 + 0.1 * jax.random.normal(ks[1], (planes,), jnp.float32),
        "b1": 0.1 * jax.random.normal(ks[2], (planes,), jnp.float32),
        "w2": 0.3 * jax.random.normal(ks[3], (3, 3, planes, planes),
                                      jnp.float32),
        "g2": 1.0 + 0.1 * jax.random.normal(ks[4], (planes,), jnp.float32),
        "b2": 0.1 * jax.random.normal(ks[5], (planes,), jnp.float32),
    }
    if with_shortcut:
        p["ws"] = 0.3 * jax.random.normal(ks[6], (cin, planes), jnp.float32)
        p["gs"] = 1.0 + 0.1 * jax.random.normal(ks[7], (planes,), jnp.float32)
        p["bs"] = 0.1 * jax.random.normal(ks[8], (planes,), jnp.float32)
    return p


if __name__ == "__main__":
    key = jax.random.PRNGKey(0)
    k_x1, k_p1, k_x2, k_p2 = jax.random.split(key, 4)

    fwd = jax.jit(functools.partial(basic_block_forward, stride=1))

    # Tolerance note: activations are stored bf16 in HBM and MXU operands are
    # bf16 (the reference is f32 HIGHEST), so the comparison uses 5e-2.
    ATOL = RTOL = 5e-2

    # Case 1: in_planes != planes -> projection (1x1 conv + BN) shortcut.
    n, cin, hw, planes = 2, 4, 16, 8
    x1 = jax.random.normal(k_x1, (n, cin, hw, hw), jnp.float32)
    p1 = _make_params(k_p1, cin, planes, with_shortcut=True)
    out1 = jax.block_until_ready(fwd(x1, p1))
    ref1 = jax.block_until_ready(basic_block_ref(x1, p1, 1))
    assert out1.shape == (n, planes, hw, hw), out1.shape
    assert jnp.allclose(out1, ref1, atol=ATOL, rtol=RTOL), \
        float(jnp.max(jnp.abs(out1 - ref1)))

    # Case 2: in_planes == planes, stride 1 -> identity shortcut.
    x2 = jax.random.normal(k_x2, (n, planes, hw, hw), jnp.float32)
    p2 = _make_params(k_p2, planes, planes, with_shortcut=False)
    out2 = jax.block_until_ready(fwd(x2, p2))
    ref2 = jax.block_until_ready(basic_block_ref(x2, p2, 1))
    assert out2.shape == (n, planes, hw, hw), out2.shape
    assert jnp.allclose(out2, ref2, atol=ATOL, rtol=RTOL), \
        float(jnp.max(jnp.abs(out2 - ref2)))

    print("KERNEL_OK")
</pallas_src>

<mosaic_0001>
module attributes {stable_mosaic.version = 11 : i64} {
  func.func @_conv3x3_proj_kernel(%arg0: i32, %arg1: memref<1x18x18x128xbf16, #tpu.memory_space<vmem>>, %arg2: memref<9x128x128xbf16, #tpu.memory_space<vmem>>, %arg3: memref<128x128xbf16, #tpu.memory_space<vmem>>, %arg4: memref<1x16x16x128xbf16, #tpu.memory_space<vmem>>, %arg5: memref<1x16x16x128xbf16, #tpu.memory_space<vmem>>, %arg6: memref<1x4x128xf32, #tpu.memory_space<vmem>>) attributes {dimension_semantics = [#tpu.dimension_semantics<parallel>], iteration_bounds = array<i64: 2>, scalar_prefetch = 0 : i64, scratch_operands = 0 : i64, tpu.core_type = #tpu.core_type<tc>, window_params = [{transform_indices = @transform_0, window_bounds = array<i64: 1, 18, 18, 128>}, {pipeline_mode = #tpu.pipeline_mode<synchronous>, transform_indices = @transform_1, window_bounds = array<i64: 9, 128, 128>}, {pipeline_mode = #tpu.pipeline_mode<synchronous>, transform_indices = @transform_2, window_bounds = array<i64: 128, 128>}, {transform_indices = @transform_3, window_bounds = array<i64: 1, 16, 16, 128>}, {transform_indices = @transform_4, window_bounds = array<i64: 1, 16, 16, 128>}, {transform_indices = @transform_5, window_bounds = array<i64: 1, 4, 128>}]} {
    %cst = arith.constant 0.000000e+00 : f32
    %0 = vector.broadcast %cst : f32 to vector<1x128xf32>
    %cst_0 = arith.constant 0.000000e+00 : f32
    %1 = vector.broadcast %cst_0 : f32 to vector<1x128xf32>
    %cst_1 = arith.constant 0.000000e+00 : f32
    %2 = vector.broadcast %cst_1 : f32 to vector<1x128xf32>
    %cst_2 = arith.constant 0.000000e+00 : f32
    %3 = vector.broadcast %cst_2 : f32 to vector<1x128xf32>
    %c0 = arith.constant 0 : index
    %c0_3 = arith.constant 0 : index
    %4 = vector.load %arg3[%c0, %c0_3] : memref<128x128xbf16, #tpu.memory_space<vmem>>, vector<128x128xbf16>
    %cst_4 = arith.constant 0.000000e+00 : f32
    %5 = vector.broadcast %cst_4 : f32 to vector<256x128xf32>
    %c0_5 = arith.constant 0 : index
    %c0_6 = arith.constant 0 : index
    %c0_7 = arith.constant 0 : index
    %c0_8 = arith.constant 0 : index
    %6 = vector.load %arg1[%c0_5, %c0_6, %c0_7, %c0_8] : memref<1x18x18x128xbf16, #tpu.memory_space<vmem>>, vector<1x16x16x128xbf16>
    %7 = vector.shape_cast %6 : vector<1x16x16x128xbf16> to vector<16x16x128xbf16>
    %8 = vector.shape_cast %7 : vector<16x16x128xbf16> to vector<256x128xbf16>
    %c0_9 = arith.constant 0 : index
    %c0_10 = arith.constant 0 : index
    %c0_11 = arith.constant 0 : index
    %9 = vector.load %arg2[%c0_9, %c0_10, %c0_11] : memref<9x128x128xbf16, #tpu.memory_space<vmem>>, vector<1x128x128xbf16>
    %10 = vector.shape_cast %9 : vector<1x128x128xbf16> to vector<128x128xbf16>
    %cst_12 = arith.constant dense<0.000000e+00> : vector<256x128xf32>
    %11 = tpu.matmul %8, %10, %cst_12 {dimension_numbers = #tpu.dot_dimension_numbers<[1], [0], [0], [1], [0, 0, 1, 1], [], []>} : vector<256x128xbf16>, vector<128x128xbf16>, vector<256x128xf32> -> vector<256x128xf32>
    %12 = arith.addf %5, %11 : vector<256x128xf32>
    %c0_13 = arith.constant 0 : index
    %c0_14 = arith.constant 0 : index
    %c1 = arith.constant 1 : index
    %c0_15 = arith.constant 0 : index
    %13 = vector.load %arg1[%c0_13, %c0_14, %c1, %c0_15] : memref<1x18x18x128xbf16, #tpu.memory_space<vmem>>, vector<1x16x16x128xbf16>
    %14 = vector.shape_cast %13 : vector<1x16x16x128xbf16> to vector<16x16x128xbf16>
    %15 = vector.shape_cast %14 : vector<16x16x128xbf16> to vector<256x128xbf16>
    %c1_16 = arith.constant 1 : index
    %c0_17 = arith.constant 0 : index
    %c0_18 = arith.constant 0 : index
    %16 = vector.load %arg2[%c1_16, %c0_17, %c0_18] : memref<9x128x128xbf16, #tpu.memory_space<vmem>>, vector<1x128x128xbf16>
    %17 = vector.shape_cast %16 : vector<1x128x128xbf16> to vector<128x128xbf16>
    %cst_19 = arith.constant dense<0.000000e+00> : vector<256x128xf32>
    %18 = tpu.matmul %15, %17, %cst_19 {dimension_numbers = #tpu.dot_dimension_numbers<[1], [0], [0], [1], [0, 0, 1, 1], [], []>} : vector<256x128xbf16>, vector<128x128xbf16>, vector<256x128xf32> -> vector<256x128xf32>
    %19 = arith.addf %12, %18 : vector<256x128xf32>
    %c0_20 = arith.constant 0 : index
    %c0_21 = arith.constant 0 : index
    %c2 = arith.constant 2 : index
    %c0_22 = arith.constant 0 : index
    %20 = vector.load %arg1[%c0_20, %c0_21, %c2, %c0_22] : memref<1x18x18x128xbf16, #tpu.memory_space<vmem>>, vector<1x16x16x128xbf16>
    %21 = vector.shape_cast %20 : vector<1x16x16x128xbf16> to vector<16x16x128xbf16>
    %22 = vector.shape_cast %21 : vector<16x16x128xbf16> to vector<256x128xbf16>
    %c2_23 = arith.constant 2 : index
    %c0_24 = arith.constant 0 : index
    %c0_25 = arith.constant 0 : index
    %23 = vector.load %arg2[%c2_23, %c0_24, %c0_25] : memref<9x128x128xbf16, #tpu.memory_space<vmem>>, vector<1x128x128xbf16>
    %24 = vector.shape_cast %23 : vector<1x128x128xbf16> to vector<128x128xbf16>
    %cst_26 = arith.constant dense<0.000000e+00> : vector<256x128xf32>
    %25 = tpu.matmul %22, %24, %cst_26 {dimension_numbers = #tpu.dot_dimension_numbers<[1], [0], [0], [1], [0, 0, 1, 1], [], []>} : vector<256x128xbf16>, vector<128x128xbf16>, vector<256x128xf32> -> vector<256x128xf32>
    %26 = arith.addf %19, %25 : vector<256x128xf32>
    %c0_27 = arith.constant 0 : index
    %c1_28 = arith.constant 1 : index
    %c0_29 = arith.constant 0 : index
    %c0_30 = arith.constant 0 : index
    %27 = vector.load %arg1[%c0_27, %c1_28, %c0_29, %c0_30] : memref<1x18x18x128xbf16, #tpu.memory_space<vmem>>, vector<1x16x16x128xbf16>
    %28 = vector.shape_cast %27 : vector<1x16x16x128xbf16> to vector<16x16x128xbf16>
    %29 = vector.shape_cast %28 : vector<16x16x128xbf16> to vector<256x128xbf16>
    %c3 = arith.constant 3 : index
    %c0_31 = arith.constant 0 : index
    %c0_32 = arith.constant 0 : index
    %30 = vector.load %arg2[%c3, %c0_31, %c0_32] : memref<9x128x128xbf16, #tpu.memory_space<vmem>>, vector<1x128x128xbf16>
    %31 = vector.shape_cast %30 : vector<1x128x128xbf16> to vector<128x128xbf16>
    %cst_33 = arith.constant dense<0.000000e+00> : vector<256x128xf32>
    %32 = tpu.matmul %29, %31, %cst_33 {dimension_numbers = #tpu.dot_dimension_numbers<[1], [0], [0], [1], [0, 0, 1, 1], [], []>} : vector<256x128xbf16>, vector<128x128xbf16>, vector<256x128xf32> -> vector<256x128xf32>
    %33 = arith.addf %26, %32 : vector<256x128xf32>
    %c0_34 = arith.constant 0 : index
    %c1_35 = arith.constant 1 : index
    %c1_36 = arith.constant 1 : index
    %c0_37 = arith.constant 0 : index
    %34 = vector.load %arg1[%c0_34, %c1_35, %c1_36, %c0_37] : memref<1x18x18x128xbf16, #tpu.memory_space<vmem>>, vector<1x16x16x128xbf16>
    %35 = vector.shape_cast %34 : vector<1x16x16x128xbf16> to vector<16x16x128xbf16>
    %36 = vector.shape_cast %35 : vector<16x16x128xbf16> to vector<256x128xbf16>
    %c4 = arith.constant 4 : index
    %c0_38 = arith.constant 0 : index
    %c0_39 = arith.constant 0 : index
    %37 = vector.load %arg2[%c4, %c0_38, %c0_39] : memref<9x128x128xbf16, #tpu.memory_space<vmem>>, vector<1x128x128xbf16>
    %38 = vector.shape_cast %37 : vector<1x128x128xbf16> to vector<128x128xbf16>
    %cst_40 = arith.constant dense<0.000000e+00> : vector<256x128xf32>
    %39 = tpu.matmul %36, %38, %cst_40 {dimension_numbers = #tpu.dot_dimension_numbers<[1], [0], [0], [1], [0, 0, 1, 1], [], []>} : vector<256x128xbf16>, vector<128x128xbf16>, vector<256x128xf32> -> vector<256x128xf32>
    %40 = arith.addf %33, %39 : vector<256x128xf32>
    %c0_41 = arith.constant 0 : index
    %c1_42 = arith.constant 1 : index
    %c2_43 = arith.constant 2 : index
    %c0_44 = arith.constant 0 : index
    %41 = vector.load %arg1[%c0_41, %c1_42, %c2_43, %c0_44] : memref<1x18x18x128xbf16, #tpu.memory_space<vmem>>, vector<1x16x16x128xbf16>
    %42 = vector.shape_cast %41 : vector<1x16x16x128xbf16> to vector<16x16x128xbf16>
    %43 = vector.shape_cast %42 : vector<16x16x128xbf16> to vector<256x128xbf16>
    %c5 = arith.constant 5 : index
    %c0_45 = arith.constant 0 : index
    %c0_46 = arith.constant 0 : index
    %44 = vector.load %arg2[%c5, %c0_45, %c0_46] : memref<9x128x128xbf16, #tpu.memory_space<vmem>>, vector<1x128x128xbf16>
    %45 = vector.shape_cast %44 : vector<1x128x128xbf16> to vector<128x128xbf16>
    %cst_47 = arith.constant dense<0.000000e+00> : vector<256x128xf32>
    %46 = tpu.matmul %43, %45, %cst_47 {dimension_numbers = #tpu.dot_dimension_numbers<[1], [0], [0], [1], [0, 0, 1, 1], [], []>} : vector<256x128xbf16>, vector<128x128xbf16>, vector<256x128xf32> -> vector<256x128xf32>
    %47 = arith.addf %40, %46 : vector<256x128xf32>
    %c0_48 = arith.constant 0 : index
    %c2_49 = arith.constant 2 : index
    %c0_50 = arith.constant 0 : index
    %c0_51 = arith.constant 0 : index
    %48 = vector.load %arg1[%c0_48, %c2_49, %c0_50, %c0_51] : memref<1x18x18x128xbf16, #tpu.memory_space<vmem>>, vector<1x16x16x128xbf16>
    %49 = vector.shape_cast %48 : vector<1x16x16x128xbf16> to vector<16x16x128xbf16>
    %50 = vector.shape_cast %49 : vector<16x16x128xbf16> to vector<256x128xbf16>
    %c6 = arith.constant 6 : index
    %c0_52 = arith.constant 0 : index
    %c0_53 = arith.constant 0 : index
    %51 = vector.load %arg2[%c6, %c0_52, %c0_53] : memref<9x128x128xbf16, #tpu.memory_space<vmem>>, vector<1x128x128xbf16>
    %52 = vector.shape_cast %51 : vector<1x128x128xbf16> to vector<128x128xbf16>
    %cst_54 = arith.constant dense<0.000000e+00> : vector<256x128xf32>
    %53 = tpu.matmul %50, %52, %cst_54 {dimension_numbers = #tpu.dot_dimension_numbers<[1], [0], [0], [1], [0, 0, 1, 1], [], []>} : vector<256x128xbf16>, vector<128x128xbf16>, vector<256x128xf32> -> vector<256x128xf32>
    %54 = arith.addf %47, %53 : vector<256x128xf32>
    %c0_55 = arith.constant 0 : index
    %c2_56 = arith.constant 2 : index
    %c1_57 = arith.constant 1 : index
    %c0_58 = arith.constant 0 : index
    %55 = vector.load %arg1[%c0_55, %c2_56, %c1_57, %c0_58] : memref<1x18x18x128xbf16, #tpu.memory_space<vmem>>, vector<1x16x16x128xbf16>
    %56 = vector.shape_cast %55 : vector<1x16x16x128xbf16> to vector<16x16x128xbf16>
    %57 = vector.shape_cast %56 : vector<16x16x128xbf16> to vector<256x128xbf16>
    %c7 = arith.constant 7 : index
    %c0_59 = arith.constant 0 : index
    %c0_60 = arith.constant 0 : index
    %58 = vector.load %arg2[%c7, %c0_59, %c0_60] : memref<9x128x128xbf16, #tpu.memory_space<vmem>>, vector<1x128x128xbf16>
    %59 = vector.shape_cast %58 : vector<1x128x128xbf16> to vector<128x128xbf16>
    %cst_61 = arith.constant dense<0.000000e+00> : vector<256x128xf32>
    %60 = tpu.matmul %57, %59, %cst_61 {dimension_numbers = #tpu.dot_dimension_numbers<[1], [0], [0], [1], [0, 0, 1, 1], [], []>} : vector<256x128xbf16>, vector<128x128xbf16>, vector<256x128xf32> -> vector<256x128xf32>
    %61 = arith.addf %54, %60 : vector<256x128xf32>
    %c0_62 = arith.constant 0 : index
    %c2_63 = arith.constant 2 : index
    %c2_64 = arith.constant 2 : index
    %c0_65 = arith.constant 0 : index
    %62 = vector.load %arg1[%c0_62, %c2_63, %c2_64, %c0_65] : memref<1x18x18x128xbf16, #tpu.memory_space<vmem>>, vector<1x16x16x128xbf16>
    %63 = vector.shape_cast %62 : vector<1x16x16x128xbf16> to vector<16x16x128xbf16>
    %64 = vector.shape_cast %63 : vector<16x16x128xbf16> to vector<256x128xbf16>
    %c8 = arith.constant 8 : index
    %c0_66 = arith.constant 0 : index
    %c0_67 = arith.constant 0 : index
    %65 = vector.load %arg2[%c8, %c0_66, %c0_67] : memref<9x128x128xbf16, #tpu.memory_space<vmem>>, vector<1x128x128xbf16>
    %66 = vector.shape_cast %65 : vector<1x128x128xbf16> to vector<128x128xbf16>
    %cst_68 = arith.constant dense<0.000000e+00> : vector<256x128xf32>
    %67 = tpu.matmul %64, %66, %cst_68 {dimension_numbers = #tpu.dot_dimension_numbers<[1], [0], [0], [1], [0, 0, 1, 1], [], []>} : vector<256x128xbf16>, vector<128x128xbf16>, vector<256x128xf32> -> vector<256x128xf32>
    %68 = arith.addf %61, %67 : vector<256x128xf32>
    %cst_69 = arith.constant dense<0.000000e+00> : vector<256x128xf32>
    %69 = tpu.matmul %36, %4, %cst_69 {dimension_numbers = #tpu.dot_dimension_numbers<[1], [0], [0], [1], [0, 0, 1, 1], [], []>} : vector<256x128xbf16>, vector<128x128xbf16>, vector<256x128xf32> -> vector<256x128xf32>
    %cst_70 = arith.constant dense<0.000000e+00> : vector<128xf32>
    %70 = vector.multi_reduction <add>, %68, %cst_70 [0] : vector<256x128xf32> to vector<128xf32>
    %71 = vector.shape_cast %70 : vector<128xf32> to vector<1x128xf32>
    %72 = arith.addf %0, %71 : vector<1x128xf32>
    %73 = arith.mulf %68, %68 : vector<256x128xf32>
    %cst_71 = arith.constant dense<0.000000e+00> : vector<128xf32>
    %74 = vector.multi_reduction <add>, %73, %cst_71 [0] : vector<256x128xf32> to vector<128xf32>
    %75 = vector.shape_cast %74 : vector<128xf32> to vector<1x128xf32>
    %76 = arith.addf %1, %75 : vector<1x128xf32>
    %cst_72 = arith.constant dense<0.000000e+00> : vector<128xf32>
    %77 = vector.multi_reduction <add>, %69, %cst_72 [0] : vector<256x128xf32> to vector<128xf32>
    %78 = vector.shape_cast %77 : vector<128xf32> to vector<1x128xf32>
    %79 = arith.addf %2, %78 : vector<1x128xf32>
    %80 = arith.mulf %69, %69 : vector<256x128xf32>
    %cst_73 = arith.constant dense<0.000000e+00> : vector<128xf32>
    %81 = vector.multi_reduction <add>, %80, %cst_73 [0] : vector<256x128xf32> to vector<128xf32>
    %82 = vector.shape_cast %81 : vector<128xf32> to vector<1x128xf32>
    %83 = arith.addf %3, %82 : vector<1x128xf32>
    %84 = vector.shape_cast %68 : vector<256x128xf32> to vector<16x16x128xf32>
    %85 = arith.truncf %84 : vector<16x16x128xf32> to vector<16x16x128xbf16>
    %c0_74 = arith.constant 0 : index
    %c0_75 = arith.constant 0 : index
    %c0_76 = arith.constant 0 : index
    %c0_77 = arith.constant 0 : index
    %86 = vector.load %arg4[%c0_74, %c0_75, %c0_76, %c0_77] : memref<1x16x16x128xbf16, #tpu.memory_space<vmem>>, vector<1x16x16x128xbf16>
    %87 = vector.shape_cast %86 : vector<1x16x16x128xbf16> to vector<16x16x128xbf16>
    %88 = vector.shape_cast %85 : vector<16x16x128xbf16> to vector<1x16x16x128xbf16>
    tpu.vector_store %arg4[%c0_74, %c0_75, %c0_76, %c0_77], %88 {strides = array<i32>} : memref<1x16x16x128xbf16, #tpu.memory_space<vmem>>, vector<1x16x16x128xbf16>,
    %89 = vector.shape_cast %69 : vector<256x128xf32> to vector<16x16x128xf32>
    %90 = arith.truncf %89 : vector<16x16x128xf32> to vector<16x16x128xbf16>
    %c0_78 = arith.constant 0 : index
    %c0_79 = arith.constant 0 : index
    %c0_80 = arith.constant 0 : index
    %c0_81 = arith.constant 0 : index
    %91 = vector.load %arg5[%c0_78, %c0_79, %c0_80, %c0_81] : memref<1x16x16x128xbf16, #tpu.memory_space<vmem>>, vector<1x16x16x128xbf16>
    %92 = vector.shape_cast %91 : vector<1x16x16x128xbf16> to vector<16x16x128xbf16>
    %93 = vector.shape_cast %90 : vector<16x16x128xbf16> to vector<1x16x16x128xbf16>
    tpu.vector_store %arg5[%c0_78, %c0_79, %c0_80, %c0_81], %93 {strides = array<i32>} : memref<1x16x16x128xbf16, #tpu.memory_space<vmem>>, vector<1x16x16x128xbf16>,
    %c0_82 = arith.constant 0 : index
    %c0_83 = arith.constant 0 : index
    %c0_84 = arith.constant 0 : index
    %94 = vector.load %arg6[%c0_82, %c0_83, %c0_84] : memref<1x4x128xf32, #tpu.memory_space<vmem>>, vector<1x1x128xf32>
    %95 = vector.shape_cast %94 : vector<1x1x128xf32> to vector<1x128xf32>
    %96 = vector.shape_cast %72 : vector<1x128xf32> to vector<1x1x128xf32>
    tpu.vector_store %arg6[%c0_82, %c0_83, %c0_84], %96 {strides = array<i32>} : memref<1x4x128xf32, #tpu.memory_space<vmem>>, vector<1x1x128xf32>,
    %c0_85 = arith.constant 0 : index
    %c1_86 = arith.constant 1 : index
    %c0_87 = arith.constant 0 : index
    %97 = vector.load %arg6[%c0_85, %c1_86, %c0_87] : memref<1x4x128xf32, #tpu.memory_space<vmem>>, vector<1x1x128xf32>
    %98 = vector.shape_cast %97 : vector<1x1x128xf32> to vector<1x128xf32>
    %99 = vector.shape_cast %76 : vector<1x128xf32> to vector<1x1x128xf32>
    tpu.vector_store %arg6[%c0_85, %c1_86, %c0_87], %99 {strides = array<i32>} : memref<1x4x128xf32, #tpu.memory_space<vmem>>, vector<1x1x128xf32>,
    %c0_88 = arith.constant 0 : index
    %c2_89 = arith.constant 2 : index
    %c0_90 = arith.constant 0 : index
    %100 = vector.load %arg6[%c0_88, %c2_89, %c0_90] : memref<1x4x128xf32, #tpu.memory_space<vmem>>, vector<1x1x128xf32>
    %101 = vector.shape_cast %100 : vector<1x1x128xf32> to vector<1x128xf32>
    %102 = vector.shape_cast %79 : vector<1x128xf32> to vector<1x1x128xf32>
    tpu.vector_store %arg6[%c0_88, %c2_89, %c0_90], %102 {strides = array<i32>} : memref<1x4x128xf32, #tpu.memory_space<vmem>>, vector<1x1x128xf32>,
    %c0_91 = arith.constant 0 : index
    %c3_92 = arith.constant 3 : index
    %c0_93 = arith.constant 0 : index
    %103 = vector.load %arg6[%c0_91, %c3_92, %c0_93] : memref<1x4x128xf32, #tpu.memory_space<vmem>>, vector<1x1x128xf32>
    %104 = vector.shape_cast %103 : vector<1x1x128xf32> to vector<1x128xf32>
    %105 = vector.shape_cast %83 : vector<1x128xf32> to vector<1x1x128xf32>
    tpu.vector_store %arg6[%c0_91, %c3_92, %c0_93], %105 {strides = array<i32>} : memref<1x4x128xf32, #tpu.memory_space<vmem>>, vector<1x1x128xf32>,
    return
  }
  func.func @transform_0(%arg0: i32) -> (i32, i32, i32, i32) {
    %c0_i32 = arith.constant 0 : i32
    %c0_i32_0 = arith.constant 0 : i32
    %c0_i32_1 = arith.constant 0 : i32
    %c0_i32_2 = arith.constant 0 : i32
    return %arg0, %c0_i32, %c0_i32_0, %c0_i32_1 : i32, i32, i32, i32
  }
  func.func @transform_1(%arg0: i32) -> (i32, i32, i32) {
    %c0_i32 = arith.constant 0 : i32
    %c0_i32_0 = arith.constant 0 : i32
    %c0_i32_1 = arith.constant 0 : i32
    %c0_i32_2 = arith.constant 0 : i32
    return %c0_i32, %c0_i32_0, %c0_i32_1 : i32, i32, i32
  }
  func.func @transform_2(%arg0: i32) -> (i32, i32) {
    %c0_i32 = arith.constant 0 : i32
    %c0_i32_0 = arith.constant 0 : i32
    %c0_i32_1 = arith.constant 0 : i32
    return %c0_i32, %c0_i32_0 : i32, i32
  }
  func.func @transform_3(%arg0: i32) -> (i32, i32, i32, i32) {
    %c0_i32 = arith.constant 0 : i32
    %c0_i32_0 = arith.constant 0 : i32
    %c0_i32_1 = arith.constant 0 : i32
    %c0_i32_2 = arith.constant 0 : i32
    return %arg0, %c0_i32, %c0_i32_0, %c0_i32_1 : i32, i32, i32, i32
  }
  func.func @transform_4(%arg0: i32) -> (i32, i32, i32, i32) {
    %c0_i32 = arith.constant 0 : i32
    %c0_i32_0 = arith.constant 0 : i32
    %c0_i32_1 = arith.constant 0 : i32
    %c0_i32_2 = arith.constant 0 : i32
    return %arg0, %c0_i32, %c0_i32_0, %c0_i32_1 : i32, i32, i32, i32
  }
  func.func @transform_5(%arg0: i32) -> (i32, i32, i32) {
    %c0_i32 = arith.constant 0 : i32
    %c0_i32_0 = arith.constant 0 : i32
    %c0_i32_1 = arith.constant 0 : i32
    return %arg0, %c0_i32, %c0_i32_0 : i32, i32, i32
  }
}

module attributes {stable_mosaic.version = 11 : i64} {
  func.func @_bn_relu_kernel(%arg0: i32, %arg1: memref<512x128xbf16, #tpu.memory_space<vmem>>, %arg2: memref<1x128xf32, #tpu.memory_space<vmem>>, %arg3: memref<1x128xf32, #tpu.memory_space<vmem>>, %arg4: memref<512x128xbf16, #tpu.memory_space<vmem>>) attributes {dimension_semantics = [#tpu.dimension_semantics<parallel>], iteration_bounds = array<i64: 1>, scalar_prefetch = 0 : i64, scratch_operands = 0 : i64, tpu.core_type = #tpu.core_type<tc>, window_params = [{transform_indices = @transform_0, window_bounds = array<i64: 512, 128>}, {pipeline_mode = #tpu.pipeline_mode<synchronous>, transform_indices = @transform_1, window_bounds = array<i64: 1, 128>}, {pipeline_mode = #tpu.pipeline_mode<synchronous>, transform_indices = @transform_2, window_bounds = array<i64: 1, 128>}, {transform_indices = @transform_3, window_bounds = array<i64: 512, 128>}]} {
    %c0 = arith.constant 0 : index
    %c0_0 = arith.constant 0 : index
    %0 = vector.load %arg1[%c0, %c0_0] : memref<512x128xbf16, #tpu.memory_space<vmem>>, vector<512x128xbf16>
    %1 = arith.extf %0 : vector<512x128xbf16> to vector<512x128xf32>
    %c0_1 = arith.constant 0 : index
    %c0_2 = arith.constant 0 : index
    %2 = vector.load %arg2[%c0_1, %c0_2] : memref<1x128xf32, #tpu.memory_space<vmem>>, vector<1x128xf32>
    %3 = vector.broadcast %2 : vector<1x128xf32> to vector<512x128xf32>
    %4 = arith.mulf %1, %3 : vector<512x128xf32>
    %c0_3 = arith.constant 0 : index
    %c0_4 = arith.constant 0 : index
    %5 = vector.load %arg3[%c0_3, %c0_4] : memref<1x128xf32, #tpu.memory_space<vmem>>, vector<1x128xf32>
    %6 = vector.broadcast %5 : vector<1x128xf32> to vector<512x128xf32>
    %7 = arith.addf %4, %6 : vector<512x128xf32>
    %cst = arith.constant 0.000000e+00 : f32
    %8 = vector.broadcast %cst : f32 to vector<512x128xf32>
    %9 = arith.maximumf %7, %8 : vector<512x128xf32>
    %10 = arith.truncf %9 : vector<512x128xf32> to vector<512x128xbf16>
    %c0_5 = arith.constant 0 : index
    %c0_6 = arith.constant 0 : index
    %11 = vector.load %arg4[%c0_5, %c0_6] : memref<512x128xbf16, #tpu.memory_space<vmem>>, vector<512x128xbf16>
    tpu.vector_store %arg4[%c0_5, %c0_6], %10 {strides = array<i32>} : memref<512x128xbf16, #tpu.memory_space<vmem>>, vector<512x128xbf16>,
    return
  }
  func.func @transform_0(%arg0: i32) -> (i32, i32) {
    %c0_i32 = arith.constant 0 : i32
    %c0_i32_0 = arith.constant 0 : i32
    return %arg0, %c0_i32 : i32, i32
  }
  func.func @transform_1(%arg0: i32) -> (i32, i32) {
    %c0_i32 = arith.constant 0 : i32
    %c0_i32_0 = arith.constant 0 : i32
    %c0_i32_1 = arith.constant 0 : i32
    return %c0_i32, %c0_i32_0 : i32, i32
  }
  func.func @transform_2(%arg0: i32) -> (i32, i32) {
    %c0_i32 = arith.constant 0 : i32
    %c0_i32_0 = arith.constant 0 : i32
    %c0_i32_1 = arith.constant 0 : i32
    return %c0_i32, %c0_i32_0 : i32, i32
  }
  func.func @transform_3(%arg0: i32) -> (i32, i32) {
    %c0_i32 = arith.constant 0 : i32
    %c0_i32_0 = arith.constant 0 : i32
    return %arg0, %c0_i32 : i32, i32
  }
}

module attributes {stable_mosaic.version = 11 : i64} {
  func.func @_conv3x3_kernel(%arg0: i32, %arg1: memref<1x18x18x128xbf16, #tpu.memory_space<vmem>>, %arg2: memref<9x128x128xbf16, #tpu.memory_space<vmem>>, %arg3: memref<1x16x16x128xbf16, #tpu.memory_space<vmem>>, %arg4: memref<1x2x128xf32, #tpu.memory_space<vmem>>) attributes {dimension_semantics = [#tpu.dimension_semantics<parallel>], iteration_bounds = array<i64: 2>, scalar_prefetch = 0 : i64, scratch_operands = 0 : i64, tpu.core_type = #tpu.core_type<tc>, window_params = [{transform_indices = @transform_0, window_bounds = array<i64: 1, 18, 18, 128>}, {pipeline_mode = #tpu.pipeline_mode<synchronous>, transform_indices = @transform_1, window_bounds = array<i64: 9, 128, 128>}, {transform_indices = @transform_2, window_bounds = array<i64: 1, 16, 16, 128>}, {transform_indices = @transform_3, window_bounds = array<i64: 1, 2, 128>}]} {
    %cst = arith.constant 0.000000e+00 : f32
    %0 = vector.broadcast %cst : f32 to vector<1x128xf32>
    %cst_0 = arith.constant 0.000000e+00 : f32
    %1 = vector.broadcast %cst_0 : f32 to vector<1x128xf32>
    %cst_1 = arith.constant 0.000000e+00 : f32
    %2 = vector.broadcast %cst_1 : f32 to vector<256x128xf32>
    %c0 = arith.constant 0 : index
    %c0_2 = arith.constant 0 : index
    %c0_3 = arith.constant 0 : index
    %c0_4 = arith.constant 0 : index
    %3 = vector.load %arg1[%c0, %c0_2, %c0_3, %c0_4] : memref<1x18x18x128xbf16, #tpu.memory_space<vmem>>, vector<1x16x16x128xbf16>
    %4 = vector.shape_cast %3 : vector<1x16x16x128xbf16> to vector<16x16x128xbf16>
    %5 = vector.shape_cast %4 : vector<16x16x128xbf16> to vector<256x128xbf16>
    %c0_5 = arith.constant 0 : index
    %c0_6 = arith.constant 0 : index
    %c0_7 = arith.constant 0 : index
    %6 = vector.load %arg2[%c0_5, %c0_6, %c0_7] : memref<9x128x128xbf16, #tpu.memory_space<vmem>>, vector<1x128x128xbf16>
    %7 = vector.shape_cast %6 : vector<1x128x128xbf16> to vector<128x128xbf16>
    %cst_8 = arith.constant dense<0.000000e+00> : vector<256x128xf32>
    %8 = tpu.matmul %5, %7, %cst_8 {dimension_numbers = #tpu.dot_dimension_numbers<[1], [0], [0], [1], [0, 0, 1, 1], [], []>} : vector<256x128xbf16>, vector<128x128xbf16>, vector<256x128xf32> -> vector<256x128xf32>
    %9 = arith.addf %2, %8 : vector<256x128xf32>
    %c0_9 = arith.constant 0 : index
    %c0_10 = arith.constant 0 : index
    %c1 = arith.constant 1 : index
    %c0_11 = arith.constant 0 : index
    %10 = vector.load %arg1[%c0_9, %c0_10, %c1, %c0_11] : memref<1x18x18x128xbf16, #tpu.memory_space<vmem>>, vector<1x16x16x128xbf16>
    %11 = vector.shape_cast %10 : vector<1x16x16x128xbf16> to vector<16x16x128xbf16>
    %12 = vector.shape_cast %11 : vector<16x16x128xbf16> to vector<256x128xbf16>
    %c1_12 = arith.constant 1 : index
    %c0_13 = arith.constant 0 : index
    %c0_14 = arith.constant 0 : index
    %13 = vector.load %arg2[%c1_12, %c0_13, %c0_14] : memref<9x128x128xbf16, #tpu.memory_space<vmem>>, vector<1x128x128xbf16>
    %14 = vector.shape_cast %13 : vector<1x128x128xbf16> to vector<128x128xbf16>
    %cst_15 = arith.constant dense<0.000000e+00> : vector<256x128xf32>
    %15 = tpu.matmul %12, %14, %cst_15 {dimension_numbers = #tpu.dot_dimension_numbers<[1], [0], [0], [1], [0, 0, 1, 1], [], []>} : vector<256x128xbf16>, vector<128x128xbf16>, vector<256x128xf32> -> vector<256x128xf32>
    %16 = arith.addf %9, %15 : vector<256x128xf32>
    %c0_16 = arith.constant 0 : index
    %c0_17 = arith.constant 0 : index
    %c2 = arith.constant 2 : index
    %c0_18 = arith.constant 0 : index
    %17 = vector.load %arg1[%c0_16, %c0_17, %c2, %c0_18] : memref<1x18x18x128xbf16, #tpu.memory_space<vmem>>, vector<1x16x16x128xbf16>
    %18 = vector.shape_cast %17 : vector<1x16x16x128xbf16> to vector<16x16x128xbf16>
    %19 = vector.shape_cast %18 : vector<16x16x128xbf16> to vector<256x128xbf16>
    %c2_19 = arith.constant 2 : index
    %c0_20 = arith.constant 0 : index
    %c0_21 = arith.constant 0 : index
    %20 = vector.load %arg2[%c2_19, %c0_20, %c0_21] : memref<9x128x128xbf16, #tpu.memory_space<vmem>>, vector<1x128x128xbf16>
    %21 = vector.shape_cast %20 : vector<1x128x128xbf16> to vector<128x128xbf16>
    %cst_22 = arith.constant dense<0.000000e+00> : vector<256x128xf32>
    %22 = tpu.matmul %19, %21, %cst_22 {dimension_numbers = #tpu.dot_dimension_numbers<[1], [0], [0], [1], [0, 0, 1, 1], [], []>} : vector<256x128xbf16>, vector<128x128xbf16>, vector<256x128xf32> -> vector<256x128xf32>
    %23 = arith.addf %16, %22 : vector<256x128xf32>
    %c0_23 = arith.constant 0 : index
    %c1_24 = arith.constant 1 : index
    %c0_25 = arith.constant 0 : index
    %c0_26 = arith.constant 0 : index
    %24 = vector.load %arg1[%c0_23, %c1_24, %c0_25, %c0_26] : memref<1x18x18x128xbf16, #tpu.memory_space<vmem>>, vector<1x16x16x128xbf16>
    %25 = vector.shape_cast %24 : vector<1x16x16x128xbf16> to vector<16x16x128xbf16>
    %26 = vector.shape_cast %25 : vector<16x16x128xbf16> to vector<256x128xbf16>
    %c3 = arith.constant 3 : index
    %c0_27 = arith.constant 0 : index
    %c0_28 = arith.constant 0 : index
    %27 = vector.load %arg2[%c3, %c0_27, %c0_28] : memref<9x128x128xbf16, #tpu.memory_space<vmem>>, vector<1x128x128xbf16>
    %28 = vector.shape_cast %27 : vector<1x128x128xbf16> to vector<128x128xbf16>
    %cst_29 = arith.constant dense<0.000000e+00> : vector<256x128xf32>
    %29 = tpu.matmul %26, %28, %cst_29 {dimension_numbers = #tpu.dot_dimension_numbers<[1], [0], [0], [1], [0, 0, 1, 1], [], []>} : vector<256x128xbf16>, vector<128x128xbf16>, vector<256x128xf32> -> vector<256x128xf32>
    %30 = arith.addf %23, %29 : vector<256x128xf32>
    %c0_30 = arith.constant 0 : index
    %c1_31 = arith.constant 1 : index
    %c1_32 = arith.constant 1 : index
    %c0_33 = arith.constant 0 : index
    %31 = vector.load %arg1[%c0_30, %c1_31, %c1_32, %c0_33] : memref<1x18x18x128xbf16, #tpu.memory_space<vmem>>, vector<1x16x16x128xbf16>
    %32 = vector.shape_cast %31 : vector<1x16x16x128xbf16> to vector<16x16x128xbf16>
    %33 = vector.shape_cast %32 : vector<16x16x128xbf16> to vector<256x128xbf16>
    %c4 = arith.constant 4 : index
    %c0_34 = arith.constant 0 : index
    %c0_35 = arith.constant 0 : index
    %34 = vector.load %arg2[%c4, %c0_34, %c0_35] : memref<9x128x128xbf16, #tpu.memory_space<vmem>>, vector<1x128x128xbf16>
    %35 = vector.shape_cast %34 : vector<1x128x128xbf16> to vector<128x128xbf16>
    %cst_36 = arith.constant dense<0.000000e+00> : vector<256x128xf32>
    %36 = tpu.matmul %33, %35, %cst_36 {dimension_numbers = #tpu.dot_dimension_numbers<[1], [0], [0], [1], [0, 0, 1, 1], [], []>} : vector<256x128xbf16>, vector<128x128xbf16>, vector<256x128xf32> -> vector<256x128xf32>
    %37 = arith.addf %30, %36 : vector<256x128xf32>
    %c0_37 = arith.constant 0 : index
    %c1_38 = arith.constant 1 : index
    %c2_39 = arith.constant 2 : index
    %c0_40 = arith.constant 0 : index
    %38 = vector.load %arg1[%c0_37, %c1_38, %c2_39, %c0_40] : memref<1x18x18x128xbf16, #tpu.memory_space<vmem>>, vector<1x16x16x128xbf16>
    %39 = vector.shape_cast %38 : vector<1x16x16x128xbf16> to vector<16x16x128xbf16>
    %40 = vector.shape_cast %39 : vector<16x16x128xbf16> to vector<256x128xbf16>
    %c5 = arith.constant 5 : index
    %c0_41 = arith.constant 0 : index
    %c0_42 = arith.constant 0 : index
    %41 = vector.load %arg2[%c5, %c0_41, %c0_42] : memref<9x128x128xbf16, #tpu.memory_space<vmem>>, vector<1x128x128xbf16>
    %42 = vector.shape_cast %41 : vector<1x128x128xbf16> to vector<128x128xbf16>
    %cst_43 = arith.constant dense<0.000000e+00> : vector<256x128xf32>
    %43 = tpu.matmul %40, %42, %cst_43 {dimension_numbers = #tpu.dot_dimension_numbers<[1], [0], [0], [1], [0, 0, 1, 1], [], []>} : vector<256x128xbf16>, vector<128x128xbf16>, vector<256x128xf32> -> vector<256x128xf32>
    %44 = arith.addf %37, %43 : vector<256x128xf32>
    %c0_44 = arith.constant 0 : index
    %c2_45 = arith.constant 2 : index
    %c0_46 = arith.constant 0 : index
    %c0_47 = arith.constant 0 : index
    %45 = vector.load %arg1[%c0_44, %c2_45, %c0_46, %c0_47] : memref<1x18x18x128xbf16, #tpu.memory_space<vmem>>, vector<1x16x16x128xbf16>
    %46 = vector.shape_cast %45 : vector<1x16x16x128xbf16> to vector<16x16x128xbf16>
    %47 = vector.shape_cast %46 : vector<16x16x128xbf16> to vector<256x128xbf16>
    %c6 = arith.constant 6 : index
    %c0_48 = arith.constant 0 : index
    %c0_49 = arith.constant 0 : index
    %48 = vector.load %arg2[%c6, %c0_48, %c0_49] : memref<9x128x128xbf16, #tpu.memory_space<vmem>>, vector<1x128x128xbf16>
    %49 = vector.shape_cast %48 : vector<1x128x128xbf16> to vector<128x128xbf16>
    %cst_50 = arith.constant dense<0.000000e+00> : vector<256x128xf32>
    %50 = tpu.matmul %47, %49, %cst_50 {dimension_numbers = #tpu.dot_dimension_numbers<[1], [0], [0], [1], [0, 0, 1, 1], [], []>} : vector<256x128xbf16>, vector<128x128xbf16>, vector<256x128xf32> -> vector<256x128xf32>
    %51 = arith.addf %44, %50 : vector<256x128xf32>
    %c0_51 = arith.constant 0 : index
    %c2_52 = arith.constant 2 : index
    %c1_53 = arith.constant 1 : index
    %c0_54 = arith.constant 0 : index
    %52 = vector.load %arg1[%c0_51, %c2_52, %c1_53, %c0_54] : memref<1x18x18x128xbf16, #tpu.memory_space<vmem>>, vector<1x16x16x128xbf16>
    %53 = vector.shape_cast %52 : vector<1x16x16x128xbf16> to vector<16x16x128xbf16>
    %54 = vector.shape_cast %53 : vector<16x16x128xbf16> to vector<256x128xbf16>
    %c7 = arith.constant 7 : index
    %c0_55 = arith.constant 0 : index
    %c0_56 = arith.constant 0 : index
    %55 = vector.load %arg2[%c7, %c0_55, %c0_56] : memref<9x128x128xbf16, #tpu.memory_space<vmem>>, vector<1x128x128xbf16>
    %56 = vector.shape_cast %55 : vector<1x128x128xbf16> to vector<128x128xbf16>
    %cst_57 = arith.constant dense<0.000000e+00> : vector<256x128xf32>
    %57 = tpu.matmul %54, %56, %cst_57 {dimension_numbers = #tpu.dot_dimension_numbers<[1], [0], [0], [1], [0, 0, 1, 1], [], []>} : vector<256x128xbf16>, vector<128x128xbf16>, vector<256x128xf32> -> vector<256x128xf32>
    %58 = arith.addf %51, %57 : vector<256x128xf32>
    %c0_58 = arith.constant 0 : index
    %c2_59 = arith.constant 2 : index
    %c2_60 = arith.constant 2 : index
    %c0_61 = arith.constant 0 : index
    %59 = vector.load %arg1[%c0_58, %c2_59, %c2_60, %c0_61] : memref<1x18x18x128xbf16, #tpu.memory_space<vmem>>, vector<1x16x16x128xbf16>
    %60 = vector.shape_cast %59 : vector<1x16x16x128xbf16> to vector<16x16x128xbf16>
    %61 = vector.shape_cast %60 : vector<16x16x128xbf16> to vector<256x128xbf16>
    %c8 = arith.constant 8 : index
    %c0_62 = arith.constant 0 : index
    %c0_63 = arith.constant 0 : index
    %62 = vector.load %arg2[%c8, %c0_62, %c0_63] : memref<9x128x128xbf16, #tpu.memory_space<vmem>>, vector<1x128x128xbf16>
    %63 = vector.shape_cast %62 : vector<1x128x128xbf16> to vector<128x128xbf16>
    %cst_64 = arith.constant dense<0.000000e+00> : vector<256x128xf32>
    %64 = tpu.matmul %61, %63, %cst_64 {dimension_numbers = #tpu.dot_dimension_numbers<[1], [0], [0], [1], [0, 0, 1, 1], [], []>} : vector<256x128xbf16>, vector<128x128xbf16>, vector<256x128xf32> -> vector<256x128xf32>
    %65 = arith.addf %58, %64 : vector<256x128xf32>
    %cst_65 = arith.constant dense<0.000000e+00> : vector<128xf32>
    %66 = vector.multi_reduction <add>, %65, %cst_65 [0] : vector<256x128xf32> to vector<128xf32>
    %67 = vector.shape_cast %66 : vector<128xf32> to vector<1x128xf32>
    %68 = arith.addf %0, %67 : vector<1x128xf32>
    %69 = arith.mulf %65, %65 : vector<256x128xf32>
    %cst_66 = arith.constant dense<0.000000e+00> : vector<128xf32>
    %70 = vector.multi_reduction <add>, %69, %cst_66 [0] : vector<256x128xf32> to vector<128xf32>
    %71 = vector.shape_cast %70 : vector<128xf32> to vector<1x128xf32>
    %72 = arith.addf %1, %71 : vector<1x128xf32>
    %73 = vector.shape_cast %65 : vector<256x128xf32> to vector<16x16x128xf32>
    %74 = arith.truncf %73 : vector<16x16x128xf32> to vector<16x16x128xbf16>
    %c0_67 = arith.constant 0 : index
    %c0_68 = arith.constant 0 : index
    %c0_69 = arith.constant 0 : index
    %c0_70 = arith.constant 0 : index
    %75 = vector.load %arg3[%c0_67, %c0_68, %c0_69, %c0_70] : memref<1x16x16x128xbf16, #tpu.memory_space<vmem>>, vector<1x16x16x128xbf16>
    %76 = vector.shape_cast %75 : vector<1x16x16x128xbf16> to vector<16x16x128xbf16>
    %77 = vector.shape_cast %74 : vector<16x16x128xbf16> to vector<1x16x16x128xbf16>
    tpu.vector_store %arg3[%c0_67, %c0_68, %c0_69, %c0_70], %77 {strides = array<i32>} : memref<1x16x16x128xbf16, #tpu.memory_space<vmem>>, vector<1x16x16x128xbf16>,
    %c0_71 = arith.constant 0 : index
    %c0_72 = arith.constant 0 : index
    %c0_73 = arith.constant 0 : index
    %78 = vector.load %arg4[%c0_71, %c0_72, %c0_73] : memref<1x2x128xf32, #tpu.memory_space<vmem>>, vector<1x1x128xf32>
    %79 = vector.shape_cast %78 : vector<1x1x128xf32> to vector<1x128xf32>
    %80 = vector.shape_cast %68 : vector<1x128xf32> to vector<1x1x128xf32>
    tpu.vector_store %arg4[%c0_71, %c0_72, %c0_73], %80 {strides = array<i32>} : memref<1x2x128xf32, #tpu.memory_space<vmem>>, vector<1x1x128xf32>,
    %c0_74 = arith.constant 0 : index
    %c1_75 = arith.constant 1 : index
    %c0_76 = arith.constant 0 : index
    %81 = vector.load %arg4[%c0_74, %c1_75, %c0_76] : memref<1x2x128xf32, #tpu.memory_space<vmem>>, vector<1x1x128xf32>
    %82 = vector.shape_cast %81 : vector<1x1x128xf32> to vector<1x128xf32>
    %83 = vector.shape_cast %72 : vector<1x128xf32> to vector<1x1x128xf32>
    tpu.vector_store %arg4[%c0_74, %c1_75, %c0_76], %83 {strides = array<i32>} : memref<1x2x128xf32, #tpu.memory_space<vmem>>, vector<1x1x128xf32>,
    return
  }
  func.func @transform_0(%arg0: i32) -> (i32, i32, i32, i32) {
    %c0_i32 = arith.constant 0 : i32
    %c0_i32_0 = arith.constant 0 : i32
    %c0_i32_1 = arith.constant 0 : i32
    %c0_i32_2 = arith.constant 0 : i32
    return %arg0, %c0_i32, %c0_i32_0, %c0_i32_1 : i32, i32, i32, i32
  }
  func.func @transform_1(%arg0: i32) -> (i32, i32, i32) {
    %c0_i32 = arith.constant 0 : i32
    %c0_i32_0 = arith.constant 0 : i32
    %c0_i32_1 = arith.constant 0 : i32
    %c0_i32_2 = arith.constant 0 : i32
    return %c0_i32, %c0_i32_0, %c0_i32_1 : i32, i32, i32
  }
  func.func @transform_2(%arg0: i32) -> (i32, i32, i32, i32) {
    %c0_i32 = arith.constant 0 : i32
    %c0_i32_0 = arith.constant 0 : i32
    %c0_i32_1 = arith.constant 0 : i32
    %c0_i32_2 = arith.constant 0 : i32
    return %arg0, %c0_i32, %c0_i32_0, %c0_i32_1 : i32, i32, i32, i32
  }
  func.func @transform_3(%arg0: i32) -> (i32, i32, i32) {
    %c0_i32 = arith.constant 0 : i32
    %c0_i32_0 = arith.constant 0 : i32
    %c0_i32_1 = arith.constant 0 : i32
    return %arg0, %c0_i32, %c0_i32_0 : i32, i32, i32
  }
}

module attributes {stable_mosaic.version = 11 : i64} {
  func.func @_bn_bn_add_relu_kernel(%arg0: i32, %arg1: memref<512x128xbf16, #tpu.memory_space<vmem>>, %arg2: memref<1x128xf32, #tpu.memory_space<vmem>>, %arg3: memref<1x128xf32, #tpu.memory_space<vmem>>, %arg4: memref<512x128xbf16, #tpu.memory_space<vmem>>, %arg5: memref<1x128xf32, #tpu.memory_space<vmem>>, %arg6: memref<1x128xf32, #tpu.memory_space<vmem>>, %arg7: memref<512x128xf32, #tpu.memory_space<vmem>>) attributes {dimension_semantics = [#tpu.dimension_semantics<parallel>], iteration_bounds = array<i64: 1>, scalar_prefetch = 0 : i64, scratch_operands = 0 : i64, tpu.core_type = #tpu.core_type<tc>, window_params = [{transform_indices = @transform_0, window_bounds = array<i64: 512, 128>}, {pipeline_mode = #tpu.pipeline_mode<synchronous>, transform_indices = @transform_1, window_bounds = array<i64: 1, 128>}, {pipeline_mode = #tpu.pipeline_mode<synchronous>, transform_indices = @transform_2, window_bounds = array<i64: 1, 128>}, {transform_indices = @transform_3, window_bounds = array<i64: 512, 128>}, {pipeline_mode = #tpu.pipeline_mode<synchronous>, transform_indices = @transform_4, window_bounds = array<i64: 1, 128>}, {pipeline_mode = #tpu.pipeline_mode<synchronous>, transform_indices = @transform_5, window_bounds = array<i64: 1, 128>}, {transform_indices = @transform_6, window_bounds = array<i64: 512, 128>}]} {
    %c0 = arith.constant 0 : index
    %c0_0 = arith.constant 0 : index
    %0 = vector.load %arg1[%c0, %c0_0] : memref<512x128xbf16, #tpu.memory_space<vmem>>, vector<512x128xbf16>
    %1 = arith.extf %0 : vector<512x128xbf16> to vector<512x128xf32>
    %c0_1 = arith.constant 0 : index
    %c0_2 = arith.constant 0 : index
    %2 = vector.load %arg2[%c0_1, %c0_2] : memref<1x128xf32, #tpu.memory_space<vmem>>, vector<1x128xf32>
    %3 = vector.broadcast %2 : vector<1x128xf32> to vector<512x128xf32>
    %4 = arith.mulf %1, %3 : vector<512x128xf32>
    %c0_3 = arith.constant 0 : index
    %c0_4 = arith.constant 0 : index
    %5 = vector.load %arg3[%c0_3, %c0_4] : memref<1x128xf32, #tpu.memory_space<vmem>>, vector<1x128xf32>
    %6 = vector.broadcast %5 : vector<1x128xf32> to vector<512x128xf32>
    %7 = arith.addf %4, %6 : vector<512x128xf32>
    %c0_5 = arith.constant 0 : index
    %c0_6 = arith.constant 0 : index
    %8 = vector.load %arg4[%c0_5, %c0_6] : memref<512x128xbf16, #tpu.memory_space<vmem>>, vector<512x128xbf16>
    %9 = arith.extf %8 : vector<512x128xbf16> to vector<512x128xf32>
    %c0_7 = arith.constant 0 : index
    %c0_8 = arith.constant 0 : index
    %10 = vector.load %arg5[%c0_7, %c0_8] : memref<1x128xf32, #tpu.memory_space<vmem>>, vector<1x128xf32>
    %11 = vector.broadcast %10 : vector<1x128xf32> to vector<512x128xf32>
    %12 = arith.mulf %9, %11 : vector<512x128xf32>
    %c0_9 = arith.constant 0 : index
    %c0_10 = arith.constant 0 : index
    %13 = vector.load %arg6[%c0_9, %c0_10] : memref<1x128xf32, #tpu.memory_space<vmem>>, vector<1x128xf32>
    %14 = vector.broadcast %13 : vector<1x128xf32> to vector<512x128xf32>
    %15 = arith.addf %12, %14 : vector<512x128xf32>
    %16 = arith.addf %7, %15 : vector<512x128xf32>
    %cst = arith.constant 0.000000e+00 : f32
    %17 = vector.broadcast %cst : f32 to vector<512x128xf32>
    %18 = arith.maximumf %16, %17 : vector<512x128xf32>
    %c0_11 = arith.constant 0 : index
    %c0_12 = arith.constant 0 : index
    %19 = vector.load %arg7[%c0_11, %c0_12] : memref<512x128xf32, #tpu.memory_space<vmem>>, vector<512x128xf32>
    tpu.vector_store %arg7[%c0_11, %c0_12], %18 {strides = array<i32>} : memref<512x128xf32, #tpu.memory_space<vmem>>, vector<512x128xf32>,
    return
  }
  func.func @transform_0(%arg0: i32) -> (i32, i32) {
    %c0_i32 = arith.constant 0 : i32
    %c0_i32_0 = arith.constant 0 : i32
    return %arg0, %c0_i32 : i32, i32
  }
  func.func @transform_1(%arg0: i32) -> (i32, i32) {
    %c0_i32 = arith.constant 0 : i32
    %c0_i32_0 = arith.constant 0 : i32
    %c0_i32_1 = arith.constant 0 : i32
    return %c0_i32, %c0_i32_0 : i32, i32
  }
  func.func @transform_2(%arg0: i32) -> (i32, i32) {
    %c0_i32 = arith.constant 0 : i32
    %c0_i32_0 = arith.constant 0 : i32
    %c0_i32_1 = arith.constant 0 : i32
    return %c0_i32, %c0_i32_0 : i32, i32
  }
  func.func @transform_3(%arg0: i32) -> (i32, i32) {
    %c0_i32 = arith.constant 0 : i32
    %c0_i32_0 = arith.constant 0 : i32
    return %arg0, %c0_i32 : i32, i32
  }
  func.func @transform_4(%arg0: i32) -> (i32, i32) {
    %c0_i32 = arith.constant 0 : i32
    %c0_i32_0 = arith.constant 0 : i32
    %c0_i32_1 = arith.constant 0 : i32
    return %c0_i32, %c0_i32_0 : i32, i32
  }
  func.func @transform_5(%arg0: i32) -> (i32, i32) {
    %c0_i32 = arith.constant 0 : i32
    %c0_i32_0 = arith.constant 0 : i32
    %c0_i32_1 = arith.constant 0 : i32
    return %c0_i32, %c0_i32_0 : i32, i32
  }
  func.func @transform_6(%arg0: i32) -> (i32, i32) {
    %c0_i32 = arith.constant 0 : i32
    %c0_i32_0 = arith.constant 0 : i32
    return %arg0, %c0_i32 : i32, i32
  }
}

</mosaic_0001>

<llo_original>
// kernel: basic_block_forward.5
$region0: #{basic_block_forward.5}
  #allocation0 [shape = 'u32[]', space=smem, size = 0x4, offset = 0x4, fixed_abs, tag = 'smem constant byte address 0x4 - core index']
  #allocation1 [shape = 'u32[72,128]{1,0:T(1,128)}', space=vmem, size = 0x9000, scoped, tag = 'internal scratch']
  %s0 = inlined_call_operand.vmem [shape: bf16[512,128], index: 0, kind: input, shape index: {}]
  %s1 = inlined_call_operand.vmem [shape: f32[1,128], index: 1, kind: input, shape index: {}]
  %s2 = inlined_call_operand.vmem [shape: f32[1,128], index: 2, kind: input, shape index: {}]
  %s3 = inlined_call_operand.vmem [shape: bf16[512,128], index: 3, kind: output, shape index: {}]
  %s4 = sld [smem:[#allocation0]]
  $region22: #{basic_block_forward.5} parent=0
    _
  %s6 = ssub.s32 1, %s4
  %s7 = scalar_select 0, %s6, %s4
  // Predicated region
  $region2: #{basic_block_forward.5} parent=0 // pred_check
    _
  $region3: #{basic_block_forward.5} parent=0 // pred_check_branch
    %9 = sbr.rel (0) target = $region5
  $region4: #{basic_block_forward.5} parent=0 // pred_region
    _
  $region5: #{basic_block_forward.5} parent=0 // pred_fallthru
    _
  // Predicated region
  $region6: #{basic_block_forward.5} parent=0 // pred_check
    _
  $region7: #{basic_block_forward.5} parent=0 // pred_check_branch
    %11 = sbr.rel (0) target = $region9
  $region8: #{basic_block_forward.5} parent=0 // pred_region
    _
  $region9: #{basic_block_forward.5} parent=0 // pred_fallthru
    _
  // Predicated region
  $region10: #{basic_block_forward.5} parent=0 // pred_check
    _
  $region11: #{basic_block_forward.5} parent=0 // pred_check_branch
    %13 = sbr.rel (0) target = $region13
  $region12: #{basic_block_forward.5} parent=0 // pred_region
    _
  $region13: #{basic_block_forward.5} parent=0 // pred_fallthru
    _
  %v14 = vld [vmem:[%s0] sm:$0xf]
  %v15 = vld [vmem:[%s0 + $0x4] sm:$0xf]
  %v16 = vld [vmem:[%s0 + $0x8] sm:$0xf]
  %v17 = vld [vmem:[%s0 + $0xc] sm:$0xf]
  %v18 = vld [vmem:[%s0 + $0x10] sm:$0xf]
  %v19 = vld [vmem:[%s0 + $0x14] sm:$0xf]
  %v20 = vld [vmem:[%s0 + $0x18] sm:$0xf]
  %v21 = vld [vmem:[%s0 + $0x1c] sm:$0xf]
  %v22 = vld [vmem:[%s0 + $0x20] sm:$0xf]
  %v23 = vld [vmem:[%s0 + $0x24] sm:$0xf]
  %v24 = vld [vmem:[%s0 + $0x28] sm:$0xf]
  %v25 = vld [vmem:[%s0 + $0x2c] sm:$0xf]
  %v26 = vld [vmem:[%s0 + $0x30] sm:$0xf]
  %v27 = vld [vmem:[%s0 + $0x34] sm:$0xf]
  %v28 = vld [vmem:[%s0 + $0x38] sm:$0xf]
  %v29 = vld [vmem:[%s0 + $0x3c] sm:$0xf]
  %v30 = vld [vmem:[%s0 + $0x40] sm:$0xf]
  %v31 = vld [vmem:[%s0 + $0x44] sm:$0xf]
  %v32 = vld [vmem:[%s0 + $0x48] sm:$0xf]
  %v33 = vld [vmem:[%s0 + $0x4c] sm:$0xf]
  %v34 = vld [vmem:[%s0 + $0x50] sm:$0xf]
  %v35 = vld [vmem:[%s0 + $0x54] sm:$0xf]
  %v36 = vld [vmem:[%s0 + $0x58] sm:$0xf]
  %v37 = vld [vmem:[%s0 + $0x5c] sm:$0xf]
  %v38 = vld [vmem:[%s0 + $0x60] sm:$0xf]
  %v39 = vld [vmem:[%s0 + $0x64] sm:$0xf]
  %v40 = vld [vmem:[%s0 + $0x68] sm:$0xf]
  %v41 = vld [vmem:[%s0 + $0x6c] sm:$0xf]
  %v42 = vld [vmem:[%s0 + $0x70] sm:$0xf]
  %v43 = vld [vmem:[%s0 + $0x74] sm:$0xf]
  %v44 = vld [vmem:[%s0 + $0x78] sm:$0xf]
  %v45 = vld [vmem:[%s0 + $0x7c] sm:$0xf]
  %v46 = vld [vmem:[%s0 + $0x80] sm:$0xf]
  %v47 = vld [vmem:[%s0 + $0x84] sm:$0xf]
  %v48 = vld [vmem:[%s0 + $0x88] sm:$0xf]
  %v49 = vld [vmem:[%s0 + $0x8c] sm:$0xf]
  %v50 = vld [vmem:[%s0 + $0x90] sm:$0xf]
  %v51 = vld [vmem:[%s0 + $0x94] sm:$0xf]
  %v52 = vld [vmem:[%s0 + $0x98] sm:$0xf]
  %v53 = vld [vmem:[%s0 + $0x9c] sm:$0xf]
  %v54 = vld [vmem:[%s0 + $0xa0] sm:$0xf]
  %v55 = vld [vmem:[%s0 + $0xa4] sm:$0xf]
  %v56 = vld [vmem:[%s0 + $0xa8] sm:$0xf]
  %v57 = vld [vmem:[%s0 + $0xac] sm:$0xf]
  %v58 = vld [vmem:[%s0 + $0xb0] sm:$0xf]
  %v59 = vld [vmem:[%s0 + $0xb4] sm:$0xf]
  %v60 = vld [vmem:[%s0 + $0xb8] sm:$0xf]
  %v61 = vld [vmem:[%s0 + $0xbc] sm:$0xf]
  %v62 = vld [vmem:[%s0 + $0xc0] sm:$0xf]
  %v63 = vld [vmem:[%s0 + $0xc4] sm:$0xf]
  %v64 = vld [vmem:[%s0 + $0xc8] sm:$0xf]
  %v65 = vld [vmem:[%s0 + $0xcc] sm:$0xf]
  %v66 = vld [vmem:[%s0 + $0xd0] sm:$0xf]
  %v67 = vld [vmem:[%s0 + $0xd4] sm:$0xf]
  %v68 = vld [vmem:[%s0 + $0xd8] sm:$0xf]
  %v69 = vld [vmem:[%s0 + $0xdc] sm:$0xf]
  %v70 = vld [vmem:[%s0 + $0xe0] sm:$0xf]
  %v71 = vld [vmem:[%s0 + $0xe4] sm:$0xf]
  %v72 = vld [vmem:[%s0 + $0xe8] sm:$0xf]
  %v73 = vld [vmem:[%s0 + $0xec] sm:$0xf]
  %v74 = vld [vmem:[%s0 + $0xf0] sm:$0xf]
  %v75 = vld [vmem:[%s0 + $0xf4] sm:$0xf]
  %v76 = vld [vmem:[%s0 + $0xf8] sm:$0xf]
  %v77 = vld [vmem:[%s0 + $0xfc] sm:$0xf]
  %v78 = vunpack.c.l.bf16 %v14
  %v79 = vunpack.c.l.bf16 %v15
  %v80 = vunpack.c.l.bf16 %v16
  %v81 = vunpack.c.l.bf16 %v17
  %v82 = vunpack.c.l.bf16 %v18
  %v83 = vunpack.c.l.bf16 %v19
  %v84 = vunpack.c.l.bf16 %v20
  %v85 = vunpack.c.l.bf16 %v21
  %v86 = vunpack.c.l.bf16 %v22
  %v87 = vunpack.c.l.bf16 %v23
  %v88 = vunpack.c.l.bf16 %v24
  %v89 = vunpack.c.l.bf16 %v25
  %v90 = vunpack.c.l.bf16 %v26
  %v91 = vunpack.c.l.bf16 %v27
  %v92 = vunpack.c.l.bf16 %v28
  %v93 = vunpack.c.l.bf16 %v29
  %v94 = vunpack.c.l.bf16 %v30
  %v95 = vunpack.c.l.bf16 %v31
  %v96 = vunpack.c.l.bf16 %v32
  %v97 = vunpack.c.l.bf16 %v33
  %v98 = vunpack.c.l.bf16 %v34
  %v99 = vunpack.c.l.bf16 %v35
  %v100 = vunpack.c.l.bf16 %v36
  %v101 = vunpack.c.l.bf16 %v37
  %v102 = vunpack.c.l.bf16 %v38
  %v103 = vunpack.c.l.bf16 %v39
  %v104 = vunpack.c.l.bf16 %v40
  %v105 = vunpack.c.l.bf16 %v41
  %v106 = vunpack.c.l.bf16 %v42
  %v107 = vunpack.c.l.bf16 %v43
  %v108 = vunpack.c.l.bf16 %v44
  %v109 = vunpack.c.l.bf16 %v45
  %v110 = vunpack.c.l.bf16 %v46
  %v111 = vunpack.c.l.bf16 %v47
  %v112 = vunpack.c.l.bf16 %v48
  %v113 = vunpack.c.l.bf16 %v49
  %v114 = vunpack.c.l.bf16 %v50
  %v115 = vunpack.c.l.bf16 %v51
  %v116 = vunpack.c.l.bf16 %v52
  %v117 = vunpack.c.l.bf16 %v53
  %v118 = vunpack.c.l.bf16 %v54
  %v119 = vunpack.c.l.bf16 %v55
  %v120 = vunpack.c.l.bf16 %v56
  %v121 = vunpack.c.l.bf16 %v57
  %v122 = vunpack.c.l.bf16 %v58
  %v123 = vunpack.c.l.bf16 %v59
  %v124 = vunpack.c.l.bf16 %v60
  %v125 = vunpack.c.l.bf16 %v61
  %v126 = vunpack.c.l.bf16 %v62
  %v127 = vunpack.c.l.bf16 %v63
  %v128 = vunpack.c.l.bf16 %v64
  %v129 = vunpack.c.l.bf16 %v65
  %v130 = vunpack.c.l.bf16 %v66
  %v131 = vunpack.c.l.bf16 %v67
  %v132 = vunpack.c.l.bf16 %v68
  %v133 = vunpack.c.l.bf16 %v69
  %v134 = vunpack.c.l.bf16 %v70
  %v135 = vunpack.c.l.bf16 %v71
  %v136 = vunpack.c.l.bf16 %v72
  %v137 = vunpack.c.l.bf16 %v73
  %v138 = vunpack.c.l.bf16 %v74
  %v139 = vunpack.c.l.bf16 %v75
  %v140 = vunpack.c.l.bf16 %v76
  %v141 = vunpack.c.l.bf16 %v77
  %v142 = vld [vmem:[%s1] sm:$0x1]
  %v144 = vperm.slane %v142, 0
  %v146 = vmul.f32 %v78, %v144
  %v147 = vmul.f32 %v79, %v144
  %v148 = vmul.f32 %v80, %v144
  %v149 = vmul.f32 %v81, %v144
  %v150 = vmul.f32 %v82, %v144
  %v151 = vmul.f32 %v83, %v144
  %v152 = vmul.f32 %v84, %v144
  %v153 = vmul.f32 %v85, %v144
  %v154 = vmul.f32 %v86, %v144
  %v155 = vmul.f32 %v87, %v144
  %v156 = vmul.f32 %v88, %v144
  %v157 = vmul.f32 %v89, %v144
  %v158 = vmul.f32 %v90, %v144
  %v159 = vmul.f32 %v91, %v144
  %v160 = vmul.f32 %v92, %v144
  %v161 = vmul.f32 %v93, %v144
  %v162 = vmul.f32 %v94, %v144
  %v163 = vmul.f32 %v95, %v144
  %v164 = vmul.f32 %v96, %v144
  %v165 = vmul.f32 %v97, %v144
  %v166 = vmul.f32 %v98, %v144
  %v167 = vmul.f32 %v99, %v144
  %v168 = vmul.f32 %v100, %v144
  %v169 = vmul.f32 %v101, %v144
  %v170 = vmul.f32 %v102, %v144
  %v171 = vmul.f32 %v103, %v144
  %v172 = vmul.f32 %v104, %v144
  %v173 = vmul.f32 %v105, %v144
  %v174 = vmul.f32 %v106, %v144
  %v175 = vmul.f32 %v107, %v144
  %v176 = vmul.f32 %v108, %v144
  %v177 = vmul.f32 %v109, %v144
  %v178 = vmul.f32 %v110, %v144
  %v179 = vmul.f32 %v111, %v144
  %v180 = vmul.f32 %v112, %v144
  %v181 = vmul.f32 %v113, %v144
  %v182 = vmul.f32 %v114, %v144
  %v183 = vmul.f32 %v115, %v144
  %v184 = vmul.f32 %v116, %v144
  %v185 = vmul.f32 %v117, %v144
  %v186 = vmul.f32 %v118, %v144
  %v187 = vmul.f32 %v119, %v144
  %v188 = vmul.f32 %v120, %v144
  %v189 = vmul.f32 %v121, %v144
  %v190 = vmul.f32 %v122, %v144
  %v191 = vmul.f32 %v123, %v144
  %v192 = vmul.f32 %v124, %v144
  %v193 = vmul.f32 %v125, %v144
  %v194 = vmul.f32 %v126, %v144
  %v195 = vmul.f32 %v127, %v144
  %v196 = vmul.f32 %v128, %v144
  %v197 = vmul.f32 %v129, %v144
  %v198 = vmul.f32 %v130, %v144
  %v199 = vmul.f32 %v131, %v144
  %v200 = vmul.f32 %v132, %v144
  %v201 = vmul.f32 %v133, %v144
  %v202 = vmul.f32 %v134, %v144
  %v203 = vmul.f32 %v135, %v144
  %v204 = vmul.f32 %v136, %v144
  %v205 = vmul.f32 %v137, %v144
  %v206 = vmul.f32 %v138, %v144
  %v207 = vmul.f32 %v139, %v144
  %v208 = vmul.f32 %v140, %v144
  %v209 = vmul.f32 %v141, %v144
  %v210 = vld [vmem:[%s2] sm:$0x1]
  %v212 = vperm.slane %v210, 0
  %v214 = vadd.f32 %v146, %v212
  %v215 = vadd.f32 %v147, %v212
  %v216 = vadd.f32 %v148, %v212
  %v217 = vadd.f32 %v149, %v212
  %v218 = vadd.f32 %v150, %v212
  %v219 = vadd.f32 %v151, %v212
  %v220 = vadd.f32 %v152, %v212
  %v221 = vadd.f32 %v153, %v212
  %v222 = vadd.f32 %v154, %v212
  %v223 = vadd.f32 %v155, %v212
  %v224 = vadd.f32 %v156, %v212
  %v225 = vadd.f32 %v157, %v212
  %v226 = vadd.f32 %v158, %v212
  %v227 = vadd.f32 %v159, %v212
  %v228 = vadd.f32 %v160, %v212
  %v229 = vadd.f32 %v161, %v212
  %v230 = vadd.f32 %v162, %v212
  %v231 = vadd.f32 %v163, %v212
  %v232 = vadd.f32 %v164, %v212
  %v233 = vadd.f32 %v165, %v212
  %v234 = vadd.f32 %v166, %v212
  %v235 = vadd.f32 %v167, %v212
  %v236 = vadd.f32 %v168, %v212
  %v237 = vadd.f32 %v169, %v212
  %v238 = vadd.f32 %v170, %v212
  %v239 = vadd.f32 %v171, %v212
  %v240 = vadd.f32 %v172, %v212
  %v241 = vadd.f32 %v173, %v212
  %v242 = vadd.f32 %v174, %v212
  %v243 = vadd.f32 %v175, %v212
  %v244 = vadd.f32 %v176, %v212
  %v245 = vadd.f32 %v177, %v212
  %v246 = vadd.f32 %v178, %v212
  %v247 = vadd.f32 %v179, %v212
  %v248 = vadd.f32 %v180, %v212
  %v249 = vadd.f32 %v181, %v212
  %v250 = vadd.f32 %v182, %v212
  %v251 = vadd.f32 %v183, %v212
  %v252 = vadd.f32 %v184, %v212
  %v253 = vadd.f32 %v185, %v212
  %v254 = vadd.f32 %v186, %v212
  %v255 = vadd.f32 %v187, %v212
  %v256 = vadd.f32 %v188, %v212
  %v257 = vadd.f32 %v189, %v212
  %v258 = vadd.f32 %v190, %v212
  %v259 = vadd.f32 %v191, %v212
  %v260 = vadd.f32 %v192, %v212
  %v261 = vadd.f32 %v193, %v212
  %v262 = vadd.f32 %v194, %v212
  %v263 = vadd.f32 %v195, %v212
  %v264 = vadd.f32 %v196, %v212
  %v265 = vadd.f32 %v197, %v212
  %v266 = vadd.f32 %v198, %v212
  %v267 = vadd.f32 %v199, %v212
  %v268 = vadd.f32 %v200, %v212
  %v269 = vadd.f32 %v201, %v212
  %v270 = vadd.f32 %v202, %v212
  %v271 = vadd.f32 %v203, %v212
  %v272 = vadd.f32 %v204, %v212
  %v273 = vadd.f32 %v205, %v212
  %v274 = vadd.f32 %v206, %v212
  %v275 = vadd.f32 %v207, %v212
  %v276 = vadd.f32 %v208, %v212
  %v277 = vadd.f32 %v209, %v212
  %v278 = vmax.f32 %v214, 0.0
  %v279 = vmax.f32 %v215, 0.0
  %v280 = vmax.f32 %v216, 0.0
  %v281 = vmax.f32 %v217, 0.0
  %v282 = vmax.f32 %v218, 0.0
  %v283 = vmax.f32 %v219, 0.0
  %v284 = vmax.f32 %v220, 0.0
  %v285 = vmax.f32 %v221, 0.0
  %v286 = vmax.f32 %v222, 0.0
  %v287 = vmax.f32 %v223, 0.0
  %v288 = vmax.f32 %v224, 0.0
  %v289 = vmax.f32 %v225, 0.0
  %v290 = vmax.f32 %v226, 0.0
  %v291 = vmax.f32 %v227, 0.0
  %v292 = vmax.f32 %v228, 0.0
  %v293 = vmax.f32 %v229, 0.0
  %v294 = vmax.f32 %v230, 0.0
  %v295 = vmax.f32 %v231, 0.0
  %v296 = vmax.f32 %v232, 0.0
  %v297 = vmax.f32 %v233, 0.0
  %v298 = vmax.f32 %v234, 0.0
  %v299 = vmax.f32 %v235, 0.0
  %v300 = vmax.f32 %v236, 0.0
  %v301 = vmax.f32 %v237, 0.0
  %v302 = vmax.f32 %v238, 0.0
  %v303 = vmax.f32 %v239, 0.0
  %v304 = vmax.f32 %v240, 0.0
  %v305 = vmax.f32 %v241, 0.0
  %v306 = vmax.f32 %v242, 0.0
  %v307 = vmax.f32 %v243, 0.0
  %v308 = vmax.f32 %v244, 0.0
  %v309 = vmax.f32 %v245, 0.0
  %v310 = vmax.f32 %v246, 0.0
  %v311 = vmax.f32 %v247, 0.0
  %v312 = vmax.f32 %v248, 0.0
  %v313 = vmax.f32 %v249, 0.0
  %v314 = vmax.f32 %v250, 0.0
  %v315 = vmax.f32 %v251, 0.0
  %v316 = vmax.f32 %v252, 0.0
  %v317 = vmax.f32 %v253, 0.0
  %v318 = vmax.f32 %v254, 0.0
  %v319 = vmax.f32 %v255, 0.0
  %v320 = vmax.f32 %v256, 0.0
  %v321 = vmax.f32 %v257, 0.0
  %v322 = vmax.f32 %v258, 0.0
  %v323 = vmax.f32 %v259, 0.0
  %v324 = vmax.f32 %v260, 0.0
  %v325 = vmax.f32 %v261, 0.0
  %v326 = vmax.f32 %v262, 0.0
  %v327 = vmax.f32 %v263, 0.0
  %v328 = vmax.f32 %v264, 0.0
  %v329 = vmax.f32 %v265, 0.0
  %v330 = vmax.f32 %v266, 0.0
  %v331 = vmax.f32 %v267, 0.0
  %v332 = vmax.f32 %v268, 0.0
  %v333 = vmax.f32 %v269, 0.0
  %v334 = vmax.f32 %v270, 0.0
  %v335 = vmax.f32 %v271, 0.0
  %v336 = vmax.f32 %v272, 0.0
  %v337 = vmax.f32 %v273, 0.0
  %v338 = vmax.f32 %v274, 0.0
  %v339 = vmax.f32 %v275, 0.0
  %v340 = vmax.f32 %v276, 0.0
  %v341 = vmax.f32 %v277, 0.0
  %v342 = vpack.c.bf16 %v278, %v278
  %v343 = vpack.c.bf16 %v279, %v279
  %v344 = vpack.c.bf16 %v280, %v280
  %v345 = vpack.c.bf16 %v281, %v281
  %v346 = vpack.c.bf16 %v282, %v282
  %v347 = vpack.c.bf16 %v283, %v283
  %v348 = vpack.c.bf16 %v284, %v284
  %v349 = vpack.c.bf16 %v285, %v285
  %v350 = vpack.c.bf16 %v286, %v286
  %v351 = vpack.c.bf16 %v287, %v287
  %v352 = vpack.c.bf16 %v288, %v288
  %v353 = vpack.c.bf16 %v289, %v289
  %v354 = vpack.c.bf16 %v290, %v290
  %v355 = vpack.c.bf16 %v291, %v291
  %v356 = vpack.c.bf16 %v292, %v292
  %v357 = vpack.c.bf16 %v293, %v293
  %v358 = vpack.c.bf16 %v294, %v294
  %v359 = vpack.c.bf16 %v295, %v295
  %v360 = vpack.c.bf16 %v296, %v296
  %v361 = vpack.c.bf16 %v297, %v297
  %v362 = vpack.c.bf16 %v298, %v298
  %v363 = vpack.c.bf16 %v299, %v299
  %v364 = vpack.c.bf16 %v300, %v300
  %v365 = vpack.c.bf16 %v301, %v301
  %v366 = vpack.c.bf16 %v302, %v302
  %v367 = vpack.c.bf16 %v303, %v303
  %v368 = vpack.c.bf16 %v304, %v304
  %v369 = vpack.c.bf16 %v305, %v305
  %v370 = vpack.c.bf16 %v306, %v306
  %v371 = vpack.c.bf16 %v307, %v307
  %v372 = vpack.c.bf16 %v308, %v308
  %v373 = vpack.c.bf16 %v309, %v309
  %v374 = vpack.c.bf16 %v310, %v310
  %v375 = vpack.c.bf16 %v311, %v311
  %v376 = vpack.c.bf16 %v312, %v312
  %v377 = vpack.c.bf16 %v313, %v313
  %v378 = vpack.c.bf16 %v314, %v314
  %v379 = vpack.c.bf16 %v315, %v315
  %v380 = vpack.c.bf16 %v316, %v316
  %v381 = vpack.c.bf16 %v317, %v317
  %v382 = vpack.c.bf16 %v318, %v318
  %v383 = vpack.c.bf16 %v319, %v319
  %v384 = vpack.c.bf16 %v320, %v320
  %v385 = vpack.c.bf16 %v321, %v321
  %v386 = vpack.c.bf16 %v322, %v322
  %v387 = vpack.c.bf16 %v323, %v323
  %v388 = vpack.c.bf16 %v324, %v324
  %v389 = vpack.c.bf16 %v325, %v325
  %v390 = vpack.c.bf16 %v326, %v326
  %v391 = vpack.c.bf16 %v327, %v327
  %v392 = vpack.c.bf16 %v328, %v328
  %v393 = vpack.c.bf16 %v329, %v329
  %v394 = vpack.c.bf16 %v330, %v330
  %v395 = vpack.c.bf16 %v331, %v331
  %v396 = vpack.c.bf16 %v332, %v332
  %v397 = vpack.c.bf16 %v333, %v333
  %v398 = vpack.c.bf16 %v334, %v334
  %v399 = vpack.c.bf16 %v335, %v335
  %v400 = vpack.c.bf16 %v336, %v336
  %v401 = vpack.c.bf16 %v337, %v337
  %v402 = vpack.c.bf16 %v338, %v338
  %v403 = vpack.c.bf16 %v339, %v339
  %v404 = vpack.c.bf16 %v340, %v340
  %v405 = vpack.c.bf16 %v341, %v341
  %406 = vst [vmem:[%s3] sm:$0xf] %v342
  %407 = vst [vmem:[%s3 + $0x4] sm:$0xf] %v343
  %408 = vst [vmem:[%s3 + $0x8] sm:$0xf] %v344
  %409 = vst [vmem:[%s3 + $0xc] sm:$0xf] %v345
  %410 = vst [vmem:[%s3 + $0x10] sm:$0xf] %v346
  %411 = vst [vmem:[%s3 + $0x14] sm:$0xf] %v347
  %412 = vst [vmem:[%s3 + $0x18] sm:$0xf] %v348
  %413 = vst [vmem:[%s3 + $0x1c] sm:$0xf] %v349
  %414 = vst [vmem:[%s3 + $0x20] sm:$0xf] %v350
  %415 = vst [vmem:[%s3 + $0x24] sm:$0xf] %v351
  %416 = vst [vmem:[%s3 + $0x28] sm:$0xf] %v352
  %417 = vst [vmem:[%s3 + $0x2c] sm:$0xf] %v353
  %418 = vst [vmem:[%s3 + $0x30] sm:$0xf] %v354
  %419 = vst [vmem:[%s3 + $0x34] sm:$0xf] %v355
  %420 = vst [vmem:[%s3 + $0x38] sm:$0xf] %v356
  %421 = vst [vmem:[%s3 + $0x3c] sm:$0xf] %v357
  %422 = vst [vmem:[%s3 + $0x40] sm:$0xf] %v358
  %423 = vst [vmem:[%s3 + $0x44] sm:$0xf] %v359
  %424 = vst [vmem:[%s3 + $0x48] sm:$0xf] %v360
  %425 = vst [vmem:[%s3 + $0x4c] sm:$0xf] %v361
  %426 = vst [vmem:[%s3 + $0x50] sm:$0xf] %v362
  %427 = vst [vmem:[%s3 + $0x54] sm:$0xf] %v363
  %428 = vst [vmem:[%s3 + $0x58] sm:$0xf] %v364
  %429 = vst [vmem:[%s3 + $0x5c] sm:$0xf] %v365
  %430 = vst [vmem:[%s3 + $0x60] sm:$0xf] %v366
  %431 = vst [vmem:[%s3 + $0x64] sm:$0xf] %v367
  %432 = vst [vmem:[%s3 + $0x68] sm:$0xf] %v368
  %433 = vst [vmem:[%s3 + $0x6c] sm:$0xf] %v369
  %434 = vst [vmem:[%s3 + $0x70] sm:$0xf] %v370
  %435 = vst [vmem:[%s3 + $0x74] sm:$0xf] %v371
  %436 = vst [vmem:[%s3 + $0x78] sm:$0xf] %v372
  %437 = vst [vmem:[%s3 + $0x7c] sm:$0xf] %v373
  %438 = vst [vmem:[%s3 + $0x80] sm:$0xf] %v374
  %439 = vst [vmem:[%s3 + $0x84] sm:$0xf] %v375
  %440 = vst [vmem:[%s3 + $0x88] sm:$0xf] %v376
  %441 = vst [vmem:[%s3 + $0x8c] sm:$0xf] %v377
  %442 = vst [vmem:[%s3 + $0x90] sm:$0xf] %v378
  %443 = vst [vmem:[%s3 + $0x94] sm:$0xf] %v379
  %444 = vst [vmem:[%s3 + $0x98] sm:$0xf] %v380
  %445 = vst [vmem:[%s3 + $0x9c] sm:$0xf] %v381
  %446 = vst [vmem:[%s3 + $0xa0] sm:$0xf] %v382
  %447 = vst [vmem:[%s3 + $0xa4] sm:$0xf] %v383
  %448 = vst [vmem:[%s3 + $0xa8] sm:$0xf] %v384
  %449 = vst [vmem:[%s3 + $0xac] sm:$0xf] %v385
  %450 = vst [vmem:[%s3 + $0xb0] sm:$0xf] %v386
  %451 = vst [vmem:[%s3 + $0xb4] sm:$0xf] %v387
  %452 = vst [vmem:[%s3 + $0xb8] sm:$0xf] %v388
  %453 = vst [vmem:[%s3 + $0xbc] sm:$0xf] %v389
  %454 = vst [vmem:[%s3 + $0xc0] sm:$0xf] %v390
  %455 = vst [vmem:[%s3 + $0xc4] sm:$0xf] %v391
  %456 = vst [vmem:[%s3 + $0xc8] sm:$0xf] %v392
  %457 = vst [vmem:[%s3 + $0xcc] sm:$0xf] %v393
  %458 = vst [vmem:[%s3 + $0xd0] sm:$0xf] %v394
  %459 = vst [vmem:[%s3 + $0xd4] sm:$0xf] %v395
  %460 = vst [vmem:[%s3 + $0xd8] sm:$0xf] %v396
  %461 = vst [vmem:[%s3 + $0xdc] sm:$0xf] %v397
  %462 = vst [vmem:[%s3 + $0xe0] sm:$0xf] %v398
  %463 = vst [vmem:[%s3 + $0xe4] sm:$0xf] %v399
  %464 = vst [vmem:[%s3 + $0xe8] sm:$0xf] %v400
  %465 = vst [vmem:[%s3 + $0xec] sm:$0xf] %v401
  %466 = vst [vmem:[%s3 + $0xf0] sm:$0xf] %v402
  %467 = vst [vmem:[%s3 + $0xf4] sm:$0xf] %v403
  %468 = vst [vmem:[%s3 + $0xf8] sm:$0xf] %v404
  %469 = vst [vmem:[%s3 + $0xfc] sm:$0xf] %v405
  // Predicated region
  $region14: #{basic_block_forward.5} parent=0 // pred_check
    _
  $region15: #{basic_block_forward.5} parent=0 // pred_check_branch
    %471 = sbr.rel (0) target = $region17
  $region16: #{basic_block_forward.5} parent=0 // pred_region
    _
  $region17: #{basic_block_forward.5} parent=0 // pred_fallthru
    _
  // Predicated region
  $region18: #{basic_block_forward.5} parent=0 // pred_check
    _
  $region19: #{basic_block_forward.5} parent=0 // pred_check_branch
    %473 = sbr.rel (0) target = $region21
  $region20: #{basic_block_forward.5} parent=0 // pred_region
    _
  $region21: #{basic_block_forward.5} parent=0 // pred_fallthru
    _

// kernel: basic_block_forward.7
$region0: #{basic_block_forward.7}
  #allocation0 [shape = 'u32[]', space=smem, size = 0x4, offset = 0x4, fixed_abs, tag = 'smem constant byte address 0x4 - core index']
  #allocation1 [shape = 'u32[72,128]{1,0:T(1,128)}', space=vmem, size = 0x9000, scoped, tag = 'internal scratch']
  %s0 = inlined_call_operand.vmem [shape: bf16[512,128], index: 0, kind: input, shape index: {}]
  %s1 = inlined_call_operand.vmem [shape: f32[1,128], index: 1, kind: input, shape index: {}]
  %s2 = inlined_call_operand.vmem [shape: f32[1,128], index: 2, kind: input, shape index: {}]
  %s3 = inlined_call_operand.vmem [shape: bf16[512,128], index: 3, kind: input, shape index: {}]
  %s4 = inlined_call_operand.vmem [shape: f32[1,128], index: 4, kind: input, shape index: {}]
  %s5 = inlined_call_operand.vmem [shape: f32[1,128], index: 5, kind: input, shape index: {}]
  %s6 = inlined_call_operand.vmem [shape: f32[512,128], index: 6, kind: output, shape index: {}]
  %s7 = sld [smem:[#allocation0]]
  $region34: #{basic_block_forward.7} parent=0
    _
  %s9 = ssub.s32 1, %s7
  %s10 = scalar_select 0, %s9, %s7
  // Predicated region
  $region2: #{basic_block_forward.7} parent=0 // pred_check
    _
  $region3: #{basic_block_forward.7} parent=0 // pred_check_branch
    %12 = sbr.rel (0) target = $region5
  $region4: #{basic_block_forward.7} parent=0 // pred_region
    _
  $region5: #{basic_block_forward.7} parent=0 // pred_fallthru
    _
  // Predicated region
  $region6: #{basic_block_forward.7} parent=0 // pred_check
    _
  $region7: #{basic_block_forward.7} parent=0 // pred_check_branch
    %14 = sbr.rel (0) target = $region9
  $region8: #{basic_block_forward.7} parent=0 // pred_region
    _
  $region9: #{basic_block_forward.7} parent=0 // pred_fallthru
    _
  // Predicated region
  $region10: #{basic_block_forward.7} parent=0 // pred_check
    _
  $region11: #{basic_block_forward.7} parent=0 // pred_check_branch
    %16 = sbr.rel (0) target = $region13
  $region12: #{basic_block_forward.7} parent=0 // pred_region
    _
  $region13: #{basic_block_forward.7} parent=0 // pred_fallthru
    _
  // Predicated region
  $region14: #{basic_block_forward.7} parent=0 // pred_check
    _
  $region15: #{basic_block_forward.7} parent=0 // pred_check_branch
    %18 = sbr.rel (0) target = $region17
  $region16: #{basic_block_forward.7} parent=0 // pred_region
    _
  $region17: #{basic_block_forward.7} parent=0 // pred_fallthru
    _
  // Predicated region
  $region18: #{basic_block_forward.7} parent=0 // pred_check
    _
  $region19: #{basic_block_forward.7} parent=0 // pred_check_branch
    %20 = sbr.rel (0) target = $region21
  $region20: #{basic_block_forward.7} parent=0 // pred_region
    _
  $region21: #{basic_block_forward.7} parent=0 // pred_fallthru
    _
  // Predicated region
  $region22: #{basic_block_forward.7} parent=0 // pred_check
    _
  $region23: #{basic_block_forward.7} parent=0 // pred_check_branch
    %22 = sbr.rel (0) target = $region25
  $region24: #{basic_block_forward.7} parent=0 // pred_region
    _
  $region25: #{basic_block_forward.7} parent=0 // pred_fallthru
    _
  %v23 = vld [vmem:[%s0] sm:$0xf]
  %v24 = vld [vmem:[%s0 + $0x4] sm:$0xf]
  %v25 = vld [vmem:[%s0 + $0x8] sm:$0xf]
  %v26 = vld [vmem:[%s0 + $0xc] sm:$0xf]
  %v27 = vld [vmem:[%s0 + $0x10] sm:$0xf]
  %v28 = vld [vmem:[%s0 + $0x14] sm:$0xf]
  %v29 = vld [vmem:[%s0 + $0x18] sm:$0xf]
  %v30 = vld [vmem:[%s0 + $0x1c] sm:$0xf]
  %v31 = vld [vmem:[%s0 + $0x20] sm:$0xf]
  %v32 = vld [vmem:[%s0 + $0x24] sm:$0xf]
  %v33 = vld [vmem:[%s0 + $0x28] sm:$0xf]
  %v34 = vld [vmem:[%s0 + $0x2c] sm:$0xf]
  %v35 = vld [vmem:[%s0 + $0x30] sm:$0xf]
  %v36 = vld [vmem:[%s0 + $0x34] sm:$0xf]
  %v37 = vld [vmem:[%s0 + $0x38] sm:$0xf]
  %v38 = vld [vmem:[%s0 + $0x3c] sm:$0xf]
  %v39 = vld [vmem:[%s0 + $0x40] sm:$0xf]
  %v40 = vld [vmem:[%s0 + $0x44] sm:$0xf]
  %v41 = vld [vmem:[%s0 + $0x48] sm:$0xf]
  %v42 = vld [vmem:[%s0 + $0x4c] sm:$0xf]
  %v43 = vld [vmem:[%s0 + $0x50] sm:$0xf]
  %v44 = vld [vmem:[%s0 + $0x54] sm:$0xf]
  %v45 = vld [vmem:[%s0 + $0x58] sm:$0xf]
  %v46 = vld [vmem:[%s0 + $0x5c] sm:$0xf]
  %v47 = vld [vmem:[%s0 + $0x60] sm:$0xf]
  %v48 = vld [vmem:[%s0 + $0x64] sm:$0xf]
  %v49 = vld [vmem:[%s0 + $0x68] sm:$0xf]
  %v50 = vld [vmem:[%s0 + $0x6c] sm:$0xf]
  %v51 = vld [vmem:[%s0 + $0x70] sm:$0xf]
  %v52 = vld [vmem:[%s0 + $0x74] sm:$0xf]
  %v53 = vld [vmem:[%s0 + $0x78] sm:$0xf]
  %v54 = vld [vmem:[%s0 + $0x7c] sm:$0xf]
  %v55 = vld [vmem:[%s0 + $0x80] sm:$0xf]
  %v56 = vld [vmem:[%s0 + $0x84] sm:$0xf]
  %v57 = vld [vmem:[%s0 + $0x88] sm:$0xf]
  %v58 = vld [vmem:[%s0 + $0x8c] sm:$0xf]
  %v59 = vld [vmem:[%s0 + $0x90] sm:$0xf]
  %v60 = vld [vmem:[%s0 + $0x94] sm:$0xf]
  %v61 = vld [vmem:[%s0 + $0x98] sm:$0xf]
  %v62 = vld [vmem:[%s0 + $0x9c] sm:$0xf]
  %v63 = vld [vmem:[%s0 + $0xa0] sm:$0xf]
  %v64 = vld [vmem:[%s0 + $0xa4] sm:$0xf]
  %v65 = vld [vmem:[%s0 + $0xa8] sm:$0xf]
  %v66 = vld [vmem:[%s0 + $0xac] sm:$0xf]
  %v67 = vld [vmem:[%s0 + $0xb0] sm:$0xf]
  %v68 = vld [vmem:[%s0 + $0xb4] sm:$0xf]
  %v69 = vld [vmem:[%s0 + $0xb8] sm:$0xf]
  %v70 = vld [vmem:[%s0 + $0xbc] sm:$0xf]
  %v71 = vld [vmem:[%s0 + $0xc0] sm:$0xf]
  %v72 = vld [vmem:[%s0 + $0xc4] sm:$0xf]
  %v73 = vld [vmem:[%s0 + $0xc8] sm:$0xf]
  %v74 = vld [vmem:[%s0 + $0xcc] sm:$0xf]
  %v75 = vld [vmem:[%s0 + $0xd0] sm:$0xf]
  %v76 = vld [vmem:[%s0 + $0xd4] sm:$0xf]
  %v77 = vld [vmem:[%s0 + $0xd8] sm:$0xf]
  %v78 = vld [vmem:[%s0 + $0xdc] sm:$0xf]
  %v79 = vld [vmem:[%s0 + $0xe0] sm:$0xf]
  %v80 = vld [vmem:[%s0 + $0xe4] sm:$0xf]
  %v81 = vld [vmem:[%s0 + $0xe8] sm:$0xf]
  %v82 = vld [vmem:[%s0 + $0xec] sm:$0xf]
  %v83 = vld [vmem:[%s0 + $0xf0] sm:$0xf]
  %v84 = vld [vmem:[%s0 + $0xf4] sm:$0xf]
  %v85 = vld [vmem:[%s0 + $0xf8] sm:$0xf]
  %v86 = vld [vmem:[%s0 + $0xfc] sm:$0xf]
  %v87 = vunpack.c.l.bf16 %v23
  %v88 = vunpack.c.l.bf16 %v24
  %v89 = vunpack.c.l.bf16 %v25
  %v90 = vunpack.c.l.bf16 %v26
  %v91 = vunpack.c.l.bf16 %v27
  %v92 = vunpack.c.l.bf16 %v28
  %v93 = vunpack.c.l.bf16 %v29
  %v94 = vunpack.c.l.bf16 %v30
  %v95 = vunpack.c.l.bf16 %v31
  %v96 = vunpack.c.l.bf16 %v32
  %v97 = vunpack.c.l.bf16 %v33
  %v98 = vunpack.c.l.bf16 %v34
  %v99 = vunpack.c.l.bf16 %v35
  %v100 = vunpack.c.l.bf16 %v36
  %v101 = vunpack.c.l.bf16 %v37
  %v102 = vunpack.c.l.bf16 %v38
  %v103 = vunpack.c.l.bf16 %v39
  %v104 = vunpack.c.l.bf16 %v40
  %v105 = vunpack.c.l.bf16 %v41
  %v106 = vunpack.c.l.bf16 %v42
  %v107 = vunpack.c.l.bf16 %v43
  %v108 = vunpack.c.l.bf16 %v44
  %v109 = vunpack.c.l.bf16 %v45
  %v110 = vunpack.c.l.bf16 %v46
  %v111 = vunpack.c.l.bf16 %v47
  %v112 = vunpack.c.l.bf16 %v48
  %v113 = vunpack.c.l.bf16 %v49
  %v114 = vunpack.c.l.bf16 %v50
  %v115 = vunpack.c.l.bf16 %v51
  %v116 = vunpack.c.l.bf16 %v52
  %v117 = vunpack.c.l.bf16 %v53
  %v118 = vunpack.c.l.bf16 %v54
  %v119 = vunpack.c.l.bf16 %v55
  %v120 = vunpack.c.l.bf16 %v56
  %v121 = vunpack.c.l.bf16 %v57
  %v122 = vunpack.c.l.bf16 %v58
  %v123 = vunpack.c.l.bf16 %v59
  %v124 = vunpack.c.l.bf16 %v60
  %v125 = vunpack.c.l.bf16 %v61
  %v126 = vunpack.c.l.bf16 %v62
  %v127 = vunpack.c.l.bf16 %v63
  %v128 = vunpack.c.l.bf16 %v64
  %v129 = vunpack.c.l.bf16 %v65
  %v130 = vunpack.c.l.bf16 %v66
  %v131 = vunpack.c.l.bf16 %v67
  %v132 = vunpack.c.l.bf16 %v68
  %v133 = vunpack.c.l.bf16 %v69
  %v134 = vunpack.c.l.bf16 %v70
  %v135 = vunpack.c.l.bf16 %v71
  %v136 = vunpack.c.l.bf16 %v72
  %v137 = vunpack.c.l.bf16 %v73
  %v138 = vunpack.c.l.bf16 %v74
  %v139 = vunpack.c.l.bf16 %v75
  %v140 = vunpack.c.l.bf16 %v76
  %v141 = vunpack.c.l.bf16 %v77
  %v142 = vunpack.c.l.bf16 %v78
  %v143 = vunpack.c.l.bf16 %v79
  %v144 = vunpack.c.l.bf16 %v80
  %v145 = vunpack.c.l.bf16 %v81
  %v146 = vunpack.c.l.bf16 %v82
  %v147 = vunpack.c.l.bf16 %v83
  %v148 = vunpack.c.l.bf16 %v84
  %v149 = vunpack.c.l.bf16 %v85
  %v150 = vunpack.c.l.bf16 %v86
  %v151 = vld [vmem:[%s1] sm:$0x1]
  %v153 = vperm.slane %v151, 0
  %v155 = vmul.f32 %v87, %v153
  %v156 = vmul.f32 %v88, %v153
  %v157 = vmul.f32 %v89, %v153
  %v158 = vmul.f32 %v90, %v153
  %v159 = vmul.f32 %v91, %v153
  %v160 = vmul.f32 %v92, %v153
  %v161 = vmul.f32 %v93, %v153
  %v162 = vmul.f32 %v94, %v153
  %v163 = vmul.f32 %v95, %v153
  %v164 = vmul.f32 %v96, %v153
  %v165 = vmul.f32 %v97, %v153
  %v166 = vmul.f32 %v98, %v153
  %v167 = vmul.f32 %v99, %v153
  %v168 = vmul.f32 %v100, %v153
  %v169 = vmul.f32 %v101, %v153
  %v170 = vmul.f32 %v102, %v153
  %v171 = vmul.f32 %v103, %v153
  %v172 = vmul.f32 %v104, %v153
  %v173 = vmul.f32 %v105, %v153
  %v174 = vmul.f32 %v106, %v153
  %v175 = vmul.f32 %v107, %v153
  %v176 = vmul.f32 %v108, %v153
  %v177 = vmul.f32 %v109, %v153
  %v178 = vmul.f32 %v110, %v153
  %v179 = vmul.f32 %v111, %v153
  %v180 = vmul.f32 %v112, %v153
  %v181 = vmul.f32 %v113, %v153
  %v182 = vmul.f32 %v114, %v153
  %v183 = vmul.f32 %v115, %v153
  %v184 = vmul.f32 %v116, %v153
  %v185 = vmul.f32 %v117, %v153
  %v186 = vmul.f32 %v118, %v153
  %v187 = vmul.f32 %v119, %v153
  %v188 = vmul.f32 %v120, %v153
  %v189 = vmul.f32 %v121, %v153
  %v190 = vmul.f32 %v122, %v153
  %v191 = vmul.f32 %v123, %v153
  %v192 = vmul.f32 %v124, %v153
  %v193 = vmul.f32 %v125, %v153
  %v194 = vmul.f32 %v126, %v153
  %v195 = vmul.f32 %v127, %v153
  %v196 = vmul.f32 %v128, %v153
  %v197 = vmul.f32 %v129, %v153
  %v198 = vmul.f32 %v130, %v153
  %v199 = vmul.f32 %v131, %v153
  %v200 = vmul.f32 %v132, %v153
  %v201 = vmul.f32 %v133, %v153
  %v202 = vmul.f32 %v134, %v153
  %v203 = vmul.f32 %v135, %v153
  %v204 = vmul.f32 %v136, %v153
  %v205 = vmul.f32 %v137, %v153
  %v206 = vmul.f32 %v138, %v153
  %v207 = vmul.f32 %v139, %v153
  %v208 = vmul.f32 %v140, %v153
  %v209 = vmul.f32 %v141, %v153
  %v210 = vmul.f32 %v142, %v153
  %v211 = vmul.f32 %v143, %v153
  %v212 = vmul.f32 %v144, %v153
  %v213 = vmul.f32 %v145, %v153
  %v214 = vmul.f32 %v146, %v153
  %v215 = vmul.f32 %v147, %v153
  %v216 = vmul.f32 %v148, %v153
  %v217 = vmul.f32 %v149, %v153
  %v218 = vmul.f32 %v150, %v153
  %v219 = vld [vmem:[%s2] sm:$0x1]
  %v221 = vperm.slane %v219, 0
  %v223 = vadd.f32 %v155, %v221
  %v224 = vadd.f32 %v156, %v221
  %v225 = vadd.f32 %v157, %v221
  %v226 = vadd.f32 %v158, %v221
  %v227 = vadd.f32 %v159, %v221
  %v228 = vadd.f32 %v160, %v221
  %v229 = vadd.f32 %v161, %v221
  %v230 = vadd.f32 %v162, %v221
  %v231 = vadd.f32 %v163, %v221
  %v232 = vadd.f32 %v164, %v221
  %v233 = vadd.f32 %v165, %v221
  %v234 = vadd.f32 %v166, %v221
  %v235 = vadd.f32 %v167, %v221
  %v236 = vadd.f32 %v168, %v221
  %v237 = vadd.f32 %v169, %v221
  %v238 = vadd.f32 %v170, %v221
  %v239 = vadd.f32 %v171, %v221
  %v240 = vadd.f32 %v172, %v221
  %v241 = vadd.f32 %v173, %v221
  %v242 = vadd.f32 %v174, %v221
  %v243 = vadd.f32 %v175, %v221
  %v244 = vadd.f32 %v176, %v221
  %v245 = vadd.f32 %v177, %v221
  %v246 = vadd.f32 %v178, %v221
  %v247 = vadd.f32 %v179, %v221
  %v248 = vadd.f32 %v180, %v221
  %v249 = vadd.f32 %v181, %v221
  %v250 = vadd.f32 %v182, %v221
  %v251 = vadd.f32 %v183, %v221
  %v252 = vadd.f32 %v184, %v221
  %v253 = vadd.f32 %v185, %v221
  %v254 = vadd.f32 %v186, %v221
  %v255 = vadd.f32 %v187, %v221
  %v256 = vadd.f32 %v188, %v221
  %v257 = vadd.f32 %v189, %v221
  %v258 = vadd.f32 %v190, %v221
  %v259 = vadd.f32 %v191, %v221
  %v260 = vadd.f32 %v192, %v221
  %v261 = vadd.f32 %v193, %v221
  %v262 = vadd.f32 %v194, %v221
  %v263 = vadd.f32 %v195, %v221
  %v264 = vadd.f32 %v196, %v221
  %v265 = vadd.f32 %v197, %v221
  %v266 = vadd.f32 %v198, %v221
  %v267 = vadd.f32 %v199, %v221
  %v268 = vadd.f32 %v200, %v221
  %v269 = vadd.f32 %v201, %v221
  %v270 = vadd.f32 %v202, %v221
  %v271 = vadd.f32 %v203, %v221
  %v272 = vadd.f32 %v204, %v221
  %v273 = vadd.f32 %v205, %v221
  %v274 = vadd.f32 %v206, %v221
  %v275 = vadd.f32 %v207, %v221
  %v276 = vadd.f32 %v208, %v221
  %v277 = vadd.f32 %v209, %v221
  %v278 = vadd.f32 %v210, %v221
  %v279 = vadd.f32 %v211, %v221
  %v280 = vadd.f32 %v212, %v221
  %v281 = vadd.f32 %v213, %v221
  %v282 = vadd.f32 %v214, %v221
  %v283 = vadd.f32 %v215, %v221
  %v284 = vadd.f32 %v216, %v221
  %v285 = vadd.f32 %v217, %v221
  %v286 = vadd.f32 %v218, %v221
  %v287 = vld [vmem:[%s3] sm:$0xf]
  %v288 = vld [vmem:[%s3 + $0x4] sm:$0xf]
  %v289 = vld [vmem:[%s3 + $0x8] sm:$0xf]
  %v290 = vld [vmem:[%s3 + $0xc] sm:$0xf]
  %v291 = vld [vmem:[%s3 + $0x10] sm:$0xf]
  %v292 = vld [vmem:[%s3 + $0x14] sm:$0xf]
  %v293 = vld [vmem:[%s3 + $0x18] sm:$0xf]
  %v294 = vld [vmem:[%s3 + $0x1c] sm:$0xf]
  %v295 = vld [vmem:[%s3 + $0x20] sm:$0xf]
  %v296 = vld [vmem:[%s3 + $0x24] sm:$0xf]
  %v297 = vld [vmem:[%s3 + $0x28] sm:$0xf]
  %v298 = vld [vmem:[%s3 + $0x2c] sm:$0xf]
  %v299 = vld [vmem:[%s3 + $0x30] sm:$0xf]
  %v300 = vld [vmem:[%s3 + $0x34] sm:$0xf]
  %v301 = vld [vmem:[%s3 + $0x38] sm:$0xf]
  %v302 = vld [vmem:[%s3 + $0x3c] sm:$0xf]
  %v303 = vld [vmem:[%s3 + $0x40] sm:$0xf]
  %v304 = vld [vmem:[%s3 + $0x44] sm:$0xf]
  %v305 = vld [vmem:[%s3 + $0x48] sm:$0xf]
  %v306 = vld [vmem:[%s3 + $0x4c] sm:$0xf]
  %v307 = vld [vmem:[%s3 + $0x50] sm:$0xf]
  %v308 = vld [vmem:[%s3 + $0x54] sm:$0xf]
  %v309 = vld [vmem:[%s3 + $0x58] sm:$0xf]
  %v310 = vld [vmem:[%s3 + $0x5c] sm:$0xf]
  %v311 = vld [vmem:[%s3 + $0x60] sm:$0xf]
  %v312 = vld [vmem:[%s3 + $0x64] sm:$0xf]
  %v313 = vld [vmem:[%s3 + $0x68] sm:$0xf]
  %v314 = vld [vmem:[%s3 + $0x6c] sm:$0xf]
  %v315 = vld [vmem:[%s3 + $0x70] sm:$0xf]
  %v316 = vld [vmem:[%s3 + $0x74] sm:$0xf]
  %v317 = vld [vmem:[%s3 + $0x78] sm:$0xf]
  %v318 = vld [vmem:[%s3 + $0x7c] sm:$0xf]
  %v319 = vld [vmem:[%s3 + $0x80] sm:$0xf]
  %v320 = vld [vmem:[%s3 + $0x84] sm:$0xf]
  %v321 = vld [vmem:[%s3 + $0x88] sm:$0xf]
  %v322 = vld [vmem:[%s3 + $0x8c] sm:$0xf]
  %v323 = vld [vmem:[%s3 + $0x90] sm:$0xf]
  %v324 = vld [vmem:[%s3 + $0x94] sm:$0xf]
  %v325 = vld [vmem:[%s3 + $0x98] sm:$0xf]
  %v326 = vld [vmem:[%s3 + $0x9c] sm:$0xf]
  %v327 = vld [vmem:[%s3 + $0xa0] sm:$0xf]
  %v328 = vld [vmem:[%s3 + $0xa4] sm:$0xf]
  %v329 = vld [vmem:[%s3 + $0xa8] sm:$0xf]
  %v330 = vld [vmem:[%s3 + $0xac] sm:$0xf]
  %v331 = vld [vmem:[%s3 + $0xb0] sm:$0xf]
  %v332 = vld [vmem:[%s3 + $0xb4] sm:$0xf]
  %v333 = vld [vmem:[%s3 + $0xb8] sm:$0xf]
  %v334 = vld [vmem:[%s3 + $0xbc] sm:$0xf]
  %v335 = vld [vmem:[%s3 + $0xc0] sm:$0xf]
  %v336 = vld [vmem:[%s3 + $0xc4] sm:$0xf]
  %v337 = vld [vmem:[%s3 + $0xc8] sm:$0xf]
  %v338 = vld [vmem:[%s3 + $0xcc] sm:$0xf]
  %v339 = vld [vmem:[%s3 + $0xd0] sm:$0xf]
  %v340 = vld [vmem:[%s3 + $0xd4] sm:$0xf]
  %v341 = vld [vmem:[%s3 + $0xd8] sm:$0xf]
  %v342 = vld [vmem:[%s3 + $0xdc] sm:$0xf]
  %v343 = vld [vmem:[%s3 + $0xe0] sm:$0xf]
  %v344 = vld [vmem:[%s3 + $0xe4] sm:$0xf]
  %v345 = vld [vmem:[%s3 + $0xe8] sm:$0xf]
  %v346 = vld [vmem:[%s3 + $0xec] sm:$0xf]
  %v347 = vld [vmem:[%s3 + $0xf0] sm:$0xf]
  %v348 = vld [vmem:[%s3 + $0xf4] sm:$0xf]
  %v349 = vld [vmem:[%s3 + $0xf8] sm:$0xf]
  %v350 = vld [vmem:[%s3 + $0xfc] sm:$0xf]
  %v351 = vunpack.c.l.bf16 %v287
  %v352 = vunpack.c.l.bf16 %v288
  %v353 = vunpack.c.l.bf16 %v289
  %v354 = vunpack.c.l.bf16 %v290
  %v355 = vunpack.c.l.bf16 %v291
  %v356 = vunpack.c.l.bf16 %v292
  %v357 = vunpack.c.l.bf16 %v293
  %v358 = vunpack.c.l.bf16 %v294
  %v359 = vunpack.c.l.bf16 %v295
  %v360 = vunpack.c.l.bf16 %v296
  %v361 = vunpack.c.l.bf16 %v297
  %v362 = vunpack.c.l.bf16 %v298
  %v363 = vunpack.c.l.bf16 %v299
  %v364 = vunpack.c.l.bf16 %v300
  %v365 = vunpack.c.l.bf16 %v301
  %v366 = vunpack.c.l.bf16 %v302
  %v367 = vunpack.c.l.bf16 %v303
  %v368 = vunpack.c.l.bf16 %v304
  %v369 = vunpack.c.l.bf16 %v305
  %v370 = vunpack.c.l.bf16 %v306
  %v371 = vunpack.c.l.bf16 %v307
  %v372 = vunpack.c.l.bf16 %v308
  %v373 = vunpack.c.l.bf16 %v309
  %v374 = vunpack.c.l.bf16 %v310
  %v375 = vunpack.c.l.bf16 %v311
  %v376 = vunpack.c.l.bf16 %v312
  %v377 = vunpack.c.l.bf16 %v313
  %v378 = vunpack.c.l.bf16 %v314
  %v379 = vunpack.c.l.bf16 %v315
  %v380 = vunpack.c.l.bf16 %v316
  %v381 = vunpack.c.l.bf16 %v317
  %v382 = vunpack.c.l.bf16 %v318
  %v383 = vunpack.c.l.bf16 %v319
  %v384 = vunpack.c.l.bf16 %v320
  %v385 = vunpack.c.l.bf16 %v321
  %v386 = vunpack.c.l.bf16 %v322
  %v387 = vunpack.c.l.bf16 %v323
  %v388 = vunpack.c.l.bf16 %v324
  %v389 = vunpack.c.l.bf16 %v325
  %v390 = vunpack.c.l.bf16 %v326
  %v391 = vunpack.c.l.bf16 %v327
  %v392 = vunpack.c.l.bf16 %v328
  %v393 = vunpack.c.l.bf16 %v329
  %v394 = vunpack.c.l.bf16 %v330
  %v395 = vunpack.c.l.bf16 %v331
  %v396 = vunpack.c.l.bf16 %v332
  %v397 = vunpack.c.l.bf16 %v333
  %v398 = vunpack.c.l.bf16 %v334
  %v399 = vunpack.c.l.bf16 %v335
  %v400 = vunpack.c.l.bf16 %v336
  %v401 = vunpack.c.l.bf16 %v337
  %v402 = vunpack.c.l.bf16 %v338
  %v403 = vunpack.c.l.bf16 %v339
  %v404 = vunpack.c.l.bf16 %v340
  %v405 = vunpack.c.l.bf16 %v341
  %v406 = vunpack.c.l.bf16 %v342
  %v407 = vunpack.c.l.bf16 %v343
  %v408 = vunpack.c.l.bf16 %v344
  %v409 = vunpack.c.l.bf16 %v345
  %v410 = vunpack.c.l.bf16 %v346
  %v411 = vunpack.c.l.bf16 %v347
  %v412 = vunpack.c.l.bf16 %v348
  %v413 = vunpack.c.l.bf16 %v349
  %v414 = vunpack.c.l.bf16 %v350
  %v415 = vld [vmem:[%s4] sm:$0x1]
  %v417 = vperm.slane %v415, 0
  %v419 = vmul.f32 %v351, %v417
  %v420 = vmul.f32 %v352, %v417
  %v421 = vmul.f32 %v353, %v417
  %v422 = vmul.f32 %v354, %v417
  %v423 = vmul.f32 %v355, %v417
  %v424 = vmul.f32 %v356, %v417
  %v425 = vmul.f32 %v357, %v417
  %v426 = vmul.f32 %v358, %v417
  %v427 = vmul.f32 %v359, %v417
  %v428 = vmul.f32 %v360, %v417
  %v429 = vmul.f32 %v361, %v417
  %v430 = vmul.f32 %v362, %v417
  %v431 = vmul.f32 %v363, %v417
  %v432 = vmul.f32 %v364, %v417
  %v433 = vmul.f32 %v365, %v417
  %v434 = vmul.f32 %v366, %v417
  %v435 = vmul.f32 %v367, %v417
  %v436 = vmul.f32 %v368, %v417
  %v437 = vmul.f32 %v369, %v417
  %v438 = vmul.f32 %v370, %v417
  %v439 = vmul.f32 %v371, %v417
  %v440 = vmul.f32 %v372, %v417
  %v441 = vmul.f32 %v373, %v417
  %v442 = vmul.f32 %v374, %v417
  %v443 = vmul.f32 %v375, %v417
  %v444 = vmul.f32 %v376, %v417
  %v445 = vmul.f32 %v377, %v417
  %v446 = vmul.f32 %v378, %v417
  %v447 = vmul.f32 %v379, %v417
  %v448 = vmul.f32 %v380, %v417
  %v449 = vmul.f32 %v381, %v417
  %v450 = vmul.f32 %v382, %v417
  %v451 = vmul.f32 %v383, %v417
  %v452 = vmul.f32 %v384, %v417
  %v453 = vmul.f32 %v385, %v417
  %v454 = vmul.f32 %v386, %v417
  %v455 = vmul.f32 %v387, %v417
  %v456 = vmul.f32 %v388, %v417
  %v457 = vmul.f32 %v389, %v417
  %v458 = vmul.f32 %v390, %v417
  %v459 = vmul.f32 %v391, %v417
  %v460 = vmul.f32 %v392, %v417
  %v461 = vmul.f32 %v393, %v417
  %v462 = vmul.f32 %v394, %v417
  %v463 = vmul.f32 %v395, %v417
  %v464 = vmul.f32 %v396, %v417
  %v465 = vmul.f32 %v397, %v417
  %v466 = vmul.f32 %v398, %v417
  %v467 = vmul.f32 %v399, %v417
  %v468 = vmul.f32 %v400, %v417
  %v469 = vmul.f32 %v401, %v417
  %v470 = vmul.f32 %v402, %v417
  %v471 = vmul.f32 %v403, %v417
  %v472 = vmul.f32 %v404, %v417
  %v473 = vmul.f32 %v405, %v417
  %v474 = vmul.f32 %v406, %v417
  %v475 = vmul.f32 %v407, %v417
  %v476 = vmul.f32 %v408, %v417
  %v477 = vmul.f32 %v409, %v417
  %v478 = vmul.f32 %v410, %v417
  %v479 = vmul.f32 %v411, %v417
  %v480 = vmul.f32 %v412, %v417
  %v481 = vmul.f32 %v413, %v417
  %v482 = vmul.f32 %v414, %v417
  %v483 = vld [vmem:[%s5] sm:$0x1]
  %v485 = vperm.slane %v483, 0
  %v487 = vadd.f32 %v419, %v485
  %v488 = vadd.f32 %v420, %v485
  %v489 = vadd.f32 %v421, %v485
  %v490 = vadd.f32 %v422, %v485
  %v491 = vadd.f32 %v423, %v485
  %v492 = vadd.f32 %v424, %v485
  %v493 = vadd.f32 %v425, %v485
  %v494 = vadd.f32 %v426, %v485
  %v495 = vadd.f32 %v427, %v485
  %v496 = vadd.f32 %v428, %v485
  %v497 = vadd.f32 %v429, %v485
  %v498 = vadd.f32 %v430, %v485
  %v499 = vadd.f32 %v431, %v485
  %v500 = vadd.f32 %v432, %v485
  %v501 = vadd.f32 %v433, %v485
  %v502 = vadd.f32 %v434, %v485
  %v503 = vadd.f32 %v435, %v485
  %v504 = vadd.f32 %v436, %v485
  %v505 = vadd.f32 %v437, %v485
  %v506 = vadd.f32 %v438, %v485
  %v507 = vadd.f32 %v439, %v485
  %v508 = vadd.f32 %v440, %v485
  %v509 = vadd.f32 %v441, %v485
  %v510 = vadd.f32 %v442, %v485
  %v511 = vadd.f32 %v443, %v485
  %v512 = vadd.f32 %v444, %v485
  %v513 = vadd.f32 %v445, %v485
  %v514 = vadd.f32 %v446, %v485
  %v515 = vadd.f32 %v447, %v485
  %v516 = vadd.f32 %v448, %v485
  %v517 = vadd.f32 %v449, %v485
  %v518 = vadd.f32 %v450, %v485
  %v519 = vadd.f32 %v451, %v485
  %v520 = vadd.f32 %v452, %v485
  %v521 = vadd.f32 %v453, %v485
  %v522 = vadd.f32 %v454, %v485
  %v523 = vadd.f32 %v455, %v485
  %v524 = vadd.f32 %v456, %v485
  %v525 = vadd.f32 %v457, %v485
  %v526 = vadd.f32 %v458, %v485
  %v527 = vadd.f32 %v459, %v485
  %v528 = vadd.f32 %v460, %v485
  %v529 = vadd.f32 %v461, %v485
  %v530 = vadd.f32 %v462, %v485
  %v531 = vadd.f32 %v463, %v485
  %v532 = vadd.f32 %v464, %v485
  %v533 = vadd.f32 %v465, %v485
  %v534 = vadd.f32 %v466, %v485
  %v535 = vadd.f32 %v467, %v485
  %v536 = vadd.f32 %v468, %v485
  %v537 = vadd.f32 %v469, %v485
  %v538 = vadd.f32 %v470, %v485
  %v539 = vadd.f32 %v471, %v485
  %v540 = vadd.f32 %v472, %v485
  %v541 = vadd.f32 %v473, %v485
  %v542 = vadd.f32 %v474, %v485
  %v543 = vadd.f32 %v475, %v485
  %v544 = vadd.f32 %v476, %v485
  %v545 = vadd.f32 %v477, %v485
  %v546 = vadd.f32 %v478, %v485
  %v547 = vadd.f32 %v479, %v485
  %v548 = vadd.f32 %v480, %v485
  %v549 = vadd.f32 %v481, %v485
  %v550 = vadd.f32 %v482, %v485
  %v551 = vadd.f32 %v223, %v487
  %v552 = vadd.f32 %v224, %v488
  %v553 = vadd.f32 %v225, %v489
  %v554 = vadd.f32 %v226, %v490
  %v555 = vadd.f32 %v227, %v491
  %v556 = vadd.f32 %v228, %v492
  %v557 = vadd.f32 %v229, %v493
  %v558 = vadd.f32 %v230, %v494
  %v559 = vadd.f32 %v231, %v495
  %v560 = vadd.f32 %v232, %v496
  %v561 = vadd.f32 %v233, %v497
  %v562 = vadd.f32 %v234, %v498
  %v563 = vadd.f32 %v235, %v499
  %v564 = vadd.f32 %v236, %v500
  %v565 = vadd.f32 %v237, %v501
  %v566 = vadd.f32 %v238, %v502
  %v567 = vadd.f32 %v239, %v503
  %v568 = vadd.f32 %v240, %v504
  %v569 = vadd.f32 %v241, %v505
  %v570 = vadd.f32 %v242, %v506
  %v571 = vadd.f32 %v243, %v507
  %v572 = vadd.f32 %v244, %v508
  %v573 = vadd.f32 %v245, %v509
  %v574 = vadd.f32 %v246, %v510
  %v575 = vadd.f32 %v247, %v511
  %v576 = vadd.f32 %v248, %v512
  %v577 = vadd.f32 %v249, %v513
  %v578 = vadd.f32 %v250, %v514
  %v579 = vadd.f32 %v251, %v515
  %v580 = vadd.f32 %v252, %v516
  %v581 = vadd.f32 %v253, %v517
  %v582 = vadd.f32 %v254, %v518
  %v583 = vadd.f32 %v255, %v519
  %v584 = vadd.f32 %v256, %v520
  %v585 = vadd.f32 %v257, %v521
  %v586 = vadd.f32 %v258, %v522
  %v587 = vadd.f32 %v259, %v523
  %v588 = vadd.f32 %v260, %v524
  %v589 = vadd.f32 %v261, %v525
  %v590 = vadd.f32 %v262, %v526
  %v591 = vadd.f32 %v263, %v527
  %v592 = vadd.f32 %v264, %v528
  %v593 = vadd.f32 %v265, %v529
  %v594 = vadd.f32 %v266, %v530
  %v595 = vadd.f32 %v267, %v531
  %v596 = vadd.f32 %v268, %v532
  %v597 = vadd.f32 %v269, %v533
  %v598 = vadd.f32 %v270, %v534
  %v599 = vadd.f32 %v271, %v535
  %v600 = vadd.f32 %v272, %v536
  %v601 = vadd.f32 %v273, %v537
  %v602 = vadd.f32 %v274, %v538
  %v603 = vadd.f32 %v275, %v539
  %v604 = vadd.f32 %v276, %v540
  %v605 = vadd.f32 %v277, %v541
  %v606 = vadd.f32 %v278, %v542
  %v607 = vadd.f32 %v279, %v543
  %v608 = vadd.f32 %v280, %v544
  %v609 = vadd.f32 %v281, %v545
  %v610 = vadd.f32 %v282, %v546
  %v611 = vadd.f32 %v283, %v547
  %v612 = vadd.f32 %v284, %v548
  %v613 = vadd.f32 %v285, %v549
  %v614 = vadd.f32 %v286, %v550
  %v615 = vmax.f32 %v551, 0.0
  %v616 = vmax.f32 %v552, 0.0
  %v617 = vmax.f32 %v553, 0.0
  %v618 = vmax.f32 %v554, 0.0
  %v619 = vmax.f32 %v555, 0.0
  %v620 = vmax.f32 %v556, 0.0
  %v621 = vmax.f32 %v557, 0.0
  %v622 = vmax.f32 %v558, 0.0
  %v623 = vmax.f32 %v559, 0.0
  %v624 = vmax.f32 %v560, 0.0
  %v625 = vmax.f32 %v561, 0.0
  %v626 = vmax.f32 %v562, 0.0
  %v627 = vmax.f32 %v563, 0.0
  %v628 = vmax.f32 %v564, 0.0
  %v629 = vmax.f32 %v565, 0.0
  %v630 = vmax.f32 %v566, 0.0
  %v631 = vmax.f32 %v567, 0.0
  %v632 = vmax.f32 %v568, 0.0
  %v633 = vmax.f32 %v569, 0.0
  %v634 = vmax.f32 %v570, 0.0
  %v635 = vmax.f32 %v571, 0.0
  %v636 = vmax.f32 %v572, 0.0
  %v637 = vmax.f32 %v573, 0.0
  %v638 = vmax.f32 %v574, 0.0
  %v639 = vmax.f32 %v575, 0.0
  %v640 = vmax.f32 %v576, 0.0
  %v641 = vmax.f32 %v577, 0.0
  %v642 = vmax.f32 %v578, 0.0
  %v643 = vmax.f32 %v579, 0.0
  %v644 = vmax.f32 %v580, 0.0
  %v645 = vmax.f32 %v581, 0.0
  %v646 = vmax.f32 %v582, 0.0
  %v647 = vmax.f32 %v583, 0.0
  %v648 = vmax.f32 %v584, 0.0
  %v649 = vmax.f32 %v585, 0.0
  %v650 = vmax.f32 %v586, 0.0
  %v651 = vmax.f32 %v587, 0.0
  %v652 = vmax.f32 %v588, 0.0
  %v653 = vmax.f32 %v589, 0.0
  %v654 = vmax.f32 %v590, 0.0
  %v655 = vmax.f32 %v591, 0.0
  %v656 = vmax.f32 %v592, 0.0
  %v657 = vmax.f32 %v593, 0.0
  %v658 = vmax.f32 %v594, 0.0
  %v659 = vmax.f32 %v595, 0.0
  %v660 = vmax.f32 %v596, 0.0
  %v661 = vmax.f32 %v597, 0.0
  %v662 = vmax.f32 %v598, 0.0
  %v663 = vmax.f32 %v599, 0.0
  %v664 = vmax.f32 %v600, 0.0
  %v665 = vmax.f32 %v601, 0.0
  %v666 = vmax.f32 %v602, 0.0
  %v667 = vmax.f32 %v603, 0.0
  %v668 = vmax.f32 %v604, 0.0
  %v669 = vmax.f32 %v605, 0.0
  %v670 = vmax.f32 %v606, 0.0
  %v671 = vmax.f32 %v607, 0.0
  %v672 = vmax.f32 %v608, 0.0
  %v673 = vmax.f32 %v609, 0.0
  %v674 = vmax.f32 %v610, 0.0
  %v675 = vmax.f32 %v611, 0.0
  %v676 = vmax.f32 %v612, 0.0
  %v677 = vmax.f32 %v613, 0.0
  %v678 = vmax.f32 %v614, 0.0
  %679 = vst [vmem:[%s6] sm:$0xff] %v615
  %680 = vst [vmem:[%s6 + $0x8] sm:$0xff] %v616
  %681 = vst [vmem:[%s6 + $0x10] sm:$0xff] %v617
  %682 = vst [vmem:[%s6 + $0x18] sm:$0xff] %v618
  %683 = vst [vmem:[%s6 + $0x20] sm:$0xff] %v619
  %684 = vst [vmem:[%s6 + $0x28] sm:$0xff] %v620
  %685 = vst [vmem:[%s6 + $0x30] sm:$0xff] %v621
  %686 = vst [vmem:[%s6 + $0x38] sm:$0xff] %v622
  %687 = vst [vmem:[%s6 + $0x40] sm:$0xff] %v623
  %688 = vst [vmem:[%s6 + $0x48] sm:$0xff] %v624
  %689 = vst [vmem:[%s6 + $0x50] sm:$0xff] %v625
  %690 = vst [vmem:[%s6 + $0x58] sm:$0xff] %v626
  %691 = vst [vmem:[%s6 + $0x60] sm:$0xff] %v627
  %692 = vst [vmem:[%s6 + $0x68] sm:$0xff] %v628
  %693 = vst [vmem:[%s6 + $0x70] sm:$0xff] %v629
  %694 = vst [vmem:[%s6 + $0x78] sm:$0xff] %v630
  %695 = vst [vmem:[%s6 + $0x80] sm:$0xff] %v631
  %696 = vst [vmem:[%s6 + $0x88] sm:$0xff] %v632
  %697 = vst [vmem:[%s6 + $0x90] sm:$0xff] %v633
  %698 = vst [vmem:[%s6 + $0x98] sm:$0xff] %v634
  %699 = vst [vmem:[%s6 + $0xa0] sm:$0xff] %v635
  %700 = vst [vmem:[%s6 + $0xa8] sm:$0xff] %v636
  %701 = vst [vmem:[%s6 + $0xb0] sm:$0xff] %v637
  %702 = vst [vmem:[%s6 + $0xb8] sm:$0xff] %v638
  %703 = vst [vmem:[%s6 + $0xc0] sm:$0xff] %v639
  %704 = vst [vmem:[%s6 + $0xc8] sm:$0xff] %v640
  %705 = vst [vmem:[%s6 + $0xd0] sm:$0xff] %v641
  %706 = vst [vmem:[%s6 + $0xd8] sm:$0xff] %v642
  %707 = vst [vmem:[%s6 + $0xe0] sm:$0xff] %v643
  %708 = vst [vmem:[%s6 + $0xe8] sm:$0xff] %v644
  %709 = vst [vmem:[%s6 + $0xf0] sm:$0xff] %v645
  %710 = vst [vmem:[%s6 + $0xf8] sm:$0xff] %v646
  %711 = vst [vmem:[%s6 + $0x100] sm:$0xff] %v647
  %712 = vst [vmem:[%s6 + $0x108] sm:$0xff] %v648
  %713 = vst [vmem:[%s6 + $0x110] sm:$0xff] %v649
  %714 = vst [vmem:[%s6 + $0x118] sm:$0xff] %v650
  %715 = vst [vmem:[%s6 + $0x120] sm:$0xff] %v651
  %716 = vst [vmem:[%s6 + $0x128] sm:$0xff] %v652
  %717 = vst [vmem:[%s6 + $0x130] sm:$0xff] %v653
  %718 = vst [vmem:[%s6 + $0x138] sm:$0xff] %v654
  %719 = vst [vmem:[%s6 + $0x140] sm:$0xff] %v655
  %720 = vst [vmem:[%s6 + $0x148] sm:$0xff] %v656
  %721 = vst [vmem:[%s6 + $0x150] sm:$0xff] %v657
  %722 = vst [vmem:[%s6 + $0x158] sm:$0xff] %v658
  %723 = vst [vmem:[%s6 + $0x160] sm:$0xff] %v659
  %724 = vst [vmem:[%s6 + $0x168] sm:$0xff] %v660
  %725 = vst [vmem:[%s6 + $0x170] sm:$0xff] %v661
  %726 = vst [vmem:[%s6 + $0x178] sm:$0xff] %v662
  %727 = vst [vmem:[%s6 + $0x180] sm:$0xff] %v663
  %728 = vst [vmem:[%s6 + $0x188] sm:$0xff] %v664
  %729 = vst [vmem:[%s6 + $0x190] sm:$0xff] %v665
  %730 = vst [vmem:[%s6 + $0x198] sm:$0xff] %v666
  %731 = vst [vmem:[%s6 + $0x1a0] sm:$0xff] %v667
  %732 = vst [vmem:[%s6 + $0x1a8] sm:$0xff] %v668
  %733 = vst [vmem:[%s6 + $0x1b0] sm:$0xff] %v669
  %734 = vst [vmem:[%s6 + $0x1b8] sm:$0xff] %v670
  %735 = vst [vmem:[%s6 + $0x1c0] sm:$0xff] %v671
  %736 = vst [vmem:[%s6 + $0x1c8] sm:$0xff] %v672
  %737 = vst [vmem:[%s6 + $0x1d0] sm:$0xff] %v673
  %738 = vst [vmem:[%s6 + $0x1d8] sm:$0xff] %v674
  %739 = vst [vmem:[%s6 + $0x1e0] sm:$0xff] %v675
  %740 = vst [vmem:[%s6 + $0x1e8] sm:$0xff] %v676
  %741 = vst [vmem:[%s6 + $0x1f0] sm:$0xff] %v677
  %742 = vst [vmem:[%s6 + $0x1f8] sm:$0xff] %v678
  // Predicated region
  $region26: #{basic_block_forward.7} parent=0 // pred_check
    _
  $region27: #{basic_block_forward.7} parent=0 // pred_check_branch
    %744 = sbr.rel (0) target = $region29
  $region28: #{basic_block_forward.7} parent=0 // pred_region
    _
  $region29: #{basic_block_forward.7} parent=0 // pred_fallthru
    _
  // Predicated region
  $region30: #{basic_block_forward.7} parent=0 // pred_check
    _
  $region31: #{basic_block_forward.7} parent=0 // pred_check_branch
    %746 = sbr.rel (0) target = $region33
  $region32: #{basic_block_forward.7} parent=0 // pred_region
    _
  $region33: #{basic_block_forward.7} parent=0 // pred_fallthru
    _

// kernel: basic_block_forward.6
$region0: #{basic_block_forward.6}
  #allocation0 [shape = 'u32[]', space=smem, size = 0x4, offset = 0x4, fixed_abs, tag = 'smem constant byte address 0x4 - core index']
  #allocation1 [shape = 'u32[72,128]{1,0:T(1,128)}', space=vmem, size = 0x9000, scoped, tag = 'internal scratch']
  %s0 = inlined_call_operand.vmem [shape: bf16[2,18,18,128], index: 0, kind: input, shape index: {}]
  %s1 = inlined_call_operand.vmem [shape: bf16[9,128,128], index: 1, kind: input, shape index: {}]
  %s2 = inlined_call_operand.vmem [shape: bf16[2,16,16,128], index: 2, kind: output, shape index: {0}]
  %s3 = inlined_call_operand.vmem [shape: f32[2,2,128], index: 3, kind: output, shape index: {1}]
  %4 = xla_tuple %s2, %s3
  %s5 = sld [smem:[#allocation0]]
  $region49: #{basic_block_forward.6} parent=0
    _
  %s7 = ssub.s32 1, %s5
  %s8 = scalar_select 0, %s7, %s5
  loop: start=0, step=1, limit=4
  $region2: #{basic_block_forward.6} parent=0 // loop_pre_header
    _
  $region3: #{basic_block_forward.6} parent=0 // loop_header
    %s10 = sphi 0, %s14
    %p11 = scmp.ge.s32.totalorder %s10, 4
    %s20 = sphi 0, %s22
    %s23 = sphi 0, %s20
    %s24 = sphi 0, %s23
    %s40 = sphi 0, %s24
    %s44 = sphi 0, %s44
    %s46 = sphi 0, %s44
    %s47 = sphi 0, %s46
    %s61 = sphi 0, %s47
    %s67 = sphi 0, %s69
    %s70 = sphi 0, %s67
    %s71 = sphi 0, %s70
    %s87 = sphi 0, %s71
    %s93 = sphi 0, %s95
    %s96 = sphi 0, %s93
    %s97 = sphi 0, %s96
    %s113 = sphi 0, %s97
  $region4: #{basic_block_forward.6} parent=0 // loop_header_branch
    %13 = sbr.rel (%p11) target = $region8
  $region5: #{basic_block_forward.6} parent=0 // loop_body
    %s15 = ssub.s32 %s10, 1
    %s16 = ssub.s32 %s10, 2
    %s17 = sadd.s32 %s10, 1
    %s18 = ssub.s32 %s10, %s17
    %p19 = scmp.eq.s32.totalorder %s18, 0
    %s21 = sadd.s32 %s20, 1
    %s22 = scalar_select %p19, %s20, %s21
    %p25 = pneg %p19
    %p26 = scmp.eq.s32.totalorder %s10, 1
    %p27 = por %p25, %p26
    %p28 = scmp.ne.s32.totalorder %s20, %s23
    %p29 = scmp.eq.s32.totalorder %s10, 0
    %p30 = por %p28, %p29
    %p31 = scmp.ne.s32.totalorder %s20, %s23
    %p32 = scmp.eq.s32.totalorder %s15, 1
    %p33 = por %p31, %p32
    %p34 = scmp.ne.s32.totalorder %s23, %s24
    %p35 = scmp.eq.s32.totalorder %s15, 0
    %p36 = por %p34, %p35
    %p37 = scmp.ne.s32.totalorder %s23, %s24
    %p38 = scmp.eq.s32.totalorder %s16, 1
    %p39 = por %p37, %p38
    %p41 = scmp.ne.s32.totalorder %s24, %s40
    %p42 = scmp.eq.s32.totalorder %s16, 0
    %p43 = por %p41, %p42
    %s45 = sadd.s32 %s44, 1
    %p48 = scmp.eq.s32.totalorder %s10, 1
    %p49 = scmp.ne.s32.totalorder %s44, %s46
    %p50 = scmp.eq.s32.totalorder %s10, 0
    %p51 = por %p49, %p50
    %p52 = scmp.ne.s32.totalorder %s44, %s46
    %p53 = scmp.eq.s32.totalorder %s15, 1
    %p54 = por %p52, %p53
    %p55 = scmp.ne.s32.totalorder %s46, %s47
    %p56 = scmp.eq.s32.totalorder %s15, 0
    %p57 = por %p55, %p56
    %p58 = scmp.ne.s32.totalorder %s46, %s47
    %p59 = scmp.eq.s32.totalorder %s16, 1
    %p60 = por %p58, %p59
    %p62 = scmp.ne.s32.totalorder %s47, %s61
    %p63 = scmp.eq.s32.totalorder %s16, 0
    %p64 = por %p62, %p63
    %s65 = ssub.s32 %s10, %s17
    %p66 = scmp.eq.s32.totalorder %s65, 0
    %s68 = sadd.s32 %s67, 1
    %s69 = scalar_select %p66, %s67, %s68
    %p72 = pneg %p66
    %p73 = scmp.eq.s32.totalorder %s10, 1
    %p74 = por %p72, %p73
    %p75 = scmp.ne.s32.totalorder %s67, %s70
    %p76 = scmp.eq.s32.totalorder %s10, 0
    %p77 = por %p75, %p76
    %p78 = scmp.ne.s32.totalorder %s67, %s70
    %p79 = scmp.eq.s32.totalorder %s15, 1
    %p80 = por %p78, %p79
    %p81 = scmp.ne.s32.totalorder %s70, %s71
    %p82 = scmp.eq.s32.totalorder %s15, 0
    %p83 = por %p81, %p82
    %p84 = scmp.ne.s32.totalorder %s70, %s71
    %p85 = scmp.eq.s32.totalorder %s16, 1
    %p86 = por %p84, %p85
    %p88 = scmp.ne.s32.totalorder %s71, %s87
    %p89 = scmp.eq.s32.totalorder %s16, 0
    %p90 = por %p88, %p89
    %s91 = ssub.s32 %s10, %s17
    %p92 = scmp.eq.s32.totalorder %s91, 0
    %s94 = sadd.s32 %s93, 1
    %s95 = scalar_select %p92, %s93, %s94
    %p98 = pneg %p92
    %p99 = scmp.eq.s32.totalorder %s10, 1
    %p100 = por %p98, %p99
    %p101 = scmp.ne.s32.totalorder %s93, %s96
    %p102 = scmp.eq.s32.totalorder %s10, 0
    %p103 = por %p101, %p102
    %p104 = scmp.ne.s32.totalorder %s93, %s96
    %p105 = scmp.eq.s32.totalorder %s15, 1
    %p106 = por %p104, %p105
    %p107 = scmp.ne.s32.totalorder %s96, %s97
    %p108 = scmp.eq.s32.totalorder %s15, 0
    %p109 = por %p107, %p108
    %p110 = scmp.ne.s32.totalorder %s96, %s97
    %p111 = scmp.eq.s32.totalorder %s16, 1
    %p112 = por %p110, %p111
    %p114 = scmp.ne.s32.totalorder %s97, %s113
    %p115 = scmp.eq.s32.totalorder %s16, 0
    %p116 = por %p114, %p115
    %p117 = scmp.le.s32.totalorder 1, %s10
    %p118 = scmp.lt.s32.totalorder %s10, 3
    %p119 = pnand %p117, %p118
    %p120 = pneg %p119
    // Predicated region
    $region9: #{basic_block_forward.6} parent=5 // pred_check
      _
    $region10: #{basic_block_forward.6} parent=5 // pred_check_branch
      %122 = sbr.rel (%p119) target = $region12
    $region11: #{basic_block_forward.6} parent=5 // pred_region
      %s123 = ssub.s32 %s10, 1
      // Predicated region
      $region13: #{basic_block_forward.6} parent=11 // pred_check
        %p124 = pneg %p57
      $region14: #{basic_block_forward.6} parent=11 // pred_check_branch
        %126 = sbr.rel (%p124) target = $region16
      $region15: #{basic_block_forward.6} parent=11 // pred_region
        _
      $region16: #{basic_block_forward.6} parent=11 // pred_fallthru
        _
    $region12: #{basic_block_forward.6} parent=5 // pred_fallthru
      _
    %p127 = scmp.lt.s32.totalorder %s10, 2
    // Predicated region
    $region17: #{basic_block_forward.6} parent=5 // pred_check
      %p128 = pneg %p127
    $region18: #{basic_block_forward.6} parent=5 // pred_check_branch
      %130 = sbr.rel (%p128) target = $region20
    $region19: #{basic_block_forward.6} parent=5 // pred_region
      // Predicated region
      $region21: #{basic_block_forward.6} parent=19 // pred_check
        %p131 = pneg %p30
      $region22: #{basic_block_forward.6} parent=19 // pred_check_branch
        %133 = sbr.rel (%p131) target = $region24
      $region23: #{basic_block_forward.6} parent=19 // pred_region
        %p134 = scmp.lt.s32.totalorder %s10, 1
        %s135 = scalar_select %p134, %s10, 1
        %s136 = smul.addr %s135, 54
        %s137 = smul.addr %s136, 4
        %s138 = scalar_lea.vmem %s0, %s137
      $region24: #{basic_block_forward.6} parent=19 // pred_fallthru
        _
    $region20: #{basic_block_forward.6} parent=5 // pred_fallthru
      _
    %p139 = scmp.le.s32.totalorder 1, %s10
    %p140 = scmp.lt.s32.totalorder %s10, 3
    %p141 = pnand %p139, %p140
    %p142 = pneg %p141
    // Predicated region
    $region25: #{basic_block_forward.6} parent=5 // pred_check
      _
    $region26: #{basic_block_forward.6} parent=5 // pred_check_branch
      %144 = sbr.rel (%p141) target = $region28
    $region27: #{basic_block_forward.6} parent=5 // pred_region
      %s145 = ssub.s32 %s10, 1
      %p146 = scmp.lt.s32.totalorder %s15, 1
      %s147 = scalar_select %p146, %s15, 1
      %s148 = smul.addr %s147, 54
      %s149 = smul.addr %s148, 4
      %s150 = scalar_lea.vmem %s0, %s149
      %p151 = pneg %p36
      %p152 = pneg %p33
      %p153 = pneg %p57
      %p154 = pneg %p54
      %p155 = pneg %p83
      %p156 = pneg %p80
      %p157 = scmp.lt.s32.totalorder %s15, 1
      %s158 = scalar_select %p157, %s15, 1
      %s159 = smul.addr %s158, 32
      %s160 = smul.addr %s159, 4
      %s161 = scalar_lea.vmem %s2, %s160
      %p162 = pneg %p109
      %p163 = pneg %p106
      %p164 = scmp.lt.s32.totalorder %s15, 1
      %s165 = scalar_select %p164, %s15, 1
      %s166 = smul.addr %s165, 2
      %s167 = scalar_lea.vmem %s3, %s166
      %p168 = scmp.lt.s32.totalorder %s15, 1
      %s169 = scalar_select %p168, %s15, 1
      %s170 = smul.addr %s169, 54
      %s171 = smul.addr %s170, 4
      %s172 = scalar_lea.vmem %s0, %s171
      %p173 = scmp.lt.s32.totalorder %s15, 1
      %s174 = scalar_select %p173, %s15, 1
      %s175 = smul.addr %s174, 32
      %s176 = smul.addr %s175, 4
      %s177 = scalar_lea.vmem %s2, %s176
      %p178 = scmp.lt.s32.totalorder %s15, 1
      %s179 = scalar_select %p178, %s15, 1
      %s180 = smul.addr %s179, 2
      %s181 = scalar_lea.vmem %s3, %s180
      %v182 = vld [vmem:[%s172] sm:$0xf]
      %v183 = vld [vmem:[%s172 + $0x4] sm:$0xf]
      %v184 = vld [vmem:[%s172 + $0xc] sm:$0xf]
      %v185 = vld [vmem:[%s172 + $0x10] sm:$0xf]
      %v186 = vld [vmem:[%s172 + $0x18] sm:$0xf]
      %v187 = vld [vmem:[%s172 + $0x1c] sm:$0xf]
      %v188 = vld [vmem:[%s172 + $0x24] sm:$0xf]
      %v189 = vld [vmem:[%s172 + $0x28] sm:$0xf]
      %v190 = vld [vmem:[%s172 + $0x30] sm:$0xf]
      %v191 = vld [vmem:[%s172 + $0x34] sm:$0xf]
      %v192 = vld [vmem:[%s172 + $0x3c] sm:$0xf]
      %v193 = vld [vmem:[%s172 + $0x40] sm:$0xf]
      %v194 = vld [vmem:[%s172 + $0x48] sm:$0xf]
      %v195 = vld [vmem:[%s172 + $0x4c] sm:$0xf]
      %v196 = vld [vmem:[%s172 + $0x54] sm:$0xf]
      %v197 = vld [vmem:[%s172 + $0x58] sm:$0xf]
      %v198 = vld [vmem:[%s172 + $0x60] sm:$0xf]
      %v199 = vld [vmem:[%s172 + $0x64] sm:$0xf]
      %v200 = vld [vmem:[%s172 + $0x6c] sm:$0xf]
      %v201 = vld [vmem:[%s172 + $0x70] sm:$0xf]
      %v202 = vld [vmem:[%s172 + $0x78] sm:$0xf]
      %v203 = vld [vmem:[%s172 + $0x7c] sm:$0xf]
      %v204 = vld [vmem:[%s172 + $0x84] sm:$0xf]
      %v205 = vld [vmem:[%s172 + $0x88] sm:$0xf]
      %v206 = vld [vmem:[%s172 + $0x90] sm:$0xf]
      %v207 = vld [vmem:[%s172 + $0x94] sm:$0xf]
      %v208 = vld [vmem:[%s172 + $0x9c] sm:$0xf]
      %v209 = vld [vmem:[%s172 + $0xa0] sm:$0xf]
      %v210 = vld [vmem:[%s172 + $0xa8] sm:$0xf]
      %v211 = vld [vmem:[%s172 + $0xac] sm:$0xf]
      %v212 = vld [vmem:[%s172 + $0xb4] sm:$0xf]
      %v213 = vld [vmem:[%s172 + $0xb8] sm:$0xf]
      %v214 = vld [vmem:[%s1] sm:$0xf]
      %v215 = vld [vmem:[%s1 + $0x4] sm:$0xf]
      %v216 = vld [vmem:[%s1 + $0x8] sm:$0xf]
      %v217 = vld [vmem:[%s1 + $0xc] sm:$0xf]
      %v218 = vld [vmem:[%s1 + $0x10] sm:$0xf]
      %v219 = vld [vmem:[%s1 + $0x14] sm:$0xf]
      %v220 = vld [vmem:[%s1 + $0x18] sm:$0xf]
      %v221 = vld [vmem:[%s1 + $0x1c] sm:$0xf]
      %v222 = vld [vmem:[%s1 + $0x20] sm:$0xf]
      %v223 = vld [vmem:[%s1 + $0x24] sm:$0xf]
      %v224 = vld [vmem:[%s1 + $0x28] sm:$0xf]
      %v225 = vld [vmem:[%s1 + $0x2c] sm:$0xf]
      %v226 = vld [vmem:[%s1 + $0x30] sm:$0xf]
      %v227 = vld [vmem:[%s1 + $0x34] sm:$0xf]
      %v228 = vld [vmem:[%s1 + $0x38] sm:$0xf]
      %v229 = vld [vmem:[%s1 + $0x3c] sm:$0xf]
      %v230 = vld [vmem:[%s172 + $0x8] sm:$0x1]
      %v231 = vld [vmem:[%s172 + $0x14] sm:$0x1]
      %v232 = vld [vmem:[%s172 + $0x20] sm:$0x1]
      %v233 = vld [vmem:[%s172 + $0x2c] sm:$0x1]
      %v234 = vld [vmem:[%s172 + $0x38] sm:$0x1]
      %v235 = vld [vmem:[%s172 + $0x44] sm:$0x1]
      %v236 = vld [vmem:[%s172 + $0x50] sm:$0x1]
      %v237 = vld [vmem:[%s172 + $0x5c] sm:$0x1]
      %v238 = vld [vmem:[%s172 + $0x68] sm:$0x1]
      %v239 = vld [vmem:[%s172 + $0x74] sm:$0x1]
      %v240 = vld [vmem:[%s172 + $0x80] sm:$0x1]
      %v241 = vld [vmem:[%s172 + $0x8c] sm:$0x1]
      %v242 = vld [vmem:[%s172 + $0x98] sm:$0x1]
      %v243 = vld [vmem:[%s172 + $0xa4] sm:$0x1]
      %v244 = vld [vmem:[%s172 + $0xb0] sm:$0x1]
      %v245 = vld [vmem:[%s172 + $0xbc] sm:$0x1]
      %vm246 = vsmask.f32 3328
      %vm247 = vsmask.f32 7440
      %vm248 = vmor %vm246, %vm247
      %v250 = vshrl.u32 %v182, 16
      %v252 = vrot.slane %v250, 4
      %v253 = vshll.u32 %v182, 16
      %v255 = vrot.slane %v253, 5
      %v256 = vor.u32 %v252, %v255
      %v257 = vrot.slane %v256, 4
      %v259 = vshll.u32 %v183, 16
      %v261 = vrot.slane %v259, 5
      %v262 = vsel %vm248, %v257, %v261
      %v263 = vshrl.u32 %v183, 16
      %v265 = vrot.slane %v263, 4
      %v266 = vor.u32 %v265, %v261
      %v267 = vrot.slane %v266, 4
      %v269 = vshll.u32 %v230, 16
      %v271 = vrot.slane %v269, 5
      %v272 = vsel %vm248, %v267, %v271
      %v274 = vshrl.u32 %v184, 16
      %v276 = vrot.slane %v274, 4
      %v277 = vshll.u32 %v184, 16
      %v279 = vrot.slane %v277, 5
      %v280 = vor.u32 %v276, %v279
      %v281 = vrot.slane %v280, 4
      %v283 = vshll.u32 %v185, 16
      %v285 = vrot.slane %v283, 5
      %v286 = vsel %vm248, %v281, %v285
      %v287 = vshrl.u32 %v185, 16
      %v289 = vrot.slane %v287, 4
      %v290 = vor.u32 %v289, %v285
      %v291 = vrot.slane %v290, 4
      %v293 = vshll.u32 %v231, 16
      %v295 = vrot.slane %v293, 5
      %v296 = vsel %vm248, %v291, %v295
      %v298 = vshrl.u32 %v186, 16
      %v300 = vrot.slane %v298, 4
      %v301 = vshll.u32 %v186, 16
      %v303 = vrot.slane %v301, 5
      %v304 = vor.u32 %v300, %v303
      %v305 = vrot.slane %v304, 4
      %v307 = vshll.u32 %v187, 16
      %v309 = vrot.slane %v307, 5
      %v310 = vsel %vm248, %v305, %v309
      %v311 = vshrl.u32 %v187, 16
      %v313 = vrot.slane %v311, 4
      %v314 = vor.u32 %v313, %v309
      %v315 = vrot.slane %v314, 4
      %v317 = vshll.u32 %v232, 16
      %v319 = vrot.slane %v317, 5
      %v320 = vsel %vm248, %v315, %v319
      %v322 = vshrl.u32 %v188, 16
      %v324 = vrot.slane %v322, 4
      %v325 = vshll.u32 %v188, 16
      %v327 = vrot.slane %v325, 5
      %v328 = vor.u32 %v324, %v327
      %v329 = vrot.slane %v328, 4
      %v331 = vshll.u32 %v189, 16
      %v333 = vrot.slane %v331, 5
      %v334 = vsel %vm248, %v329, %v333
      %v335 = vshrl.u32 %v189, 16
      %v337 = vrot.slane %v335, 4
      %v338 = vor.u32 %v337, %v333
      %v339 = vrot.slane %v338, 4
      %v341 = vshll.u32 %v233, 16
      %v343 = vrot.slane %v341, 5
      %v344 = vsel %vm248, %v339, %v343
      %v346 = vshrl.u32 %v190, 16
      %v348 = vrot.slane %v346, 4
      %v349 = vshll.u32 %v190, 16
      %v351 = vrot.slane %v349, 5
      %v352 = vor.u32 %v348, %v351
      %v353 = vrot.slane %v352, 4
      %v355 = vshll.u32 %v191, 16
      %v357 = vrot.slane %v355, 5
      %v358 = vsel %vm248, %v353, %v357
      %v359 = vshrl.u32 %v191, 16
      %v361 = vrot.slane %v359, 4
      %v362 = vor.u32 %v361, %v357
      %v363 = vrot.slane %v362, 4
      %v365 = vshll.u32 %v234, 16
      %v367 = vrot.slane %v365, 5
      %v368 = vsel %vm248, %v363, %v367
      %v370 = vshrl.u32 %v192, 16
      %v372 = vrot.slane %v370, 4
      %v373 = vshll.u32 %v192, 16
      %v375 = vrot.slane %v373, 5
      %v376 = vor.u32 %v372, %v375
      %v377 = vrot.slane %v376, 4
      %v379 = vshll.u32 %v193, 16
      %v381 = vrot.slane %v379, 5
      %v382 = vsel %vm248, %v377, %v381
      %v383 = vshrl.u32 %v193, 16
      %v385 = vrot.slane %v383, 4
      %v386 = vor.u32 %v385, %v381
      %v387 = vrot.slane %v386, 4
      %v389 = vshll.u32 %v235, 16
      %v391 = vrot.slane %v389, 5
      %v392 = vsel %vm248, %v387, %v391
      %v394 = vshrl.u32 %v194, 16
      %v396 = vrot.slane %v394, 4
      %v397 = vshll.u32 %v194, 16
      %v399 = vrot.slane %v397, 5
      %v400 = vor.u32 %v396, %v399
      %v401 = vrot.slane %v400, 4
      %v403 = vshll.u32 %v195, 16
      %v405 = vrot.slane %v403, 5
      %v406 = vsel %vm248, %v401, %v405
      %v407 = vshrl.u32 %v195, 16
      %v409 = vrot.slane %v407, 4
      %v410 = vor.u32 %v409, %v405
      %v411 = vrot.slane %v410, 4
      %v413 = vshll.u32 %v236, 16
      %v415 = vrot.slane %v413, 5
      %v416 = vsel %vm248, %v411, %v415
      %v418 = vshrl.u32 %v196, 16
      %v420 = vrot.slane %v418, 4
      %v421 = vshll.u32 %v196, 16
      %v423 = vrot.slane %v421, 5
      %v424 = vor.u32 %v420, %v423
      %v425 = vrot.slane %v424, 4
      %v427 = vshll.u32 %v197, 16
      %v429 = vrot.slane %v427, 5
      %v430 = vsel %vm248, %v425, %v429
      %v431 = vshrl.u32 %v197, 16
      %v433 = vrot.slane %v431, 4
      %v434 = vor.u32 %v433, %v429
      %v435 = vrot.slane %v434, 4
      %v437 = vshll.u32 %v237, 16
      %v439 = vrot.slane %v437, 5
      %v440 = vsel %vm248, %v435, %v439
      %v442 = vshrl.u32 %v198, 16
      %v444 = vrot.slane %v442, 4
      %v445 = vshll.u32 %v198, 16
      %v447 = vrot.slane %v445, 5
      %v448 = vor.u32 %v444, %v447
      %v449 = vrot.slane %v448, 4
      %v451 = vshll.u32 %v199, 16
      %v453 = vrot.slane %v451, 5
      %v454 = vsel %vm248, %v449, %v453
      %v455 = vshrl.u32 %v199, 16
      %v457 = vrot.slane %v455, 4
      %v458 = vor.u32 %v457, %v453
      %v459 = vrot.slane %v458, 4
      %v461 = vshll.u32 %v238, 16
      %v463 = vrot.slane %v461, 5
      %v464 = vsel %vm248, %v459, %v463
      %v466 = vshrl.u32 %v200, 16
      %v468 = vrot.slane %v466, 4
      %v469 = vshll.u32 %v200, 16
      %v471 = vrot.slane %v469, 5
      %v472 = vor.u32 %v468, %v471
      %v473 = vrot.slane %v472, 4
      %v475 = vshll.u32 %v201, 16
      %v477 = vrot.slane %v475, 5
      %v478 = vsel %vm248, %v473, %v477
      %v479 = vshrl.u32 %v201, 16
      %v481 = vrot.slane %v479, 4
      %v482 = vor.u32 %v481, %v477
      %v483 = vrot.slane %v482, 4
      %v485 = vshll.u32 %v239, 16
      %v487 = vrot.slane %v485, 5
      %v488 = vsel %vm248, %v483, %v487
      %v490 = vshrl.u32 %v202, 16
      %v492 = vrot.slane %v490, 4
      %v493 = vshll.u32 %v202, 16
      %v495 = vrot.slane %v493, 5
      %v496 = vor.u32 %v492, %v495
      %v497 = vrot.slane %v496, 4
      %v499 = vshll.u32 %v203, 16
      %v501 = vrot.slane %v499, 5
      %v502 = vsel %vm248, %v497, %v501
      %v503 = vshrl.u32 %v203, 16
      %v505 = vrot.slane %v503, 4
      %v506 = vor.u32 %v505, %v501
      %v507 = vrot.slane %v506, 4
      %v509 = vshll.u32 %v240, 16
      %v511 = vrot.slane %v509, 5
      %v512 = vsel %vm248, %v507, %v511
      %v514 = vshrl.u32 %v204, 16
      %v516 = vrot.slane %v514, 4
      %v517 = vshll.u32 %v204, 16
      %v519 = vrot.slane %v517, 5
      %v520 = vor.u32 %v516, %v519
      %v521 = vrot.slane %v520, 4
      %v523 = vshll.u32 %v205, 16
      %v525 = vrot.slane %v523, 5
      %v526 = vsel %vm248, %v521, %v525
      %v527 = vshrl.u32 %v205, 16
      %v529 = vrot.slane %v527, 4
      %v530 = vor.u32 %v529, %v525
      %v531 = vrot.slane %v530, 4
      %v533 = vshll.u32 %v241, 16
      %v535 = vrot.slane %v533, 5
      %v536 = vsel %vm248, %v531, %v535
      %v538 = vshrl.u32 %v206, 16
      %v540 = vrot.slane %v538, 4
      %v541 = vshll.u32 %v206, 16
      %v543 = vrot.slane %v541, 5
      %v544 = vor.u32 %v540, %v543
      %v545 = vrot.slane %v544, 4
      %v547 = vshll.u32 %v207, 16
      %v549 = vrot.slane %v547, 5
      %v550 = vsel %vm248, %v545, %v549
      %v551 = vshrl.u32 %v207, 16
      %v553 = vrot.slane %v551, 4
      %v554 = vor.u32 %v553, %v549
      %v555 = vrot.slane %v554, 4
      %v557 = vshll.u32 %v242, 16
      %v559 = vrot.slane %v557, 5
      %v560 = vsel %vm248, %v555, %v559
      %v562 = vshrl.u32 %v208, 16
      %v564 = vrot.slane %v562, 4
      %v565 = vshll.u32 %v208, 16
      %v567 = vrot.slane %v565, 5
      %v568 = vor.u32 %v564, %v567
      %v569 = vrot.slane %v568, 4
      %v571 = vshll.u32 %v209, 16
      %v573 = vrot.slane %v571, 5
      %v574 = vsel %vm248, %v569, %v573
      %v575 = vshrl.u32 %v209, 16
      %v577 = vrot.slane %v575, 4
      %v578 = vor.u32 %v577, %v573
      %v579 = vrot.slane %v578, 4
      %v581 = vshll.u32 %v243, 16
      %v583 = vrot.slane %v581, 5
      %v584 = vsel %vm248, %v579, %v583
      %v586 = vshrl.u32 %v210, 16
      %v588 = vrot.slane %v586, 4
      %v589 = vshll.u32 %v210, 16
      %v591 = vrot.slane %v589, 5
      %v592 = vor.u32 %v588, %v591
      %v593 = vrot.slane %v592, 4
      %v595 = vshll.u32 %v211, 16
      %v597 = vrot.slane %v595, 5
      %v598 = vsel %vm248, %v593, %v597
      %v599 = vshrl.u32 %v211, 16
      %v601 = vrot.slane %v599, 4
      %v602 = vor.u32 %v601, %v597
      %v603 = vrot.slane %v602, 4
      %v605 = vshll.u32 %v244, 16
      %v607 = vrot.slane %v605, 5
      %v608 = vsel %vm248, %v603, %v607
      %v610 = vshrl.u32 %v212, 16
      %v612 = vrot.slane %v610, 4
      %v613 = vshll.u32 %v212, 16
      %v615 = vrot.slane %v613, 5
      %v616 = vor.u32 %v612, %v615
      %v617 = vrot.slane %v616, 4
      %v619 = vshll.u32 %v213, 16
      %v621 = vrot.slane %v619, 5
      %v622 = vsel %vm248, %v617, %v621
      %v623 = vshrl.u32 %v213, 16
      %v625 = vrot.slane %v623, 4
      %v626 = vor.u32 %v625, %v621
      %v627 = vrot.slane %v626, 4
      %v629 = vshll.u32 %v245, 16
      %v631 = vrot.slane %v629, 5
      %v632 = vsel %vm248, %v627, %v631
      %s633 = scalar_lea.vmem %s1, 64
      %v634 = vld [vmem:[%s633] sm:$0xf]
      %v635 = vld [vmem:[%s633 + $0x4] sm:$0xf]
      %v636 = vld [vmem:[%s633 + $0x8] sm:$0xf]
      %v637 = vld [vmem:[%s633 + $0xc] sm:$0xf]
      %v638 = vld [vmem:[%s633 + $0x10] sm:$0xf]
      %v639 = vld [vmem:[%s633 + $0x14] sm:$0xf]
      %v640 = vld [vmem:[%s633 + $0x18] sm:$0xf]
      %v641 = vld [vmem:[%s633 + $0x1c] sm:$0xf]
      %v642 = vld [vmem:[%s633 + $0x20] sm:$0xf]
      %v643 = vld [vmem:[%s633 + $0x24] sm:$0xf]
      %v644 = vld [vmem:[%s633 + $0x28] sm:$0xf]
      %v645 = vld [vmem:[%s633 + $0x2c] sm:$0xf]
      %v646 = vld [vmem:[%s633 + $0x30] sm:$0xf]
      %v647 = vld [vmem:[%s633 + $0x34] sm:$0xf]
      %v648 = vld [vmem:[%s633 + $0x38] sm:$0xf]
      %v649 = vld [vmem:[%s633 + $0x3c] sm:$0xf]
      %v650 = vunpack.c.l.b16 %v262
      %v651 = vunpack.c.l.b16 %v272
      %v652 = vunpack.c.l.b16 %v286
      %v653 = vunpack.c.l.b16 %v296
      %v654 = vunpack.c.l.b16 %v310
      %v655 = vunpack.c.l.b16 %v320
      %v656 = vunpack.c.l.b16 %v334
      %v657 = vunpack.c.l.b16 %v344
      %v658 = vunpack.c.l.b16 %v358
      %v659 = vunpack.c.l.b16 %v368
      %v660 = vunpack.c.l.b16 %v382
      %v661 = vunpack.c.l.b16 %v392
      %v662 = vunpack.c.l.b16 %v406
      %v663 = vunpack.c.l.b16 %v416
      %v664 = vunpack.c.l.b16 %v430
      %v665 = vunpack.c.l.b16 %v440
      %v666 = vunpack.c.l.b16 %v454
      %v667 = vunpack.c.l.b16 %v464
      %v668 = vunpack.c.l.b16 %v478
      %v669 = vunpack.c.l.b16 %v488
      %v670 = vunpack.c.l.b16 %v502
      %v671 = vunpack.c.l.b16 %v512
      %v672 = vunpack.c.l.b16 %v526
      %v673 = vunpack.c.l.b16 %v536
      %v674 = vunpack.c.l.b16 %v550
      %v675 = vunpack.c.l.b16 %v560
      %v676 = vunpack.c.l.b16 %v574
      %v677 = vunpack.c.l.b16 %v584
      %v678 = vunpack.c.l.b16 %v598
      %v679 = vunpack.c.l.b16 %v608
      %v680 = vunpack.c.l.b16 %v622
      %v681 = vunpack.c.l.b16 %v632
      %v682 = vpack.c.b16 %v651, %v650
      %v683 = vpack.c.b16 %v653, %v652
      %v684 = vpack.c.b16 %v655, %v654
      %v685 = vpack.c.b16 %v657, %v656
      %v686 = vpack.c.b16 %v659, %v658
      %v687 = vpack.c.b16 %v661, %v660
      %v688 = vpack.c.b16 %v663, %v662
      %v689 = vpack.c.b16 %v665, %v664
      %v690 = vpack.c.b16 %v667, %v666
      %v691 = vpack.c.b16 %v669, %v668
      %v692 = vpack.c.b16 %v671, %v670
      %v693 = vpack.c.b16 %v673, %v672
      %v694 = vpack.c.b16 %v675, %v674
      %v695 = vpack.c.b16 %v677, %v676
      %v696 = vpack.c.b16 %v679, %v678
      %v697 = vpack.c.b16 %v681, %v680
      %v730 = vunpack.c.l.b16 %v634
      %v731 = vunpack.c.l.b16 %v635
      %v732 = vunpack.c.l.b16 %v636
      %v733 = vunpack.c.l.b16 %v637
      %v734 = vunpack.c.l.b16 %v638
      %v735 = vunpack.c.l.b16 %v639
      %v736 = vunpack.c.l.b16 %v640
      %v737 = vunpack.c.l.b16 %v641
      %v738 = vunpack.c.l.b16 %v642
      %v739 = vunpack.c.l.b16 %v643
      %v740 = vunpack.c.l.b16 %v644
      %v741 = vunpack.c.l.b16 %v645
      %v742 = vunpack.c.l.b16 %v646
      %v743 = vunpack.c.l.b16 %v647
      %v744 = vunpack.c.l.b16 %v648
      %v745 = vunpack.c.l.b16 %v649
      %v746 = vpack.c.b16 %v731, %v730
      %v747 = vpack.c.b16 %v733, %v732
      %v748 = vpack.c.b16 %v735, %v734
      %v749 = vpack.c.b16 %v737, %v736
      %v750 = vpack.c.b16 %v739, %v738
      %v751 = vpack.c.b16 %v741, %v740
      %v752 = vpack.c.b16 %v743, %v742
      %v753 = vpack.c.b16 %v745, %v744
      %762 = vmatpush.bf16.msra.mxu0 %v753
      %763 = vmatpush.bf16.msra.mxu0 %v752
      %764 = vmatpush.bf16.msra.mxu0 %v751
      %765 = vmatpush.bf16.msra.mxu0 %v750
      %766 = vmatpush.bf16.msra.mxu0 %v749
      %767 = vmatpush.bf16.msra.mxu0 %v748
      %768 = vmatpush.bf16.msra.mxu0 %v747
      %769 = vmatpush.bf16.msra.mxu0 %v746
      %770 = vmatmul.bf16.gmra.mxu0 %v682
      %v771 = vpop.f32.mrf.mxu0
      %v772 = vadd.f32 0.0, %v771
      %v773 = vpop.f32.mrf.mxu0
      %v774 = vadd.f32 0.0, %v773
      %775 = vmatmul.bf16.gmra.mxu0 %v683
      %v776 = vpop.f32.mrf.mxu0
      %v777 = vadd.f32 0.0, %v776
      %v778 = vpop.f32.mrf.mxu0
      %v779 = vadd.f32 0.0, %v778
      %780 = vmatmul.bf16.gmra.mxu0 %v684
      %v781 = vpop.f32.mrf.mxu0
      %v782 = vadd.f32 0.0, %v781
      %v783 = vpop.f32.mrf.mxu0
      %v784 = vadd.f32 0.0, %v783
      %785 = vmatmul.bf16.gmra.mxu0 %v685
      %v786 = vpop.f32.mrf.mxu0
      %v787 = vadd.f32 0.0, %v786
      %v788 = vpop.f32.mrf.mxu0
      %v789 = vadd.f32 0.0, %v788
      %790 = vmatmul.bf16.gmra.mxu0 %v686
      %v791 = vpop.f32.mrf.mxu0
      %v792 = vadd.f32 0.0, %v791
      %v793 = vpop.f32.mrf.mxu0
      %v794 = vadd.f32 0.0, %v793
      %795 = vmatmul.bf16.gmra.mxu0 %v687
      %v796 = vpop.f32.mrf.mxu0
      %v797 = vadd.f32 0.0, %v796
      %v798 = vpop.f32.mrf.mxu0
      %v799 = vadd.f32 0.0, %v798
      %800 = vmatmul.bf16.gmra.mxu0 %v688
      %v801 = vpop.f32.mrf.mxu0
      %v802 = vadd.f32 0.0, %v801
      %v803 = vpop.f32.mrf.mxu0
      %v804 = vadd.f32 0.0, %v803
      %805 = vmatmul.bf16.gmra.mxu0 %v689
      %v806 = vpop.f32.mrf.mxu0
      %v807 = vadd.f32 0.0, %v806
      %v808 = vpop.f32.mrf.mxu0
      %v809 = vadd.f32 0.0, %v808
      %810 = vmatmul.bf16.gmra.mxu0 %v690
      %v811 = vpop.f32.mrf.mxu0
      %v812 = vadd.f32 0.0, %v811
      %v813 = vpop.f32.mrf.mxu0
      %v814 = vadd.f32 0.0, %v813
      %815 = vmatmul.bf16.gmra.mxu0 %v691
      %v816 = vpop.f32.mrf.mxu0
      %v817 = vadd.f32 0.0, %v816
      %v818 = vpop.f32.mrf.mxu0
      %v819 = vadd.f32 0.0, %v818
      %820 = vmatmul.bf16.gmra.mxu0 %v692
      %v821 = vpop.f32.mrf.mxu0
      %v822 = vadd.f32 0.0, %v821
      %v823 = vpop.f32.mrf.mxu0
      %v824 = vadd.f32 0.0, %v823
      %825 = vmatmul.bf16.gmra.mxu0 %v693
      %v826 = vpop.f32.mrf.mxu0
      %v827 = vadd.f32 0.0, %v826
      %v828 = vpop.f32.mrf.mxu0
      %v829 = vadd.f32 0.0, %v828
      %830 = vmatmul.bf16.gmra.mxu0 %v694
      %v831 = vpop.f32.mrf.mxu0
      %v832 = vadd.f32 0.0, %v831
      %v833 = vpop.f32.mrf.mxu0
      %v834 = vadd.f32 0.0, %v833
      %835 = vmatmul.bf16.gmra.mxu0 %v695
      %v836 = vpop.f32.mrf.mxu0
      %v837 = vadd.f32 0.0, %v836
      %v838 = vpop.f32.mrf.mxu0
      %v839 = vadd.f32 0.0, %v838
      %840 = vmatmul.bf16.gmra.mxu0 %v696
      %v841 = vpop.f32.mrf.mxu0
      %v842 = vadd.f32 0.0, %v841
      %v843 = vpop.f32.mrf.mxu0
      %v844 = vadd.f32 0.0, %v843
      %845 = vmatmul.bf16.gmra.mxu0 %v697
      %v846 = vpop.f32.mrf.mxu0
      %v847 = vadd.f32 0.0, %v846
      %v848 = vpop.f32.mrf.mxu0
      %v849 = vadd.f32 0.0, %v848
      %850 = vdwg.mxu0
      %v883 = vunpack.c.l.b16 %v182
      %v884 = vunpack.c.l.b16 %v183
      %v885 = vunpack.c.l.b16 %v184
      %v886 = vunpack.c.l.b16 %v185
      %v887 = vunpack.c.l.b16 %v186
      %v888 = vunpack.c.l.b16 %v187
      %v889 = vunpack.c.l.b16 %v188
      %v890 = vunpack.c.l.b16 %v189
      %v891 = vunpack.c.l.b16 %v190
      %v892 = vunpack.c.l.b16 %v191
      %v893 = vunpack.c.l.b16 %v192
      %v894 = vunpack.c.l.b16 %v193
      %v895 = vunpack.c.l.b16 %v194
      %v896 = vunpack.c.l.b16 %v195
      %v897 = vunpack.c.l.b16 %v196
      %v898 = vunpack.c.l.b16 %v197
      %v899 = vunpack.c.l.b16 %v198
      %v900 = vunpack.c.l.b16 %v199
      %v901 = vunpack.c.l.b16 %v200
      %v902 = vunpack.c.l.b16 %v201
      %v903 = vunpack.c.l.b16 %v202
      %v904 = vunpack.c.l.b16 %v203
      %v905 = vunpack.c.l.b16 %v204
      %v906 = vunpack.c.l.b16 %v205
      %v907 = vunpack.c.l.b16 %v206
      %v908 = vunpack.c.l.b16 %v207
      %v909 = vunpack.c.l.b16 %v208
      %v910 = vunpack.c.l.b16 %v209
      %v911 = vunpack.c.l.b16 %v210
      %v912 = vunpack.c.l.b16 %v211
      %v913 = vunpack.c.l.b16 %v212
      %v914 = vunpack.c.l.b16 %v213
      %v915 = vpack.c.b16 %v884, %v883
      %v916 = vpack.c.b16 %v886, %v885
      %v917 = vpack.c.b16 %v888, %v887
      %v918 = vpack.c.b16 %v890, %v889
      %v919 = vpack.c.b16 %v892, %v891
      %v920 = vpack.c.b16 %v894, %v893
      %v921 = vpack.c.b16 %v896, %v895
      %v922 = vpack.c.b16 %v898, %v897
      %v923 = vpack.c.b16 %v900, %v899
      %v924 = vpack.c.b16 %v902, %v901
      %v925 = vpack.c.b16 %v904, %v903
      %v926 = vpack.c.b16 %v906, %v905
      %v927 = vpack.c.b16 %v908, %v907
      %v928 = vpack.c.b16 %v910, %v909
      %v929 = vpack.c.b16 %v912, %v911
      %v930 = vpack.c.b16 %v914, %v913
      %v963 = vunpack.c.l.b16 %v214
      %v964 = vunpack.c.l.b16 %v215
      %v965 = vunpack.c.l.b16 %v216
      %v966 = vunpack.c.l.b16 %v217
      %v967 = vunpack.c.l.b16 %v218
      %v968 = vunpack.c.l.b16 %v219
      %v969 = vunpack.c.l.b16 %v220
      %v970 = vunpack.c.l.b16 %v221
      %v971 = vunpack.c.l.b16 %v222
      %v972 = vunpack.c.l.b16 %v223
      %v973 = vunpack.c.l.b16 %v224
      %v974 = vunpack.c.l.b16 %v225
      %v975 = vunpack.c.l.b16 %v226
      %v976 = vunpack.c.l.b16 %v227
      %v977 = vunpack.c.l.b16 %v228
      %v978 = vunpack.c.l.b16 %v229
      %v979 = vpack.c.b16 %v964, %v963
      %v980 = vpack.c.b16 %v966, %v965
      %v981 = vpack.c.b16 %v968, %v967
      %v982 = vpack.c.b16 %v970, %v969
      %v983 = vpack.c.b16 %v972, %v971
      %v984 = vpack.c.b16 %v974, %v973
      %v985 = vpack.c.b16 %v976, %v975
      %v986 = vpack.c.b16 %v978, %v977
      %995 = vmatpush.bf16.msra.mxu0 %v986
      %996 = vmatpush.bf16.msra.mxu0 %v985
      %997 = vmatpush.bf16.msra.mxu0 %v984
      %998 = vmatpush.bf16.msra.mxu0 %v983
      %999 = vmatpush.bf16.msra.mxu0 %v982
      %1000 = vmatpush.bf16.msra.mxu0 %v981
      %1001 = vmatpush.bf16.msra.mxu0 %v980
      %1002 = vmatpush.bf16.msra.mxu0 %v979
      %1003 = vmatmul.bf16.gmra.mxu0 %v915
      %v1004 = vpop.f32.mrf.mxu0
      %v1005 = vadd.f32 %v772, %v1004
      %v1006 = vpop.f32.mrf.mxu0
      %v1007 = vadd.f32 %v774, %v1006
      %1008 = vmatmul.bf16.gmra.mxu0 %v916
      %v1009 = vpop.f32.mrf.mxu0
      %v1010 = vadd.f32 %v777, %v1009
      %v1011 = vpop.f32.mrf.mxu0
      %v1012 = vadd.f32 %v779, %v1011
      %1013 = vmatmul.bf16.gmra.mxu0 %v917
      %v1014 = vpop.f32.mrf.mxu0
      %v1015 = vadd.f32 %v782, %v1014
      %v1016 = vpop.f32.mrf.mxu0
      %v1017 = vadd.f32 %v784, %v1016
      %1018 = vmatmul.bf16.gmra.mxu0 %v918
      %v1019 = vpop.f32.mrf.mxu0
      %v1020 = vadd.f32 %v787, %v1019
      %v1021 = vpop.f32.mrf.mxu0
      %v1022 = vadd.f32 %v789, %v1021
      %1023 = vmatmul.bf16.gmra.mxu0 %v919
      %v1024 = vpop.f32.mrf.mxu0
      %v1025 = vadd.f32 %v792, %v1024
      %v1026 = vpop.f32.mrf.mxu0
      %v1027 = vadd.f32 %v794, %v1026
      %1028 = vmatmul.bf16.gmra.mxu0 %v920
      %v1029 = vpop.f32.mrf.mxu0
      %v1030 = vadd.f32 %v797, %v1029
      %v1031 = vpop.f32.mrf.mxu0
      %v1032 = vadd.f32 %v799, %v1031
      %1033 = vmatmul.bf16.gmra.mxu0 %v921
      %v1034 = vpop.f32.mrf.mxu0
      %v1035 = vadd.f32 %v802, %v1034
      %v1036 = vpop.f32.mrf.mxu0
      %v1037 = vadd.f32 %v804, %v1036
      %1038 = vmatmul.bf16.gmra.mxu0 %v922
      %v1039 = vpop.f32.mrf.mxu0
      %v1040 = vadd.f32 %v807, %v1039
      %v1041 = vpop.f32.mrf.mxu0
      %v1042 = vadd.f32 %v809, %v1041
      %1043 = vmatmul.bf16.gmra.mxu0 %v923
      %v1044 = vpop.f32.mrf.mxu0
      %v1045 = vadd.f32 %v812, %v1044
      %v1046 = vpop.f32.mrf.mxu0
      %v1047 = vadd.f32 %v814, %v1046
      %1048 = vmatmul.bf16.gmra.mxu0 %v924
      %v1049 = vpop.f32.mrf.mxu0
      %v1050 = vadd.f32 %v817, %v1049
      %v1051 = vpop.f32.mrf.mxu0
      %v1052 = vadd.f32 %v819, %v1051
      %1053 = vmatmul.bf16.gmra.mxu0 %v925
      %v1054 = vpop.f32.mrf.mxu0
      %v1055 = vadd.f32 %v822, %v1054
      %v1056 = vpop.f32.mrf.mxu0
      %v1057 = vadd.f32 %v824, %v1056
      %1058 = vmatmul.bf16.gmra.mxu0 %v926
      %v1059 = vpop.f32.mrf.mxu0
      %v1060 = vadd.f32 %v827, %v1059
      %v1061 = vpop.f32.mrf.mxu0
      %v1062 = vadd.f32 %v829, %v1061
      %1063 = vmatmul.bf16.gmra.mxu0 %v927
      %v1064 = vpop.f32.mrf.mxu0
      %v1065 = vadd.f32 %v832, %v1064
      %v1066 = vpop.f32.mrf.mxu0
      %v1067 = vadd.f32 %v834, %v1066
      %1068 = vmatmul.bf16.gmra.mxu0 %v928
      %v1069 = vpop.f32.mrf.mxu0
      %v1070 = vadd.f32 %v837, %v1069
      %v1071 = vpop.f32.mrf.mxu0
      %v1072 = vadd.f32 %v839, %v1071
      %1073 = vmatmul.bf16.gmra.mxu0 %v929
      %v1074 = vpop.f32.mrf.mxu0
      %v1075 = vadd.f32 %v842, %v1074
      %v1076 = vpop.f32.mrf.mxu0
      %v1077 = vadd.f32 %v844, %v1076
      %1078 = vmatmul.bf16.gmra.mxu0 %v930
      %v1079 = vpop.f32.mrf.mxu0
      %v1080 = vadd.f32 %v847, %v1079
      %v1081 = vpop.f32.mrf.mxu0
      %v1082 = vadd.f32 %v849, %v1081
      %1083 = vdwg.mxu0
      %v1084 = vld [vmem:[%s172] sm:$0xe]
      %v1085 = vld [vmem:[%s172 + $0xc] sm:$0xe]
      %v1086 = vld [vmem:[%s172 + $0x18] sm:$0xe]
      %v1087 = vld [vmem:[%s172 + $0x24] sm:$0xe]
      %v1088 = vld [vmem:[%s172 + $0x30] sm:$0xe]
      %v1089 = vld [vmem:[%s172 + $0x3c] sm:$0xe]
      %v1090 = vld [vmem:[%s172 + $0x48] sm:$0xe]
      %v1091 = vld [vmem:[%s172 + $0x54] sm:$0xe]
      %v1092 = vld [vmem:[%s172 + $0x60] sm:$0xe]
      %v1093 = vld [vmem:[%s172 + $0x6c] sm:$0xe]
      %v1094 = vld [vmem:[%s172 + $0x78] sm:$0xe]
      %v1095 = vld [vmem:[%s172 + $0x84] sm:$0xe]
      %v1096 = vld [vmem:[%s172 + $0x90] sm:$0xe]
      %v1097 = vld [vmem:[%s172 + $0x9c] sm:$0xe]
      %v1098 = vld [vmem:[%s172 + $0xa8] sm:$0xe]
      %v1099 = vld [vmem:[%s172 + $0xb4] sm:$0xe]
      %vm1132 = vcmask 1042432
      %vm1133 = vcmask 1046532
      %vm1134 = vmor %vm1132, %vm1133
      %v1135 = vrot.slane %v1084, 5
      %v1136 = vrot.slane %v1135, 4
      %v1137 = vrot.slane %v183, 5
      %v1138 = vsel %vm1134, %v1136, %v1137
      %v1139 = vrot.slane %v1137, 4
      %v1140 = vrot.slane %v230, 5
      %v1141 = vsel %vm1134, %v1139, %v1140
      %v1142 = vrot.slane %v1085, 5
      %v1143 = vrot.slane %v1142, 4
      %v1144 = vrot.slane %v185, 5
      %v1145 = vsel %vm1134, %v1143, %v1144
      %v1146 = vrot.slane %v1144, 4
      %v1147 = vrot.slane %v231, 5
      %v1148 = vsel %vm1134, %v1146, %v1147
      %v1149 = vrot.slane %v1086, 5
      %v1150 = vrot.slane %v1149, 4
      %v1151 = vrot.slane %v187, 5
      %v1152 = vsel %vm1134, %v1150, %v1151
      %v1153 = vrot.slane %v1151, 4
      %v1154 = vrot.slane %v232, 5
      %v1155 = vsel %vm1134, %v1153, %v1154
      %v1156 = vrot.slane %v1087, 5
      %v1157 = vrot.slane %v1156, 4
      %v1158 = vrot.slane %v189, 5
      %v1159 = vsel %vm1134, %v1157, %v1158
      %v1160 = vrot.slane %v1158, 4
      %v1161 = vrot.slane %v233, 5
      %v1162 = vsel %vm1134, %v1160, %v1161
      %v1163 = vrot.slane %v1088, 5
      %v1164 = vrot.slane %v1163, 4
      %v1165 = vrot.slane %v191, 5
      %v1166 = vsel %vm1134, %v1164, %v1165
      %v1167 = vrot.slane %v1165, 4
      %v1168 = vrot.slane %v234, 5
      %v1169 = vsel %vm1134, %v1167, %v1168
      %v1170 = vrot.slane %v1089, 5
      %v1171 = vrot.slane %v1170, 4
      %v1172 = vrot.slane %v193, 5
      %v1173 = vsel %vm1134, %v1171, %v1172
      %v1174 = vrot.slane %v1172, 4
      %v1175 = vrot.slane %v235, 5
      %v1176 = vsel %vm1134, %v1174, %v1175
      %v1177 = vrot.slane %v1090, 5
      %v1178 = vrot.slane %v1177, 4
      %v1179 = vrot.slane %v195, 5
      %v1180 = vsel %vm1134, %v1178, %v1179
      %v1181 = vrot.slane %v1179, 4
      %v1182 = vrot.slane %v236, 5
      %v1183 = vsel %vm1134, %v1181, %v1182
      %v1184 = vrot.slane %v1091, 5
      %v1185 = vrot.slane %v1184, 4
      %v1186 = vrot.slane %v197, 5
      %v1187 = vsel %vm1134, %v1185, %v1186
      %v1188 = vrot.slane %v1186, 4
      %v1189 = vrot.slane %v237, 5
      %v1190 = vsel %vm1134, %v1188, %v1189
      %v1191 = vrot.slane %v1092, 5
      %v1192 = vrot.slane %v1191, 4
      %v1193 = vrot.slane %v199, 5
      %v1194 = vsel %vm1134, %v1192, %v1193
      %v1195 = vrot.slane %v1193, 4
      %v1196 = vrot.slane %v238, 5
      %v1197 = vsel %vm1134, %v1195, %v1196
      %v1198 = vrot.slane %v1093, 5
      %v1199 = vrot.slane %v1198, 4
      %v1200 = vrot.slane %v201, 5
      %v1201 = vsel %vm1134, %v1199, %v1200
      %v1202 = vrot.slane %v1200, 4
      %v1203 = vrot.slane %v239, 5
      %v1204 = vsel %vm1134, %v1202, %v1203
      %v1205 = vrot.slane %v1094, 5
      %v1206 = vrot.slane %v1205, 4
      %v1207 = vrot.slane %v203, 5
      %v1208 = vsel %vm1134, %v1206, %v1207
      %v1209 = vrot.slane %v1207, 4
      %v1210 = vrot.slane %v240, 5
      %v1211 = vsel %vm1134, %v1209, %v1210
      %v1212 = vrot.slane %v1095, 5
      %v1213 = vrot.slane %v1212, 4
      %v1214 = vrot.slane %v205, 5
      %v1215 = vsel %vm1134, %v1213, %v1214
      %v1216 = vrot.slane %v1214, 4
      %v1217 = vrot.slane %v241, 5
      %v1218 = vsel %vm1134, %v1216, %v1217
      %v1219 = vrot.slane %v1096, 5
      %v1220 = vrot.slane %v1219, 4
      %v1221 = vrot.slane %v207, 5
      %v1222 = vsel %vm1134, %v1220, %v1221
      %v1223 = vrot.slane %v1221, 4
      %v1224 = vrot.slane %v242, 5
      %v1225 = vsel %vm1134, %v1223, %v1224
      %v1226 = vrot.slane %v1097, 5
      %v1227 = vrot.slane %v1226, 4
      %v1228 = vrot.slane %v209, 5
      %v1229 = vsel %vm1134, %v1227, %v1228
      %v1230 = vrot.slane %v1228, 4
      %v1231 = vrot.slane %v243, 5
      %v1232 = vsel %vm1134, %v1230, %v1231
      %v1233 = vrot.slane %v1098, 5
      %v1234 = vrot.slane %v1233, 4
      %v1235 = vrot.slane %v211, 5
      %v1236 = vsel %vm1134, %v1234, %v1235
      %v1237 = vrot.slane %v1235, 4
      %v1238 = vrot.slane %v244, 5
      %v1239 = vsel %vm1134, %v1237, %v1238
      %v1240 = vrot.slane %v1099, 5
      %v1241 = vrot.slane %v1240, 4
      %v1242 = vrot.slane %v213, 5
      %v1243 = vsel %vm1134, %v1241, %v1242
      %v1244 = vrot.slane %v1242, 4
      %v1245 = vrot.slane %v245, 5
      %v1246 = vsel %vm1134, %v1244, %v1245
      %s1247 = scalar_lea.vmem %s1, 128
      %v1248 = vld [vmem:[%s1247] sm:$0xf]
      %v1249 = vld [vmem:[%s1247 + $0x4] sm:$0xf]
      %v1250 = vld [vmem:[%s1247 + $0x8] sm:$0xf]
      %v1251 = vld [vmem:[%s1247 + $0xc] sm:$0xf]
      %v1252 = vld [vmem:[%s1247 + $0x10] sm:$0xf]
      %v1253 = vld [vmem:[%s1247 + $0x14] sm:$0xf]
      %v1254 = vld [vmem:[%s1247 + $0x18] sm:$0xf]
      %v1255 = vld [vmem:[%s1247 + $0x1c] sm:$0xf]
      %v1256 = vld [vmem:[%s1247 + $0x20] sm:$0xf]
      %v1257 = vld [vmem:[%s1247 + $0x24] sm:$0xf]
      %v1258 = vld [vmem:[%s1247 + $0x28] sm:$0xf]
      %v1259 = vld [vmem:[%s1247 + $0x2c] sm:$0xf]
      %v1260 = vld [vmem:[%s1247 + $0x30] sm:$0xf]
      %v1261 = vld [vmem:[%s1247 + $0x34] sm:$0xf]
      %v1262 = vld [vmem:[%s1247 + $0x38] sm:$0xf]
      %v1263 = vld [vmem:[%s1247 + $0x3c] sm:$0xf]
      %v1264 = vunpack.c.l.b16 %v1138
      %v1265 = vunpack.c.l.b16 %v1141
      %v1266 = vunpack.c.l.b16 %v1145
      %v1267 = vunpack.c.l.b16 %v1148
      %v1268 = vunpack.c.l.b16 %v1152
      %v1269 = vunpack.c.l.b16 %v1155
      %v1270 = vunpack.c.l.b16 %v1159
      %v1271 = vunpack.c.l.b16 %v1162
      %v1272 = vunpack.c.l.b16 %v1166
      %v1273 = vunpack.c.l.b16 %v1169
      %v1274 = vunpack.c.l.b16 %v1173
      %v1275 = vunpack.c.l.b16 %v1176
      %v1276 = vunpack.c.l.b16 %v1180
      %v1277 = vunpack.c.l.b16 %v1183
      %v1278 = vunpack.c.l.b16 %v1187
      %v1279 = vunpack.c.l.b16 %v1190
      %v1280 = vunpack.c.l.b16 %v1194
      %v1281 = vunpack.c.l.b16 %v1197
      %v1282 = vunpack.c.l.b16 %v1201
      %v1283 = vunpack.c.l.b16 %v1204
      %v1284 = vunpack.c.l.b16 %v1208
      %v1285 = vunpack.c.l.b16 %v1211
      %v1286 = vunpack.c.l.b16 %v1215
      %v1287 = vunpack.c.l.b16 %v1218
      %v1288 = vunpack.c.l.b16 %v1222
      %v1289 = vunpack.c.l.b16 %v1225
      %v1290 = vunpack.c.l.b16 %v1229
      %v1291 = vunpack.c.l.b16 %v1232
      %v1292 = vunpack.c.l.b16 %v1236
      %v1293 = vunpack.c.l.b16 %v1239
      %v1294 = vunpack.c.l.b16 %v1243
      %v1295 = vunpack.c.l.b16 %v1246
      %v1296 = vpack.c.b16 %v1265, %v1264
      %v1297 = vpack.c.b16 %v1267, %v1266
      %v1298 = vpack.c.b16 %v1269, %v1268
      %v1299 = vpack.c.b16 %v1271, %v1270
      %v1300 = vpack.c.b16 %v1273, %v1272
      %v1301 = vpack.c.b16 %v1275, %v1274
      %v1302 = vpack.c.b16 %v1277, %v1276
      %v1303 = vpack.c.b16 %v1279, %v1278
      %v1304 = vpack.c.b16 %v1281, %v1280
      %v1305 = vpack.c.b16 %v1283, %v1282
      %v1306 = vpack.c.b16 %v1285, %v1284
      %v1307 = vpack.c.b16 %v1287, %v1286
      %v1308 = vpack.c.b16 %v1289, %v1288
      %v1309 = vpack.c.b16 %v1291, %v1290
      %v1310 = vpack.c.b16 %v1293, %v1292
      %v1311 = vpack.c.b16 %v1295, %v1294
      %v1344 = vunpack.c.l.b16 %v1248
      %v1345 = vunpack.c.l.b16 %v1249
      %v1346 = vunpack.c.l.b16 %v1250
      %v1347 = vunpack.c.l.b16 %v1251
      %v1348 = vunpack.c.l.b16 %v1252
      %v1349 = vunpack.c.l.b16 %v1253
      %v1350 = vunpack.c.l.b16 %v1254
      %v1351 = vunpack.c.l.b16 %v1255
      %v1352 = vunpack.c.l.b16 %v1256
      %v1353 = vunpack.c.l.b16 %v1257
      %v1354 = vunpack.c.l.b16 %v1258
      %v1355 = vunpack.c.l.b16 %v1259
      %v1356 = vunpack.c.l.b16 %v1260
      %v1357 = vunpack.c.l.b16 %v1261
      %v1358 = vunpack.c.l.b16 %v1262
      %v1359 = vunpack.c.l.b16 %v1263
      %v1360 = vpack.c.b16 %v1345, %v1344
      %v1361 = vpack.c.b16 %v1347, %v1346
      %v1362 = vpack.c.b16 %v1349, %v1348
      %v1363 = vpack.c.b16 %v1351, %v1350
      %v1364 = vpack.c.b16 %v1353, %v1352
      %v1365 = vpack.c.b16 %v1355, %v1354
      %v1366 = vpack.c.b16 %v1357, %v1356
      %v1367 = vpack.c.b16 %v1359, %v1358
      %1376 = vmatpush.bf16.msra.mxu0 %v1367
      %1377 = vmatpush.bf16.msra.mxu0 %v1366
      %1378 = vmatpush.bf16.msra.mxu0 %v1365
      %1379 = vmatpush.bf16.msra.mxu0 %v1364
      %1380 = vmatpush.bf16.msra.mxu0 %v1363
      %1381 = vmatpush.bf16.msra.mxu0 %v1362
      %1382 = vmatpush.bf16.msra.mxu0 %v1361
      %1383 = vmatpush.bf16.msra.mxu0 %v1360
      %1384 = vmatmul.bf16.gmra.mxu0 %v1296
      %v1385 = vpop.f32.mrf.mxu0
      %v1386 = vadd.f32 0.0, %v1385
      %v1387 = vpop.f32.mrf.mxu0
      %v1388 = vadd.f32 0.0, %v1387
      %1389 = vmatmul.bf16.gmra.mxu0 %v1297
      %v1390 = vpop.f32.mrf.mxu0
      %v1391 = vadd.f32 0.0, %v1390
      %v1392 = vpop.f32.mrf.mxu0
      %v1393 = vadd.f32 0.0, %v1392
      %1394 = vmatmul.bf16.gmra.mxu0 %v1298
      %v1395 = vpop.f32.mrf.mxu0
      %v1396 = vadd.f32 0.0, %v1395
      %v1397 = vpop.f32.mrf.mxu0
      %v1398 = vadd.f32 0.0, %v1397
      %1399 = vmatmul.bf16.gmra.mxu0 %v1299
      %v1400 = vpop.f32.mrf.mxu0
      %v1401 = vadd.f32 0.0, %v1400
      %v1402 = vpop.f32.mrf.mxu0
      %v1403 = vadd.f32 0.0, %v1402
      %1404 = vmatmul.bf16.gmra.mxu0 %v1300
      %v1405 = vpop.f32.mrf.mxu0
      %v1406 = vadd.f32 0.0, %v1405
      %v1407 = vpop.f32.mrf.mxu0
      %v1408 = vadd.f32 0.0, %v1407
      %1409 = vmatmul.bf16.gmra.mxu0 %v1301
      %v1410 = vpop.f32.mrf.mxu0
      %v1411 = vadd.f32 0.0, %v1410
      %v1412 = vpop.f32.mrf.mxu0
      %v1413 = vadd.f32 0.0, %v1412
      %1414 = vmatmul.bf16.gmra.mxu0 %v1302
      %v1415 = vpop.f32.mrf.mxu0
      %v1416 = vadd.f32 0.0, %v1415
      %v1417 = vpop.f32.mrf.mxu0
      %v1418 = vadd.f32 0.0, %v1417
      %1419 = vmatmul.bf16.gmra.mxu0 %v1303
      %v1420 = vpop.f32.mrf.mxu0
      %v1421 = vadd.f32 0.0, %v1420
      %v1422 = vpop.f32.mrf.mxu0
      %v1423 = vadd.f32 0.0, %v1422
      %1424 = vmatmul.bf16.gmra.mxu0 %v1304
      %v1425 = vpop.f32.mrf.mxu0
      %v1426 = vadd.f32 0.0, %v1425
      %v1427 = vpop.f32.mrf.mxu0
      %v1428 = vadd.f32 0.0, %v1427
      %1429 = vmatmul.bf16.gmra.mxu0 %v1305
      %v1430 = vpop.f32.mrf.mxu0
      %v1431 = vadd.f32 0.0, %v1430
      %v1432 = vpop.f32.mrf.mxu0
      %v1433 = vadd.f32 0.0, %v1432
      %1434 = vmatmul.bf16.gmra.mxu0 %v1306
      %v1435 = vpop.f32.mrf.mxu0
      %v1436 = vadd.f32 0.0, %v1435
      %v1437 = vpop.f32.mrf.mxu0
      %v1438 = vadd.f32 0.0, %v1437
      %1439 = vmatmul.bf16.gmra.mxu0 %v1307
      %v1440 = vpop.f32.mrf.mxu0
      %v1441 = vadd.f32 0.0, %v1440
      %v1442 = vpop.f32.mrf.mxu0
      %v1443 = vadd.f32 0.0, %v1442
      %1444 = vmatmul.bf16.gmra.mxu0 %v1308
      %v1445 = vpop.f32.mrf.mxu0
      %v1446 = vadd.f32 0.0, %v1445
      %v1447 = vpop.f32.mrf.mxu0
      %v1448 = vadd.f32 0.0, %v1447
      %1449 = vmatmul.bf16.gmra.mxu0 %v1309
      %v1450 = vpop.f32.mrf.mxu0
      %v1451 = vadd.f32 0.0, %v1450
      %v1452 = vpop.f32.mrf.mxu0
      %v1453 = vadd.f32 0.0, %v1452
      %1454 = vmatmul.bf16.gmra.mxu0 %v1310
      %v1455 = vpop.f32.mrf.mxu0
      %v1456 = vadd.f32 0.0, %v1455
      %v1457 = vpop.f32.mrf.mxu0
      %v1458 = vadd.f32 0.0, %v1457
      %1459 = vmatmul.bf16.gmra.mxu0 %v1311
      %v1460 = vpop.f32.mrf.mxu0
      %v1461 = vadd.f32 0.0, %v1460
      %v1462 = vpop.f32.mrf.mxu0
      %v1463 = vadd.f32 0.0, %v1462
      %1464 = vdwg.mxu0
      %v1465 = vadd.f32 %v1005, %v1386
      %v1466 = vadd.f32 %v1007, %v1388
      %v1467 = vadd.f32 %v1010, %v1391
      %v1468 = vadd.f32 %v1012, %v1393
      %v1469 = vadd.f32 %v1015, %v1396
      %v1470 = vadd.f32 %v1017, %v1398
      %v1471 = vadd.f32 %v1020, %v1401
      %v1472 = vadd.f32 %v1022, %v1403
      %v1473 = vadd.f32 %v1025, %v1406
      %v1474 = vadd.f32 %v1027, %v1408
      %v1475 = vadd.f32 %v1030, %v1411
      %v1476 = vadd.f32 %v1032, %v1413
      %v1477 = vadd.f32 %v1035, %v1416
      %v1478 = vadd.f32 %v1037, %v1418
      %v1479 = vadd.f32 %v1040, %v1421
      %v1480 = vadd.f32 %v1042, %v1423
      %v1481 = vadd.f32 %v1045, %v1426
      %v1482 = vadd.f32 %v1047, %v1428
      %v1483 = vadd.f32 %v1050, %v1431
      %v1484 = vadd.f32 %v1052, %v1433
      %v1485 = vadd.f32 %v1055, %v1436
      %v1486 = vadd.f32 %v1057, %v1438
      %v1487 = vadd.f32 %v1060, %v1441
      %v1488 = vadd.f32 %v1062, %v1443
      %v1489 = vadd.f32 %v1065, %v1446
      %v1490 = vadd.f32 %v1067, %v1448
      %v1491 = vadd.f32 %v1070, %v1451
      %v1492 = vadd.f32 %v1072, %v1453
      %v1493 = vadd.f32 %v1075, %v1456
      %v1494 = vadd.f32 %v1077, %v1458
      %v1495 = vadd.f32 %v1080, %v1461
      %v1496 = vadd.f32 %v1082, %v1463
      %s1497 = scalar_lea.vmem %s172, 12
      %v1498 = vld [vmem:[%s1497] sm:$0xf]
      %v1499 = vld [vmem:[%s1497 + $0x4] sm:$0xf]
      %v1500 = vld [vmem:[%s1497 + $0xc] sm:$0xf]
      %v1501 = vld [vmem:[%s1497 + $0x10] sm:$0xf]
      %v1502 = vld [vmem:[%s1497 + $0x18] sm:$0xf]
      %v1503 = vld [vmem:[%s1497 + $0x1c] sm:$0xf]
      %v1504 = vld [vmem:[%s1497 + $0x24] sm:$0xf]
      %v1505 = vld [vmem:[%s1497 + $0x28] sm:$0xf]
      %v1506 = vld [vmem:[%s1497 + $0x30] sm:$0xf]
      %v1507 = vld [vmem:[%s1497 + $0x34] sm:$0xf]
      %v1508 = vld [vmem:[%s1497 + $0x3c] sm:$0xf]
      %v1509 = vld [vmem:[%s1497 + $0x40] sm:$0xf]
      %v1510 = vld [vmem:[%s1497 + $0x48] sm:$0xf]
      %v1511 = vld [vmem:[%s1497 + $0x4c] sm:$0xf]
      %v1512 = vld [vmem:[%s1497 + $0x54] sm:$0xf]
      %v1513 = vld [vmem:[%s1497 + $0x58] sm:$0xf]
      %v1514 = vld [vmem:[%s1497 + $0x60] sm:$0xf]
      %v1515 = vld [vmem:[%s1497 + $0x64] sm:$0xf]
      %v1516 = vld [vmem:[%s1497 + $0x6c] sm:$0xf]
      %v1517 = vld [vmem:[%s1497 + $0x70] sm:$0xf]
      %v1518 = vld [vmem:[%s1497 + $0x78] sm:$0xf]
      %v1519 = vld [vmem:[%s1497 + $0x7c] sm:$0xf]
      %v1520 = vld [vmem:[%s1497 + $0x84] sm:$0xf]
      %v1521 = vld [vmem:[%s1497 + $0x88] sm:$0xf]
      %v1522 = vld [vmem:[%s1497 + $0x90] sm:$0xf]
      %v1523 = vld [vmem:[%s1497 + $0x94] sm:$0xf]
      %v1524 = vld [vmem:[%s1497 + $0x9c] sm:$0xf]
      %v1525 = vld [vmem:[%s1497 + $0xa0] sm:$0xf]
      %v1526 = vld [vmem:[%s1497 + $0xa8] sm:$0xf]
      %v1527 = vld [vmem:[%s1497 + $0xac] sm:$0xf]
      %v1528 = vld [vmem:[%s1497 + $0xb4] sm:$0xf]
      %v1529 = vld [vmem:[%s1497 + $0xb8] sm:$0xf]
      %s1530 = scalar_lea.vmem %s1, 192
      %v1531 = vld [vmem:[%s1530] sm:$0xf]
      %v1532 = vld [vmem:[%s1530 + $0x4] sm:$0xf]
      %v1533 = vld [vmem:[%s1530 + $0x8] sm:$0xf]
      %v1534 = vld [vmem:[%s1530 + $0xc] sm:$0xf]
      %v1535 = vld [vmem:[%s1530 + $0x10] sm:$0xf]
      %v1536 = vld [vmem:[%s1530 + $0x14] sm:$0xf]
      %v1537 = vld [vmem:[%s1530 + $0x18] sm:$0xf]
      %v1538 = vld [vmem:[%s1530 + $0x1c] sm:$0xf]
      %v1539 = vld [vmem:[%s1530 + $0x20] sm:$0xf]
      %v1540 = vld [vmem:[%s1530 + $0x24] sm:$0xf]
      %v1541 = vld [vmem:[%s1530 + $0x28] sm:$0xf]
      %v1542 = vld [vmem:[%s1530 + $0x2c] sm:$0xf]
      %v1543 = vld [vmem:[%s1530 + $0x30] sm:$0xf]
      %v1544 = vld [vmem:[%s1530 + $0x34] sm:$0xf]
      %v1545 = vld [vmem:[%s1530 + $0x38] sm:$0xf]
      %v1546 = vld [vmem:[%s1530 + $0x3c] sm:$0xf]
      %v1579 = vunpack.c.l.b16 %v1498
      %v1580 = vunpack.c.l.b16 %v1499
      %v1581 = vunpack.c.l.b16 %v1500
      %v1582 = vunpack.c.l.b16 %v1501
      %v1583 = vunpack.c.l.b16 %v1502
      %v1584 = vunpack.c.l.b16 %v1503
      %v1585 = vunpack.c.l.b16 %v1504
      %v1586 = vunpack.c.l.b16 %v1505
      %v1587 = vunpack.c.l.b16 %v1506
      %v1588 = vunpack.c.l.b16 %v1507
      %v1589 = vunpack.c.l.b16 %v1508
      %v1590 = vunpack.c.l.b16 %v1509
      %v1591 = vunpack.c.l.b16 %v1510
      %v1592 = vunpack.c.l.b16 %v1511
      %v1593 = vunpack.c.l.b16 %v1512
      %v1594 = vunpack.c.l.b16 %v1513
      %v1595 = vunpack.c.l.b16 %v1514
      %v1596 = vunpack.c.l.b16 %v1515
      %v1597 = vunpack.c.l.b16 %v1516
      %v1598 = vunpack.c.l.b16 %v1517
      %v1599 = vunpack.c.l.b16 %v1518
      %v1600 = vunpack.c.l.b16 %v1519
      %v1601 = vunpack.c.l.b16 %v1520
      %v1602 = vunpack.c.l.b16 %v1521
      %v1603 = vunpack.c.l.b16 %v1522
      %v1604 = vunpack.c.l.b16 %v1523
      %v1605 = vunpack.c.l.b16 %v1524
      %v1606 = vunpack.c.l.b16 %v1525
      %v1607 = vunpack.c.l.b16 %v1526
      %v1608 = vunpack.c.l.b16 %v1527
      %v1609 = vunpack.c.l.b16 %v1528
      %v1610 = vunpack.c.l.b16 %v1529
      %v1611 = vpack.c.b16 %v1580, %v1579
      %v1612 = vpack.c.b16 %v1582, %v1581
      %v1613 = vpack.c.b16 %v1584, %v1583
      %v1614 = vpack.c.b16 %v1586, %v1585
      %v1615 = vpack.c.b16 %v1588, %v1587
      %v1616 = vpack.c.b16 %v1590, %v1589
      %v1617 = vpack.c.b16 %v1592, %v1591
      %v1618 = vpack.c.b16 %v1594, %v1593
      %v1619 = vpack.c.b16 %v1596, %v1595
      %v1620 = vpack.c.b16 %v1598, %v1597
      %v1621 = vpack.c.b16 %v1600, %v1599
      %v1622 = vpack.c.b16 %v1602, %v1601
      %v1623 = vpack.c.b16 %v1604, %v1603
      %v1624 = vpack.c.b16 %v1606, %v1605
      %v1625 = vpack.c.b16 %v1608, %v1607
      %v1626 = vpack.c.b16 %v1610, %v1609
      %v1659 = vunpack.c.l.b16 %v1531
      %v1660 = vunpack.c.l.b16 %v1532
      %v1661 = vunpack.c.l.b16 %v1533
      %v1662 = vunpack.c.l.b16 %v1534
      %v1663 = vunpack.c.l.b16 %v1535
      %v1664 = vunpack.c.l.b16 %v1536
      %v1665 = vunpack.c.l.b16 %v1537
      %v1666 = vunpack.c.l.b16 %v1538
      %v1667 = vunpack.c.l.b16 %v1539
      %v1668 = vunpack.c.l.b16 %v1540
      %v1669 = vunpack.c.l.b16 %v1541
      %v1670 = vunpack.c.l.b16 %v1542
      %v1671 = vunpack.c.l.b16 %v1543
      %v1672 = vunpack.c.l.b16 %v1544
      %v1673 = vunpack.c.l.b16 %v1545
      %v1674 = vunpack.c.l.b16 %v1546
      %v1675 = vpack.c.b16 %v1660, %v1659
      %v1676 = vpack.c.b16 %v1662, %v1661
      %v1677 = vpack.c.b16 %v1664, %v1663
      %v1678 = vpack.c.b16 %v1666, %v1665
      %v1679 = vpack.c.b16 %v1668, %v1667
      %v1680 = vpack.c.b16 %v1670, %v1669
      %v1681 = vpack.c.b16 %v1672, %v1671
      %v1682 = vpack.c.b16 %v1674, %v1673
      %1691 = vmatpush.bf16.msra.mxu0 %v1682
      %1692 = vmatpush.bf16.msra.mxu0 %v1681
      %1693 = vmatpush.bf16.msra.mxu0 %v1680
      %1694 = vmatpush.bf16.msra.mxu0 %v1679
      %1695 = vmatpush.bf16.msra.mxu0 %v1678
      %1696 = vmatpush.bf16.msra.mxu0 %v1677
      %1697 = vmatpush.bf16.msra.mxu0 %v1676
      %1698 = vmatpush.bf16.msra.mxu0 %v1675
      %1699 = vmatmul.bf16.gmra.mxu0 %v1611
      %v1700 = vpop.f32.mrf.mxu0
      %v1701 = vadd.f32 0.0, %v1700
      %v1702 = vpop.f32.mrf.mxu0
      %v1703 = vadd.f32 0.0, %v1702
      %1704 = vmatmul.bf16.gmra.mxu0 %v1612
      %v1705 = vpop.f32.mrf.mxu0
      %v1706 = vadd.f32 0.0, %v1705
      %v1707 = vpop.f32.mrf.mxu0
      %v1708 = vadd.f32 0.0, %v1707
      %1709 = vmatmul.bf16.gmra.mxu0 %v1613
      %v1710 = vpop.f32.mrf.mxu0
      %v1711 = vadd.f32 0.0, %v1710
      %v1712 = vpop.f32.mrf.mxu0
      %v1713 = vadd.f32 0.0, %v1712
      %1714 = vmatmul.bf16.gmra.mxu0 %v1614
      %v1715 = vpop.f32.mrf.mxu0
      %v1716 = vadd.f32 0.0, %v1715
      %v1717 = vpop.f32.mrf.mxu0
      %v1718 = vadd.f32 0.0, %v1717
      %1719 = vmatmul.bf16.gmra.mxu0 %v1615
      %v1720 = vpop.f32.mrf.mxu0
      %v1721 = vadd.f32 0.0, %v1720
      %v1722 = vpop.f32.mrf.mxu0
      %v1723 = vadd.f32 0.0, %v1722
      %1724 = vmatmul.bf16.gmra.mxu0 %v1616
      %v1725 = vpop.f32.mrf.mxu0
      %v1726 = vadd.f32 0.0, %v1725
      %v1727 = vpop.f32.mrf.mxu0
      %v1728 = vadd.f32 0.0, %v1727
      %1729 = vmatmul.bf16.gmra.mxu0 %v1617
      %v1730 = vpop.f32.mrf.mxu0
      %v1731 = vadd.f32 0.0, %v1730
      %v1732 = vpop.f32.mrf.mxu0
      %v1733 = vadd.f32 0.0, %v1732
      %1734 = vmatmul.bf16.gmra.mxu0 %v1618
      %v1735 = vpop.f32.mrf.mxu0
      %v1736 = vadd.f32 0.0, %v1735
      %v1737 = vpop.f32.mrf.mxu0
      %v1738 = vadd.f32 0.0, %v1737
      %1739 = vmatmul.bf16.gmra.mxu0 %v1619
      %v1740 = vpop.f32.mrf.mxu0
      %v1741 = vadd.f32 0.0, %v1740
      %v1742 = vpop.f32.mrf.mxu0
      %v1743 = vadd.f32 0.0, %v1742
      %1744 = vmatmul.bf16.gmra.mxu0 %v1620
      %v1745 = vpop.f32.mrf.mxu0
      %v1746 = vadd.f32 0.0, %v1745
      %v1747 = vpop.f32.mrf.mxu0
      %v1748 = vadd.f32 0.0, %v1747
      %1749 = vmatmul.bf16.gmra.mxu0 %v1621
      %v1750 = vpop.f32.mrf.mxu0
      %v1751 = vadd.f32 0.0, %v1750
      %v1752 = vpop.f32.mrf.mxu0
      %v1753 = vadd.f32 0.0, %v1752
      %1754 = vmatmul.bf16.gmra.mxu0 %v1622
      %v1755 = vpop.f32.mrf.mxu0
      %v1756 = vadd.f32 0.0, %v1755
      %v1757 = vpop.f32.mrf.mxu0
      %v1758 = vadd.f32 0.0, %v1757
      %1759 = vmatmul.bf16.gmra.mxu0 %v1623
      %v1760 = vpop.f32.mrf.mxu0
      %v1761 = vadd.f32 0.0, %v1760
      %v1762 = vpop.f32.mrf.mxu0
      %v1763 = vadd.f32 0.0, %v1762
      %1764 = vmatmul.bf16.gmra.mxu0 %v1624
      %v1765 = vpop.f32.mrf.mxu0
      %v1766 = vadd.f32 0.0, %v1765
      %v1767 = vpop.f32.mrf.mxu0
      %v1768 = vadd.f32 0.0, %v1767
      %1769 = vmatmul.bf16.gmra.mxu0 %v1625
      %v1770 = vpop.f32.mrf.mxu0
      %v1771 = vadd.f32 0.0, %v1770
      %v1772 = vpop.f32.mrf.mxu0
      %v1773 = vadd.f32 0.0, %v1772
      %1774 = vmatmul.bf16.gmra.mxu0 %v1626
      %v1775 = vpop.f32.mrf.mxu0
      %v1776 = vadd.f32 0.0, %v1775
      %v1777 = vpop.f32.mrf.mxu0
      %v1778 = vadd.f32 0.0, %v1777
      %1779 = vdwg.mxu0
      %v1780 = vadd.f32 %v1465, %v1701
      %v1781 = vadd.f32 %v1466, %v1703
      %v1782 = vadd.f32 %v1467, %v1706
      %v1783 = vadd.f32 %v1468, %v1708
      %v1784 = vadd.f32 %v1469, %v1711
      %v1785 = vadd.f32 %v1470, %v1713
      %v1786 = vadd.f32 %v1471, %v1716
      %v1787 = vadd.f32 %v1472, %v1718
      %v1788 = vadd.f32 %v1473, %v1721
      %v1789 = vadd.f32 %v1474, %v1723
      %v1790 = vadd.f32 %v1475, %v1726
      %v1791 = vadd.f32 %v1476, %v1728
      %v1792 = vadd.f32 %v1477, %v1731
      %v1793 = vadd.f32 %v1478, %v1733
      %v1794 = vadd.f32 %v1479, %v1736
      %v1795 = vadd.f32 %v1480, %v1738
      %v1796 = vadd.f32 %v1481, %v1741
      %v1797 = vadd.f32 %v1482, %v1743
      %v1798 = vadd.f32 %v1483, %v1746
      %v1799 = vadd.f32 %v1484, %v1748
      %v1800 = vadd.f32 %v1485, %v1751
      %v1801 = vadd.f32 %v1486, %v1753
      %v1802 = vadd.f32 %v1487, %v1756
      %v1803 = vadd.f32 %v1488, %v1758
      %v1804 = vadd.f32 %v1489, %v1761
      %v1805 = vadd.f32 %v1490, %v1763
      %v1806 = vadd.f32 %v1491, %v1766
      %v1807 = vadd.f32 %v1492, %v1768
      %v1808 = vadd.f32 %v1493, %v1771
      %v1809 = vadd.f32 %v1494, %v1773
      %v1810 = vadd.f32 %v1495, %v1776
      %v1811 = vadd.f32 %v1496, %v1778
      %v1812 = vld [vmem:[%s1497] sm:$0xf]
      %v1813 = vld [vmem:[%s1497 + $0x4] sm:$0xf]
      %v1814 = vld [vmem:[%s1497 + $0x8] sm:$0x1]
      %v1815 = vld [vmem:[%s1497 + $0xc] sm:$0xf]
      %v1816 = vld [vmem:[%s1497 + $0x10] sm:$0xf]
      %v1817 = vld [vmem:[%s1497 + $0x14] sm:$0x1]
      %v1818 = vld [vmem:[%s1497 + $0x18] sm:$0xf]
      %v1819 = vld [vmem:[%s1497 + $0x1c] sm:$0xf]
      %v1820 = vld [vmem:[%s1497 + $0x20] sm:$0x1]
      %v1821 = vld [vmem:[%s1497 + $0x24] sm:$0xf]
      %v1822 = vld [vmem:[%s1497 + $0x28] sm:$0xf]
      %v1823 = vld [vmem:[%s1497 + $0x2c] sm:$0x1]
      %v1824 = vld [vmem:[%s1497 + $0x30] sm:$0xf]
      %v1825 = vld [vmem:[%s1497 + $0x34] sm:$0xf]
      %v1826 = vld [vmem:[%s1497 + $0x38] sm:$0x1]
      %v1827 = vld [vmem:[%s1497 + $0x3c] sm:$0xf]
      %v1828 = vld [vmem:[%s1497 + $0x40] sm:$0xf]
      %v1829 = vld [vmem:[%s1497 + $0x44] sm:$0x1]
      %v1830 = vld [vmem:[%s1497 + $0x48] sm:$0xf]
      %v1831 = vld [vmem:[%s1497 + $0x4c] sm:$0xf]
      %v1832 = vld [vmem:[%s1497 + $0x50] sm:$0x1]
      %v1833 = vld [vmem:[%s1497 + $0x54] sm:$0xf]
      %v1834 = vld [vmem:[%s1497 + $0x58] sm:$0xf]
      %v1835 = vld [vmem:[%s1497 + $0x5c] sm:$0x1]
      %v1836 = vld [vmem:[%s1497 + $0x60] sm:$0xf]
      %v1837 = vld [vmem:[%s1497 + $0x64] sm:$0xf]
      %v1838 = vld [vmem:[%s1497 + $0x68] sm:$0x1]
      %v1839 = vld [vmem:[%s1497 + $0x6c] sm:$0xf]
      %v1840 = vld [vmem:[%s1497 + $0x70] sm:$0xf]
      %v1841 = vld [vmem:[%s1497 + $0x74] sm:$0x1]
      %v1842 = vld [vmem:[%s1497 + $0x78] sm:$0xf]
      %v1843 = vld [vmem:[%s1497 + $0x7c] sm:$0xf]
      %v1844 = vld [vmem:[%s1497 + $0x80] sm:$0x1]
      %v1845 = vld [vmem:[%s1497 + $0x84] sm:$0xf]
      %v1846 = vld [vmem:[%s1497 + $0x88] sm:$0xf]
      %v1847 = vld [vmem:[%s1497 + $0x8c] sm:$0x1]
      %v1848 = vld [vmem:[%s1497 + $0x90] sm:$0xf]
      %v1849 = vld [vmem:[%s1497 + $0x94] sm:$0xf]
      %v1850 = vld [vmem:[%s1497 + $0x98] sm:$0x1]
      %v1851 = vld [vmem:[%s1497 + $0x9c] sm:$0xf]
      %v1852 = vld [vmem:[%s1497 + $0xa0] sm:$0xf]
      %v1853 = vld [vmem:[%s1497 + $0xa4] sm:$0x1]
      %v1854 = vld [vmem:[%s1497 + $0xa8] sm:$0xf]
      %v1855 = vld [vmem:[%s1497 + $0xac] sm:$0xf]
      %v1856 = vld [vmem:[%s1497 + $0xb0] sm:$0x1]
      %v1857 = vld [vmem:[%s1497 + $0xb4] sm:$0xf]
      %v1858 = vld [vmem:[%s1497 + $0xb8] sm:$0xf]
      %v1859 = vld [vmem:[%s1497 + $0xbc] sm:$0x1]
      %v1861 = vshrl.u32 %v1812, 16
      %v1863 = vrot.slane %v1861, 4
      %v1864 = vshll.u32 %v1812, 16
      %v1866 = vrot.slane %v1864, 5
      %v1867 = vor.u32 %v1863, %v1866
      %v1868 = vrot.slane %v1867, 4
      %v1870 = vshll.u32 %v1813, 16
      %v1872 = vrot.slane %v1870, 5
      %v1873 = vsel %vm248, %v1868, %v1872
      %v1874 = vshrl.u32 %v1813, 16
      %v1876 = vrot.slane %v1874, 4
      %v1877 = vor.u32 %v1876, %v1872
      %v1878 = vrot.slane %v1877, 4
      %v1880 = vshll.u32 %v1814, 16
      %v1882 = vrot.slane %v1880, 5
      %v1883 = vsel %vm248, %v1878, %v1882
      %v1885 = vshrl.u32 %v1815, 16
      %v1887 = vrot.slane %v1885, 4
      %v1888 = vshll.u32 %v1815, 16
      %v1890 = vrot.slane %v1888, 5
      %v1891 = vor.u32 %v1887, %v1890
      %v1892 = vrot.slane %v1891, 4
      %v1894 = vshll.u32 %v1816, 16
      %v1896 = vrot.slane %v1894, 5
      %v1897 = vsel %vm248, %v1892, %v1896
      %v1898 = vshrl.u32 %v1816, 16
      %v1900 = vrot.slane %v1898, 4
      %v1901 = vor.u32 %v1900, %v1896
      %v1902 = vrot.slane %v1901, 4
      %v1904 = vshll.u32 %v1817, 16
      %v1906 = vrot.slane %v1904, 5
      %v1907 = vsel %vm248, %v1902, %v1906
      %v1909 = vshrl.u32 %v1818, 16
      %v1911 = vrot.slane %v1909, 4
      %v1912 = vshll.u32 %v1818, 16
      %v1914 = vrot.slane %v1912, 5
      %v1915 = vor.u32 %v1911, %v1914
      %v1916 = vrot.slane %v1915, 4
      %v1918 = vshll.u32 %v1819, 16
      %v1920 = vrot.slane %v1918, 5
      %v1921 = vsel %vm248, %v1916, %v1920
      %v1922 = vshrl.u32 %v1819, 16
      %v1924 = vrot.slane %v1922, 4
      %v1925 = vor.u32 %v1924, %v1920
      %v1926 = vrot.slane %v1925, 4
      %v1928 = vshll.u32 %v1820, 16
      %v1930 = vrot.slane %v1928, 5
      %v1931 = vsel %vm248, %v1926, %v1930
      %v1933 = vshrl.u32 %v1821, 16
      %v1935 = vrot.slane %v1933, 4
      %v1936 = vshll.u32 %v1821, 16
      %v1938 = vrot.slane %v1936, 5
      %v1939 = vor.u32 %v1935, %v1938
      %v1940 = vrot.slane %v1939, 4
      %v1942 = vshll.u32 %v1822, 16
      %v1944 = vrot.slane %v1942, 5
      %v1945 = vsel %vm248, %v1940, %v1944
      %v1946 = vshrl.u32 %v1822, 16
      %v1948 = vrot.slane %v1946, 4
      %v1949 = vor.u32 %v1948, %v1944
      %v1950 = vrot.slane %v1949, 4
      %v1952 = vshll.u32 %v1823, 16
      %v1954 = vrot.slane %v1952, 5
      %v1955 = vsel %vm248, %v1950, %v1954
      %v1957 = vshrl.u32 %v1824, 16
      %v1959 = vrot.slane %v1957, 4
      %v1960 = vshll.u32 %v1824, 16
      %v1962 = vrot.slane %v1960, 5
      %v1963 = vor.u32 %v1959, %v1962
      %v1964 = vrot.slane %v1963, 4
      %v1966 = vshll.u32 %v1825, 16
      %v1968 = vrot.slane %v1966, 5
      %v1969 = vsel %vm248, %v1964, %v1968
      %v1970 = vshrl.u32 %v1825, 16
      %v1972 = vrot.slane %v1970, 4
      %v1973 = vor.u32 %v1972, %v1968
      %v1974 = vrot.slane %v1973, 4
      %v1976 = vshll.u32 %v1826, 16
      %v1978 = vrot.slane %v1976, 5
      %v1979 = vsel %vm248, %v1974, %v1978
      %v1981 = vshrl.u32 %v1827, 16
      %v1983 = vrot.slane %v1981, 4
      %v1984 = vshll.u32 %v1827, 16
      %v1986 = vrot.slane %v1984, 5
      %v1987 = vor.u32 %v1983, %v1986
      %v1988 = vrot.slane %v1987, 4
      %v1990 = vshll.u32 %v1828, 16
      %v1992 = vrot.slane %v1990, 5
      %v1993 = vsel %vm248, %v1988, %v1992
      %v1994 = vshrl.u32 %v1828, 16
      %v1996 = vrot.slane %v1994, 4
      %v1997 = vor.u32 %v1996, %v1992
      %v1998 = vrot.slane %v1997, 4
      %v2000 = vshll.u32 %v1829, 16
      %v2002 = vrot.slane %v2000, 5
      %v2003 = vsel %vm248, %v1998, %v2002
      %v2005 = vshrl.u32 %v1830, 16
      %v2007 = vrot.slane %v2005, 4
      %v2008 = vshll.u32 %v1830, 16
      %v2010 = vrot.slane %v2008, 5
      %v2011 = vor.u32 %v2007, %v2010
      %v2012 = vrot.slane %v2011, 4
      %v2014 = vshll.u32 %v1831, 16
      %v2016 = vrot.slane %v2014, 5
      %v2017 = vsel %vm248, %v2012, %v2016
      %v2018 = vshrl.u32 %v1831, 16
      %v2020 = vrot.slane %v2018, 4
      %v2021 = vor.u32 %v2020, %v2016
      %v2022 = vrot.slane %v2021, 4
      %v2024 = vshll.u32 %v1832, 16
      %v2026 = vrot.slane %v2024, 5
      %v2027 = vsel %vm248, %v2022, %v2026
      %v2029 = vshrl.u32 %v1833, 16
      %v2031 = vrot.slane %v2029, 4
      %v2032 = vshll.u32 %v1833, 16
      %v2034 = vrot.slane %v2032, 5
      %v2035 = vor.u32 %v2031, %v2034
      %v2036 = vrot.slane %v2035, 4
      %v2038 = vshll.u32 %v1834, 16
      %v2040 = vrot.slane %v2038, 5
      %v2041 = vsel %vm248, %v2036, %v2040
      %v2042 = vshrl.u32 %v1834, 16
      %v2044 = vrot.slane %v2042, 4
      %v2045 = vor.u32 %v2044, %v2040
      %v2046 = vrot.slane %v2045, 4
      %v2048 = vshll.u32 %v1835, 16
      %v2050 = vrot.slane %v2048, 5
      %v2051 = vsel %vm248, %v2046, %v2050
      %v2053 = vshrl.u32 %v1836, 16
      %v2055 = vrot.slane %v2053, 4
      %v2056 = vshll.u32 %v1836, 16
      %v2058 = vrot.slane %v2056, 5
      %v2059 = vor.u32 %v2055, %v2058
      %v2060 = vrot.slane %v2059, 4
      %v2062 = vshll.u32 %v1837, 16
      %v2064 = vrot.slane %v2062, 5
      %v2065 = vsel %vm248, %v2060, %v2064
      %v2066 = vshrl.u32 %v1837, 16
      %v2068 = vrot.slane %v2066, 4
      %v2069 = vor.u32 %v2068, %v2064
      %v2070 = vrot.slane %v2069, 4
      %v2072 = vshll.u32 %v1838, 16
      %v2074 = vrot.slane %v2072, 5
      %v2075 = vsel %vm248, %v2070, %v2074
      %v2077 = vshrl.u32 %v1839, 16
      %v2079 = vrot.slane %v2077, 4
      %v2080 = vshll.u32 %v1839, 16
      %v2082 = vrot.slane %v2080, 5
      %v2083 = vor.u32 %v2079, %v2082
      %v2084 = vrot.slane %v2083, 4
      %v2086 = vshll.u32 %v1840, 16
      %v2088 = vrot.slane %v2086, 5
      %v2089 = vsel %vm248, %v2084, %v2088
      %v2090 = vshrl.u32 %v1840, 16
      %v2092 = vrot.slane %v2090, 4
      %v2093 = vor.u32 %v2092, %v2088
      %v2094 = vrot.slane %v2093, 4
      %v2096 = vshll.u32 %v1841, 16
      %v2098 = vrot.slane %v2096, 5
      %v2099 = vsel %vm248, %v2094, %v2098
      %v2101 = vshrl.u32 %v1842, 16
      %v2103 = vrot.slane %v2101, 4
      %v2104 = vshll.u32 %v1842, 16
      %v2106 = vrot.slane %v2104, 5
      %v2107 = vor.u32 %v2103, %v2106
      %v2108 = vrot.slane %v2107, 4
      %v2110 = vshll.u32 %v1843, 16
      %v2112 = vrot.slane %v2110, 5
      %v2113 = vsel %vm248, %v2108, %v2112
      %v2114 = vshrl.u32 %v1843, 16
      %v2116 = vrot.slane %v2114, 4
      %v2117 = vor.u32 %v2116, %v2112
      %v2118 = vrot.slane %v2117, 4
      %v2120 = vshll.u32 %v1844, 16
      %v2122 = vrot.slane %v2120, 5
      %v2123 = vsel %vm248, %v2118, %v2122
      %v2125 = vshrl.u32 %v1845, 16
      %v2127 = vrot.slane %v2125, 4
      %v2128 = vshll.u32 %v1845, 16
      %v2130 = vrot.slane %v2128, 5
      %v2131 = vor.u32 %v2127, %v2130
      %v2132 = vrot.slane %v2131, 4
      %v2134 = vshll.u32 %v1846, 16
      %v2136 = vrot.slane %v2134, 5
      %v2137 = vsel %vm248, %v2132, %v2136
      %v2138 = vshrl.u32 %v1846, 16
      %v2140 = vrot.slane %v2138, 4
      %v2141 = vor.u32 %v2140, %v2136
      %v2142 = vrot.slane %v2141, 4
      %v2144 = vshll.u32 %v1847, 16
      %v2146 = vrot.slane %v2144, 5
      %v2147 = vsel %vm248, %v2142, %v2146
      %v2149 = vshrl.u32 %v1848, 16
      %v2151 = vrot.slane %v2149, 4
      %v2152 = vshll.u32 %v1848, 16
      %v2154 = vrot.slane %v2152, 5
      %v2155 = vor.u32 %v2151, %v2154
      %v2156 = vrot.slane %v2155, 4
      %v2158 = vshll.u32 %v1849, 16
      %v2160 = vrot.slane %v2158, 5
      %v2161 = vsel %vm248, %v2156, %v2160
      %v2162 = vshrl.u32 %v1849, 16
      %v2164 = vrot.slane %v2162, 4
      %v2165 = vor.u32 %v2164, %v2160
      %v2166 = vrot.slane %v2165, 4
      %v2168 = vshll.u32 %v1850, 16
      %v2170 = vrot.slane %v2168, 5
      %v2171 = vsel %vm248, %v2166, %v2170
      %v2173 = vshrl.u32 %v1851, 16
      %v2175 = vrot.slane %v2173, 4
      %v2176 = vshll.u32 %v1851, 16
      %v2178 = vrot.slane %v2176, 5
      %v2179 = vor.u32 %v2175, %v2178
      %v2180 = vrot.slane %v2179, 4
      %v2182 = vshll.u32 %v1852, 16
      %v2184 = vrot.slane %v2182, 5
      %v2185 = vsel %vm248, %v2180, %v2184
      %v2186 = vshrl.u32 %v1852, 16
      %v2188 = vrot.slane %v2186, 4
      %v2189 = vor.u32 %v2188, %v2184
      %v2190 = vrot.slane %v2189, 4
      %v2192 = vshll.u32 %v1853, 16
      %v2194 = vrot.slane %v2192, 5
      %v2195 = vsel %vm248, %v2190, %v2194
      %v2197 = vshrl.u32 %v1854, 16
      %v2199 = vrot.slane %v2197, 4
      %v2200 = vshll.u32 %v1854, 16
      %v2202 = vrot.slane %v2200, 5
      %v2203 = vor.u32 %v2199, %v2202
      %v2204 = vrot.slane %v2203, 4
      %v2206 = vshll.u32 %v1855, 16
      %v2208 = vrot.slane %v2206, 5
      %v2209 = vsel %vm248, %v2204, %v2208
      %v2210 = vshrl.u32 %v1855, 16
      %v2212 = vrot.slane %v2210, 4
      %v2213 = vor.u32 %v2212, %v2208
      %v2214 = vrot.slane %v2213, 4
      %v2216 = vshll.u32 %v1856, 16
      %v2218 = vrot.slane %v2216, 5
      %v2219 = vsel %vm248, %v2214, %v2218
      %v2221 = vshrl.u32 %v1857, 16
      %v2223 = vrot.slane %v2221, 4
      %v2224 = vshll.u32 %v1857, 16
      %v2226 = vrot.slane %v2224, 5
      %v2227 = vor.u32 %v2223, %v2226
      %v2228 = vrot.slane %v2227, 4
      %v2230 = vshll.u32 %v1858, 16
      %v2232 = vrot.slane %v2230, 5
      %v2233 = vsel %vm248, %v2228, %v2232
      %v2234 = vshrl.u32 %v1858, 16
      %v2236 = vrot.slane %v2234, 4
      %v2237 = vor.u32 %v2236, %v2232
      %v2238 = vrot.slane %v2237, 4
      %v2240 = vshll.u32 %v1859, 16
      %v2242 = vrot.slane %v2240, 5
      %v2243 = vsel %vm248, %v2238, %v2242
      %s2244 = scalar_lea.vmem %s1, 256
      %v2245 = vld [vmem:[%s2244] sm:$0xf]
      %v2246 = vld [vmem:[%s2244 + $0x4] sm:$0xf]
      %v2247 = vld [vmem:[%s2244 + $0x8] sm:$0xf]
      %v2248 = vld [vmem:[%s2244 + $0xc] sm:$0xf]
      %v2249 = vld [vmem:[%s2244 + $0x10] sm:$0xf]
      %v2250 = vld [vmem:[%s2244 + $0x14] sm:$0xf]
      %v2251 = vld [vmem:[%s2244 + $0x18] sm:$0xf]
      %v2252 = vld [vmem:[%s2244 + $0x1c] sm:$0xf]
      %v2253 = vld [vmem:[%s2244 + $0x20] sm:$0xf]
      %v2254 = vld [vmem:[%s2244 + $0x24] sm:$0xf]
      %v2255 = vld [vmem:[%s2244 + $0x28] sm:$0xf]
      %v2256 = vld [vmem:[%s2244 + $0x2c] sm:$0xf]
      %v2257 = vld [vmem:[%s2244 + $0x30] sm:$0xf]
      %v2258 = vld [vmem:[%s2244 + $0x34] sm:$0xf]
      %v2259 = vld [vmem:[%s2244 + $0x38] sm:$0xf]
      %v2260 = vld [vmem:[%s2244 + $0x3c] sm:$0xf]
      %v2261 = vunpack.c.l.b16 %v1873
      %v2262 = vunpack.c.l.b16 %v1883
      %v2263 = vunpack.c.l.b16 %v1897
      %v2264 = vunpack.c.l.b16 %v1907
      %v2265 = vunpack.c.l.b16 %v1921
      %v2266 = vunpack.c.l.b16 %v1931
      %v2267 = vunpack.c.l.b16 %v1945
      %v2268 = vunpack.c.l.b16 %v1955
      %v2269 = vunpack.c.l.b16 %v1969
      %v2270 = vunpack.c.l.b16 %v1979
      %v2271 = vunpack.c.l.b16 %v1993
      %v2272 = vunpack.c.l.b16 %v2003
      %v2273 = vunpack.c.l.b16 %v2017
      %v2274 = vunpack.c.l.b16 %v2027
      %v2275 = vunpack.c.l.b16 %v2041
      %v2276 = vunpack.c.l.b16 %v2051
      %v2277 = vunpack.c.l.b16 %v2065
      %v2278 = vunpack.c.l.b16 %v2075
      %v2279 = vunpack.c.l.b16 %v2089
      %v2280 = vunpack.c.l.b16 %v2099
      %v2281 = vunpack.c.l.b16 %v2113
      %v2282 = vunpack.c.l.b16 %v2123
      %v2283 = vunpack.c.l.b16 %v2137
      %v2284 = vunpack.c.l.b16 %v2147
      %v2285 = vunpack.c.l.b16 %v2161
      %v2286 = vunpack.c.l.b16 %v2171
      %v2287 = vunpack.c.l.b16 %v2185
      %v2288 = vunpack.c.l.b16 %v2195
      %v2289 = vunpack.c.l.b16 %v2209
      %v2290 = vunpack.c.l.b16 %v2219
      %v2291 = vunpack.c.l.b16 %v2233
      %v2292 = vunpack.c.l.b16 %v2243
      %v2293 = vpack.c.b16 %v2262, %v2261
      %v2294 = vpack.c.b16 %v2264, %v2263
      %v2295 = vpack.c.b16 %v2266, %v2265
      %v2296 = vpack.c.b16 %v2268, %v2267
      %v2297 = vpack.c.b16 %v2270, %v2269
      %v2298 = vpack.c.b16 %v2272, %v2271
      %v2299 = vpack.c.b16 %v2274, %v2273
      %v2300 = vpack.c.b16 %v2276, %v2275
      %v2301 = vpack.c.b16 %v2278, %v2277
      %v2302 = vpack.c.b16 %v2280, %v2279
      %v2303 = vpack.c.b16 %v2282, %v2281
      %v2304 = vpack.c.b16 %v2284, %v2283
      %v2305 = vpack.c.b16 %v2286, %v2285
      %v2306 = vpack.c.b16 %v2288, %v2287
      %v2307 = vpack.c.b16 %v2290, %v2289
      %v2308 = vpack.c.b16 %v2292, %v2291
      %v2341 = vunpack.c.l.b16 %v2245
      %v2342 = vunpack.c.l.b16 %v2246
      %v2343 = vunpack.c.l.b16 %v2247
      %v2344 = vunpack.c.l.b16 %v2248
      %v2345 = vunpack.c.l.b16 %v2249
      %v2346 = vunpack.c.l.b16 %v2250
      %v2347 = vunpack.c.l.b16 %v2251
      %v2348 = vunpack.c.l.b16 %v2252
      %v2349 = vunpack.c.l.b16 %v2253
      %v2350 = vunpack.c.l.b16 %v2254
      %v2351 = vunpack.c.l.b16 %v2255
      %v2352 = vunpack.c.l.b16 %v2256
      %v2353 = vunpack.c.l.b16 %v2257
      %v2354 = vunpack.c.l.b16 %v2258
      %v2355 = vunpack.c.l.b16 %v2259
      %v2356 = vunpack.c.l.b16 %v2260
      %v2357 = vpack.c.b16 %v2342, %v2341
      %v2358 = vpack.c.b16 %v2344, %v2343
      %v2359 = vpack.c.b16 %v2346, %v2345
      %v2360 = vpack.c.b16 %v2348, %v2347
      %v2361 = vpack.c.b16 %v2350, %v2349
      %v2362 = vpack.c.b16 %v2352, %v2351
      %v2363 = vpack.c.b16 %v2354, %v2353
      %v2364 = vpack.c.b16 %v2356, %v2355
      %2373 = vmatpush.bf16.msra.mxu0 %v2364
      %2374 = vmatpush.bf16.msra.mxu0 %v2363
      %2375 = vmatpush.bf16.msra.mxu0 %v2362
      %2376 = vmatpush.bf16.msra.mxu0 %v2361
      %2377 = vmatpush.bf16.msra.mxu0 %v2360
      %2378 = vmatpush.bf16.msra.mxu0 %v2359
      %2379 = vmatpush.bf16.msra.mxu0 %v2358
      %2380 = vmatpush.bf16.msra.mxu0 %v2357
      %2381 = vmatmul.bf16.gmra.mxu0 %v2293
      %v2382 = vpop.f32.mrf.mxu0
      %v2383 = vadd.f32 0.0, %v2382
      %v2384 = vpop.f32.mrf.mxu0
      %v2385 = vadd.f32 0.0, %v2384
      %2386 = vmatmul.bf16.gmra.mxu0 %v2294
      %v2387 = vpop.f32.mrf.mxu0
      %v2388 = vadd.f32 0.0, %v2387
      %v2389 = vpop.f32.mrf.mxu0
      %v2390 = vadd.f32 0.0, %v2389
      %2391 = vmatmul.bf16.gmra.mxu0 %v2295
      %v2392 = vpop.f32.mrf.mxu0
      %v2393 = vadd.f32 0.0, %v2392
      %v2394 = vpop.f32.mrf.mxu0
      %v2395 = vadd.f32 0.0, %v2394
      %2396 = vmatmul.bf16.gmra.mxu0 %v2296
      %v2397 = vpop.f32.mrf.mxu0
      %v2398 = vadd.f32 0.0, %v2397
      %v2399 = vpop.f32.mrf.mxu0
      %v2400 = vadd.f32 0.0, %v2399
      %2401 = vmatmul.bf16.gmra.mxu0 %v2297
      %v2402 = vpop.f32.mrf.mxu0
      %v2403 = vadd.f32 0.0, %v2402
      %v2404 = vpop.f32.mrf.mxu0
      %v2405 = vadd.f32 0.0, %v2404
      %2406 = vmatmul.bf16.gmra.mxu0 %v2298
      %v2407 = vpop.f32.mrf.mxu0
      %v2408 = vadd.f32 0.0, %v2407
      %v2409 = vpop.f32.mrf.mxu0
      %v2410 = vadd.f32 0.0, %v2409
      %2411 = vmatmul.bf16.gmra.mxu0 %v2299
      %v2412 = vpop.f32.mrf.mxu0
      %v2413 = vadd.f32 0.0, %v2412
      %v2414 = vpop.f32.mrf.mxu0
      %v2415 = vadd.f32 0.0, %v2414
      %2416 = vmatmul.bf16.gmra.mxu0 %v2300
      %v2417 = vpop.f32.mrf.mxu0
      %v2418 = vadd.f32 0.0, %v2417
      %v2419 = vpop.f32.mrf.mxu0
      %v2420 = vadd.f32 0.0, %v2419
      %2421 = vmatmul.bf16.gmra.mxu0 %v2301
      %v2422 = vpop.f32.mrf.mxu0
      %v2423 = vadd.f32 0.0, %v2422
      %v2424 = vpop.f32.mrf.mxu0
      %v2425 = vadd.f32 0.0, %v2424
      %2426 = vmatmul.bf16.gmra.mxu0 %v2302
      %v2427 = vpop.f32.mrf.mxu0
      %v2428 = vadd.f32 0.0, %v2427
      %v2429 = vpop.f32.mrf.mxu0
      %v2430 = vadd.f32 0.0, %v2429
      %2431 = vmatmul.bf16.gmra.mxu0 %v2303
      %v2432 = vpop.f32.mrf.mxu0
      %v2433 = vadd.f32 0.0, %v2432
      %v2434 = vpop.f32.mrf.mxu0
      %v2435 = vadd.f32 0.0, %v2434
      %2436 = vmatmul.bf16.gmra.mxu0 %v2304
      %v2437 = vpop.f32.mrf.mxu0
      %v2438 = vadd.f32 0.0, %v2437
      %v2439 = vpop.f32.mrf.mxu0
      %v2440 = vadd.f32 0.0, %v2439
      %2441 = vmatmul.bf16.gmra.mxu0 %v2305
      %v2442 = vpop.f32.mrf.mxu0
      %v2443 = vadd.f32 0.0, %v2442
      %v2444 = vpop.f32.mrf.mxu0
      %v2445 = vadd.f32 0.0, %v2444
      %2446 = vmatmul.bf16.gmra.mxu0 %v2306
      %v2447 = vpop.f32.mrf.mxu0
      %v2448 = vadd.f32 0.0, %v2447
      %v2449 = vpop.f32.mrf.mxu0
      %v2450 = vadd.f32 0.0, %v2449
      %2451 = vmatmul.bf16.gmra.mxu0 %v2307
      %v2452 = vpop.f32.mrf.mxu0
      %v2453 = vadd.f32 0.0, %v2452
      %v2454 = vpop.f32.mrf.mxu0
      %v2455 = vadd.f32 0.0, %v2454
      %2456 = vmatmul.bf16.gmra.mxu0 %v2308
      %v2457 = vpop.f32.mrf.mxu0
      %v2458 = vadd.f32 0.0, %v2457
      %v2459 = vpop.f32.mrf.mxu0
      %v2460 = vadd.f32 0.0, %v2459
      %2461 = vdwg.mxu0
      %v2462 = vadd.f32 %v1780, %v2383
      %v2463 = vadd.f32 %v1781, %v2385
      %v2464 = vadd.f32 %v1782, %v2388
      %v2465 = vadd.f32 %v1783, %v2390
      %v2466 = vadd.f32 %v1784, %v2393
      %v2467 = vadd.f32 %v1785, %v2395
      %v2468 = vadd.f32 %v1786, %v2398
      %v2469 = vadd.f32 %v1787, %v2400
      %v2470 = vadd.f32 %v1788, %v2403
      %v2471 = vadd.f32 %v1789, %v2405
      %v2472 = vadd.f32 %v1790, %v2408
      %v2473 = vadd.f32 %v1791, %v2410
      %v2474 = vadd.f32 %v1792, %v2413
      %v2475 = vadd.f32 %v1793, %v2415
      %v2476 = vadd.f32 %v1794, %v2418
      %v2477 = vadd.f32 %v1795, %v2420
      %v2478 = vadd.f32 %v1796, %v2423
      %v2479 = vadd.f32 %v1797, %v2425
      %v2480 = vadd.f32 %v1798, %v2428
      %v2481 = vadd.f32 %v1799, %v2430
      %v2482 = vadd.f32 %v1800, %v2433
      %v2483 = vadd.f32 %v1801, %v2435
      %v2484 = vadd.f32 %v1802, %v2438
      %v2485 = vadd.f32 %v1803, %v2440
      %v2486 = vadd.f32 %v1804, %v2443
      %v2487 = vadd.f32 %v1805, %v2445
      %v2488 = vadd.f32 %v1806, %v2448
      %v2489 = vadd.f32 %v1807, %v2450
      %v2490 = vadd.f32 %v1808, %v2453
      %v2491 = vadd.f32 %v1809, %v2455
      %v2492 = vadd.f32 %v1810, %v2458
      %v2493 = vadd.f32 %v1811, %v2460
      %v2494 = vld [vmem:[%s1497] sm:$0xe]
      %v2495 = vld [vmem:[%s1497 + $0xc] sm:$0xe]
      %v2496 = vld [vmem:[%s1497 + $0x18] sm:$0xe]
      %v2497 = vld [vmem:[%s1497 + $0x24] sm:$0xe]
      %v2498 = vld [vmem:[%s1497 + $0x30] sm:$0xe]
      %v2499 = vld [vmem:[%s1497 + $0x3c] sm:$0xe]
      %v2500 = vld [vmem:[%s1497 + $0x48] sm:$0xe]
      %v2501 = vld [vmem:[%s1497 + $0x54] sm:$0xe]
      %v2502 = vld [vmem:[%s1497 + $0x60] sm:$0xe]
      %v2503 = vld [vmem:[%s1497 + $0x6c] sm:$0xe]
      %v2504 = vld [vmem:[%s1497 + $0x78] sm:$0xe]
      %v2505 = vld [vmem:[%s1497 + $0x84] sm:$0xe]
      %v2506 = vld [vmem:[%s1497 + $0x90] sm:$0xe]
      %v2507 = vld [vmem:[%s1497 + $0x9c] sm:$0xe]
      %v2508 = vld [vmem:[%s1497 + $0xa8] sm:$0xe]
      %v2509 = vld [vmem:[%s1497 + $0xb4] sm:$0xe]
      %v2558 = vrot.slane %v2494, 5
      %v2559 = vrot.slane %v2558, 4
      %v2560 = vrot.slane %v1813, 5
      %v2561 = vsel %vm1134, %v2559, %v2560
      %v2562 = vrot.slane %v2560, 4
      %v2563 = vrot.slane %v1814, 5
      %v2564 = vsel %vm1134, %v2562, %v2563
      %v2565 = vrot.slane %v2495, 5
      %v2566 = vrot.slane %v2565, 4
      %v2567 = vrot.slane %v1816, 5
      %v2568 = vsel %vm1134, %v2566, %v2567
      %v2569 = vrot.slane %v2567, 4
      %v2570 = vrot.slane %v1817, 5
      %v2571 = vsel %vm1134, %v2569, %v2570
      %v2572 = vrot.slane %v2496, 5
      %v2573 = vrot.slane %v2572, 4
      %v2574 = vrot.slane %v1819, 5
      %v2575 = vsel %vm1134, %v2573, %v2574
      %v2576 = vrot.slane %v2574, 4
      %v2577 = vrot.slane %v1820, 5
      %v2578 = vsel %vm1134, %v2576, %v2577
      %v2579 = vrot.slane %v2497, 5
      %v2580 = vrot.slane %v2579, 4
      %v2581 = vrot.slane %v1822, 5
      %v2582 = vsel %vm1134, %v2580, %v2581
      %v2583 = vrot.slane %v2581, 4
      %v2584 = vrot.slane %v1823, 5
      %v2585 = vsel %vm1134, %v2583, %v2584
      %v2586 = vrot.slane %v2498, 5
      %v2587 = vrot.slane %v2586, 4
      %v2588 = vrot.slane %v1825, 5
      %v2589 = vsel %vm1134, %v2587, %v2588
      %v2590 = vrot.slane %v2588, 4
      %v2591 = vrot.slane %v1826, 5
      %v2592 = vsel %vm1134, %v2590, %v2591
      %v2593 = vrot.slane %v2499, 5
      %v2594 = vrot.slane %v2593, 4
      %v2595 = vrot.slane %v1828, 5
      %v2596 = vsel %vm1134, %v2594, %v2595
      %v2597 = vrot.slane %v2595, 4
      %v2598 = vrot.slane %v1829, 5
      %v2599 = vsel %vm1134, %v2597, %v2598
      %v2600 = vrot.slane %v2500, 5
      %v2601 = vrot.slane %v2600, 4
      %v2602 = vrot.slane %v1831, 5
      %v2603 = vsel %vm1134, %v2601, %v2602
      %v2604 = vrot.slane %v2602, 4
      %v2605 = vrot.slane %v1832, 5
      %v2606 = vsel %vm1134, %v2604, %v2605
      %v2607 = vrot.slane %v2501, 5
      %v2608 = vrot.slane %v2607, 4
      %v2609 = vrot.slane %v1834, 5
      %v2610 = vsel %vm1134, %v2608, %v2609
      %v2611 = vrot.slane %v2609, 4
      %v2612 = vrot.slane %v1835, 5
      %v2613 = vsel %vm1134, %v2611, %v2612
      %v2614 = vrot.slane %v2502, 5
      %v2615 = vrot.slane %v2614, 4
      %v2616 = vrot.slane %v1837, 5
      %v2617 = vsel %vm1134, %v2615, %v2616
      %v2618 = vrot.slane %v2616, 4
      %v2619 = vrot.slane %v1838, 5
      %v2620 = vsel %vm1134, %v2618, %v2619
      %v2621 = vrot.slane %v2503, 5
      %v2622 = vrot.slane %v2621, 4
      %v2623 = vrot.slane %v1840, 5
      %v2624 = vsel %vm1134, %v2622, %v2623
      %v2625 = vrot.slane %v2623, 4
      %v2626 = vrot.slane %v1841, 5
      %v2627 = vsel %vm1134, %v2625, %v2626
      %v2628 = vrot.slane %v2504, 5
      %v2629 = vrot.slane %v2628, 4
      %v2630 = vrot.slane %v1843, 5
      %v2631 = vsel %vm1134, %v2629, %v2630
      %v2632 = vrot.slane %v2630, 4
      %v2633 = vrot.slane %v1844, 5
      %v2634 = vsel %vm1134, %v2632, %v2633
      %v2635 = vrot.slane %v2505, 5
      %v2636 = vrot.slane %v2635, 4
      %v2637 = vrot.slane %v1846, 5
      %v2638 = vsel %vm1134, %v2636, %v2637
      %v2639 = vrot.slane %v2637, 4
      %v2640 = vrot.slane %v1847, 5
      %v2641 = vsel %vm1134, %v2639, %v2640
      %v2642 = vrot.slane %v2506, 5
      %v2643 = vrot.slane %v2642, 4
      %v2644 = vrot.slane %v1849, 5
      %v2645 = vsel %vm1134, %v2643, %v2644
      %v2646 = vrot.slane %v2644, 4
      %v2647 = vrot.slane %v1850, 5
      %v2648 = vsel %vm1134, %v2646, %v2647
      %v2649 = vrot.slane %v2507, 5
      %v2650 = vrot.slane %v2649, 4
      %v2651 = vrot.slane %v1852, 5
      %v2652 = vsel %vm1134, %v2650, %v2651
      %v2653 = vrot.slane %v2651, 4
      %v2654 = vrot.slane %v1853, 5
      %v2655 = vsel %vm1134, %v2653, %v2654
      %v2656 = vrot.slane %v2508, 5
      %v2657 = vrot.slane %v2656, 4
      %v2658 = vrot.slane %v1855, 5
      %v2659 = vsel %vm1134, %v2657, %v2658
      %v2660 = vrot.slane %v2658, 4
      %v2661 = vrot.slane %v1856, 5
      %v2662 = vsel %vm1134, %v2660, %v2661
      %v2663 = vrot.slane %v2509, 5
      %v2664 = vrot.slane %v2663, 4
      %v2665 = vrot.slane %v1858, 5
      %v2666 = vsel %vm1134, %v2664, %v2665
      %v2667 = vrot.slane %v2665, 4
      %v2668 = vrot.slane %v1859, 5
      %v2669 = vsel %vm1134, %v2667, %v2668
      %s2670 = scalar_lea.vmem %s1, 320
      %v2671 = vld [vmem:[%s2670] sm:$0xf]
      %v2672 = vld [vmem:[%s2670 + $0x4] sm:$0xf]
      %v2673 = vld [vmem:[%s2670 + $0x8] sm:$0xf]
      %v2674 = vld [vmem:[%s2670 + $0xc] sm:$0xf]
      %v2675 = vld [vmem:[%s2670 + $0x10] sm:$0xf]
      %v2676 = vld [vmem:[%s2670 + $0x14] sm:$0xf]
      %v2677 = vld [vmem:[%s2670 + $0x18] sm:$0xf]
      %v2678 = vld [vmem:[%s2670 + $0x1c] sm:$0xf]
      %v2679 = vld [vmem:[%s2670 + $0x20] sm:$0xf]
      %v2680 = vld [vmem:[%s2670 + $0x24] sm:$0xf]
      %v2681 = vld [vmem:[%s2670 + $0x28] sm:$0xf]
      %v2682 = vld [vmem:[%s2670 + $0x2c] sm:$0xf]
      %v2683 = vld [vmem:[%s2670 + $0x30] sm:$0xf]
      %v2684 = vld [vmem:[%s2670 + $0x34] sm:$0xf]
      %v2685 = vld [vmem:[%s2670 + $0x38] sm:$0xf]
      %v2686 = vld [vmem:[%s2670 + $0x3c] sm:$0xf]
      %v2687 = vunpack.c.l.b16 %v2561
      %v2688 = vunpack.c.l.b16 %v2564
      %v2689 = vunpack.c.l.b16 %v2568
      %v2690 = vunpack.c.l.b16 %v2571
      %v2691 = vunpack.c.l.b16 %v2575
      %v2692 = vunpack.c.l.b16 %v2578
      %v2693 = vunpack.c.l.b16 %v2582
      %v2694 = vunpack.c.l.b16 %v2585
      %v2695 = vunpack.c.l.b16 %v2589
      %v2696 = vunpack.c.l.b16 %v2592
      %v2697 = vunpack.c.l.b16 %v2596
      %v2698 = vunpack.c.l.b16 %v2599
      %v2699 = vunpack.c.l.b16 %v2603
      %v2700 = vunpack.c.l.b16 %v2606
      %v2701 = vunpack.c.l.b16 %v2610
      %v2702 = vunpack.c.l.b16 %v2613
      %v2703 = vunpack.c.l.b16 %v2617
      %v2704 = vunpack.c.l.b16 %v2620
      %v2705 = vunpack.c.l.b16 %v2624
      %v2706 = vunpack.c.l.b16 %v2627
      %v2707 = vunpack.c.l.b16 %v2631
      %v2708 = vunpack.c.l.b16 %v2634
      %v2709 = vunpack.c.l.b16 %v2638
      %v2710 = vunpack.c.l.b16 %v2641
      %v2711 = vunpack.c.l.b16 %v2645
      %v2712 = vunpack.c.l.b16 %v2648
      %v2713 = vunpack.c.l.b16 %v2652
      %v2714 = vunpack.c.l.b16 %v2655
      %v2715 = vunpack.c.l.b16 %v2659
      %v2716 = vunpack.c.l.b16 %v2662
      %v2717 = vunpack.c.l.b16 %v2666
      %v2718 = vunpack.c.l.b16 %v2669
      %v2719 = vpack.c.b16 %v2688, %v2687
      %v2720 = vpack.c.b16 %v2690, %v2689
      %v2721 = vpack.c.b16 %v2692, %v2691
      %v2722 = vpack.c.b16 %v2694, %v2693
      %v2723 = vpack.c.b16 %v2696, %v2695
      %v2724 = vpack.c.b16 %v2698, %v2697
      %v2725 = vpack.c.b16 %v2700, %v2699
      %v2726 = vpack.c.b16 %v2702, %v2701
      %v2727 = vpack.c.b16 %v2704, %v2703
      %v2728 = vpack.c.b16 %v2706, %v2705
      %v2729 = vpack.c.b16 %v2708, %v2707
      %v2730 = vpack.c.b16 %v2710, %v2709
      %v2731 = vpack.c.b16 %v2712, %v2711
      %v2732 = vpack.c.b16 %v2714, %v2713
      %v2733 = vpack.c.b16 %v2716, %v2715
      %v2734 = vpack.c.b16 %v2718, %v2717
      %v2767 = vunpack.c.l.b16 %v2671
      %v2768 = vunpack.c.l.b16 %v2672
      %v2769 = vunpack.c.l.b16 %v2673
      %v2770 = vunpack.c.l.b16 %v2674
      %v2771 = vunpack.c.l.b16 %v2675
      %v2772 = vunpack.c.l.b16 %v2676
      %v2773 = vunpack.c.l.b16 %v2677
      %v2774 = vunpack.c.l.b16 %v2678
      %v2775 = vunpack.c.l.b16 %v2679
      %v2776 = vunpack.c.l.b16 %v2680
      %v2777 = vunpack.c.l.b16 %v2681
      %v2778 = vunpack.c.l.b16 %v2682
      %v2779 = vunpack.c.l.b16 %v2683
      %v2780 = vunpack.c.l.b16 %v2684
      %v2781 = vunpack.c.l.b16 %v2685
      %v2782 = vunpack.c.l.b16 %v2686
      %v2783 = vpack.c.b16 %v2768, %v2767
      %v2784 = vpack.c.b16 %v2770, %v2769
      %v2785 = vpack.c.b16 %v2772, %v2771
      %v2786 = vpack.c.b16 %v2774, %v2773
      %v2787 = vpack.c.b16 %v2776, %v2775
      %v2788 = vpack.c.b16 %v2778, %v2777
      %v2789 = vpack.c.b16 %v2780, %v2779
      %v2790 = vpack.c.b16 %v2782, %v2781
      %2799 = vmatpush.bf16.msra.mxu0 %v2790
      %2800 = vmatpush.bf16.msra.mxu0 %v2789
      %2801 = vmatpush.bf16.msra.mxu0 %v2788
      %2802 = vmatpush.bf16.msra.mxu0 %v2787
      %2803 = vmatpush.bf16.msra.mxu0 %v2786
      %2804 = vmatpush.bf16.msra.mxu0 %v2785
      %2805 = vmatpush.bf16.msra.mxu0 %v2784
      %2806 = vmatpush.bf16.msra.mxu0 %v2783
      %2807 = vmatmul.bf16.gmra.mxu0 %v2719
      %v2808 = vpop.f32.mrf.mxu0
      %v2809 = vadd.f32 0.0, %v2808
      %v2810 = vpop.f32.mrf.mxu0
      %v2811 = vadd.f32 0.0, %v2810
      %2812 = vmatmul.bf16.gmra.mxu0 %v2720
      %v2813 = vpop.f32.mrf.mxu0
      %v2814 = vadd.f32 0.0, %v2813
      %v2815 = vpop.f32.mrf.mxu0
      %v2816 = vadd.f32 0.0, %v2815
      %2817 = vmatmul.bf16.gmra.mxu0 %v2721
      %v2818 = vpop.f32.mrf.mxu0
      %v2819 = vadd.f32 0.0, %v2818
      %v2820 = vpop.f32.mrf.mxu0
      %v2821 = vadd.f32 0.0, %v2820
      %2822 = vmatmul.bf16.gmra.mxu0 %v2722
      %v2823 = vpop.f32.mrf.mxu0
      %v2824 = vadd.f32 0.0, %v2823
      %v2825 = vpop.f32.mrf.mxu0
      %v2826 = vadd.f32 0.0, %v2825
      %2827 = vmatmul.bf16.gmra.mxu0 %v2723
      %v2828 = vpop.f32.mrf.mxu0
      %v2829 = vadd.f32 0.0, %v2828
      %v2830 = vpop.f32.mrf.mxu0
      %v2831 = vadd.f32 0.0, %v2830
      %2832 = vmatmul.bf16.gmra.mxu0 %v2724
      %v2833 = vpop.f32.mrf.mxu0
      %v2834 = vadd.f32 0.0, %v2833
      %v2835 = vpop.f32.mrf.mxu0
      %v2836 = vadd.f32 0.0, %v2835
      %2837 = vmatmul.bf16.gmra.mxu0 %v2725
      %v2838 = vpop.f32.mrf.mxu0
      %v2839 = vadd.f32 0.0, %v2838
      %v2840 = vpop.f32.mrf.mxu0
      %v2841 = vadd.f32 0.0, %v2840
      %2842 = vmatmul.bf16.gmra.mxu0 %v2726
      %v2843 = vpop.f32.mrf.mxu0
      %v2844 = vadd.f32 0.0, %v2843
      %v2845 = vpop.f32.mrf.mxu0
      %v2846 = vadd.f32 0.0, %v2845
      %2847 = vmatmul.bf16.gmra.mxu0 %v2727
      %v2848 = vpop.f32.mrf.mxu0
      %v2849 = vadd.f32 0.0, %v2848
      %v2850 = vpop.f32.mrf.mxu0
      %v2851 = vadd.f32 0.0, %v2850
      %2852 = vmatmul.bf16.gmra.mxu0 %v2728
      %v2853 = vpop.f32.mrf.mxu0
      %v2854 = vadd.f32 0.0, %v2853
      %v2855 = vpop.f32.mrf.mxu0
      %v2856 = vadd.f32 0.0, %v2855
      %2857 = vmatmul.bf16.gmra.mxu0 %v2729
      %v2858 = vpop.f32.mrf.mxu0
      %v2859 = vadd.f32 0.0, %v2858
      %v2860 = vpop.f32.mrf.mxu0
      %v2861 = vadd.f32 0.0, %v2860
      %2862 = vmatmul.bf16.gmra.mxu0 %v2730
      %v2863 = vpop.f32.mrf.mxu0
      %v2864 = vadd.f32 0.0, %v2863
      %v2865 = vpop.f32.mrf.mxu0
      %v2866 = vadd.f32 0.0, %v2865
      %2867 = vmatmul.bf16.gmra.mxu0 %v2731
      %v2868 = vpop.f32.mrf.mxu0
      %v2869 = vadd.f32 0.0, %v2868
      %v2870 = vpop.f32.mrf.mxu0
      %v2871 = vadd.f32 0.0, %v2870
      %2872 = vmatmul.bf16.gmra.mxu0 %v2732
      %v2873 = vpop.f32.mrf.mxu0
      %v2874 = vadd.f32 0.0, %v2873
      %v2875 = vpop.f32.mrf.mxu0
      %v2876 = vadd.f32 0.0, %v2875
      %2877 = vmatmul.bf16.gmra.mxu0 %v2733
      %v2878 = vpop.f32.mrf.mxu0
      %v2879 = vadd.f32 0.0, %v2878
      %v2880 = vpop.f32.mrf.mxu0
      %v2881 = vadd.f32 0.0, %v2880
      %2882 = vmatmul.bf16.gmra.mxu0 %v2734
      %v2883 = vpop.f32.mrf.mxu0
      %v2884 = vadd.f32 0.0, %v2883
      %v2885 = vpop.f32.mrf.mxu0
      %v2886 = vadd.f32 0.0, %v2885
      %2887 = vdwg.mxu0
      %v2888 = vadd.f32 %v2462, %v2809
      %v2889 = vadd.f32 %v2463, %v2811
      %v2890 = vadd.f32 %v2464, %v2814
      %v2891 = vadd.f32 %v2465, %v2816
      %v2892 = vadd.f32 %v2466, %v2819
      %v2893 = vadd.f32 %v2467, %v2821
      %v2894 = vadd.f32 %v2468, %v2824
      %v2895 = vadd.f32 %v2469, %v2826
      %v2896 = vadd.f32 %v2470, %v2829
      %v2897 = vadd.f32 %v2471, %v2831
      %v2898 = vadd.f32 %v2472, %v2834
      %v2899 = vadd.f32 %v2473, %v2836
      %v2900 = vadd.f32 %v2474, %v2839
      %v2901 = vadd.f32 %v2475, %v2841
      %v2902 = vadd.f32 %v2476, %v2844
      %v2903 = vadd.f32 %v2477, %v2846
      %v2904 = vadd.f32 %v2478, %v2849
      %v2905 = vadd.f32 %v2479, %v2851
      %v2906 = vadd.f32 %v2480, %v2854
      %v2907 = vadd.f32 %v2481, %v2856
      %v2908 = vadd.f32 %v2482, %v2859
      %v2909 = vadd.f32 %v2483, %v2861
      %v2910 = vadd.f32 %v2484, %v2864
      %v2911 = vadd.f32 %v2485, %v2866
      %v2912 = vadd.f32 %v2486, %v2869
      %v2913 = vadd.f32 %v2487, %v2871
      %v2914 = vadd.f32 %v2488, %v2874
      %v2915 = vadd.f32 %v2489, %v2876
      %v2916 = vadd.f32 %v2490, %v2879
      %v2917 = vadd.f32 %v2491, %v2881
      %v2918 = vadd.f32 %v2492, %v2884
      %v2919 = vadd.f32 %v2493, %v2886
      %s2920 = scalar_lea.vmem %s172, 24
      %v2921 = vld [vmem:[%s2920] sm:$0xf]
      %v2922 = vld [vmem:[%s2920 + $0x4] sm:$0xf]
      %v2923 = vld [vmem:[%s2920 + $0xc] sm:$0xf]
      %v2924 = vld [vmem:[%s2920 + $0x10] sm:$0xf]
      %v2925 = vld [vmem:[%s2920 + $0x18] sm:$0xf]
      %v2926 = vld [vmem:[%s2920 + $0x1c] sm:$0xf]
      %v2927 = vld [vmem:[%s2920 + $0x24] sm:$0xf]
      %v2928 = vld [vmem:[%s2920 + $0x28] sm:$0xf]
      %v2929 = vld [vmem:[%s2920 + $0x30] sm:$0xf]
      %v2930 = vld [vmem:[%s2920 + $0x34] sm:$0xf]
      %v2931 = vld [vmem:[%s2920 + $0x3c] sm:$0xf]
      %v2932 = vld [vmem:[%s2920 + $0x40] sm:$0xf]
      %v2933 = vld [vmem:[%s2920 + $0x48] sm:$0xf]
      %v2934 = vld [vmem:[%s2920 + $0x4c] sm:$0xf]
      %v2935 = vld [vmem:[%s2920 + $0x54] sm:$0xf]
      %v2936 = vld [vmem:[%s2920 + $0x58] sm:$0xf]
      %v2937 = vld [vmem:[%s2920 + $0x60] sm:$0xf]
      %v2938 = vld [vmem:[%s2920 + $0x64] sm:$0xf]
      %v2939 = vld [vmem:[%s2920 + $0x6c] sm:$0xf]
      %v2940 = vld [vmem:[%s2920 + $0x70] sm:$0xf]
      %v2941 = vld [vmem:[%s2920 + $0x78] sm:$0xf]
      %v2942 = vld [vmem:[%s2920 + $0x7c] sm:$0xf]
      %v2943 = vld [vmem:[%s2920 + $0x84] sm:$0xf]
      %v2944 = vld [vmem:[%s2920 + $0x88] sm:$0xf]
      %v2945 = vld [vmem:[%s2920 + $0x90] sm:$0xf]
      %v2946 = vld [vmem:[%s2920 + $0x94] sm:$0xf]
      %v2947 = vld [vmem:[%s2920 + $0x9c] sm:$0xf]
      %v2948 = vld [vmem:[%s2920 + $0xa0] sm:$0xf]
      %v2949 = vld [vmem:[%s2920 + $0xa8] sm:$0xf]
      %v2950 = vld [vmem:[%s2920 + $0xac] sm:$0xf]
      %v2951 = vld [vmem:[%s2920 + $0xb4] sm:$0xf]
      %v2952 = vld [vmem:[%s2920 + $0xb8] sm:$0xf]
      %s2953 = scalar_lea.vmem %s1, 384
      %v2954 = vld [vmem:[%s2953] sm:$0xf]
      %v2955 = vld [vmem:[%s2953 + $0x4] sm:$0xf]
      %v2956 = vld [vmem:[%s2953 + $0x8] sm:$0xf]
      %v2957 = vld [vmem:[%s2953 + $0xc] sm:$0xf]
      %v2958 = vld [vmem:[%s2953 + $0x10] sm:$0xf]
      %v2959 = vld [vmem:[%s2953 + $0x14] sm:$0xf]
      %v2960 = vld [vmem:[%s2953 + $0x18] sm:$0xf]
      %v2961 = vld [vmem:[%s2953 + $0x1c] sm:$0xf]
      %v2962 = vld [vmem:[%s2953 + $0x20] sm:$0xf]
      %v2963 = vld [vmem:[%s2953 + $0x24] sm:$0xf]
      %v2964 = vld [vmem:[%s2953 + $0x28] sm:$0xf]
      %v2965 = vld [vmem:[%s2953 + $0x2c] sm:$0xf]
      %v2966 = vld [vmem:[%s2953 + $0x30] sm:$0xf]
      %v2967 = vld [vmem:[%s2953 + $0x34] sm:$0xf]
      %v2968 = vld [vmem:[%s2953 + $0x38] sm:$0xf]
      %v2969 = vld [vmem:[%s2953 + $0x3c] sm:$0xf]
      %v3002 = vunpack.c.l.b16 %v2921
      %v3003 = vunpack.c.l.b16 %v2922
      %v3004 = vunpack.c.l.b16 %v2923
      %v3005 = vunpack.c.l.b16 %v2924
      %v3006 = vunpack.c.l.b16 %v2925
      %v3007 = vunpack.c.l.b16 %v2926
      %v3008 = vunpack.c.l.b16 %v2927
      %v3009 = vunpack.c.l.b16 %v2928
      %v3010 = vunpack.c.l.b16 %v2929
      %v3011 = vunpack.c.l.b16 %v2930
      %v3012 = vunpack.c.l.b16 %v2931
      %v3013 = vunpack.c.l.b16 %v2932
      %v3014 = vunpack.c.l.b16 %v2933
      %v3015 = vunpack.c.l.b16 %v2934
      %v3016 = vunpack.c.l.b16 %v2935
      %v3017 = vunpack.c.l.b16 %v2936
      %v3018 = vunpack.c.l.b16 %v2937
      %v3019 = vunpack.c.l.b16 %v2938
      %v3020 = vunpack.c.l.b16 %v2939
      %v3021 = vunpack.c.l.b16 %v2940
      %v3022 = vunpack.c.l.b16 %v2941
      %v3023 = vunpack.c.l.b16 %v2942
      %v3024 = vunpack.c.l.b16 %v2943
      %v3025 = vunpack.c.l.b16 %v2944
      %v3026 = vunpack.c.l.b16 %v2945
      %v3027 = vunpack.c.l.b16 %v2946
      %v3028 = vunpack.c.l.b16 %v2947
      %v3029 = vunpack.c.l.b16 %v2948
      %v3030 = vunpack.c.l.b16 %v2949
      %v3031 = vunpack.c.l.b16 %v2950
      %v3032 = vunpack.c.l.b16 %v2951
      %v3033 = vunpack.c.l.b16 %v2952
      %v3034 = vpack.c.b16 %v3003, %v3002
      %v3035 = vpack.c.b16 %v3005, %v3004
      %v3036 = vpack.c.b16 %v3007, %v3006
      %v3037 = vpack.c.b16 %v3009, %v3008
      %v3038 = vpack.c.b16 %v3011, %v3010
      %v3039 = vpack.c.b16 %v3013, %v3012
      %v3040 = vpack.c.b16 %v3015, %v3014
      %v3041 = vpack.c.b16 %v3017, %v3016
      %v3042 = vpack.c.b16 %v3019, %v3018
      %v3043 = vpack.c.b16 %v3021, %v3020
      %v3044 = vpack.c.b16 %v3023, %v3022
      %v3045 = vpack.c.b16 %v3025, %v3024
      %v3046 = vpack.c.b16 %v3027, %v3026
      %v3047 = vpack.c.b16 %v3029, %v3028
      %v3048 = vpack.c.b16 %v3031, %v3030
      %v3049 = vpack.c.b16 %v3033, %v3032
      %v3082 = vunpack.c.l.b16 %v2954
      %v3083 = vunpack.c.l.b16 %v2955
      %v3084 = vunpack.c.l.b16 %v2956
      %v3085 = vunpack.c.l.b16 %v2957
      %v3086 = vunpack.c.l.b16 %v2958
      %v3087 = vunpack.c.l.b16 %v2959
      %v3088 = vunpack.c.l.b16 %v2960
      %v3089 = vunpack.c.l.b16 %v2961
      %v3090 = vunpack.c.l.b16 %v2962
      %v3091 = vunpack.c.l.b16 %v2963
      %v3092 = vunpack.c.l.b16 %v2964
      %v3093 = vunpack.c.l.b16 %v2965
      %v3094 = vunpack.c.l.b16 %v2966
      %v3095 = vunpack.c.l.b16 %v2967
      %v3096 = vunpack.c.l.b16 %v2968
      %v3097 = vunpack.c.l.b16 %v2969
      %v3098 = vpack.c.b16 %v3083, %v3082
      %v3099 = vpack.c.b16 %v3085, %v3084
      %v3100 = vpack.c.b16 %v3087, %v3086
      %v3101 = vpack.c.b16 %v3089, %v3088
      %v3102 = vpack.c.b16 %v3091, %v3090
      %v3103 = vpack.c.b16 %v3093, %v3092
      %v3104 = vpack.c.b16 %v3095, %v3094
      %v3105 = vpack.c.b16 %v3097, %v3096
      %3114 = vmatpush.bf16.msra.mxu0 %v3105
      %3115 = vmatpush.bf16.msra.mxu0 %v3104
      %3116 = vmatpush.bf16.msra.mxu0 %v3103
      %3117 = vmatpush.bf16.msra.mxu0 %v3102
      %3118 = vmatpush.bf16.msra.mxu0 %v3101
      %3119 = vmatpush.bf16.msra.mxu0 %v3100
      %3120 = vmatpush.bf16.msra.mxu0 %v3099
      %3121 = vmatpush.bf16.msra.mxu0 %v3098
      %3122 = vmatmul.bf16.gmra.mxu0 %v3034
      %v3123 = vpop.f32.mrf.mxu0
      %v3124 = vadd.f32 0.0, %v3123
      %v3125 = vpop.f32.mrf.mxu0
      %v3126 = vadd.f32 0.0, %v3125
      %3127 = vmatmul.bf16.gmra.mxu0 %v3035
      %v3128 = vpop.f32.mrf.mxu0
      %v3129 = vadd.f32 0.0, %v3128
      %v3130 = vpop.f32.mrf.mxu0
      %v3131 = vadd.f32 0.0, %v3130
      %3132 = vmatmul.bf16.gmra.mxu0 %v3036
      %v3133 = vpop.f32.mrf.mxu0
      %v3134 = vadd.f32 0.0, %v3133
      %v3135 = vpop.f32.mrf.mxu0
      %v3136 = vadd.f32 0.0, %v3135
      %3137 = vmatmul.bf16.gmra.mxu0 %v3037
      %v3138 = vpop.f32.mrf.mxu0
      %v3139 = vadd.f32 0.0, %v3138
      %v3140 = vpop.f32.mrf.mxu0
      %v3141 = vadd.f32 0.0, %v3140
      %3142 = vmatmul.bf16.gmra.mxu0 %v3038
      %v3143 = vpop.f32.mrf.mxu0
      %v3144 = vadd.f32 0.0, %v3143
      %v3145 = vpop.f32.mrf.mxu0
      %v3146 = vadd.f32 0.0, %v3145
      %3147 = vmatmul.bf16.gmra.mxu0 %v3039
      %v3148 = vpop.f32.mrf.mxu0
      %v3149 = vadd.f32 0.0, %v3148
      %v3150 = vpop.f32.mrf.mxu0
      %v3151 = vadd.f32 0.0, %v3150
      %3152 = vmatmul.bf16.gmra.mxu0 %v3040
      %v3153 = vpop.f32.mrf.mxu0
      %v3154 = vadd.f32 0.0, %v3153
      %v3155 = vpop.f32.mrf.mxu0
      %v3156 = vadd.f32 0.0, %v3155
      %3157 = vmatmul.bf16.gmra.mxu0 %v3041
      %v3158 = vpop.f32.mrf.mxu0
      %v3159 = vadd.f32 0.0, %v3158
      %v3160 = vpop.f32.mrf.mxu0
      %v3161 = vadd.f32 0.0, %v3160
      %3162 = vmatmul.bf16.gmra.mxu0 %v3042
      %v3163 = vpop.f32.mrf.mxu0
      %v3164 = vadd.f32 0.0, %v3163
      %v3165 = vpop.f32.mrf.mxu0
      %v3166 = vadd.f32 0.0, %v3165
      %3167 = vmatmul.bf16.gmra.mxu0 %v3043
      %v3168 = vpop.f32.mrf.mxu0
      %v3169 = vadd.f32 0.0, %v3168
      %v3170 = vpop.f32.mrf.mxu0
      %v3171 = vadd.f32 0.0, %v3170
      %3172 = vmatmul.bf16.gmra.mxu0 %v3044
      %v3173 = vpop.f32.mrf.mxu0
      %v3174 = vadd.f32 0.0, %v3173
      %v3175 = vpop.f32.mrf.mxu0
      %v3176 = vadd.f32 0.0, %v3175
      %3177 = vmatmul.bf16.gmra.mxu0 %v3045
      %v3178 = vpop.f32.mrf.mxu0
      %v3179 = vadd.f32 0.0, %v3178
      %v3180 = vpop.f32.mrf.mxu0
      %v3181 = vadd.f32 0.0, %v3180
      %3182 = vmatmul.bf16.gmra.mxu0 %v3046
      %v3183 = vpop.f32.mrf.mxu0
      %v3184 = vadd.f32 0.0, %v3183
      %v3185 = vpop.f32.mrf.mxu0
      %v3186 = vadd.f32 0.0, %v3185
      %3187 = vmatmul.bf16.gmra.mxu0 %v3047
      %v3188 = vpop.f32.mrf.mxu0
      %v3189 = vadd.f32 0.0, %v3188
      %v3190 = vpop.f32.mrf.mxu0
      %v3191 = vadd.f32 0.0, %v3190
      %3192 = vmatmul.bf16.gmra.mxu0 %v3048
      %v3193 = vpop.f32.mrf.mxu0
      %v3194 = vadd.f32 0.0, %v3193
      %v3195 = vpop.f32.mrf.mxu0
      %v3196 = vadd.f32 0.0, %v3195
      %3197 = vmatmul.bf16.gmra.mxu0 %v3049
      %v3198 = vpop.f32.mrf.mxu0
      %v3199 = vadd.f32 0.0, %v3198
      %v3200 = vpop.f32.mrf.mxu0
      %v3201 = vadd.f32 0.0, %v3200
      %3202 = vdwg.mxu0
      %v3203 = vadd.f32 %v2888, %v3124
      %v3204 = vadd.f32 %v2889, %v3126
      %v3205 = vadd.f32 %v2890, %v3129
      %v3206 = vadd.f32 %v2891, %v3131
      %v3207 = vadd.f32 %v2892, %v3134
      %v3208 = vadd.f32 %v2893, %v3136
      %v3209 = vadd.f32 %v2894, %v3139
      %v3210 = vadd.f32 %v2895, %v3141
      %v3211 = vadd.f32 %v2896, %v3144
      %v3212 = vadd.f32 %v2897, %v3146
      %v3213 = vadd.f32 %v2898, %v3149
      %v3214 = vadd.f32 %v2899, %v3151
      %v3215 = vadd.f32 %v2900, %v3154
      %v3216 = vadd.f32 %v2901, %v3156
      %v3217 = vadd.f32 %v2902, %v3159
      %v3218 = vadd.f32 %v2903, %v3161
      %v3219 = vadd.f32 %v2904, %v3164
      %v3220 = vadd.f32 %v2905, %v3166
      %v3221 = vadd.f32 %v2906, %v3169
      %v3222 = vadd.f32 %v2907, %v3171
      %v3223 = vadd.f32 %v2908, %v3174
      %v3224 = vadd.f32 %v2909, %v3176
      %v3225 = vadd.f32 %v2910, %v3179
      %v3226 = vadd.f32 %v2911, %v3181
      %v3227 = vadd.f32 %v2912, %v3184
      %v3228 = vadd.f32 %v2913, %v3186
      %v3229 = vadd.f32 %v2914, %v3189
      %v3230 = vadd.f32 %v2915, %v3191
      %v3231 = vadd.f32 %v2916, %v3194
      %v3232 = vadd.f32 %v2917, %v3196
      %v3233 = vadd.f32 %v2918, %v3199
      %v3234 = vadd.f32 %v2919, %v3201
      %v3235 = vld [vmem:[%s2920] sm:$0xf]
      %v3236 = vld [vmem:[%s2920 + $0x4] sm:$0xf]
      %v3237 = vld [vmem:[%s2920 + $0x8] sm:$0x1]
      %v3238 = vld [vmem:[%s2920 + $0xc] sm:$0xf]
      %v3239 = vld [vmem:[%s2920 + $0x10] sm:$0xf]
      %v3240 = vld [vmem:[%s2920 + $0x14] sm:$0x1]
      %v3241 = vld [vmem:[%s2920 + $0x18] sm:$0xf]
      %v3242 = vld [vmem:[%s2920 + $0x1c] sm:$0xf]
      %v3243 = vld [vmem:[%s2920 + $0x20] sm:$0x1]
      %v3244 = vld [vmem:[%s2920 + $0x24] sm:$0xf]
      %v3245 = vld [vmem:[%s2920 + $0x28] sm:$0xf]
      %v3246 = vld [vmem:[%s2920 + $0x2c] sm:$0x1]
      %v3247 = vld [vmem:[%s2920 + $0x30] sm:$0xf]
      %v3248 = vld [vmem:[%s2920 + $0x34] sm:$0xf]
      %v3249 = vld [vmem:[%s2920 + $0x38] sm:$0x1]
      %v3250 = vld [vmem:[%s2920 + $0x3c] sm:$0xf]
      %v3251 = vld [vmem:[%s2920 + $0x40] sm:$0xf]
      %v3252 = vld [vmem:[%s2920 + $0x44] sm:$0x1]
      %v3253 = vld [vmem:[%s2920 + $0x48] sm:$0xf]
      %v3254 = vld [vmem:[%s2920 + $0x4c] sm:$0xf]
      %v3255 = vld [vmem:[%s2920 + $0x50] sm:$0x1]
      %v3256 = vld [vmem:[%s2920 + $0x54] sm:$0xf]
      %v3257 = vld [vmem:[%s2920 + $0x58] sm:$0xf]
      %v3258 = vld [vmem:[%s2920 + $0x5c] sm:$0x1]
      %v3259 = vld [vmem:[%s2920 + $0x60] sm:$0xf]
      %v3260 = vld [vmem:[%s2920 + $0x64] sm:$0xf]
      %v3261 = vld [vmem:[%s2920 + $0x68] sm:$0x1]
      %v3262 = vld [vmem:[%s2920 + $0x6c] sm:$0xf]
      %v3263 = vld [vmem:[%s2920 + $0x70] sm:$0xf]
      %v3264 = vld [vmem:[%s2920 + $0x74] sm:$0x1]
      %v3265 = vld [vmem:[%s2920 + $0x78] sm:$0xf]
      %v3266 = vld [vmem:[%s2920 + $0x7c] sm:$0xf]
      %v3267 = vld [vmem:[%s2920 + $0x80] sm:$0x1]
      %v3268 = vld [vmem:[%s2920 + $0x84] sm:$0xf]
      %v3269 = vld [vmem:[%s2920 + $0x88] sm:$0xf]
      %v3270 = vld [vmem:[%s2920 + $0x8c] sm:$0x1]
      %v3271 = vld [vmem:[%s2920 + $0x90] sm:$0xf]
      %v3272 = vld [vmem:[%s2920 + $0x94] sm:$0xf]
      %v3273 = vld [vmem:[%s2920 + $0x98] sm:$0x1]
      %v3274 = vld [vmem:[%s2920 + $0x9c] sm:$0xf]
      %v3275 = vld [vmem:[%s2920 + $0xa0] sm:$0xf]
      %v3276 = vld [vmem:[%s2920 + $0xa4] sm:$0x1]
      %v3277 = vld [vmem:[%s2920 + $0xa8] sm:$0xf]
      %v3278 = vld [vmem:[%s2920 + $0xac] sm:$0xf]
      %v3279 = vld [vmem:[%s2920 + $0xb0] sm:$0x1]
      %v3280 = vld [vmem:[%s2920 + $0xb4] sm:$0xf]
      %v3281 = vld [vmem:[%s2920 + $0xb8] sm:$0xf]
      %v3282 = vld [vmem:[%s2920 + $0xbc] sm:$0x1]
      %v3284 = vshrl.u32 %v3235, 16
      %v3286 = vrot.slane %v3284, 4
      %v3287 = vshll.u32 %v3235, 16
      %v3289 = vrot.slane %v3287, 5
      %v3290 = vor.u32 %v3286, %v3289
      %v3291 = vrot.slane %v3290, 4
      %v3293 = vshll.u32 %v3236, 16
      %v3295 = vrot.slane %v3293, 5
      %v3296 = vsel %vm248, %v3291, %v3295
      %v3297 = vshrl.u32 %v3236, 16
      %v3299 = vrot.slane %v3297, 4
      %v3300 = vor.u32 %v3299, %v3295
      %v3301 = vrot.slane %v3300, 4
      %v3303 = vshll.u32 %v3237, 16
      %v3305 = vrot.slane %v3303, 5
      %v3306 = vsel %vm248, %v3301, %v3305
      %v3308 = vshrl.u32 %v3238, 16
      %v3310 = vrot.slane %v3308, 4
      %v3311 = vshll.u32 %v3238, 16
      %v3313 = vrot.slane %v3311, 5
      %v3314 = vor.u32 %v3310, %v3313
      %v3315 = vrot.slane %v3314, 4
      %v3317 = vshll.u32 %v3239, 16
      %v3319 = vrot.slane %v3317, 5
      %v3320 = vsel %vm248, %v3315, %v3319
      %v3321 = vshrl.u32 %v3239, 16
      %v3323 = vrot.slane %v3321, 4
      %v3324 = vor.u32 %v3323, %v3319
      %v3325 = vrot.slane %v3324, 4
      %v3327 = vshll.u32 %v3240, 16
      %v3329 = vrot.slane %v3327, 5
      %v3330 = vsel %vm248, %v3325, %v3329
      %v3332 = vshrl.u32 %v3241, 16
      %v3334 = vrot.slane %v3332, 4
      %v3335 = vshll.u32 %v3241, 16
      %v3337 = vrot.slane %v3335, 5
      %v3338 = vor.u32 %v3334, %v3337
      %v3339 = vrot.slane %v3338, 4
      %v3341 = vshll.u32 %v3242, 16
      %v3343 = vrot.slane %v3341, 5
      %v3344 = vsel %vm248, %v3339, %v3343
      %v3345 = vshrl.u32 %v3242, 16
      %v3347 = vrot.slane %v3345, 4
      %v3348 = vor.u32 %v3347, %v3343
      %v3349 = vrot.slane %v3348, 4
      %v3351 = vshll.u32 %v3243, 16
      %v3353 = vrot.slane %v3351, 5
      %v3354 = vsel %vm248, %v3349, %v3353
      %v3356 = vshrl.u32 %v3244, 16
      %v3358 = vrot.slane %v3356, 4
      %v3359 = vshll.u32 %v3244, 16
      %v3361 = vrot.slane %v3359, 5
      %v3362 = vor.u32 %v3358, %v3361
      %v3363 = vrot.slane %v3362, 4
      %v3365 = vshll.u32 %v3245, 16
      %v3367 = vrot.slane %v3365, 5
      %v3368 = vsel %vm248, %v3363, %v3367
      %v3369 = vshrl.u32 %v3245, 16
      %v3371 = vrot.slane %v3369, 4
      %v3372 = vor.u32 %v3371, %v3367
      %v3373 = vrot.slane %v3372, 4
      %v3375 = vshll.u32 %v3246, 16
      %v3377 = vrot.slane %v3375, 5
      %v3378 = vsel %vm248, %v3373, %v3377
      %v3380 = vshrl.u32 %v3247, 16
      %v3382 = vrot.slane %v3380, 4
      %v3383 = vshll.u32 %v3247, 16
      %v3385 = vrot.slane %v3383, 5
      %v3386 = vor.u32 %v3382, %v3385
      %v3387 = vrot.slane %v3386, 4
      %v3389 = vshll.u32 %v3248, 16
      %v3391 = vrot.slane %v3389, 5
      %v3392 = vsel %vm248, %v3387, %v3391
      %v3393 = vshrl.u32 %v3248, 16
      %v3395 = vrot.slane %v3393, 4
      %v3396 = vor.u32 %v3395, %v3391
      %v3397 = vrot.slane %v3396, 4
      %v3399 = vshll.u32 %v3249, 16
      %v3401 = vrot.slane %v3399, 5
      %v3402 = vsel %vm248, %v3397, %v3401
      %v3404 = vshrl.u32 %v3250, 16
      %v3406 = vrot.slane %v3404, 4
      %v3407 = vshll.u32 %v3250, 16
      %v3409 = vrot.slane %v3407, 5
      %v3410 = vor.u32 %v3406, %v3409
      %v3411 = vrot.slane %v3410, 4
      %v3413 = vshll.u32 %v3251, 16
      %v3415 = vrot.slane %v3413, 5
      %v3416 = vsel %vm248, %v3411, %v3415
      %v3417 = vshrl.u32 %v3251, 16
      %v3419 = vrot.slane %v3417, 4
      %v3420 = vor.u32 %v3419, %v3415
      %v3421 = vrot.slane %v3420, 4
      %v3423 = vshll.u32 %v3252, 16
      %v3425 = vrot.slane %v3423, 5
      %v3426 = vsel %vm248, %v3421, %v3425
      %v3428 = vshrl.u32 %v3253, 16
      %v3430 = vrot.slane %v3428, 4
      %v3431 = vshll.u32 %v3253, 16
      %v3433 = vrot.slane %v3431, 5
      %v3434 = vor.u32 %v3430, %v3433
      %v3435 = vrot.slane %v3434, 4
      %v3437 = vshll.u32 %v3254, 16
      %v3439 = vrot.slane %v3437, 5
      %v3440 = vsel %vm248, %v3435, %v3439
      %v3441 = vshrl.u32 %v3254, 16
      %v3443 = vrot.slane %v3441, 4
      %v3444 = vor.u32 %v3443, %v3439
      %v3445 = vrot.slane %v3444, 4
      %v3447 = vshll.u32 %v3255, 16
      %v3449 = vrot.slane %v3447, 5
      %v3450 = vsel %vm248, %v3445, %v3449
      %v3452 = vshrl.u32 %v3256, 16
      %v3454 = vrot.slane %v3452, 4
      %v3455 = vshll.u32 %v3256, 16
      %v3457 = vrot.slane %v3455, 5
      %v3458 = vor.u32 %v3454, %v3457
      %v3459 = vrot.slane %v3458, 4
      %v3461 = vshll.u32 %v3257, 16
      %v3463 = vrot.slane %v3461, 5
      %v3464 = vsel %vm248, %v3459, %v3463
      %v3465 = vshrl.u32 %v3257, 16
      %v3467 = vrot.slane %v3465, 4
      %v3468 = vor.u32 %v3467, %v3463
      %v3469 = vrot.slane %v3468, 4
      %v3471 = vshll.u32 %v3258, 16
      %v3473 = vrot.slane %v3471, 5
      %v3474 = vsel %vm248, %v3469, %v3473
      %v3476 = vshrl.u32 %v3259, 16
      %v3478 = vrot.slane %v3476, 4
      %v3479 = vshll.u32 %v3259, 16
      %v3481 = vrot.slane %v3479, 5
      %v3482 = vor.u32 %v3478, %v3481
      %v3483 = vrot.slane %v3482, 4
      %v3485 = vshll.u32 %v3260, 16
      %v3487 = vrot.slane %v3485, 5
      %v3488 = vsel %vm248, %v3483, %v3487
      %v3489 = vshrl.u32 %v3260, 16
      %v3491 = vrot.slane %v3489, 4
      %v3492 = vor.u32 %v3491, %v3487
      %v3493 = vrot.slane %v3492, 4
      %v3495 = vshll.u32 %v3261, 16
      %v3497 = vrot.slane %v3495, 5
      %v3498 = vsel %vm248, %v3493, %v3497
      %v3500 = vshrl.u32 %v3262, 16
      %v3502 = vrot.slane %v3500, 4
      %v3503 = vshll.u32 %v3262, 16
      %v3505 = vrot.slane %v3503, 5
      %v3506 = vor.u32 %v3502, %v3505
      %v3507 = vrot.slane %v3506, 4
      %v3509 = vshll.u32 %v3263, 16
      %v3511 = vrot.slane %v3509, 5
      %v3512 = vsel %vm248, %v3507, %v3511
      %v3513 = vshrl.u32 %v3263, 16
      %v3515 = vrot.slane %v3513, 4
      %v3516 = vor.u32 %v3515, %v3511
      %v3517 = vrot.slane %v3516, 4
      %v3519 = vshll.u32 %v3264, 16
      %v3521 = vrot.slane %v3519, 5
      %v3522 = vsel %vm248, %v3517, %v3521
      %v3524 = vshrl.u32 %v3265, 16
      %v3526 = vrot.slane %v3524, 4
      %v3527 = vshll.u32 %v3265, 16
      %v3529 = vrot.slane %v3527, 5
      %v3530 = vor.u32 %v3526, %v3529
      %v3531 = vrot.slane %v3530, 4
      %v3533 = vshll.u32 %v3266, 16
      %v3535 = vrot.slane %v3533, 5
      %v3536 = vsel %vm248, %v3531, %v3535
      %v3537 = vshrl.u32 %v3266, 16
      %v3539 = vrot.slane %v3537, 4
      %v3540 = vor.u32 %v3539, %v3535
      %v3541 = vrot.slane %v3540, 4
      %v3543 = vshll.u32 %v3267, 16
      %v3545 = vrot.slane %v3543, 5
      %v3546 = vsel %vm248, %v3541, %v3545
      %v3548 = vshrl.u32 %v3268, 16
      %v3550 = vrot.slane %v3548, 4
      %v3551 = vshll.u32 %v3268, 16
      %v3553 = vrot.slane %v3551, 5
      %v3554 = vor.u32 %v3550, %v3553
      %v3555 = vrot.slane %v3554, 4
      %v3557 = vshll.u32 %v3269, 16
      %v3559 = vrot.slane %v3557, 5
      %v3560 = vsel %vm248, %v3555, %v3559
      %v3561 = vshrl.u32 %v3269, 16
      %v3563 = vrot.slane %v3561, 4
      %v3564 = vor.u32 %v3563, %v3559
      %v3565 = vrot.slane %v3564, 4
      %v3567 = vshll.u32 %v3270, 16
      %v3569 = vrot.slane %v3567, 5
      %v3570 = vsel %vm248, %v3565, %v3569
      %v3572 = vshrl.u32 %v3271, 16
      %v3574 = vrot.slane %v3572, 4
      %v3575 = vshll.u32 %v3271, 16
      %v3577 = vrot.slane %v3575, 5
      %v3578 = vor.u32 %v3574, %v3577
      %v3579 = vrot.slane %v3578, 4
      %v3581 = vshll.u32 %v3272, 16
      %v3583 = vrot.slane %v3581, 5
      %v3584 = vsel %vm248, %v3579, %v3583
      %v3585 = vshrl.u32 %v3272, 16
      %v3587 = vrot.slane %v3585, 4
      %v3588 = vor.u32 %v3587, %v3583
      %v3589 = vrot.slane %v3588, 4
      %v3591 = vshll.u32 %v3273, 16
      %v3593 = vrot.slane %v3591, 5
      %v3594 = vsel %vm248, %v3589, %v3593
      %v3596 = vshrl.u32 %v3274, 16
      %v3598 = vrot.slane %v3596, 4
      %v3599 = vshll.u32 %v3274, 16
      %v3601 = vrot.slane %v3599, 5
      %v3602 = vor.u32 %v3598, %v3601
      %v3603 = vrot.slane %v3602, 4
      %v3605 = vshll.u32 %v3275, 16
      %v3607 = vrot.slane %v3605, 5
      %v3608 = vsel %vm248, %v3603, %v3607
      %v3609 = vshrl.u32 %v3275, 16
      %v3611 = vrot.slane %v3609, 4
      %v3612 = vor.u32 %v3611, %v3607
      %v3613 = vrot.slane %v3612, 4
      %v3615 = vshll.u32 %v3276, 16
      %v3617 = vrot.slane %v3615, 5
      %v3618 = vsel %vm248, %v3613, %v3617
      %v3620 = vshrl.u32 %v3277, 16
      %v3622 = vrot.slane %v3620, 4
      %v3623 = vshll.u32 %v3277, 16
      %v3625 = vrot.slane %v3623, 5
      %v3626 = vor.u32 %v3622, %v3625
      %v3627 = vrot.slane %v3626, 4
      %v3629 = vshll.u32 %v3278, 16
      %v3631 = vrot.slane %v3629, 5
      %v3632 = vsel %vm248, %v3627, %v3631
      %v3633 = vshrl.u32 %v3278, 16
      %v3635 = vrot.slane %v3633, 4
      %v3636 = vor.u32 %v3635, %v3631
      %v3637 = vrot.slane %v3636, 4
      %v3639 = vshll.u32 %v3279, 16
      %v3641 = vrot.slane %v3639, 5
      %v3642 = vsel %vm248, %v3637, %v3641
      %v3644 = vshrl.u32 %v3280, 16
      %v3646 = vrot.slane %v3644, 4
      %v3647 = vshll.u32 %v3280, 16
      %v3649 = vrot.slane %v3647, 5
      %v3650 = vor.u32 %v3646, %v3649
      %v3651 = vrot.slane %v3650, 4
      %v3653 = vshll.u32 %v3281, 16
      %v3655 = vrot.slane %v3653, 5
      %v3656 = vsel %vm248, %v3651, %v3655
      %v3657 = vshrl.u32 %v3281, 16
      %v3659 = vrot.slane %v3657, 4
      %v3660 = vor.u32 %v3659, %v3655
      %v3661 = vrot.slane %v3660, 4
      %v3663 = vshll.u32 %v3282, 16
      %v3665 = vrot.slane %v3663, 5
      %v3666 = vsel %vm248, %v3661, %v3665
      %s3667 = scalar_lea.vmem %s1, 448
      %v3668 = vld [vmem:[%s3667] sm:$0xf]
      %v3669 = vld [vmem:[%s3667 + $0x4] sm:$0xf]
      %v3670 = vld [vmem:[%s3667 + $0x8] sm:$0xf]
      %v3671 = vld [vmem:[%s3667 + $0xc] sm:$0xf]
      %v3672 = vld [vmem:[%s3667 + $0x10] sm:$0xf]
      %v3673 = vld [vmem:[%s3667 + $0x14] sm:$0xf]
      %v3674 = vld [vmem:[%s3667 + $0x18] sm:$0xf]
      %v3675 = vld [vmem:[%s3667 + $0x1c] sm:$0xf]
      %v3676 = vld [vmem:[%s3667 + $0x20] sm:$0xf]
      %v3677 = vld [vmem:[%s3667 + $0x24] sm:$0xf]
      %v3678 = vld [vmem:[%s3667 + $0x28] sm:$0xf]
      %v3679 = vld [vmem:[%s3667 + $0x2c] sm:$0xf]
      %v3680 = vld [vmem:[%s3667 + $0x30] sm:$0xf]
      %v3681 = vld [vmem:[%s3667 + $0x34] sm:$0xf]
      %v3682 = vld [vmem:[%s3667 + $0x38] sm:$0xf]
      %v3683 = vld [vmem:[%s3667 + $0x3c] sm:$0xf]
      %v3684 = vunpack.c.l.b16 %v3296
      %v3685 = vunpack.c.l.b16 %v3306
      %v3686 = vunpack.c.l.b16 %v3320
      %v3687 = vunpack.c.l.b16 %v3330
      %v3688 = vunpack.c.l.b16 %v3344
      %v3689 = vunpack.c.l.b16 %v3354
      %v3690 = vunpack.c.l.b16 %v3368
      %v3691 = vunpack.c.l.b16 %v3378
      %v3692 = vunpack.c.l.b16 %v3392
      %v3693 = vunpack.c.l.b16 %v3402
      %v3694 = vunpack.c.l.b16 %v3416
      %v3695 = vunpack.c.l.b16 %v3426
      %v3696 = vunpack.c.l.b16 %v3440
      %v3697 = vunpack.c.l.b16 %v3450
      %v3698 = vunpack.c.l.b16 %v3464
      %v3699 = vunpack.c.l.b16 %v3474
      %v3700 = vunpack.c.l.b16 %v3488
      %v3701 = vunpack.c.l.b16 %v3498
      %v3702 = vunpack.c.l.b16 %v3512
      %v3703 = vunpack.c.l.b16 %v3522
      %v3704 = vunpack.c.l.b16 %v3536
      %v3705 = vunpack.c.l.b16 %v3546
      %v3706 = vunpack.c.l.b16 %v3560
      %v3707 = vunpack.c.l.b16 %v3570
      %v3708 = vunpack.c.l.b16 %v3584
      %v3709 = vunpack.c.l.b16 %v3594
      %v3710 = vunpack.c.l.b16 %v3608
      %v3711 = vunpack.c.l.b16 %v3618
      %v3712 = vunpack.c.l.b16 %v3632
      %v3713 = vunpack.c.l.b16 %v3642
      %v3714 = vunpack.c.l.b16 %v3656
      %v3715 = vunpack.c.l.b16 %v3666
      %v3716 = vpack.c.b16 %v3685, %v3684
      %v3717 = vpack.c.b16 %v3687, %v3686
      %v3718 = vpack.c.b16 %v3689, %v3688
      %v3719 = vpack.c.b16 %v3691, %v3690
      %v3720 = vpack.c.b16 %v3693, %v3692
      %v3721 = vpack.c.b16 %v3695, %v3694
      %v3722 = vpack.c.b16 %v3697, %v3696
      %v3723 = vpack.c.b16 %v3699, %v3698
      %v3724 = vpack.c.b16 %v3701, %v3700
      %v3725 = vpack.c.b16 %v3703, %v3702
      %v3726 = vpack.c.b16 %v3705, %v3704
      %v3727 = vpack.c.b16 %v3707, %v3706
      %v3728 = vpack.c.b16 %v3709, %v3708
      %v3729 = vpack.c.b16 %v3711, %v3710
      %v3730 = vpack.c.b16 %v3713, %v3712
      %v3731 = vpack.c.b16 %v3715, %v3714
      %v3764 = vunpack.c.l.b16 %v3668
      %v3765 = vunpack.c.l.b16 %v3669
      %v3766 = vunpack.c.l.b16 %v3670
      %v3767 = vunpack.c.l.b16 %v3671
      %v3768 = vunpack.c.l.b16 %v3672
      %v3769 = vunpack.c.l.b16 %v3673
      %v3770 = vunpack.c.l.b16 %v3674
      %v3771 = vunpack.c.l.b16 %v3675
      %v3772 = vunpack.c.l.b16 %v3676
      %v3773 = vunpack.c.l.b16 %v3677
      %v3774 = vunpack.c.l.b16 %v3678
      %v3775 = vunpack.c.l.b16 %v3679
      %v3776 = vunpack.c.l.b16 %v3680
      %v3777 = vunpack.c.l.b16 %v3681
      %v3778 = vunpack.c.l.b16 %v3682
      %v3779 = vunpack.c.l.b16 %v3683
      %v3780 = vpack.c.b16 %v3765, %v3764
      %v3781 = vpack.c.b16 %v3767, %v3766
      %v3782 = vpack.c.b16 %v3769, %v3768
      %v3783 = vpack.c.b16 %v3771, %v3770
      %v3784 = vpack.c.b16 %v3773, %v3772
      %v3785 = vpack.c.b16 %v3775, %v3774
      %v3786 = vpack.c.b16 %v3777, %v3776
      %v3787 = vpack.c.b16 %v3779, %v3778
      %3796 = vmatpush.bf16.msra.mxu0 %v3787
      %3797 = vmatpush.bf16.msra.mxu0 %v3786
      %3798 = vmatpush.bf16.msra.mxu0 %v3785
      %3799 = vmatpush.bf16.msra.mxu0 %v3784
      %3800 = vmatpush.bf16.msra.mxu0 %v3783
      %3801 = vmatpush.bf16.msra.mxu0 %v3782
      %3802 = vmatpush.bf16.msra.mxu0 %v3781
      %3803 = vmatpush.bf16.msra.mxu0 %v3780
      %3804 = vmatmul.bf16.gmra.mxu0 %v3716
      %v3805 = vpop.f32.mrf.mxu0
      %v3806 = vadd.f32 0.0, %v3805
      %v3807 = vpop.f32.mrf.mxu0
      %v3808 = vadd.f32 0.0, %v3807
      %3809 = vmatmul.bf16.gmra.mxu0 %v3717
      %v3810 = vpop.f32.mrf.mxu0
      %v3811 = vadd.f32 0.0, %v3810
      %v3812 = vpop.f32.mrf.mxu0
      %v3813 = vadd.f32 0.0, %v3812
      %3814 = vmatmul.bf16.gmra.mxu0 %v3718
      %v3815 = vpop.f32.mrf.mxu0
      %v3816 = vadd.f32 0.0, %v3815
      %v3817 = vpop.f32.mrf.mxu0
      %v3818 = vadd.f32 0.0, %v3817
      %3819 = vmatmul.bf16.gmra.mxu0 %v3719
      %v3820 = vpop.f32.mrf.mxu0
      %v3821 = vadd.f32 0.0, %v3820
      %v3822 = vpop.f32.mrf.mxu0
      %v3823 = vadd.f32 0.0, %v3822
      %3824 = vmatmul.bf16.gmra.mxu0 %v3720
      %v3825 = vpop.f32.mrf.mxu0
      %v3826 = vadd.f32 0.0, %v3825
      %v3827 = vpop.f32.mrf.mxu0
      %v3828 = vadd.f32 0.0, %v3827
      %3829 = vmatmul.bf16.gmra.mxu0 %v3721
      %v3830 = vpop.f32.mrf.mxu0
      %v3831 = vadd.f32 0.0, %v3830
      %v3832 = vpop.f32.mrf.mxu0
      %v3833 = vadd.f32 0.0, %v3832
      %3834 = vmatmul.bf16.gmra.mxu0 %v3722
      %v3835 = vpop.f32.mrf.mxu0
      %v3836 = vadd.f32 0.0, %v3835
      %v3837 = vpop.f32.mrf.mxu0
      %v3838 = vadd.f32 0.0, %v3837
      %3839 = vmatmul.bf16.gmra.mxu0 %v3723
      %v3840 = vpop.f32.mrf.mxu0
      %v3841 = vadd.f32 0.0, %v3840
      %v3842 = vpop.f32.mrf.mxu0
      %v3843 = vadd.f32 0.0, %v3842
      %3844 = vmatmul.bf16.gmra.mxu0 %v3724
      %v3845 = vpop.f32.mrf.mxu0
      %v3846 = vadd.f32 0.0, %v3845
      %v3847 = vpop.f32.mrf.mxu0
      %v3848 = vadd.f32 0.0, %v3847
      %3849 = vmatmul.bf16.gmra.mxu0 %v3725
      %v3850 = vpop.f32.mrf.mxu0
      %v3851 = vadd.f32 0.0, %v3850
      %v3852 = vpop.f32.mrf.mxu0
      %v3853 = vadd.f32 0.0, %v3852
      %3854 = vmatmul.bf16.gmra.mxu0 %v3726
      %v3855 = vpop.f32.mrf.mxu0
      %v3856 = vadd.f32 0.0, %v3855
      %v3857 = vpop.f32.mrf.mxu0
      %v3858 = vadd.f32 0.0, %v3857
      %3859 = vmatmul.bf16.gmra.mxu0 %v3727
      %v3860 = vpop.f32.mrf.mxu0
      %v3861 = vadd.f32 0.0, %v3860
      %v3862 = vpop.f32.mrf.mxu0
      %v3863 = vadd.f32 0.0, %v3862
      %3864 = vmatmul.bf16.gmra.mxu0 %v3728
      %v3865 = vpop.f32.mrf.mxu0
      %v3866 = vadd.f32 0.0, %v3865
      %v3867 = vpop.f32.mrf.mxu0
      %v3868 = vadd.f32 0.0, %v3867
      %3869 = vmatmul.bf16.gmra.mxu0 %v3729
      %v3870 = vpop.f32.mrf.mxu0
      %v3871 = vadd.f32 0.0, %v3870
      %v3872 = vpop.f32.mrf.mxu0
      %v3873 = vadd.f32 0.0, %v3872
      %3874 = vmatmul.bf16.gmra.mxu0 %v3730
      %v3875 = vpop.f32.mrf.mxu0
      %v3876 = vadd.f32 0.0, %v3875
      %v3877 = vpop.f32.mrf.mxu0
      %v3878 = vadd.f32 0.0, %v3877
      %3879 = vmatmul.bf16.gmra.mxu0 %v3731
      %v3880 = vpop.f32.mrf.mxu0
      %v3881 = vadd.f32 0.0, %v3880
      %v3882 = vpop.f32.mrf.mxu0
      %v3883 = vadd.f32 0.0, %v3882
      %3884 = vdwg.mxu0
      %v3885 = vadd.f32 %v3203, %v3806
      %v3886 = vadd.f32 %v3204, %v3808
      %v3887 = vadd.f32 %v3205, %v3811
      %v3888 = vadd.f32 %v3206, %v3813
      %v3889 = vadd.f32 %v3207, %v3816
      %v3890 = vadd.f32 %v3208, %v3818
      %v3891 = vadd.f32 %v3209, %v3821
      %v3892 = vadd.f32 %v3210, %v3823
      %v3893 = vadd.f32 %v3211, %v3826
      %v3894 = vadd.f32 %v3212, %v3828
      %v3895 = vadd.f32 %v3213, %v3831
      %v3896 = vadd.f32 %v3214, %v3833
      %v3897 = vadd.f32 %v3215, %v3836
      %v3898 = vadd.f32 %v3216, %v3838
      %v3899 = vadd.f32 %v3217, %v3841
      %v3900 = vadd.f32 %v3218, %v3843
      %v3901 = vadd.f32 %v3219, %v3846
      %v3902 = vadd.f32 %v3220, %v3848
      %v3903 = vadd.f32 %v3221, %v3851
      %v3904 = vadd.f32 %v3222, %v3853
      %v3905 = vadd.f32 %v3223, %v3856
      %v3906 = vadd.f32 %v3224, %v3858
      %v3907 = vadd.f32 %v3225, %v3861
      %v3908 = vadd.f32 %v3226, %v3863
      %v3909 = vadd.f32 %v3227, %v3866
      %v3910 = vadd.f32 %v3228, %v3868
      %v3911 = vadd.f32 %v3229, %v3871
      %v3912 = vadd.f32 %v3230, %v3873
      %v3913 = vadd.f32 %v3231, %v3876
      %v3914 = vadd.f32 %v3232, %v3878
      %v3915 = vadd.f32 %v3233, %v3881
      %v3916 = vadd.f32 %v3234, %v3883
      %v3917 = vld [vmem:[%s2920] sm:$0xe]
      %v3918 = vld [vmem:[%s2920 + $0xc] sm:$0xe]
      %v3919 = vld [vmem:[%s2920 + $0x18] sm:$0xe]
      %v3920 = vld [vmem:[%s2920 + $0x24] sm:$0xe]
      %v3921 = vld [vmem:[%s2920 + $0x30] sm:$0xe]
      %v3922 = vld [vmem:[%s2920 + $0x3c] sm:$0xe]
      %v3923 = vld [vmem:[%s2920 + $0x48] sm:$0xe]
      %v3924 = vld [vmem:[%s2920 + $0x54] sm:$0xe]
      %v3925 = vld [vmem:[%s2920 + $0x60] sm:$0xe]
      %v3926 = vld [vmem:[%s2920 + $0x6c] sm:$0xe]
      %v3927 = vld [vmem:[%s2920 + $0x78] sm:$0xe]
      %v3928 = vld [vmem:[%s2920 + $0x84] sm:$0xe]
      %v3929 = vld [vmem:[%s2920 + $0x90] sm:$0xe]
      %v3930 = vld [vmem:[%s2920 + $0x9c] sm:$0xe]
      %v3931 = vld [vmem:[%s2920 + $0xa8] sm:$0xe]
      %v3932 = vld [vmem:[%s2920 + $0xb4] sm:$0xe]
      %v3981 = vrot.slane %v3917, 5
      %v3982 = vrot.slane %v3981, 4
      %v3983 = vrot.slane %v3236, 5
      %v3984 = vsel %vm1134, %v3982, %v3983
      %v3985 = vrot.slane %v3983, 4
      %v3986 = vrot.slane %v3237, 5
      %v3987 = vsel %vm1134, %v3985, %v3986
      %v3988 = vrot.slane %v3918, 5
      %v3989 = vrot.slane %v3988, 4
      %v3990 = vrot.slane %v3239, 5
      %v3991 = vsel %vm1134, %v3989, %v3990
      %v3992 = vrot.slane %v3990, 4
      %v3993 = vrot.slane %v3240, 5
      %v3994 = vsel %vm1134, %v3992, %v3993
      %v3995 = vrot.slane %v3919, 5
      %v3996 = vrot.slane %v3995, 4
      %v3997 = vrot.slane %v3242, 5
      %v3998 = vsel %vm1134, %v3996, %v3997
      %v3999 = vrot.slane %v3997, 4
      %v4000 = vrot.slane %v3243, 5
      %v4001 = vsel %vm1134, %v3999, %v4000
      %v4002 = vrot.slane %v3920, 5
      %v4003 = vrot.slane %v4002, 4
      %v4004 = vrot.slane %v3245, 5
      %v4005 = vsel %vm1134, %v4003, %v4004
      %v4006 = vrot.slane %v4004, 4
      %v4007 = vrot.slane %v3246, 5
      %v4008 = vsel %vm1134, %v4006, %v4007
      %v4009 = vrot.slane %v3921, 5
      %v4010 = vrot.slane %v4009, 4
      %v4011 = vrot.slane %v3248, 5
      %v4012 = vsel %vm1134, %v4010, %v4011
      %v4013 = vrot.slane %v4011, 4
      %v4014 = vrot.slane %v3249, 5
      %v4015 = vsel %vm1134, %v4013, %v4014
      %v4016 = vrot.slane %v3922, 5
      %v4017 = vrot.slane %v4016, 4
      %v4018 = vrot.slane %v3251, 5
      %v4019 = vsel %vm1134, %v4017, %v4018
      %v4020 = vrot.slane %v4018, 4
      %v4021 = vrot.slane %v3252, 5
      %v4022 = vsel %vm1134, %v4020, %v4021
      %v4023 = vrot.slane %v3923, 5
      %v4024 = vrot.slane %v4023, 4
      %v4025 = vrot.slane %v3254, 5
      %v4026 = vsel %vm1134, %v4024, %v4025
      %v4027 = vrot.slane %v4025, 4
      %v4028 = vrot.slane %v3255, 5
      %v4029 = vsel %vm1134, %v4027, %v4028
      %v4030 = vrot.slane %v3924, 5
      %v4031 = vrot.slane %v4030, 4
      %v4032 = vrot.slane %v3257, 5
      %v4033 = vsel %vm1134, %v4031, %v4032
      %v4034 = vrot.slane %v4032, 4
      %v4035 = vrot.slane %v3258, 5
      %v4036 = vsel %vm1134, %v4034, %v4035
      %v4037 = vrot.slane %v3925, 5
      %v4038 = vrot.slane %v4037, 4
      %v4039 = vrot.slane %v3260, 5
      %v4040 = vsel %vm1134, %v4038, %v4039
      %v4041 = vrot.slane %v4039, 4
      %v4042 = vrot.slane %v3261, 5
      %v4043 = vsel %vm1134, %v4041, %v4042
      %v4044 = vrot.slane %v3926, 5
      %v4045 = vrot.slane %v4044, 4
      %v4046 = vrot.slane %v3263, 5
      %v4047 = vsel %vm1134, %v4045, %v4046
      %v4048 = vrot.slane %v4046, 4
      %v4049 = vrot.slane %v3264, 5
      %v4050 = vsel %vm1134, %v4048, %v4049
      %v4051 = vrot.slane %v3927, 5
      %v4052 = vrot.slane %v4051, 4
      %v4053 = vrot.slane %v3266, 5
      %v4054 = vsel %vm1134, %v4052, %v4053
      %v4055 = vrot.slane %v4053, 4
      %v4056 = vrot.slane %v3267, 5
      %v4057 = vsel %vm1134, %v4055, %v4056
      %v4058 = vrot.slane %v3928, 5
      %v4059 = vrot.slane %v4058, 4
      %v4060 = vrot.slane %v3269, 5
      %v4061 = vsel %vm1134, %v4059, %v4060
      %v4062 = vrot.slane %v4060, 4
      %v4063 = vrot.slane %v3270, 5
      %v4064 = vsel %vm1134, %v4062, %v4063
      %v4065 = vrot.slane %v3929, 5
      %v4066 = vrot.slane %v4065, 4
      %v4067 = vrot.slane %v3272, 5
      %v4068 = vsel %vm1134, %v4066, %v4067
      %v4069 = vrot.slane %v4067, 4
      %v4070 = vrot.slane %v3273, 5
      %v4071 = vsel %vm1134, %v4069, %v4070
      %v4072 = vrot.slane %v3930, 5
      %v4073 = vrot.slane %v4072, 4
      %v4074 = vrot.slane %v3275, 5
      %v4075 = vsel %vm1134, %v4073, %v4074
      %v4076 = vrot.slane %v4074, 4
      %v4077 = vrot.slane %v3276, 5
      %v4078 = vsel %vm1134, %v4076, %v4077
      %v4079 = vrot.slane %v3931, 5
      %v4080 = vrot.slane %v4079, 4
      %v4081 = vrot.slane %v3278, 5
      %v4082 = vsel %vm1134, %v4080, %v4081
      %v4083 = vrot.slane %v4081, 4
      %v4084 = vrot.slane %v3279, 5
      %v4085 = vsel %vm1134, %v4083, %v4084
      %v4086 = vrot.slane %v3932, 5
      %v4087 = vrot.slane %v4086, 4
      %v4088 = vrot.slane %v3281, 5
      %v4089 = vsel %vm1134, %v4087, %v4088
      %v4090 = vrot.slane %v4088, 4
      %v4091 = vrot.slane %v3282, 5
      %v4092 = vsel %vm1134, %v4090, %v4091
      %s4093 = scalar_lea.vmem %s1, 512
      %v4094 = vld [vmem:[%s4093] sm:$0xf]
      %v4095 = vld [vmem:[%s4093 + $0x4] sm:$0xf]
      %v4096 = vld [vmem:[%s4093 + $0x8] sm:$0xf]
      %v4097 = vld [vmem:[%s4093 + $0xc] sm:$0xf]
      %v4098 = vld [vmem:[%s4093 + $0x10] sm:$0xf]
      %v4099 = vld [vmem:[%s4093 + $0x14] sm:$0xf]
      %v4100 = vld [vmem:[%s4093 + $0x18] sm:$0xf]
      %v4101 = vld [vmem:[%s4093 + $0x1c] sm:$0xf]
      %v4102 = vld [vmem:[%s4093 + $0x20] sm:$0xf]
      %v4103 = vld [vmem:[%s4093 + $0x24] sm:$0xf]
      %v4104 = vld [vmem:[%s4093 + $0x28] sm:$0xf]
      %v4105 = vld [vmem:[%s4093 + $0x2c] sm:$0xf]
      %v4106 = vld [vmem:[%s4093 + $0x30] sm:$0xf]
      %v4107 = vld [vmem:[%s4093 + $0x34] sm:$0xf]
      %v4108 = vld [vmem:[%s4093 + $0x38] sm:$0xf]
      %v4109 = vld [vmem:[%s4093 + $0x3c] sm:$0xf]
      %v4110 = vunpack.c.l.b16 %v3984
      %v4111 = vunpack.c.l.b16 %v3987
      %v4112 = vunpack.c.l.b16 %v3991
      %v4113 = vunpack.c.l.b16 %v3994
      %v4114 = vunpack.c.l.b16 %v3998
      %v4115 = vunpack.c.l.b16 %v4001
      %v4116 = vunpack.c.l.b16 %v4005
      %v4117 = vunpack.c.l.b16 %v4008
      %v4118 = vunpack.c.l.b16 %v4012
      %v4119 = vunpack.c.l.b16 %v4015
      %v4120 = vunpack.c.l.b16 %v4019
      %v4121 = vunpack.c.l.b16 %v4022
      %v4122 = vunpack.c.l.b16 %v4026
      %v4123 = vunpack.c.l.b16 %v4029
      %v4124 = vunpack.c.l.b16 %v4033
      %v4125 = vunpack.c.l.b16 %v4036
      %v4126 = vunpack.c.l.b16 %v4040
      %v4127 = vunpack.c.l.b16 %v4043
      %v4128 = vunpack.c.l.b16 %v4047
      %v4129 = vunpack.c.l.b16 %v4050
      %v4130 = vunpack.c.l.b16 %v4054
      %v4131 = vunpack.c.l.b16 %v4057
      %v4132 = vunpack.c.l.b16 %v4061
      %v4133 = vunpack.c.l.b16 %v4064
      %v4134 = vunpack.c.l.b16 %v4068
      %v4135 = vunpack.c.l.b16 %v4071
      %v4136 = vunpack.c.l.b16 %v4075
      %v4137 = vunpack.c.l.b16 %v4078
      %v4138 = vunpack.c.l.b16 %v4082
      %v4139 = vunpack.c.l.b16 %v4085
      %v4140 = vunpack.c.l.b16 %v4089
      %v4141 = vunpack.c.l.b16 %v4092
      %v4142 = vpack.c.b16 %v4111, %v4110
      %v4143 = vpack.c.b16 %v4113, %v4112
      %v4144 = vpack.c.b16 %v4115, %v4114
      %v4145 = vpack.c.b16 %v4117, %v4116
      %v4146 = vpack.c.b16 %v4119, %v4118
      %v4147 = vpack.c.b16 %v4121, %v4120
      %v4148 = vpack.c.b16 %v4123, %v4122
      %v4149 = vpack.c.b16 %v4125, %v4124
      %v4150 = vpack.c.b16 %v4127, %v4126
      %v4151 = vpack.c.b16 %v4129, %v4128
      %v4152 = vpack.c.b16 %v4131, %v4130
      %v4153 = vpack.c.b16 %v4133, %v4132
      %v4154 = vpack.c.b16 %v4135, %v4134
      %v4155 = vpack.c.b16 %v4137, %v4136
      %v4156 = vpack.c.b16 %v4139, %v4138
      %v4157 = vpack.c.b16 %v4141, %v4140
      %v4190 = vunpack.c.l.b16 %v4094
      %v4191 = vunpack.c.l.b16 %v4095
      %v4192 = vunpack.c.l.b16 %v4096
      %v4193 = vunpack.c.l.b16 %v4097
      %v4194 = vunpack.c.l.b16 %v4098
      %v4195 = vunpack.c.l.b16 %v4099
      %v4196 = vunpack.c.l.b16 %v4100
      %v4197 = vunpack.c.l.b16 %v4101
      %v4198 = vunpack.c.l.b16 %v4102
      %v4199 = vunpack.c.l.b16 %v4103
      %v4200 = vunpack.c.l.b16 %v4104
      %v4201 = vunpack.c.l.b16 %v4105
      %v4202 = vunpack.c.l.b16 %v4106
      %v4203 = vunpack.c.l.b16 %v4107
      %v4204 = vunpack.c.l.b16 %v4108
      %v4205 = vunpack.c.l.b16 %v4109
      %v4206 = vpack.c.b16 %v4191, %v4190
      %v4207 = vpack.c.b16 %v4193, %v4192
      %v4208 = vpack.c.b16 %v4195, %v4194
      %v4209 = vpack.c.b16 %v4197, %v4196
      %v4210 = vpack.c.b16 %v4199, %v4198
      %v4211 = vpack.c.b16 %v4201, %v4200
      %v4212 = vpack.c.b16 %v4203, %v4202
      %v4213 = vpack.c.b16 %v4205, %v4204
      %4222 = vmatpush.bf16.msra.mxu0 %v4213
      %4223 = vmatpush.bf16.msra.mxu0 %v4212
      %4224 = vmatpush.bf16.msra.mxu0 %v4211
      %4225 = vmatpush.bf16.msra.mxu0 %v4210
      %4226 = vmatpush.bf16.msra.mxu0 %v4209
      %4227 = vmatpush.bf16.msra.mxu0 %v4208
      %4228 = vmatpush.bf16.msra.mxu0 %v4207
      %4229 = vmatpush.bf16.msra.mxu0 %v4206
      %4230 = vmatmul.bf16.gmra.mxu0 %v4142
      %v4231 = vpop.f32.mrf.mxu0
      %v4232 = vadd.f32 0.0, %v4231
      %v4233 = vpop.f32.mrf.mxu0
      %v4234 = vadd.f32 0.0, %v4233
      %4235 = vmatmul.bf16.gmra.mxu0 %v4143
      %v4236 = vpop.f32.mrf.mxu0
      %v4237 = vadd.f32 0.0, %v4236
      %v4238 = vpop.f32.mrf.mxu0
      %v4239 = vadd.f32 0.0, %v4238
      %4240 = vmatmul.bf16.gmra.mxu0 %v4144
      %v4241 = vpop.f32.mrf.mxu0
      %v4242 = vadd.f32 0.0, %v4241
      %v4243 = vpop.f32.mrf.mxu0
      %v4244 = vadd.f32 0.0, %v4243
      %4245 = vmatmul.bf16.gmra.mxu0 %v4145
      %v4246 = vpop.f32.mrf.mxu0
      %v4247 = vadd.f32 0.0, %v4246
      %v4248 = vpop.f32.mrf.mxu0
      %v4249 = vadd.f32 0.0, %v4248
      %4250 = vmatmul.bf16.gmra.mxu0 %v4146
      %v4251 = vpop.f32.mrf.mxu0
      %v4252 = vadd.f32 0.0, %v4251
      %v4253 = vpop.f32.mrf.mxu0
      %v4254 = vadd.f32 0.0, %v4253
      %4255 = vmatmul.bf16.gmra.mxu0 %v4147
      %v4256 = vpop.f32.mrf.mxu0
      %v4257 = vadd.f32 0.0, %v4256
      %v4258 = vpop.f32.mrf.mxu0
      %v4259 = vadd.f32 0.0, %v4258
      %4260 = vmatmul.bf16.gmra.mxu0 %v4148
      %v4261 = vpop.f32.mrf.mxu0
      %v4262 = vadd.f32 0.0, %v4261
      %v4263 = vpop.f32.mrf.mxu0
      %v4264 = vadd.f32 0.0, %v4263
      %4265 = vmatmul.bf16.gmra.mxu0 %v4149
      %v4266 = vpop.f32.mrf.mxu0
      %v4267 = vadd.f32 0.0, %v4266
      %v4268 = vpop.f32.mrf.mxu0
      %v4269 = vadd.f32 0.0, %v4268
      %4270 = vmatmul.bf16.gmra.mxu0 %v4150
      %v4271 = vpop.f32.mrf.mxu0
      %v4272 = vadd.f32 0.0, %v4271
      %v4273 = vpop.f32.mrf.mxu0
      %v4274 = vadd.f32 0.0, %v4273
      %4275 = vmatmul.bf16.gmra.mxu0 %v4151
      %v4276 = vpop.f32.mrf.mxu0
      %v4277 = vadd.f32 0.0, %v4276
      %v4278 = vpop.f32.mrf.mxu0
      %v4279 = vadd.f32 0.0, %v4278
      %4280 = vmatmul.bf16.gmra.mxu0 %v4152
      %v4281 = vpop.f32.mrf.mxu0
      %v4282 = vadd.f32 0.0, %v4281
      %v4283 = vpop.f32.mrf.mxu0
      %v4284 = vadd.f32 0.0, %v4283
      %4285 = vmatmul.bf16.gmra.mxu0 %v4153
      %v4286 = vpop.f32.mrf.mxu0
      %v4287 = vadd.f32 0.0, %v4286
      %v4288 = vpop.f32.mrf.mxu0
      %v4289 = vadd.f32 0.0, %v4288
      %4290 = vmatmul.bf16.gmra.mxu0 %v4154
      %v4291 = vpop.f32.mrf.mxu0
      %v4292 = vadd.f32 0.0, %v4291
      %v4293 = vpop.f32.mrf.mxu0
      %v4294 = vadd.f32 0.0, %v4293
      %4295 = vmatmul.bf16.gmra.mxu0 %v4155
      %v4296 = vpop.f32.mrf.mxu0
      %v4297 = vadd.f32 0.0, %v4296
      %v4298 = vpop.f32.mrf.mxu0
      %v4299 = vadd.f32 0.0, %v4298
      %4300 = vmatmul.bf16.gmra.mxu0 %v4156
      %v4301 = vpop.f32.mrf.mxu0
      %v4302 = vadd.f32 0.0, %v4301
      %v4303 = vpop.f32.mrf.mxu0
      %v4304 = vadd.f32 0.0, %v4303
      %4305 = vmatmul.bf16.gmra.mxu0 %v4157
      %v4306 = vpop.f32.mrf.mxu0
      %v4307 = vadd.f32 0.0, %v4306
      %v4308 = vpop.f32.mrf.mxu0
      %v4309 = vadd.f32 0.0, %v4308
      %4310 = vdwg.mxu0
      %v4311 = vadd.f32 %v3885, %v4232
      %v4312 = vadd.f32 %v3886, %v4234
      %v4313 = vadd.f32 %v3887, %v4237
      %v4314 = vadd.f32 %v3888, %v4239
      %v4315 = vadd.f32 %v3889, %v4242
      %v4316 = vadd.f32 %v3890, %v4244
      %v4317 = vadd.f32 %v3891, %v4247
      %v4318 = vadd.f32 %v3892, %v4249
      %v4319 = vadd.f32 %v3893, %v4252
      %v4320 = vadd.f32 %v3894, %v4254
      %v4321 = vadd.f32 %v3895, %v4257
      %v4322 = vadd.f32 %v3896, %v4259
      %v4323 = vadd.f32 %v3897, %v4262
      %v4324 = vadd.f32 %v3898, %v4264
      %v4325 = vadd.f32 %v3899, %v4267
      %v4326 = vadd.f32 %v3900, %v4269
      %v4327 = vadd.f32 %v3901, %v4272
      %v4328 = vadd.f32 %v3902, %v4274
      %v4329 = vadd.f32 %v3903, %v4277
      %v4330 = vadd.f32 %v3904, %v4279
      %v4331 = vadd.f32 %v3905, %v4282
      %v4332 = vadd.f32 %v3906, %v4284
      %v4333 = vadd.f32 %v3907, %v4287
      %v4334 = vadd.f32 %v3908, %v4289
      %v4335 = vadd.f32 %v3909, %v4292
      %v4336 = vadd.f32 %v3910, %v4294
      %v4337 = vadd.f32 %v3911, %v4297
      %v4338 = vadd.f32 %v3912, %v4299
      %v4339 = vadd.f32 %v3913, %v4302
      %v4340 = vadd.f32 %v3914, %v4304
      %v4341 = vadd.f32 %v3915, %v4307
      %v4342 = vadd.f32 %v3916, %v4309
      %v4343 = vadd.f32 %v4311, %v4312
      %v4344 = vadd.f32 %v4343, %v4313
      %v4345 = vadd.f32 %v4344, %v4314
      %v4346 = vadd.f32 %v4345, %v4315
      %v4347 = vadd.f32 %v4346, %v4316
      %v4348 = vadd.f32 %v4347, %v4317
      %v4349 = vadd.f32 %v4348, %v4318
      %v4350 = vadd.f32 %v4349, %v4319
      %v4351 = vadd.f32 %v4350, %v4320
      %v4352 = vadd.f32 %v4351, %v4321
      %v4353 = vadd.f32 %v4352, %v4322
      %v4354 = vadd.f32 %v4353, %v4323
      %v4355 = vadd.f32 %v4354, %v4324
      %v4356 = vadd.f32 %v4355, %v4325
      %v4357 = vadd.f32 %v4356, %v4326
      %v4358 = vadd.f32 %v4357, %v4327
      %v4359 = vadd.f32 %v4358, %v4328
      %v4360 = vadd.f32 %v4359, %v4329
      %v4361 = vadd.f32 %v4360, %v4330
      %v4362 = vadd.f32 %v4361, %v4331
      %v4363 = vadd.f32 %v4362, %v4332
      %v4364 = vadd.f32 %v4363, %v4333
      %v4365 = vadd.f32 %v4364, %v4334
      %v4366 = vadd.f32 %v4365, %v4335
      %v4367 = vadd.f32 %v4366, %v4336
      %v4368 = vadd.f32 %v4367, %v4337
      %v4369 = vadd.f32 %v4368, %v4338
      %v4370 = vadd.f32 %v4369, %v4339
      %v4371 = vadd.f32 %v4370, %v4340
      %v4372 = vadd.f32 %v4371, %v4341
      %v4373 = vadd.f32 %v4372, %v4342
      %v4374 = vrot.slane %v4373, 4
      %v4375 = vadd.f32 %v4373, %v4374
      %v4376 = vrot.slane %v4375, 2
      %v4377 = vadd.f32 %v4375, %v4376
      %v4378 = vrot.slane %v4377, 1
      %v4379 = vadd.f32 %v4377, %v4378
      %v4380 = vadd.f32 %v4379, 0.0
      %v4381 = vmul.f32 %v4311, %v4311
      %v4382 = vmul.f32 %v4312, %v4312
      %v4383 = vmul.f32 %v4313, %v4313
      %v4384 = vmul.f32 %v4314, %v4314
      %v4385 = vmul.f32 %v4315, %v4315
      %v4386 = vmul.f32 %v4316, %v4316
      %v4387 = vmul.f32 %v4317, %v4317
      %v4388 = vmul.f32 %v4318, %v4318
      %v4389 = vmul.f32 %v4319, %v4319
      %v4390 = vmul.f32 %v4320, %v4320
      %v4391 = vmul.f32 %v4321, %v4321
      %v4392 = vmul.f32 %v4322, %v4322
      %v4393 = vmul.f32 %v4323, %v4323
      %v4394 = vmul.f32 %v4324, %v4324
      %v4395 = vmul.f32 %v4325, %v4325
      %v4396 = vmul.f32 %v4326, %v4326
      %v4397 = vmul.f32 %v4327, %v4327
      %v4398 = vmul.f32 %v4328, %v4328
      %v4399 = vmul.f32 %v4329, %v4329
      %v4400 = vmul.f32 %v4330, %v4330
      %v4401 = vmul.f32 %v4331, %v4331
      %v4402 = vmul.f32 %v4332, %v4332
      %v4403 = vmul.f32 %v4333, %v4333
      %v4404 = vmul.f32 %v4334, %v4334
      %v4405 = vmul.f32 %v4335, %v4335
      %v4406 = vmul.f32 %v4336, %v4336
      %v4407 = vmul.f32 %v4337, %v4337
      %v4408 = vmul.f32 %v4338, %v4338
      %v4409 = vmul.f32 %v4339, %v4339
      %v4410 = vmul.f32 %v4340, %v4340
      %v4411 = vmul.f32 %v4341, %v4341
      %v4412 = vmul.f32 %v4342, %v4342
      %v4413 = vadd.f32 %v4381, %v4382
      %v4414 = vadd.f32 %v4413, %v4383
      %v4415 = vadd.f32 %v4414, %v4384
      %v4416 = vadd.f32 %v4415, %v4385
      %v4417 = vadd.f32 %v4416, %v4386
      %v4418 = vadd.f32 %v4417, %v4387
      %v4419 = vadd.f32 %v4418, %v4388
      %v4420 = vadd.f32 %v4419, %v4389
      %v4421 = vadd.f32 %v4420, %v4390
      %v4422 = vadd.f32 %v4421, %v4391
      %v4423 = vadd.f32 %v4422, %v4392
      %v4424 = vadd.f32 %v4423, %v4393
      %v4425 = vadd.f32 %v4424, %v4394
      %v4426 = vadd.f32 %v4425, %v4395
      %v4427 = vadd.f32 %v4426, %v4396
      %v4428 = vadd.f32 %v4427, %v4397
      %v4429 = vadd.f32 %v4428, %v4398
      %v4430 = vadd.f32 %v4429, %v4399
      %v4431 = vadd.f32 %v4430, %v4400
      %v4432 = vadd.f32 %v4431, %v4401
      %v4433 = vadd.f32 %v4432, %v4402
      %v4434 = vadd.f32 %v4433, %v4403
      %v4435 = vadd.f32 %v4434, %v4404
      %v4436 = vadd.f32 %v4435, %v4405
      %v4437 = vadd.f32 %v4436, %v4406
      %v4438 = vadd.f32 %v4437, %v4407
      %v4439 = vadd.f32 %v4438, %v4408
      %v4440 = vadd.f32 %v4439, %v4409
      %v4441 = vadd.f32 %v4440, %v4410
      %v4442 = vadd.f32 %v4441, %v4411
      %v4443 = vadd.f32 %v4442, %v4412
      %v4444 = vrot.slane %v4443, 4
      %v4445 = vadd.f32 %v4443, %v4444
      %v4446 = vrot.slane %v4445, 2
      %v4447 = vadd.f32 %v4445, %v4446
      %v4448 = vrot.slane %v4447, 1
      %v4449 = vadd.f32 %v4447, %v4448
      %v4450 = vadd.f32 %v4449, 0.0
      %v4451 = vpack.c.bf16 %v4311, %v4311
      %v4452 = vpack.c.bf16 %v4312, %v4312
      %v4453 = vpack.c.bf16 %v4313, %v4313
      %v4454 = vpack.c.bf16 %v4314, %v4314
      %v4455 = vpack.c.bf16 %v4315, %v4315
      %v4456 = vpack.c.bf16 %v4316, %v4316
      %v4457 = vpack.c.bf16 %v4317, %v4317
      %v4458 = vpack.c.bf16 %v4318, %v4318
      %v4459 = vpack.c.bf16 %v4319, %v4319
      %v4460 = vpack.c.bf16 %v4320, %v4320
      %v4461 = vpack.c.bf16 %v4321, %v4321
      %v4462 = vpack.c.bf16 %v4322, %v4322
      %v4463 = vpack.c.bf16 %v4323, %v4323
      %v4464 = vpack.c.bf16 %v4324, %v4324
      %v4465 = vpack.c.bf16 %v4325, %v4325
      %v4466 = vpack.c.bf16 %v4326, %v4326
      %v4467 = vpack.c.bf16 %v4327, %v4327
      %v4468 = vpack.c.bf16 %v4328, %v4328
      %v4469 = vpack.c.bf16 %v4329, %v4329
      %v4470 = vpack.c.bf16 %v4330, %v4330
      %v4471 = vpack.c.bf16 %v4331, %v4331
      %v4472 = vpack.c.bf16 %v4332, %v4332
      %v4473 = vpack.c.bf16 %v4333, %v4333
      %v4474 = vpack.c.bf16 %v4334, %v4334
      %v4475 = vpack.c.bf16 %v4335, %v4335
      %v4476 = vpack.c.bf16 %v4336, %v4336
      %v4477 = vpack.c.bf16 %v4337, %v4337
      %v4478 = vpack.c.bf16 %v4338, %v4338
      %v4479 = vpack.c.bf16 %v4339, %v4339
      %v4480 = vpack.c.bf16 %v4340, %v4340
      %v4481 = vpack.c.bf16 %v4341, %v4341
      %v4482 = vpack.c.bf16 %v4342, %v4342
      %4483 = vst [vmem:[%s177] sm:$0xf] %v4451
      %4484 = vst [vmem:[%s177 + $0x4] sm:$0xf] %v4452
      %4485 = vst [vmem:[%s177 + $0x8] sm:$0xf] %v4453
      %4486 = vst [vmem:[%s177 + $0xc] sm:$0xf] %v4454
      %4487 = vst [vmem:[%s177 + $0x10] sm:$0xf] %v4455
      %4488 = vst [vmem:[%s177 + $0x14] sm:$0xf] %v4456
      %4489 = vst [vmem:[%s177 + $0x18] sm:$0xf] %v4457
      %4490 = vst [vmem:[%s177 + $0x1c] sm:$0xf] %v4458
      %4491 = vst [vmem:[%s177 + $0x20] sm:$0xf] %v4459
      %4492 = vst [vmem:[%s177 + $0x24] sm:$0xf] %v4460
      %4493 = vst [vmem:[%s177 + $0x28] sm:$0xf] %v4461
      %4494 = vst [vmem:[%s177 + $0x2c] sm:$0xf] %v4462
      %4495 = vst [vmem:[%s177 + $0x30] sm:$0xf] %v4463
      %4496 = vst [vmem:[%s177 + $0x34] sm:$0xf] %v4464
      %4497 = vst [vmem:[%s177 + $0x38] sm:$0xf] %v4465
      %4498 = vst [vmem:[%s177 + $0x3c] sm:$0xf] %v4466
      %4499 = vst [vmem:[%s177 + $0x40] sm:$0xf] %v4467
      %4500 = vst [vmem:[%s177 + $0x44] sm:$0xf] %v4468
      %4501 = vst [vmem:[%s177 + $0x48] sm:$0xf] %v4469
      %4502 = vst [vmem:[%s177 + $0x4c] sm:$0xf] %v4470
      %4503 = vst [vmem:[%s177 + $0x50] sm:$0xf] %v4471
      %4504 = vst [vmem:[%s177 + $0x54] sm:$0xf] %v4472
      %4505 = vst [vmem:[%s177 + $0x58] sm:$0xf] %v4473
      %4506 = vst [vmem:[%s177 + $0x5c] sm:$0xf] %v4474
      %4507 = vst [vmem:[%s177 + $0x60] sm:$0xf] %v4475
      %4508 = vst [vmem:[%s177 + $0x64] sm:$0xf] %v4476
      %4509 = vst [vmem:[%s177 + $0x68] sm:$0xf] %v4477
      %4510 = vst [vmem:[%s177 + $0x6c] sm:$0xf] %v4478
      %4511 = vst [vmem:[%s177 + $0x70] sm:$0xf] %v4479
      %4512 = vst [vmem:[%s177 + $0x74] sm:$0xf] %v4480
      %4513 = vst [vmem:[%s177 + $0x78] sm:$0xf] %v4481
      %4514 = vst [vmem:[%s177 + $0x7c] sm:$0xf] %v4482
      %4515 = vst [vmem:[%s181] sm:$0x1] %v4380
      %4516 = vst [vmem:[%s181 + $0x1] sm:$0x1] %v4450
      %p4517 = scmp.lt.s32.totalorder %s15, 1
      %s4518 = scalar_select %p4517, %s15, 1
      %s4519 = smul.addr %s4518, 32
      %s4520 = smul.addr %s4519, 4
      %s4521 = scalar_lea.vmem %s2, %s4520
      %p4522 = scmp.lt.s32.totalorder %s15, 1
      %s4523 = scalar_select %p4522, %s15, 1
      %s4524 = smul.addr %s4523, 2
      %s4525 = scalar_lea.vmem %s3, %s4524
      // Predicated region
      $region29: #{basic_block_forward.6} parent=27 // pred_check
        %p4526 = pneg %p80
      $region30: #{basic_block_forward.6} parent=27 // pred_check_branch
        %4528 = sbr.rel (%p4526) target = $region32
      $region31: #{basic_block_forward.6} parent=27 // pred_region
        _
      $region32: #{basic_block_forward.6} parent=27 // pred_fallthru
        _
      // Predicated region
      $region33: #{basic_block_forward.6} parent=27 // pred_check
        %p4529 = pneg %p106
      $region34: #{basic_block_forward.6} parent=27 // pred_check_branch
        %4531 = sbr.rel (%p4529) target = $region36
      $region35: #{basic_block_forward.6} parent=27 // pred_region
        _
      $region36: #{basic_block_forward.6} parent=27 // pred_fallthru
        _
    $region28: #{basic_block_forward.6} parent=5 // pred_fallthru
      _
    %p4532 = scmp.le.s32.totalorder 2, %s10
    // Predicated region
    $region37: #{basic_block_forward.6} parent=5 // pred_check
      %p4533 = pneg %p4532
    $region38: #{basic_block_forward.6} parent=5 // pred_check_branch
      %4535 = sbr.rel (%p4533) target = $region40
    $region39: #{basic_block_forward.6} parent=5 // pred_region
      %s4536 = ssub.s32 %s10, 2
      // Predicated region
      $region41: #{basic_block_forward.6} parent=39 // pred_check
        %p4537 = pneg %p86
      $region42: #{basic_block_forward.6} parent=39 // pred_check_branch
        %4539 = sbr.rel (%p4537) target = $region44
      $region43: #{basic_block_forward.6} parent=39 // pred_region
        %p4540 = scmp.lt.s32.totalorder %s16, 1
        %s4541 = scalar_select %p4540, %s16, 1
        %s4542 = smul.addr %s4541, 32
        %s4543 = smul.addr %s4542, 4
        %s4544 = scalar_lea.vmem %s2, %s4543
      $region44: #{basic_block_forward.6} parent=39 // pred_fallthru
        _
      // Predicated region
      $region45: #{basic_block_forward.6} parent=39 // pred_check
        %p4545 = pneg %p112
      $region46: #{basic_block_forward.6} parent=39 // pred_check_branch
        %4547 = sbr.rel (%p4545) target = $region48
      $region47: #{basic_block_forward.6} parent=39 // pred_region
        %p4548 = scmp.lt.s32.totalorder %s16, 1
        %s4549 = scalar_select %p4548, %s16, 1
        %s4550 = smul.addr %s4549, 2
        %s4551 = scalar_lea.vmem %s3, %s4550
      $region48: #{basic_block_forward.6} parent=39 // pred_fallthru
        _
    $region40: #{basic_block_forward.6} parent=5 // pred_fallthru
      _
  $region6: #{basic_block_forward.6} parent=0 // loop_footer
    %s14 = sadd.s32 1, %s10
  $region7: #{basic_block_forward.6} parent=0 // loop_footer_branch
    %9 = sbr.rel target = $region3
  $region8: #{basic_block_forward.6} parent=0 // loop_exit
    _

// kernel: basic_block_forward.4
$region0: #{basic_block_forward.4}
  #allocation0 [shape = 'u32[]', space=smem, size = 0x4, offset = 0x4, fixed_abs, tag = 'smem constant byte address 0x4 - core index']
  #allocation1 [shape = 'u32[72,128]{1,0:T(1,128)}', space=vmem, size = 0x9000, scoped, tag = 'internal scratch']
  %s0 = inlined_call_operand.vmem [shape: bf16[2,18,18,128], index: 0, kind: input, shape index: {}]
  %s1 = inlined_call_operand.vmem [shape: bf16[9,128,128], index: 1, kind: input, shape index: {}]
  %s2 = inlined_call_operand.vmem [shape: bf16[128,128], index: 2, kind: input, shape index: {}]
  %s3 = inlined_call_operand.vmem [shape: bf16[2,16,16,128], index: 3, kind: output, shape index: {0}]
  %s4 = inlined_call_operand.vmem [shape: bf16[2,16,16,128], index: 4, kind: output, shape index: {1}]
  %s5 = inlined_call_operand.vmem [shape: f32[2,4,128], index: 5, kind: output, shape index: {2}]
  %6 = xla_tuple %s3, %s4, %s5
  %s7 = sld [smem:[#allocation0]]
  $region61: #{basic_block_forward.4} parent=0
    _
  %s9 = ssub.s32 1, %s7
  %s10 = scalar_select 0, %s9, %s7
  loop: start=0, step=1, limit=4
  $region2: #{basic_block_forward.4} parent=0 // loop_pre_header
    _
  $region3: #{basic_block_forward.4} parent=0 // loop_header
    %s12 = sphi 0, %s16
    %p13 = scmp.ge.s32.totalorder %s12, 4
    %s22 = sphi 0, %s24
    %s25 = sphi 0, %s22
    %s26 = sphi 0, %s25
    %s42 = sphi 0, %s26
    %s46 = sphi 0, %s46
    %s48 = sphi 0, %s46
    %s49 = sphi 0, %s48
    %s63 = sphi 0, %s49
    %s67 = sphi 0, %s67
    %s69 = sphi 0, %s67
    %s70 = sphi 0, %s69
    %s84 = sphi 0, %s70
    %s90 = sphi 0, %s92
    %s93 = sphi 0, %s90
    %s94 = sphi 0, %s93
    %s110 = sphi 0, %s94
    %s116 = sphi 0, %s118
    %s119 = sphi 0, %s116
    %s120 = sphi 0, %s119
    %s136 = sphi 0, %s120
    %s142 = sphi 0, %s144
    %s145 = sphi 0, %s142
    %s146 = sphi 0, %s145
    %s162 = sphi 0, %s146
  $region4: #{basic_block_forward.4} parent=0 // loop_header_branch
    %15 = sbr.rel (%p13) target = $region8
  $region5: #{basic_block_forward.4} parent=0 // loop_body
    %s17 = ssub.s32 %s12, 1
    %s18 = ssub.s32 %s12, 2
    %s19 = sadd.s32 %s12, 1
    %s20 = ssub.s32 %s12, %s19
    %p21 = scmp.eq.s32.totalorder %s20, 0
    %s23 = sadd.s32 %s22, 1
    %s24 = scalar_select %p21, %s22, %s23
    %p27 = pneg %p21
    %p28 = scmp.eq.s32.totalorder %s12, 1
    %p29 = por %p27, %p28
    %p30 = scmp.ne.s32.totalorder %s22, %s25
    %p31 = scmp.eq.s32.totalorder %s12, 0
    %p32 = por %p30, %p31
    %p33 = scmp.ne.s32.totalorder %s22, %s25
    %p34 = scmp.eq.s32.totalorder %s17, 1
    %p35 = por %p33, %p34
    %p36 = scmp.ne.s32.totalorder %s25, %s26
    %p37 = scmp.eq.s32.totalorder %s17, 0
    %p38 = por %p36, %p37
    %p39 = scmp.ne.s32.totalorder %s25, %s26
    %p40 = scmp.eq.s32.totalorder %s18, 1
    %p41 = por %p39, %p40
    %p43 = scmp.ne.s32.totalorder %s26, %s42
    %p44 = scmp.eq.s32.totalorder %s18, 0
    %p45 = por %p43, %p44
    %s47 = sadd.s32 %s46, 1
    %p50 = scmp.eq.s32.totalorder %s12, 1
    %p51 = scmp.ne.s32.totalorder %s46, %s48
    %p52 = scmp.eq.s32.totalorder %s12, 0
    %p53 = por %p51, %p52
    %p54 = scmp.ne.s32.totalorder %s46, %s48
    %p55 = scmp.eq.s32.totalorder %s17, 1
    %p56 = por %p54, %p55
    %p57 = scmp.ne.s32.totalorder %s48, %s49
    %p58 = scmp.eq.s32.totalorder %s17, 0
    %p59 = por %p57, %p58
    %p60 = scmp.ne.s32.totalorder %s48, %s49
    %p61 = scmp.eq.s32.totalorder %s18, 1
    %p62 = por %p60, %p61
    %p64 = scmp.ne.s32.totalorder %s49, %s63
    %p65 = scmp.eq.s32.totalorder %s18, 0
    %p66 = por %p64, %p65
    %s68 = sadd.s32 %s67, 1
    %p71 = scmp.eq.s32.totalorder %s12, 1
    %p72 = scmp.ne.s32.totalorder %s67, %s69
    %p73 = scmp.eq.s32.totalorder %s12, 0
    %p74 = por %p72, %p73
    %p75 = scmp.ne.s32.totalorder %s67, %s69
    %p76 = scmp.eq.s32.totalorder %s17, 1
    %p77 = por %p75, %p76
    %p78 = scmp.ne.s32.totalorder %s69, %s70
    %p79 = scmp.eq.s32.totalorder %s17, 0
    %p80 = por %p78, %p79
    %p81 = scmp.ne.s32.totalorder %s69, %s70
    %p82 = scmp.eq.s32.totalorder %s18, 1
    %p83 = por %p81, %p82
    %p85 = scmp.ne.s32.totalorder %s70, %s84
    %p86 = scmp.eq.s32.totalorder %s18, 0
    %p87 = por %p85, %p86
    %s88 = ssub.s32 %s12, %s19
    %p89 = scmp.eq.s32.totalorder %s88, 0
    %s91 = sadd.s32 %s90, 1
    %s92 = scalar_select %p89, %s90, %s91
    %p95 = pneg %p89
    %p96 = scmp.eq.s32.totalorder %s12, 1
    %p97 = por %p95, %p96
    %p98 = scmp.ne.s32.totalorder %s90, %s93
    %p99 = scmp.eq.s32.totalorder %s12, 0
    %p100 = por %p98, %p99
    %p101 = scmp.ne.s32.totalorder %s90, %s93
    %p102 = scmp.eq.s32.totalorder %s17, 1
    %p103 = por %p101, %p102
    %p104 = scmp.ne.s32.totalorder %s93, %s94
    %p105 = scmp.eq.s32.totalorder %s17, 0
    %p106 = por %p104, %p105
    %p107 = scmp.ne.s32.totalorder %s93, %s94
    %p108 = scmp.eq.s32.totalorder %s18, 1
    %p109 = por %p107, %p108
    %p111 = scmp.ne.s32.totalorder %s94, %s110
    %p112 = scmp.eq.s32.totalorder %s18, 0
    %p113 = por %p111, %p112
    %s114 = ssub.s32 %s12, %s19
    %p115 = scmp.eq.s32.totalorder %s114, 0
    %s117 = sadd.s32 %s116, 1
    %s118 = scalar_select %p115, %s116, %s117
    %p121 = pneg %p115
    %p122 = scmp.eq.s32.totalorder %s12, 1
    %p123 = por %p121, %p122
    %p124 = scmp.ne.s32.totalorder %s116, %s119
    %p125 = scmp.eq.s32.totalorder %s12, 0
    %p126 = por %p124, %p125
    %p127 = scmp.ne.s32.totalorder %s116, %s119
    %p128 = scmp.eq.s32.totalorder %s17, 1
    %p129 = por %p127, %p128
    %p130 = scmp.ne.s32.totalorder %s119, %s120
    %p131 = scmp.eq.s32.totalorder %s17, 0
    %p132 = por %p130, %p131
    %p133 = scmp.ne.s32.totalorder %s119, %s120
    %p134 = scmp.eq.s32.totalorder %s18, 1
    %p135 = por %p133, %p134
    %p137 = scmp.ne.s32.totalorder %s120, %s136
    %p138 = scmp.eq.s32.totalorder %s18, 0
    %p139 = por %p137, %p138
    %s140 = ssub.s32 %s12, %s19
    %p141 = scmp.eq.s32.totalorder %s140, 0
    %s143 = sadd.s32 %s142, 1
    %s144 = scalar_select %p141, %s142, %s143
    %p147 = pneg %p141
    %p148 = scmp.eq.s32.totalorder %s12, 1
    %p149 = por %p147, %p148
    %p150 = scmp.ne.s32.totalorder %s142, %s145
    %p151 = scmp.eq.s32.totalorder %s12, 0
    %p152 = por %p150, %p151
    %p153 = scmp.ne.s32.totalorder %s142, %s145
    %p154 = scmp.eq.s32.totalorder %s17, 1
    %p155 = por %p153, %p154
    %p156 = scmp.ne.s32.totalorder %s145, %s146
    %p157 = scmp.eq.s32.totalorder %s17, 0
    %p158 = por %p156, %p157
    %p159 = scmp.ne.s32.totalorder %s145, %s146
    %p160 = scmp.eq.s32.totalorder %s18, 1
    %p161 = por %p159, %p160
    %p163 = scmp.ne.s32.totalorder %s146, %s162
    %p164 = scmp.eq.s32.totalorder %s18, 0
    %p165 = por %p163, %p164
    %p166 = scmp.le.s32.totalorder 1, %s12
    %p167 = scmp.lt.s32.totalorder %s12, 3
    %p168 = pnand %p166, %p167
    %p169 = pneg %p168
    // Predicated region
    $region9: #{basic_block_forward.4} parent=5 // pred_check
      _
    $region10: #{basic_block_forward.4} parent=5 // pred_check_branch
      %171 = sbr.rel (%p168) target = $region12
    $region11: #{basic_block_forward.4} parent=5 // pred_region
      %s172 = ssub.s32 %s12, 1
      // Predicated region
      $region13: #{basic_block_forward.4} parent=11 // pred_check
        %p173 = pneg %p59
      $region14: #{basic_block_forward.4} parent=11 // pred_check_branch
        %175 = sbr.rel (%p173) target = $region16
      $region15: #{basic_block_forward.4} parent=11 // pred_region
        _
      $region16: #{basic_block_forward.4} parent=11 // pred_fallthru
        _
      // Predicated region
      $region17: #{basic_block_forward.4} parent=11 // pred_check
        %p176 = pneg %p80
      $region18: #{basic_block_forward.4} parent=11 // pred_check_branch
        %178 = sbr.rel (%p176) target = $region20
      $region19: #{basic_block_forward.4} parent=11 // pred_region
        _
      $region20: #{basic_block_forward.4} parent=11 // pred_fallthru
        _
    $region12: #{basic_block_forward.4} parent=5 // pred_fallthru
      _
    %p179 = scmp.lt.s32.totalorder %s12, 2
    // Predicated region
    $region21: #{basic_block_forward.4} parent=5 // pred_check
      %p180 = pneg %p179
    $region22: #{basic_block_forward.4} parent=5 // pred_check_branch
      %182 = sbr.rel (%p180) target = $region24
    $region23: #{basic_block_forward.4} parent=5 // pred_region
      // Predicated region
      $region25: #{basic_block_forward.4} parent=23 // pred_check
        %p183 = pneg %p32
      $region26: #{basic_block_forward.4} parent=23 // pred_check_branch
        %185 = sbr.rel (%p183) target = $region28
      $region27: #{basic_block_forward.4} parent=23 // pred_region
        %p186 = scmp.lt.s32.totalorder %s12, 1
        %s187 = scalar_select %p186, %s12, 1
        %s188 = smul.addr %s187, 54
        %s189 = smul.addr %s188, 4
        %s190 = scalar_lea.vmem %s0, %s189
      $region28: #{basic_block_forward.4} parent=23 // pred_fallthru
        _
    $region24: #{basic_block_forward.4} parent=5 // pred_fallthru
      _
    %p191 = scmp.le.s32.totalorder 1, %s12
    %p192 = scmp.lt.s32.totalorder %s12, 3
    %p193 = pnand %p191, %p192
    %p194 = pneg %p193
    // Predicated region
    $region29: #{basic_block_forward.4} parent=5 // pred_check
      _
    $region30: #{basic_block_forward.4} parent=5 // pred_check_branch
      %196 = sbr.rel (%p193) target = $region32
    $region31: #{basic_block_forward.4} parent=5 // pred_region
      %s197 = ssub.s32 %s12, 1
      %p198 = scmp.lt.s32.totalorder %s17, 1
      %s199 = scalar_select %p198, %s17, 1
      %s200 = smul.addr %s199, 54
      %s201 = smul.addr %s200, 4
      %s202 = scalar_lea.vmem %s0, %s201
      %p203 = pneg %p38
      %p204 = pneg %p35
      %p205 = pneg %p59
      %p206 = pneg %p56
      %p207 = pneg %p80
      %p208 = pneg %p77
      %p209 = pneg %p106
      %p210 = pneg %p103
      %p211 = scmp.lt.s32.totalorder %s17, 1
      %s212 = scalar_select %p211, %s17, 1
      %s213 = smul.addr %s212, 32
      %s214 = smul.addr %s213, 4
      %s215 = scalar_lea.vmem %s3, %s214
      %p216 = pneg %p132
      %p217 = pneg %p129
      %p218 = scmp.lt.s32.totalorder %s17, 1
      %s219 = scalar_select %p218, %s17, 1
      %s220 = smul.addr %s219, 32
      %s221 = smul.addr %s220, 4
      %s222 = scalar_lea.vmem %s4, %s221
      %p223 = pneg %p158
      %p224 = pneg %p155
      %p225 = scmp.lt.s32.totalorder %s17, 1
      %s226 = scalar_select %p225, %s17, 1
      %s227 = smul.addr %s226, 4
      %s228 = scalar_lea.vmem %s5, %s227
      %p229 = scmp.lt.s32.totalorder %s17, 1
      %s230 = scalar_select %p229, %s17, 1
      %s231 = smul.addr %s230, 54
      %s232 = smul.addr %s231, 4
      %s233 = scalar_lea.vmem %s0, %s232
      %p234 = scmp.lt.s32.totalorder %s17, 1
      %s235 = scalar_select %p234, %s17, 1
      %s236 = smul.addr %s235, 32
      %s237 = smul.addr %s236, 4
      %s238 = scalar_lea.vmem %s3, %s237
      %p239 = scmp.lt.s32.totalorder %s17, 1
      %s240 = scalar_select %p239, %s17, 1
      %s241 = smul.addr %s240, 32
      %s242 = smul.addr %s241, 4
      %s243 = scalar_lea.vmem %s4, %s242
      %p244 = scmp.lt.s32.totalorder %s17, 1
      %s245 = scalar_select %p244, %s17, 1
      %s246 = smul.addr %s245, 4
      %s247 = scalar_lea.vmem %s5, %s246
      %v248 = vld [vmem:[%s2] sm:$0xf]
      %v249 = vld [vmem:[%s2 + $0x4] sm:$0xf]
      %v250 = vld [vmem:[%s2 + $0x8] sm:$0xf]
      %v251 = vld [vmem:[%s2 + $0xc] sm:$0xf]
      %v252 = vld [vmem:[%s2 + $0x10] sm:$0xf]
      %v253 = vld [vmem:[%s2 + $0x14] sm:$0xf]
      %v254 = vld [vmem:[%s2 + $0x18] sm:$0xf]
      %v255 = vld [vmem:[%s2 + $0x1c] sm:$0xf]
      %v256 = vld [vmem:[%s2 + $0x20] sm:$0xf]
      %v257 = vld [vmem:[%s2 + $0x24] sm:$0xf]
      %v258 = vld [vmem:[%s2 + $0x28] sm:$0xf]
      %v259 = vld [vmem:[%s2 + $0x2c] sm:$0xf]
      %v260 = vld [vmem:[%s2 + $0x30] sm:$0xf]
      %v261 = vld [vmem:[%s2 + $0x34] sm:$0xf]
      %v262 = vld [vmem:[%s2 + $0x38] sm:$0xf]
      %v263 = vld [vmem:[%s2 + $0x3c] sm:$0xf]
      %v264 = vld [vmem:[%s233] sm:$0xf]
      %v265 = vld [vmem:[%s233 + $0x4] sm:$0xf]
      %v266 = vld [vmem:[%s233 + $0xc] sm:$0xf]
      %v267 = vld [vmem:[%s233 + $0x10] sm:$0xf]
      %v268 = vld [vmem:[%s233 + $0x18] sm:$0xf]
      %v269 = vld [vmem:[%s233 + $0x1c] sm:$0xf]
      %v270 = vld [vmem:[%s233 + $0x24] sm:$0xf]
      %v271 = vld [vmem:[%s233 + $0x28] sm:$0xf]
      %v272 = vld [vmem:[%s233 + $0x30] sm:$0xf]
      %v273 = vld [vmem:[%s233 + $0x34] sm:$0xf]
      %v274 = vld [vmem:[%s233 + $0x3c] sm:$0xf]
      %v275 = vld [vmem:[%s233 + $0x40] sm:$0xf]
      %v276 = vld [vmem:[%s233 + $0x48] sm:$0xf]
      %v277 = vld [vmem:[%s233 + $0x4c] sm:$0xf]
      %v278 = vld [vmem:[%s233 + $0x54] sm:$0xf]
      %v279 = vld [vmem:[%s233 + $0x58] sm:$0xf]
      %v280 = vld [vmem:[%s233 + $0x60] sm:$0xf]
      %v281 = vld [vmem:[%s233 + $0x64] sm:$0xf]
      %v282 = vld [vmem:[%s233 + $0x6c] sm:$0xf]
      %v283 = vld [vmem:[%s233 + $0x70] sm:$0xf]
      %v284 = vld [vmem:[%s233 + $0x78] sm:$0xf]
      %v285 = vld [vmem:[%s233 + $0x7c] sm:$0xf]
      %v286 = vld [vmem:[%s233 + $0x84] sm:$0xf]
      %v287 = vld [vmem:[%s233 + $0x88] sm:$0xf]
      %v288 = vld [vmem:[%s233 + $0x90] sm:$0xf]
      %v289 = vld [vmem:[%s233 + $0x94] sm:$0xf]
      %v290 = vld [vmem:[%s233 + $0x9c] sm:$0xf]
      %v291 = vld [vmem:[%s233 + $0xa0] sm:$0xf]
      %v292 = vld [vmem:[%s233 + $0xa8] sm:$0xf]
      %v293 = vld [vmem:[%s233 + $0xac] sm:$0xf]
      %v294 = vld [vmem:[%s233 + $0xb4] sm:$0xf]
      %v295 = vld [vmem:[%s233 + $0xb8] sm:$0xf]
      %v296 = vld [vmem:[%s1] sm:$0xf]
      %v297 = vld [vmem:[%s1 + $0x4] sm:$0xf]
      %v298 = vld [vmem:[%s1 + $0x8] sm:$0xf]
      %v299 = vld [vmem:[%s1 + $0xc] sm:$0xf]
      %v300 = vld [vmem:[%s1 + $0x10] sm:$0xf]
      %v301 = vld [vmem:[%s1 + $0x14] sm:$0xf]
      %v302 = vld [vmem:[%s1 + $0x18] sm:$0xf]
      %v303 = vld [vmem:[%s1 + $0x1c] sm:$0xf]
      %v304 = vld [vmem:[%s1 + $0x20] sm:$0xf]
      %v305 = vld [vmem:[%s1 + $0x24] sm:$0xf]
      %v306 = vld [vmem:[%s1 + $0x28] sm:$0xf]
      %v307 = vld [vmem:[%s1 + $0x2c] sm:$0xf]
      %v308 = vld [vmem:[%s1 + $0x30] sm:$0xf]
      %v309 = vld [vmem:[%s1 + $0x34] sm:$0xf]
      %v310 = vld [vmem:[%s1 + $0x38] sm:$0xf]
      %v311 = vld [vmem:[%s1 + $0x3c] sm:$0xf]
      %v312 = vld [vmem:[%s233 + $0x8] sm:$0x1]
      %v313 = vld [vmem:[%s233 + $0x14] sm:$0x1]
      %v314 = vld [vmem:[%s233 + $0x20] sm:$0x1]
      %v315 = vld [vmem:[%s233 + $0x2c] sm:$0x1]
      %v316 = vld [vmem:[%s233 + $0x38] sm:$0x1]
      %v317 = vld [vmem:[%s233 + $0x44] sm:$0x1]
      %v318 = vld [vmem:[%s233 + $0x50] sm:$0x1]
      %v319 = vld [vmem:[%s233 + $0x5c] sm:$0x1]
      %v320 = vld [vmem:[%s233 + $0x68] sm:$0x1]
      %v321 = vld [vmem:[%s233 + $0x74] sm:$0x1]
      %v322 = vld [vmem:[%s233 + $0x80] sm:$0x1]
      %v323 = vld [vmem:[%s233 + $0x8c] sm:$0x1]
      %v324 = vld [vmem:[%s233 + $0x98] sm:$0x1]
      %v325 = vld [vmem:[%s233 + $0xa4] sm:$0x1]
      %v326 = vld [vmem:[%s233 + $0xb0] sm:$0x1]
      %v327 = vld [vmem:[%s233 + $0xbc] sm:$0x1]
      %vm328 = vsmask.f32 3328
      %vm329 = vsmask.f32 7440
      %vm330 = vmor %vm328, %vm329
      %v332 = vshrl.u32 %v264, 16
      %v334 = vrot.slane %v332, 4
      %v335 = vshll.u32 %v264, 16
      %v337 = vrot.slane %v335, 5
      %v338 = vor.u32 %v334, %v337
      %v339 = vrot.slane %v338, 4
      %v341 = vshll.u32 %v265, 16
      %v343 = vrot.slane %v341, 5
      %v344 = vsel %vm330, %v339, %v343
      %v345 = vshrl.u32 %v265, 16
      %v347 = vrot.slane %v345, 4
      %v348 = vor.u32 %v347, %v343
      %v349 = vrot.slane %v348, 4
      %v351 = vshll.u32 %v312, 16
      %v353 = vrot.slane %v351, 5
      %v354 = vsel %vm330, %v349, %v353
      %v356 = vshrl.u32 %v266, 16
      %v358 = vrot.slane %v356, 4
      %v359 = vshll.u32 %v266, 16
      %v361 = vrot.slane %v359, 5
      %v362 = vor.u32 %v358, %v361
      %v363 = vrot.slane %v362, 4
      %v365 = vshll.u32 %v267, 16
      %v367 = vrot.slane %v365, 5
      %v368 = vsel %vm330, %v363, %v367
      %v369 = vshrl.u32 %v267, 16
      %v371 = vrot.slane %v369, 4
      %v372 = vor.u32 %v371, %v367
      %v373 = vrot.slane %v372, 4
      %v375 = vshll.u32 %v313, 16
      %v377 = vrot.slane %v375, 5
      %v378 = vsel %vm330, %v373, %v377
      %v380 = vshrl.u32 %v268, 16
      %v382 = vrot.slane %v380, 4
      %v383 = vshll.u32 %v268, 16
      %v385 = vrot.slane %v383, 5
      %v386 = vor.u32 %v382, %v385
      %v387 = vrot.slane %v386, 4
      %v389 = vshll.u32 %v269, 16
      %v391 = vrot.slane %v389, 5
      %v392 = vsel %vm330, %v387, %v391
      %v393 = vshrl.u32 %v269, 16
      %v395 = vrot.slane %v393, 4
      %v396 = vor.u32 %v395, %v391
      %v397 = vrot.slane %v396, 4
      %v399 = vshll.u32 %v314, 16
      %v401 = vrot.slane %v399, 5
      %v402 = vsel %vm330, %v397, %v401
      %v404 = vshrl.u32 %v270, 16
      %v406 = vrot.slane %v404, 4
      %v407 = vshll.u32 %v270, 16
      %v409 = vrot.slane %v407, 5
      %v410 = vor.u32 %v406, %v409
      %v411 = vrot.slane %v410, 4
      %v413 = vshll.u32 %v271, 16
      %v415 = vrot.slane %v413, 5
      %v416 = vsel %vm330, %v411, %v415
      %v417 = vshrl.u32 %v271, 16
      %v419 = vrot.slane %v417, 4
      %v420 = vor.u32 %v419, %v415
      %v421 = vrot.slane %v420, 4
      %v423 = vshll.u32 %v315, 16
      %v425 = vrot.slane %v423, 5
      %v426 = vsel %vm330, %v421, %v425
      %v428 = vshrl.u32 %v272, 16
      %v430 = vrot.slane %v428, 4
      %v431 = vshll.u32 %v272, 16
      %v433 = vrot.slane %v431, 5
      %v434 = vor.u32 %v430, %v433
      %v435 = vrot.slane %v434, 4
      %v437 = vshll.u32 %v273, 16
      %v439 = vrot.slane %v437, 5
      %v440 = vsel %vm330, %v435, %v439
      %v441 = vshrl.u32 %v273, 16
      %v443 = vrot.slane %v441, 4
      %v444 = vor.u32 %v443, %v439
      %v445 = vrot.slane %v444, 4
      %v447 = vshll.u32 %v316, 16
      %v449 = vrot.slane %v447, 5
      %v450 = vsel %vm330, %v445, %v449
      %v452 = vshrl.u32 %v274, 16
      %v454 = vrot.slane %v452, 4
      %v455 = vshll.u32 %v274, 16
      %v457 = vrot.slane %v455, 5
      %v458 = vor.u32 %v454, %v457
      %v459 = vrot.slane %v458, 4
      %v461 = vshll.u32 %v275, 16
      %v463 = vrot.slane %v461, 5
      %v464 = vsel %vm330, %v459, %v463
      %v465 = vshrl.u32 %v275, 16
      %v467 = vrot.slane %v465, 4
      %v468 = vor.u32 %v467, %v463
      %v469 = vrot.slane %v468, 4
      %v471 = vshll.u32 %v317, 16
      %v473 = vrot.slane %v471, 5
      %v474 = vsel %vm330, %v469, %v473
      %v476 = vshrl.u32 %v276, 16
      %v478 = vrot.slane %v476, 4
      %v479 = vshll.u32 %v276, 16
      %v481 = vrot.slane %v479, 5
      %v482 = vor.u32 %v478, %v481
      %v483 = vrot.slane %v482, 4
      %v485 = vshll.u32 %v277, 16
      %v487 = vrot.slane %v485, 5
      %v488 = vsel %vm330, %v483, %v487
      %v489 = vshrl.u32 %v277, 16
      %v491 = vrot.slane %v489, 4
      %v492 = vor.u32 %v491, %v487
      %v493 = vrot.slane %v492, 4
      %v495 = vshll.u32 %v318, 16
      %v497 = vrot.slane %v495, 5
      %v498 = vsel %vm330, %v493, %v497
      %v500 = vshrl.u32 %v278, 16
      %v502 = vrot.slane %v500, 4
      %v503 = vshll.u32 %v278, 16
      %v505 = vrot.slane %v503, 5
      %v506 = vor.u32 %v502, %v505
      %v507 = vrot.slane %v506, 4
      %v509 = vshll.u32 %v279, 16
      %v511 = vrot.slane %v509, 5
      %v512 = vsel %vm330, %v507, %v511
      %v513 = vshrl.u32 %v279, 16
      %v515 = vrot.slane %v513, 4
      %v516 = vor.u32 %v515, %v511
      %v517 = vrot.slane %v516, 4
      %v519 = vshll.u32 %v319, 16
      %v521 = vrot.slane %v519, 5
      %v522 = vsel %vm330, %v517, %v521
      %v524 = vshrl.u32 %v280, 16
      %v526 = vrot.slane %v524, 4
      %v527 = vshll.u32 %v280, 16
      %v529 = vrot.slane %v527, 5
      %v530 = vor.u32 %v526, %v529
      %v531 = vrot.slane %v530, 4
      %v533 = vshll.u32 %v281, 16
      %v535 = vrot.slane %v533, 5
      %v536 = vsel %vm330, %v531, %v535
      %v537 = vshrl.u32 %v281, 16
      %v539 = vrot.slane %v537, 4
      %v540 = vor.u32 %v539, %v535
      %v541 = vrot.slane %v540, 4
      %v543 = vshll.u32 %v320, 16
      %v545 = vrot.slane %v543, 5
      %v546 = vsel %vm330, %v541, %v545
      %v548 = vshrl.u32 %v282, 16
      %v550 = vrot.slane %v548, 4
      %v551 = vshll.u32 %v282, 16
      %v553 = vrot.slane %v551, 5
      %v554 = vor.u32 %v550, %v553
      %v555 = vrot.slane %v554, 4
      %v557 = vshll.u32 %v283, 16
      %v559 = vrot.slane %v557, 5
      %v560 = vsel %vm330, %v555, %v559
      %v561 = vshrl.u32 %v283, 16
      %v563 = vrot.slane %v561, 4
      %v564 = vor.u32 %v563, %v559
      %v565 = vrot.slane %v564, 4
      %v567 = vshll.u32 %v321, 16
      %v569 = vrot.slane %v567, 5
      %v570 = vsel %vm330, %v565, %v569
      %v572 = vshrl.u32 %v284, 16
      %v574 = vrot.slane %v572, 4
      %v575 = vshll.u32 %v284, 16
      %v577 = vrot.slane %v575, 5
      %v578 = vor.u32 %v574, %v577
      %v579 = vrot.slane %v578, 4
      %v581 = vshll.u32 %v285, 16
      %v583 = vrot.slane %v581, 5
      %v584 = vsel %vm330, %v579, %v583
      %v585 = vshrl.u32 %v285, 16
      %v587 = vrot.slane %v585, 4
      %v588 = vor.u32 %v587, %v583
      %v589 = vrot.slane %v588, 4
      %v591 = vshll.u32 %v322, 16
      %v593 = vrot.slane %v591, 5
      %v594 = vsel %vm330, %v589, %v593
      %v596 = vshrl.u32 %v286, 16
      %v598 = vrot.slane %v596, 4
      %v599 = vshll.u32 %v286, 16
      %v601 = vrot.slane %v599, 5
      %v602 = vor.u32 %v598, %v601
      %v603 = vrot.slane %v602, 4
      %v605 = vshll.u32 %v287, 16
      %v607 = vrot.slane %v605, 5
      %v608 = vsel %vm330, %v603, %v607
      %v609 = vshrl.u32 %v287, 16
      %v611 = vrot.slane %v609, 4
      %v612 = vor.u32 %v611, %v607
      %v613 = vrot.slane %v612, 4
      %v615 = vshll.u32 %v323, 16
      %v617 = vrot.slane %v615, 5
      %v618 = vsel %vm330, %v613, %v617
      %v620 = vshrl.u32 %v288, 16
      %v622 = vrot.slane %v620, 4
      %v623 = vshll.u32 %v288, 16
      %v625 = vrot.slane %v623, 5
      %v626 = vor.u32 %v622, %v625
      %v627 = vrot.slane %v626, 4
      %v629 = vshll.u32 %v289, 16
      %v631 = vrot.slane %v629, 5
      %v632 = vsel %vm330, %v627, %v631
      %v633 = vshrl.u32 %v289, 16
      %v635 = vrot.slane %v633, 4
      %v636 = vor.u32 %v635, %v631
      %v637 = vrot.slane %v636, 4
      %v639 = vshll.u32 %v324, 16
      %v641 = vrot.slane %v639, 5
      %v642 = vsel %vm330, %v637, %v641
      %v644 = vshrl.u32 %v290, 16
      %v646 = vrot.slane %v644, 4
      %v647 = vshll.u32 %v290, 16
      %v649 = vrot.slane %v647, 5
      %v650 = vor.u32 %v646, %v649
      %v651 = vrot.slane %v650, 4
      %v653 = vshll.u32 %v291, 16
      %v655 = vrot.slane %v653, 5
      %v656 = vsel %vm330, %v651, %v655
      %v657 = vshrl.u32 %v291, 16
      %v659 = vrot.slane %v657, 4
      %v660 = vor.u32 %v659, %v655
      %v661 = vrot.slane %v660, 4
      %v663 = vshll.u32 %v325, 16
      %v665 = vrot.slane %v663, 5
      %v666 = vsel %vm330, %v661, %v665
      %v668 = vshrl.u32 %v292, 16
      %v670 = vrot.slane %v668, 4
      %v671 = vshll.u32 %v292, 16
      %v673 = vrot.slane %v671, 5
      %v674 = vor.u32 %v670, %v673
      %v675 = vrot.slane %v674, 4
      %v677 = vshll.u32 %v293, 16
      %v679 = vrot.slane %v677, 5
      %v680 = vsel %vm330, %v675, %v679
      %v681 = vshrl.u32 %v293, 16
      %v683 = vrot.slane %v681, 4
      %v684 = vor.u32 %v683, %v679
      %v685 = vrot.slane %v684, 4
      %v687 = vshll.u32 %v326, 16
      %v689 = vrot.slane %v687, 5
      %v690 = vsel %vm330, %v685, %v689
      %v692 = vshrl.u32 %v294, 16
      %v694 = vrot.slane %v692, 4
      %v695 = vshll.u32 %v294, 16
      %v697 = vrot.slane %v695, 5
      %v698 = vor.u32 %v694, %v697
      %v699 = vrot.slane %v698, 4
      %v701 = vshll.u32 %v295, 16
      %v703 = vrot.slane %v701, 5
      %v704 = vsel %vm330, %v699, %v703
      %v705 = vshrl.u32 %v295, 16
      %v707 = vrot.slane %v705, 4
      %v708 = vor.u32 %v707, %v703
      %v709 = vrot.slane %v708, 4
      %v711 = vshll.u32 %v327, 16
      %v713 = vrot.slane %v711, 5
      %v714 = vsel %vm330, %v709, %v713
      %s715 = scalar_lea.vmem %s1, 64
      %v716 = vld [vmem:[%s715] sm:$0xf]
      %v717 = vld [vmem:[%s715 + $0x4] sm:$0xf]
      %v718 = vld [vmem:[%s715 + $0x8] sm:$0xf]
      %v719 = vld [vmem:[%s715 + $0xc] sm:$0xf]
      %v720 = vld [vmem:[%s715 + $0x10] sm:$0xf]
      %v721 = vld [vmem:[%s715 + $0x14] sm:$0xf]
      %v722 = vld [vmem:[%s715 + $0x18] sm:$0xf]
      %v723 = vld [vmem:[%s715 + $0x1c] sm:$0xf]
      %v724 = vld [vmem:[%s715 + $0x20] sm:$0xf]
      %v725 = vld [vmem:[%s715 + $0x24] sm:$0xf]
      %v726 = vld [vmem:[%s715 + $0x28] sm:$0xf]
      %v727 = vld [vmem:[%s715 + $0x2c] sm:$0xf]
      %v728 = vld [vmem:[%s715 + $0x30] sm:$0xf]
      %v729 = vld [vmem:[%s715 + $0x34] sm:$0xf]
      %v730 = vld [vmem:[%s715 + $0x38] sm:$0xf]
      %v731 = vld [vmem:[%s715 + $0x3c] sm:$0xf]
      %v732 = vunpack.c.l.b16 %v344
      %v733 = vunpack.c.l.b16 %v354
      %v734 = vunpack.c.l.b16 %v368
      %v735 = vunpack.c.l.b16 %v378
      %v736 = vunpack.c.l.b16 %v392
      %v737 = vunpack.c.l.b16 %v402
      %v738 = vunpack.c.l.b16 %v416
      %v739 = vunpack.c.l.b16 %v426
      %v740 = vunpack.c.l.b16 %v440
      %v741 = vunpack.c.l.b16 %v450
      %v742 = vunpack.c.l.b16 %v464
      %v743 = vunpack.c.l.b16 %v474
      %v744 = vunpack.c.l.b16 %v488
      %v745 = vunpack.c.l.b16 %v498
      %v746 = vunpack.c.l.b16 %v512
      %v747 = vunpack.c.l.b16 %v522
      %v748 = vunpack.c.l.b16 %v536
      %v749 = vunpack.c.l.b16 %v546
      %v750 = vunpack.c.l.b16 %v560
      %v751 = vunpack.c.l.b16 %v570
      %v752 = vunpack.c.l.b16 %v584
      %v753 = vunpack.c.l.b16 %v594
      %v754 = vunpack.c.l.b16 %v608
      %v755 = vunpack.c.l.b16 %v618
      %v756 = vunpack.c.l.b16 %v632
      %v757 = vunpack.c.l.b16 %v642
      %v758 = vunpack.c.l.b16 %v656
      %v759 = vunpack.c.l.b16 %v666
      %v760 = vunpack.c.l.b16 %v680
      %v761 = vunpack.c.l.b16 %v690
      %v762 = vunpack.c.l.b16 %v704
      %v763 = vunpack.c.l.b16 %v714
      %v764 = vpack.c.b16 %v733, %v732
      %v765 = vpack.c.b16 %v735, %v734
      %v766 = vpack.c.b16 %v737, %v736
      %v767 = vpack.c.b16 %v739, %v738
      %v768 = vpack.c.b16 %v741, %v740
      %v769 = vpack.c.b16 %v743, %v742
      %v770 = vpack.c.b16 %v745, %v744
      %v771 = vpack.c.b16 %v747, %v746
      %v772 = vpack.c.b16 %v749, %v748
      %v773 = vpack.c.b16 %v751, %v750
      %v774 = vpack.c.b16 %v753, %v752
      %v775 = vpack.c.b16 %v755, %v754
      %v776 = vpack.c.b16 %v757, %v756
      %v777 = vpack.c.b16 %v759, %v758
      %v778 = vpack.c.b16 %v761, %v760
      %v779 = vpack.c.b16 %v763, %v762
      %v812 = vunpack.c.l.b16 %v716
      %v813 = vunpack.c.l.b16 %v717
      %v814 = vunpack.c.l.b16 %v718
      %v815 = vunpack.c.l.b16 %v719
      %v816 = vunpack.c.l.b16 %v720
      %v817 = vunpack.c.l.b16 %v721
      %v818 = vunpack.c.l.b16 %v722
      %v819 = vunpack.c.l.b16 %v723
      %v820 = vunpack.c.l.b16 %v724
      %v821 = vunpack.c.l.b16 %v725
      %v822 = vunpack.c.l.b16 %v726
      %v823 = vunpack.c.l.b16 %v727
      %v824 = vunpack.c.l.b16 %v728
      %v825 = vunpack.c.l.b16 %v729
      %v826 = vunpack.c.l.b16 %v730
      %v827 = vunpack.c.l.b16 %v731
      %v828 = vpack.c.b16 %v813, %v812
      %v829 = vpack.c.b16 %v815, %v814
      %v830 = vpack.c.b16 %v817, %v816
      %v831 = vpack.c.b16 %v819, %v818
      %v832 = vpack.c.b16 %v821, %v820
      %v833 = vpack.c.b16 %v823, %v822
      %v834 = vpack.c.b16 %v825, %v824
      %v835 = vpack.c.b16 %v827, %v826
      %844 = vmatpush.bf16.msra.mxu0 %v835
      %845 = vmatpush.bf16.msra.mxu0 %v834
      %846 = vmatpush.bf16.msra.mxu0 %v833
      %847 = vmatpush.bf16.msra.mxu0 %v832
      %848 = vmatpush.bf16.msra.mxu0 %v831
      %849 = vmatpush.bf16.msra.mxu0 %v830
      %850 = vmatpush.bf16.msra.mxu0 %v829
      %851 = vmatpush.bf16.msra.mxu0 %v828
      %852 = vmatmul.bf16.gmra.mxu0 %v764
      %v853 = vpop.f32.mrf.mxu0
      %v854 = vadd.f32 0.0, %v853
      %v855 = vpop.f32.mrf.mxu0
      %v856 = vadd.f32 0.0, %v855
      %857 = vmatmul.bf16.gmra.mxu0 %v765
      %v858 = vpop.f32.mrf.mxu0
      %v859 = vadd.f32 0.0, %v858
      %v860 = vpop.f32.mrf.mxu0
      %v861 = vadd.f32 0.0, %v860
      %862 = vmatmul.bf16.gmra.mxu0 %v766
      %v863 = vpop.f32.mrf.mxu0
      %v864 = vadd.f32 0.0, %v863
      %v865 = vpop.f32.mrf.mxu0
      %v866 = vadd.f32 0.0, %v865
      %867 = vmatmul.bf16.gmra.mxu0 %v767
      %v868 = vpop.f32.mrf.mxu0
      %v869 = vadd.f32 0.0, %v868
      %v870 = vpop.f32.mrf.mxu0
      %v871 = vadd.f32 0.0, %v870
      %872 = vmatmul.bf16.gmra.mxu0 %v768
      %v873 = vpop.f32.mrf.mxu0
      %v874 = vadd.f32 0.0, %v873
      %v875 = vpop.f32.mrf.mxu0
      %v876 = vadd.f32 0.0, %v875
      %877 = vmatmul.bf16.gmra.mxu0 %v769
      %v878 = vpop.f32.mrf.mxu0
      %v879 = vadd.f32 0.0, %v878
      %v880 = vpop.f32.mrf.mxu0
      %v881 = vadd.f32 0.0, %v880
      %882 = vmatmul.bf16.gmra.mxu0 %v770
      %v883 = vpop.f32.mrf.mxu0
      %v884 = vadd.f32 0.0, %v883
      %v885 = vpop.f32.mrf.mxu0
      %v886 = vadd.f32 0.0, %v885
      %887 = vmatmul.bf16.gmra.mxu0 %v771
      %v888 = vpop.f32.mrf.mxu0
      %v889 = vadd.f32 0.0, %v888
      %v890 = vpop.f32.mrf.mxu0
      %v891 = vadd.f32 0.0, %v890
      %892 = vmatmul.bf16.gmra.mxu0 %v772
      %v893 = vpop.f32.mrf.mxu0
      %v894 = vadd.f32 0.0, %v893
      %v895 = vpop.f32.mrf.mxu0
      %v896 = vadd.f32 0.0, %v895
      %897 = vmatmul.bf16.gmra.mxu0 %v773
      %v898 = vpop.f32.mrf.mxu0
      %v899 = vadd.f32 0.0, %v898
      %v900 = vpop.f32.mrf.mxu0
      %v901 = vadd.f32 0.0, %v900
      %902 = vmatmul.bf16.gmra.mxu0 %v774
      %v903 = vpop.f32.mrf.mxu0
      %v904 = vadd.f32 0.0, %v903
      %v905 = vpop.f32.mrf.mxu0
      %v906 = vadd.f32 0.0, %v905
      %907 = vmatmul.bf16.gmra.mxu0 %v775
      %v908 = vpop.f32.mrf.mxu0
      %v909 = vadd.f32 0.0, %v908
      %v910 = vpop.f32.mrf.mxu0
      %v911 = vadd.f32 0.0, %v910
      %912 = vmatmul.bf16.gmra.mxu0 %v776
      %v913 = vpop.f32.mrf.mxu0
      %v914 = vadd.f32 0.0, %v913
      %v915 = vpop.f32.mrf.mxu0
      %v916 = vadd.f32 0.0, %v915
      %917 = vmatmul.bf16.gmra.mxu0 %v777
      %v918 = vpop.f32.mrf.mxu0
      %v919 = vadd.f32 0.0, %v918
      %v920 = vpop.f32.mrf.mxu0
      %v921 = vadd.f32 0.0, %v920
      %922 = vmatmul.bf16.gmra.mxu0 %v778
      %v923 = vpop.f32.mrf.mxu0
      %v924 = vadd.f32 0.0, %v923
      %v925 = vpop.f32.mrf.mxu0
      %v926 = vadd.f32 0.0, %v925
      %927 = vmatmul.bf16.gmra.mxu0 %v779
      %v928 = vpop.f32.mrf.mxu0
      %v929 = vadd.f32 0.0, %v928
      %v930 = vpop.f32.mrf.mxu0
      %v931 = vadd.f32 0.0, %v930
      %932 = vdwg.mxu0
      %v965 = vunpack.c.l.b16 %v264
      %v966 = vunpack.c.l.b16 %v265
      %v967 = vunpack.c.l.b16 %v266
      %v968 = vunpack.c.l.b16 %v267
      %v969 = vunpack.c.l.b16 %v268
      %v970 = vunpack.c.l.b16 %v269
      %v971 = vunpack.c.l.b16 %v270
      %v972 = vunpack.c.l.b16 %v271
      %v973 = vunpack.c.l.b16 %v272
      %v974 = vunpack.c.l.b16 %v273
      %v975 = vunpack.c.l.b16 %v274
      %v976 = vunpack.c.l.b16 %v275
      %v977 = vunpack.c.l.b16 %v276
      %v978 = vunpack.c.l.b16 %v277
      %v979 = vunpack.c.l.b16 %v278
      %v980 = vunpack.c.l.b16 %v279
      %v981 = vunpack.c.l.b16 %v280
      %v982 = vunpack.c.l.b16 %v281
      %v983 = vunpack.c.l.b16 %v282
      %v984 = vunpack.c.l.b16 %v283
      %v985 = vunpack.c.l.b16 %v284
      %v986 = vunpack.c.l.b16 %v285
      %v987 = vunpack.c.l.b16 %v286
      %v988 = vunpack.c.l.b16 %v287
      %v989 = vunpack.c.l.b16 %v288
      %v990 = vunpack.c.l.b16 %v289
      %v991 = vunpack.c.l.b16 %v290
      %v992 = vunpack.c.l.b16 %v291
      %v993 = vunpack.c.l.b16 %v292
      %v994 = vunpack.c.l.b16 %v293
      %v995 = vunpack.c.l.b16 %v294
      %v996 = vunpack.c.l.b16 %v295
      %v997 = vpack.c.b16 %v966, %v965
      %v998 = vpack.c.b16 %v968, %v967
      %v999 = vpack.c.b16 %v970, %v969
      %v1000 = vpack.c.b16 %v972, %v971
      %v1001 = vpack.c.b16 %v974, %v973
      %v1002 = vpack.c.b16 %v976, %v975
      %v1003 = vpack.c.b16 %v978, %v977
      %v1004 = vpack.c.b16 %v980, %v979
      %v1005 = vpack.c.b16 %v982, %v981
      %v1006 = vpack.c.b16 %v984, %v983
      %v1007 = vpack.c.b16 %v986, %v985
      %v1008 = vpack.c.b16 %v988, %v987
      %v1009 = vpack.c.b16 %v990, %v989
      %v1010 = vpack.c.b16 %v992, %v991
      %v1011 = vpack.c.b16 %v994, %v993
      %v1012 = vpack.c.b16 %v996, %v995
      %v1045 = vunpack.c.l.b16 %v296
      %v1046 = vunpack.c.l.b16 %v297
      %v1047 = vunpack.c.l.b16 %v298
      %v1048 = vunpack.c.l.b16 %v299
      %v1049 = vunpack.c.l.b16 %v300
      %v1050 = vunpack.c.l.b16 %v301
      %v1051 = vunpack.c.l.b16 %v302
      %v1052 = vunpack.c.l.b16 %v303
      %v1053 = vunpack.c.l.b16 %v304
      %v1054 = vunpack.c.l.b16 %v305
      %v1055 = vunpack.c.l.b16 %v306
      %v1056 = vunpack.c.l.b16 %v307
      %v1057 = vunpack.c.l.b16 %v308
      %v1058 = vunpack.c.l.b16 %v309
      %v1059 = vunpack.c.l.b16 %v310
      %v1060 = vunpack.c.l.b16 %v311
      %v1061 = vpack.c.b16 %v1046, %v1045
      %v1062 = vpack.c.b16 %v1048, %v1047
      %v1063 = vpack.c.b16 %v1050, %v1049
      %v1064 = vpack.c.b16 %v1052, %v1051
      %v1065 = vpack.c.b16 %v1054, %v1053
      %v1066 = vpack.c.b16 %v1056, %v1055
      %v1067 = vpack.c.b16 %v1058, %v1057
      %v1068 = vpack.c.b16 %v1060, %v1059
      %1077 = vmatpush.bf16.msra.mxu0 %v1068
      %1078 = vmatpush.bf16.msra.mxu0 %v1067
      %1079 = vmatpush.bf16.msra.mxu0 %v1066
      %1080 = vmatpush.bf16.msra.mxu0 %v1065
      %1081 = vmatpush.bf16.msra.mxu0 %v1064
      %1082 = vmatpush.bf16.msra.mxu0 %v1063
      %1083 = vmatpush.bf16.msra.mxu0 %v1062
      %1084 = vmatpush.bf16.msra.mxu0 %v1061
      %1085 = vmatmul.bf16.gmra.mxu0 %v997
      %v1086 = vpop.f32.mrf.mxu0
      %v1087 = vadd.f32 %v854, %v1086
      %v1088 = vpop.f32.mrf.mxu0
      %v1089 = vadd.f32 %v856, %v1088
      %1090 = vmatmul.bf16.gmra.mxu0 %v998
      %v1091 = vpop.f32.mrf.mxu0
      %v1092 = vadd.f32 %v859, %v1091
      %v1093 = vpop.f32.mrf.mxu0
      %v1094 = vadd.f32 %v861, %v1093
      %1095 = vmatmul.bf16.gmra.mxu0 %v999
      %v1096 = vpop.f32.mrf.mxu0
      %v1097 = vadd.f32 %v864, %v1096
      %v1098 = vpop.f32.mrf.mxu0
      %v1099 = vadd.f32 %v866, %v1098
      %1100 = vmatmul.bf16.gmra.mxu0 %v1000
      %v1101 = vpop.f32.mrf.mxu0
      %v1102 = vadd.f32 %v869, %v1101
      %v1103 = vpop.f32.mrf.mxu0
      %v1104 = vadd.f32 %v871, %v1103
      %1105 = vmatmul.bf16.gmra.mxu0 %v1001
      %v1106 = vpop.f32.mrf.mxu0
      %v1107 = vadd.f32 %v874, %v1106
      %v1108 = vpop.f32.mrf.mxu0
      %v1109 = vadd.f32 %v876, %v1108
      %1110 = vmatmul.bf16.gmra.mxu0 %v1002
      %v1111 = vpop.f32.mrf.mxu0
      %v1112 = vadd.f32 %v879, %v1111
      %v1113 = vpop.f32.mrf.mxu0
      %v1114 = vadd.f32 %v881, %v1113
      %1115 = vmatmul.bf16.gmra.mxu0 %v1003
      %v1116 = vpop.f32.mrf.mxu0
      %v1117 = vadd.f32 %v884, %v1116
      %v1118 = vpop.f32.mrf.mxu0
      %v1119 = vadd.f32 %v886, %v1118
      %1120 = vmatmul.bf16.gmra.mxu0 %v1004
      %v1121 = vpop.f32.mrf.mxu0
      %v1122 = vadd.f32 %v889, %v1121
      %v1123 = vpop.f32.mrf.mxu0
      %v1124 = vadd.f32 %v891, %v1123
      %1125 = vmatmul.bf16.gmra.mxu0 %v1005
      %v1126 = vpop.f32.mrf.mxu0
      %v1127 = vadd.f32 %v894, %v1126
      %v1128 = vpop.f32.mrf.mxu0
      %v1129 = vadd.f32 %v896, %v1128
      %1130 = vmatmul.bf16.gmra.mxu0 %v1006
      %v1131 = vpop.f32.mrf.mxu0
      %v1132 = vadd.f32 %v899, %v1131
      %v1133 = vpop.f32.mrf.mxu0
      %v1134 = vadd.f32 %v901, %v1133
      %1135 = vmatmul.bf16.gmra.mxu0 %v1007
      %v1136 = vpop.f32.mrf.mxu0
      %v1137 = vadd.f32 %v904, %v1136
      %v1138 = vpop.f32.mrf.mxu0
      %v1139 = vadd.f32 %v906, %v1138
      %1140 = vmatmul.bf16.gmra.mxu0 %v1008
      %v1141 = vpop.f32.mrf.mxu0
      %v1142 = vadd.f32 %v909, %v1141
      %v1143 = vpop.f32.mrf.mxu0
      %v1144 = vadd.f32 %v911, %v1143
      %1145 = vmatmul.bf16.gmra.mxu0 %v1009
      %v1146 = vpop.f32.mrf.mxu0
      %v1147 = vadd.f32 %v914, %v1146
      %v1148 = vpop.f32.mrf.mxu0
      %v1149 = vadd.f32 %v916, %v1148
      %1150 = vmatmul.bf16.gmra.mxu0 %v1010
      %v1151 = vpop.f32.mrf.mxu0
      %v1152 = vadd.f32 %v919, %v1151
      %v1153 = vpop.f32.mrf.mxu0
      %v1154 = vadd.f32 %v921, %v1153
      %1155 = vmatmul.bf16.gmra.mxu0 %v1011
      %v1156 = vpop.f32.mrf.mxu0
      %v1157 = vadd.f32 %v924, %v1156
      %v1158 = vpop.f32.mrf.mxu0
      %v1159 = vadd.f32 %v926, %v1158
      %1160 = vmatmul.bf16.gmra.mxu0 %v1012
      %v1161 = vpop.f32.mrf.mxu0
      %v1162 = vadd.f32 %v929, %v1161
      %v1163 = vpop.f32.mrf.mxu0
      %v1164 = vadd.f32 %v931, %v1163
      %1165 = vdwg.mxu0
      %v1166 = vld [vmem:[%s233] sm:$0xe]
      %v1167 = vld [vmem:[%s233 + $0xc] sm:$0xe]
      %v1168 = vld [vmem:[%s233 + $0x18] sm:$0xe]
      %v1169 = vld [vmem:[%s233 + $0x24] sm:$0xe]
      %v1170 = vld [vmem:[%s233 + $0x30] sm:$0xe]
      %v1171 = vld [vmem:[%s233 + $0x3c] sm:$0xe]
      %v1172 = vld [vmem:[%s233 + $0x48] sm:$0xe]
      %v1173 = vld [vmem:[%s233 + $0x54] sm:$0xe]
      %v1174 = vld [vmem:[%s233 + $0x60] sm:$0xe]
      %v1175 = vld [vmem:[%s233 + $0x6c] sm:$0xe]
      %v1176 = vld [vmem:[%s233 + $0x78] sm:$0xe]
      %v1177 = vld [vmem:[%s233 + $0x84] sm:$0xe]
      %v1178 = vld [vmem:[%s233 + $0x90] sm:$0xe]
      %v1179 = vld [vmem:[%s233 + $0x9c] sm:$0xe]
      %v1180 = vld [vmem:[%s233 + $0xa8] sm:$0xe]
      %v1181 = vld [vmem:[%s233 + $0xb4] sm:$0xe]
      %vm1214 = vcmask 1042432
      %vm1215 = vcmask 1046532
      %vm1216 = vmor %vm1214, %vm1215
      %v1217 = vrot.slane %v1166, 5
      %v1218 = vrot.slane %v1217, 4
      %v1219 = vrot.slane %v265, 5
      %v1220 = vsel %vm1216, %v1218, %v1219
      %v1221 = vrot.slane %v1219, 4
      %v1222 = vrot.slane %v312, 5
      %v1223 = vsel %vm1216, %v1221, %v1222
      %v1224 = vrot.slane %v1167, 5
      %v1225 = vrot.slane %v1224, 4
      %v1226 = vrot.slane %v267, 5
      %v1227 = vsel %vm1216, %v1225, %v1226
      %v1228 = vrot.slane %v1226, 4
      %v1229 = vrot.slane %v313, 5
      %v1230 = vsel %vm1216, %v1228, %v1229
      %v1231 = vrot.slane %v1168, 5
      %v1232 = vrot.slane %v1231, 4
      %v1233 = vrot.slane %v269, 5
      %v1234 = vsel %vm1216, %v1232, %v1233
      %v1235 = vrot.slane %v1233, 4
      %v1236 = vrot.slane %v314, 5
      %v1237 = vsel %vm1216, %v1235, %v1236
      %v1238 = vrot.slane %v1169, 5
      %v1239 = vrot.slane %v1238, 4
      %v1240 = vrot.slane %v271, 5
      %v1241 = vsel %vm1216, %v1239, %v1240
      %v1242 = vrot.slane %v1240, 4
      %v1243 = vrot.slane %v315, 5
      %v1244 = vsel %vm1216, %v1242, %v1243
      %v1245 = vrot.slane %v1170, 5
      %v1246 = vrot.slane %v1245, 4
      %v1247 = vrot.slane %v273, 5
      %v1248 = vsel %vm1216, %v1246, %v1247
      %v1249 = vrot.slane %v1247, 4
      %v1250 = vrot.slane %v316, 5
      %v1251 = vsel %vm1216, %v1249, %v1250
      %v1252 = vrot.slane %v1171, 5
      %v1253 = vrot.slane %v1252, 4
      %v1254 = vrot.slane %v275, 5
      %v1255 = vsel %vm1216, %v1253, %v1254
      %v1256 = vrot.slane %v1254, 4
      %v1257 = vrot.slane %v317, 5
      %v1258 = vsel %vm1216, %v1256, %v1257
      %v1259 = vrot.slane %v1172, 5
      %v1260 = vrot.slane %v1259, 4
      %v1261 = vrot.slane %v277, 5
      %v1262 = vsel %vm1216, %v1260, %v1261
      %v1263 = vrot.slane %v1261, 4
      %v1264 = vrot.slane %v318, 5
      %v1265 = vsel %vm1216, %v1263, %v1264
      %v1266 = vrot.slane %v1173, 5
      %v1267 = vrot.slane %v1266, 4
      %v1268 = vrot.slane %v279, 5
      %v1269 = vsel %vm1216, %v1267, %v1268
      %v1270 = vrot.slane %v1268, 4
      %v1271 = vrot.slane %v319, 5
      %v1272 = vsel %vm1216, %v1270, %v1271
      %v1273 = vrot.slane %v1174, 5
      %v1274 = vrot.slane %v1273, 4
      %v1275 = vrot.slane %v281, 5
      %v1276 = vsel %vm1216, %v1274, %v1275
      %v1277 = vrot.slane %v1275, 4
      %v1278 = vrot.slane %v320, 5
      %v1279 = vsel %vm1216, %v1277, %v1278
      %v1280 = vrot.slane %v1175, 5
      %v1281 = vrot.slane %v1280, 4
      %v1282 = vrot.slane %v283, 5
      %v1283 = vsel %vm1216, %v1281, %v1282
      %v1284 = vrot.slane %v1282, 4
      %v1285 = vrot.slane %v321, 5
      %v1286 = vsel %vm1216, %v1284, %v1285
      %v1287 = vrot.slane %v1176, 5
      %v1288 = vrot.slane %v1287, 4
      %v1289 = vrot.slane %v285, 5
      %v1290 = vsel %vm1216, %v1288, %v1289
      %v1291 = vrot.slane %v1289, 4
      %v1292 = vrot.slane %v322, 5
      %v1293 = vsel %vm1216, %v1291, %v1292
      %v1294 = vrot.slane %v1177, 5
      %v1295 = vrot.slane %v1294, 4
      %v1296 = vrot.slane %v287, 5
      %v1297 = vsel %vm1216, %v1295, %v1296
      %v1298 = vrot.slane %v1296, 4
      %v1299 = vrot.slane %v323, 5
      %v1300 = vsel %vm1216, %v1298, %v1299
      %v1301 = vrot.slane %v1178, 5
      %v1302 = vrot.slane %v1301, 4
      %v1303 = vrot.slane %v289, 5
      %v1304 = vsel %vm1216, %v1302, %v1303
      %v1305 = vrot.slane %v1303, 4
      %v1306 = vrot.slane %v324, 5
      %v1307 = vsel %vm1216, %v1305, %v1306
      %v1308 = vrot.slane %v1179, 5
      %v1309 = vrot.slane %v1308, 4
      %v1310 = vrot.slane %v291, 5
      %v1311 = vsel %vm1216, %v1309, %v1310
      %v1312 = vrot.slane %v1310, 4
      %v1313 = vrot.slane %v325, 5
      %v1314 = vsel %vm1216, %v1312, %v1313
      %v1315 = vrot.slane %v1180, 5
      %v1316 = vrot.slane %v1315, 4
      %v1317 = vrot.slane %v293, 5
      %v1318 = vsel %vm1216, %v1316, %v1317
      %v1319 = vrot.slane %v1317, 4
      %v1320 = vrot.slane %v326, 5
      %v1321 = vsel %vm1216, %v1319, %v1320
      %v1322 = vrot.slane %v1181, 5
      %v1323 = vrot.slane %v1322, 4
      %v1324 = vrot.slane %v295, 5
      %v1325 = vsel %vm1216, %v1323, %v1324
      %v1326 = vrot.slane %v1324, 4
      %v1327 = vrot.slane %v327, 5
      %v1328 = vsel %vm1216, %v1326, %v1327
      %s1329 = scalar_lea.vmem %s1, 128
      %v1330 = vld [vmem:[%s1329] sm:$0xf]
      %v1331 = vld [vmem:[%s1329 + $0x4] sm:$0xf]
      %v1332 = vld [vmem:[%s1329 + $0x8] sm:$0xf]
      %v1333 = vld [vmem:[%s1329 + $0xc] sm:$0xf]
      %v1334 = vld [vmem:[%s1329 + $0x10] sm:$0xf]
      %v1335 = vld [vmem:[%s1329 + $0x14] sm:$0xf]
      %v1336 = vld [vmem:[%s1329 + $0x18] sm:$0xf]
      %v1337 = vld [vmem:[%s1329 + $0x1c] sm:$0xf]
      %v1338 = vld [vmem:[%s1329 + $0x20] sm:$0xf]
      %v1339 = vld [vmem:[%s1329 + $0x24] sm:$0xf]
      %v1340 = vld [vmem:[%s1329 + $0x28] sm:$0xf]
      %v1341 = vld [vmem:[%s1329 + $0x2c] sm:$0xf]
      %v1342 = vld [vmem:[%s1329 + $0x30] sm:$0xf]
      %v1343 = vld [vmem:[%s1329 + $0x34] sm:$0xf]
      %v1344 = vld [vmem:[%s1329 + $0x38] sm:$0xf]
      %v1345 = vld [vmem:[%s1329 + $0x3c] sm:$0xf]
      %v1346 = vunpack.c.l.b16 %v1220
      %v1347 = vunpack.c.l.b16 %v1223
      %v1348 = vunpack.c.l.b16 %v1227
      %v1349 = vunpack.c.l.b16 %v1230
      %v1350 = vunpack.c.l.b16 %v1234
      %v1351 = vunpack.c.l.b16 %v1237
      %v1352 = vunpack.c.l.b16 %v1241
      %v1353 = vunpack.c.l.b16 %v1244
      %v1354 = vunpack.c.l.b16 %v1248
      %v1355 = vunpack.c.l.b16 %v1251
      %v1356 = vunpack.c.l.b16 %v1255
      %v1357 = vunpack.c.l.b16 %v1258
      %v1358 = vunpack.c.l.b16 %v1262
      %v1359 = vunpack.c.l.b16 %v1265
      %v1360 = vunpack.c.l.b16 %v1269
      %v1361 = vunpack.c.l.b16 %v1272
      %v1362 = vunpack.c.l.b16 %v1276
      %v1363 = vunpack.c.l.b16 %v1279
      %v1364 = vunpack.c.l.b16 %v1283
      %v1365 = vunpack.c.l.b16 %v1286
      %v1366 = vunpack.c.l.b16 %v1290
      %v1367 = vunpack.c.l.b16 %v1293
      %v1368 = vunpack.c.l.b16 %v1297
      %v1369 = vunpack.c.l.b16 %v1300
      %v1370 = vunpack.c.l.b16 %v1304
      %v1371 = vunpack.c.l.b16 %v1307
      %v1372 = vunpack.c.l.b16 %v1311
      %v1373 = vunpack.c.l.b16 %v1314
      %v1374 = vunpack.c.l.b16 %v1318
      %v1375 = vunpack.c.l.b16 %v1321
      %v1376 = vunpack.c.l.b16 %v1325
      %v1377 = vunpack.c.l.b16 %v1328
      %v1378 = vpack.c.b16 %v1347, %v1346
      %v1379 = vpack.c.b16 %v1349, %v1348
      %v1380 = vpack.c.b16 %v1351, %v1350
      %v1381 = vpack.c.b16 %v1353, %v1352
      %v1382 = vpack.c.b16 %v1355, %v1354
      %v1383 = vpack.c.b16 %v1357, %v1356
      %v1384 = vpack.c.b16 %v1359, %v1358
      %v1385 = vpack.c.b16 %v1361, %v1360
      %v1386 = vpack.c.b16 %v1363, %v1362
      %v1387 = vpack.c.b16 %v1365, %v1364
      %v1388 = vpack.c.b16 %v1367, %v1366
      %v1389 = vpack.c.b16 %v1369, %v1368
      %v1390 = vpack.c.b16 %v1371, %v1370
      %v1391 = vpack.c.b16 %v1373, %v1372
      %v1392 = vpack.c.b16 %v1375, %v1374
      %v1393 = vpack.c.b16 %v1377, %v1376
      %v1426 = vunpack.c.l.b16 %v1330
      %v1427 = vunpack.c.l.b16 %v1331
      %v1428 = vunpack.c.l.b16 %v1332
      %v1429 = vunpack.c.l.b16 %v1333
      %v1430 = vunpack.c.l.b16 %v1334
      %v1431 = vunpack.c.l.b16 %v1335
      %v1432 = vunpack.c.l.b16 %v1336
      %v1433 = vunpack.c.l.b16 %v1337
      %v1434 = vunpack.c.l.b16 %v1338
      %v1435 = vunpack.c.l.b16 %v1339
      %v1436 = vunpack.c.l.b16 %v1340
      %v1437 = vunpack.c.l.b16 %v1341
      %v1438 = vunpack.c.l.b16 %v1342
      %v1439 = vunpack.c.l.b16 %v1343
      %v1440 = vunpack.c.l.b16 %v1344
      %v1441 = vunpack.c.l.b16 %v1345
      %v1442 = vpack.c.b16 %v1427, %v1426
      %v1443 = vpack.c.b16 %v1429, %v1428
      %v1444 = vpack.c.b16 %v1431, %v1430
      %v1445 = vpack.c.b16 %v1433, %v1432
      %v1446 = vpack.c.b16 %v1435, %v1434
      %v1447 = vpack.c.b16 %v1437, %v1436
      %v1448 = vpack.c.b16 %v1439, %v1438
      %v1449 = vpack.c.b16 %v1441, %v1440
      %1458 = vmatpush.bf16.msra.mxu0 %v1449
      %1459 = vmatpush.bf16.msra.mxu0 %v1448
      %1460 = vmatpush.bf16.msra.mxu0 %v1447
      %1461 = vmatpush.bf16.msra.mxu0 %v1446
      %1462 = vmatpush.bf16.msra.mxu0 %v1445
      %1463 = vmatpush.bf16.msra.mxu0 %v1444
      %1464 = vmatpush.bf16.msra.mxu0 %v1443
      %1465 = vmatpush.bf16.msra.mxu0 %v1442
      %1466 = vmatmul.bf16.gmra.mxu0 %v1378
      %v1467 = vpop.f32.mrf.mxu0
      %v1468 = vadd.f32 0.0, %v1467
      %v1469 = vpop.f32.mrf.mxu0
      %v1470 = vadd.f32 0.0, %v1469
      %1471 = vmatmul.bf16.gmra.mxu0 %v1379
      %v1472 = vpop.f32.mrf.mxu0
      %v1473 = vadd.f32 0.0, %v1472
      %v1474 = vpop.f32.mrf.mxu0
      %v1475 = vadd.f32 0.0, %v1474
      %1476 = vmatmul.bf16.gmra.mxu0 %v1380
      %v1477 = vpop.f32.mrf.mxu0
      %v1478 = vadd.f32 0.0, %v1477
      %v1479 = vpop.f32.mrf.mxu0
      %v1480 = vadd.f32 0.0, %v1479
      %1481 = vmatmul.bf16.gmra.mxu0 %v1381
      %v1482 = vpop.f32.mrf.mxu0
      %v1483 = vadd.f32 0.0, %v1482
      %v1484 = vpop.f32.mrf.mxu0
      %v1485 = vadd.f32 0.0, %v1484
      %1486 = vmatmul.bf16.gmra.mxu0 %v1382
      %v1487 = vpop.f32.mrf.mxu0
      %v1488 = vadd.f32 0.0, %v1487
      %v1489 = vpop.f32.mrf.mxu0
      %v1490 = vadd.f32 0.0, %v1489
      %1491 = vmatmul.bf16.gmra.mxu0 %v1383
      %v1492 = vpop.f32.mrf.mxu0
      %v1493 = vadd.f32 0.0, %v1492
      %v1494 = vpop.f32.mrf.mxu0
      %v1495 = vadd.f32 0.0, %v1494
      %1496 = vmatmul.bf16.gmra.mxu0 %v1384
      %v1497 = vpop.f32.mrf.mxu0
      %v1498 = vadd.f32 0.0, %v1497
      %v1499 = vpop.f32.mrf.mxu0
      %v1500 = vadd.f32 0.0, %v1499
      %1501 = vmatmul.bf16.gmra.mxu0 %v1385
      %v1502 = vpop.f32.mrf.mxu0
      %v1503 = vadd.f32 0.0, %v1502
      %v1504 = vpop.f32.mrf.mxu0
      %v1505 = vadd.f32 0.0, %v1504
      %1506 = vmatmul.bf16.gmra.mxu0 %v1386
      %v1507 = vpop.f32.mrf.mxu0
      %v1508 = vadd.f32 0.0, %v1507
      %v1509 = vpop.f32.mrf.mxu0
      %v1510 = vadd.f32 0.0, %v1509
      %1511 = vmatmul.bf16.gmra.mxu0 %v1387
      %v1512 = vpop.f32.mrf.mxu0
      %v1513 = vadd.f32 0.0, %v1512
      %v1514 = vpop.f32.mrf.mxu0
      %v1515 = vadd.f32 0.0, %v1514
      %1516 = vmatmul.bf16.gmra.mxu0 %v1388
      %v1517 = vpop.f32.mrf.mxu0
      %v1518 = vadd.f32 0.0, %v1517
      %v1519 = vpop.f32.mrf.mxu0
      %v1520 = vadd.f32 0.0, %v1519
      %1521 = vmatmul.bf16.gmra.mxu0 %v1389
      %v1522 = vpop.f32.mrf.mxu0
      %v1523 = vadd.f32 0.0, %v1522
      %v1524 = vpop.f32.mrf.mxu0
      %v1525 = vadd.f32 0.0, %v1524
      %1526 = vmatmul.bf16.gmra.mxu0 %v1390
      %v1527 = vpop.f32.mrf.mxu0
      %v1528 = vadd.f32 0.0, %v1527
      %v1529 = vpop.f32.mrf.mxu0
      %v1530 = vadd.f32 0.0, %v1529
      %1531 = vmatmul.bf16.gmra.mxu0 %v1391
      %v1532 = vpop.f32.mrf.mxu0
      %v1533 = vadd.f32 0.0, %v1532
      %v1534 = vpop.f32.mrf.mxu0
      %v1535 = vadd.f32 0.0, %v1534
      %1536 = vmatmul.bf16.gmra.mxu0 %v1392
      %v1537 = vpop.f32.mrf.mxu0
      %v1538 = vadd.f32 0.0, %v1537
      %v1539 = vpop.f32.mrf.mxu0
      %v1540 = vadd.f32 0.0, %v1539
      %1541 = vmatmul.bf16.gmra.mxu0 %v1393
      %v1542 = vpop.f32.mrf.mxu0
      %v1543 = vadd.f32 0.0, %v1542
      %v1544 = vpop.f32.mrf.mxu0
      %v1545 = vadd.f32 0.0, %v1544
      %1546 = vdwg.mxu0
      %v1547 = vadd.f32 %v1087, %v1468
      %v1548 = vadd.f32 %v1089, %v1470
      %v1549 = vadd.f32 %v1092, %v1473
      %v1550 = vadd.f32 %v1094, %v1475
      %v1551 = vadd.f32 %v1097, %v1478
      %v1552 = vadd.f32 %v1099, %v1480
      %v1553 = vadd.f32 %v1102, %v1483
      %v1554 = vadd.f32 %v1104, %v1485
      %v1555 = vadd.f32 %v1107, %v1488
      %v1556 = vadd.f32 %v1109, %v1490
      %v1557 = vadd.f32 %v1112, %v1493
      %v1558 = vadd.f32 %v1114, %v1495
      %v1559 = vadd.f32 %v1117, %v1498
      %v1560 = vadd.f32 %v1119, %v1500
      %v1561 = vadd.f32 %v1122, %v1503
      %v1562 = vadd.f32 %v1124, %v1505
      %v1563 = vadd.f32 %v1127, %v1508
      %v1564 = vadd.f32 %v1129, %v1510
      %v1565 = vadd.f32 %v1132, %v1513
      %v1566 = vadd.f32 %v1134, %v1515
      %v1567 = vadd.f32 %v1137, %v1518
      %v1568 = vadd.f32 %v1139, %v1520
      %v1569 = vadd.f32 %v1142, %v1523
      %v1570 = vadd.f32 %v1144, %v1525
      %v1571 = vadd.f32 %v1147, %v1528
      %v1572 = vadd.f32 %v1149, %v1530
      %v1573 = vadd.f32 %v1152, %v1533
      %v1574 = vadd.f32 %v1154, %v1535
      %v1575 = vadd.f32 %v1157, %v1538
      %v1576 = vadd.f32 %v1159, %v1540
      %v1577 = vadd.f32 %v1162, %v1543
      %v1578 = vadd.f32 %v1164, %v1545
      %s1579 = scalar_lea.vmem %s233, 12
      %v1580 = vld [vmem:[%s1579] sm:$0xf]
      %v1581 = vld [vmem:[%s1579 + $0x4] sm:$0xf]
      %v1582 = vld [vmem:[%s1579 + $0xc] sm:$0xf]
      %v1583 = vld [vmem:[%s1579 + $0x10] sm:$0xf]
      %v1584 = vld [vmem:[%s1579 + $0x18] sm:$0xf]
      %v1585 = vld [vmem:[%s1579 + $0x1c] sm:$0xf]
      %v1586 = vld [vmem:[%s1579 + $0x24] sm:$0xf]
      %v1587 = vld [vmem:[%s1579 + $0x28] sm:$0xf]
      %v1588 = vld [vmem:[%s1579 + $0x30] sm:$0xf]
      %v1589 = vld [vmem:[%s1579 + $0x34] sm:$0xf]
      %v1590 = vld [vmem:[%s1579 + $0x3c] sm:$0xf]
      %v1591 = vld [vmem:[%s1579 + $0x40] sm:$0xf]
      %v1592 = vld [vmem:[%s1579 + $0x48] sm:$0xf]
      %v1593 = vld [vmem:[%s1579 + $0x4c] sm:$0xf]
      %v1594 = vld [vmem:[%s1579 + $0x54] sm:$0xf]
      %v1595 = vld [vmem:[%s1579 + $0x58] sm:$0xf]
      %v1596 = vld [vmem:[%s1579 + $0x60] sm:$0xf]
      %v1597 = vld [vmem:[%s1579 + $0x64] sm:$0xf]
      %v1598 = vld [vmem:[%s1579 + $0x6c] sm:$0xf]
      %v1599 = vld [vmem:[%s1579 + $0x70] sm:$0xf]
      %v1600 = vld [vmem:[%s1579 + $0x78] sm:$0xf]
      %v1601 = vld [vmem:[%s1579 + $0x7c] sm:$0xf]
      %v1602 = vld [vmem:[%s1579 + $0x84] sm:$0xf]
      %v1603 = vld [vmem:[%s1579 + $0x88] sm:$0xf]
      %v1604 = vld [vmem:[%s1579 + $0x90] sm:$0xf]
      %v1605 = vld [vmem:[%s1579 + $0x94] sm:$0xf]
      %v1606 = vld [vmem:[%s1579 + $0x9c] sm:$0xf]
      %v1607 = vld [vmem:[%s1579 + $0xa0] sm:$0xf]
      %v1608 = vld [vmem:[%s1579 + $0xa8] sm:$0xf]
      %v1609 = vld [vmem:[%s1579 + $0xac] sm:$0xf]
      %v1610 = vld [vmem:[%s1579 + $0xb4] sm:$0xf]
      %v1611 = vld [vmem:[%s1579 + $0xb8] sm:$0xf]
      %s1612 = scalar_lea.vmem %s1, 192
      %v1613 = vld [vmem:[%s1612] sm:$0xf]
      %v1614 = vld [vmem:[%s1612 + $0x4] sm:$0xf]
      %v1615 = vld [vmem:[%s1612 + $0x8] sm:$0xf]
      %v1616 = vld [vmem:[%s1612 + $0xc] sm:$0xf]
      %v1617 = vld [vmem:[%s1612 + $0x10] sm:$0xf]
      %v1618 = vld [vmem:[%s1612 + $0x14] sm:$0xf]
      %v1619 = vld [vmem:[%s1612 + $0x18] sm:$0xf]
      %v1620 = vld [vmem:[%s1612 + $0x1c] sm:$0xf]
      %v1621 = vld [vmem:[%s1612 + $0x20] sm:$0xf]
      %v1622 = vld [vmem:[%s1612 + $0x24] sm:$0xf]
      %v1623 = vld [vmem:[%s1612 + $0x28] sm:$0xf]
      %v1624 = vld [vmem:[%s1612 + $0x2c] sm:$0xf]
      %v1625 = vld [vmem:[%s1612 + $0x30] sm:$0xf]
      %v1626 = vld [vmem:[%s1612 + $0x34] sm:$0xf]
      %v1627 = vld [vmem:[%s1612 + $0x38] sm:$0xf]
      %v1628 = vld [vmem:[%s1612 + $0x3c] sm:$0xf]
      %v1661 = vunpack.c.l.b16 %v1580
      %v1662 = vunpack.c.l.b16 %v1581
      %v1663 = vunpack.c.l.b16 %v1582
      %v1664 = vunpack.c.l.b16 %v1583
      %v1665 = vunpack.c.l.b16 %v1584
      %v1666 = vunpack.c.l.b16 %v1585
      %v1667 = vunpack.c.l.b16 %v1586
      %v1668 = vunpack.c.l.b16 %v1587
      %v1669 = vunpack.c.l.b16 %v1588
      %v1670 = vunpack.c.l.b16 %v1589
      %v1671 = vunpack.c.l.b16 %v1590
      %v1672 = vunpack.c.l.b16 %v1591
      %v1673 = vunpack.c.l.b16 %v1592
      %v1674 = vunpack.c.l.b16 %v1593
      %v1675 = vunpack.c.l.b16 %v1594
      %v1676 = vunpack.c.l.b16 %v1595
      %v1677 = vunpack.c.l.b16 %v1596
      %v1678 = vunpack.c.l.b16 %v1597
      %v1679 = vunpack.c.l.b16 %v1598
      %v1680 = vunpack.c.l.b16 %v1599
      %v1681 = vunpack.c.l.b16 %v1600
      %v1682 = vunpack.c.l.b16 %v1601
      %v1683 = vunpack.c.l.b16 %v1602
      %v1684 = vunpack.c.l.b16 %v1603
      %v1685 = vunpack.c.l.b16 %v1604
      %v1686 = vunpack.c.l.b16 %v1605
      %v1687 = vunpack.c.l.b16 %v1606
      %v1688 = vunpack.c.l.b16 %v1607
      %v1689 = vunpack.c.l.b16 %v1608
      %v1690 = vunpack.c.l.b16 %v1609
      %v1691 = vunpack.c.l.b16 %v1610
      %v1692 = vunpack.c.l.b16 %v1611
      %v1693 = vpack.c.b16 %v1662, %v1661
      %v1694 = vpack.c.b16 %v1664, %v1663
      %v1695 = vpack.c.b16 %v1666, %v1665
      %v1696 = vpack.c.b16 %v1668, %v1667
      %v1697 = vpack.c.b16 %v1670, %v1669
      %v1698 = vpack.c.b16 %v1672, %v1671
      %v1699 = vpack.c.b16 %v1674, %v1673
      %v1700 = vpack.c.b16 %v1676, %v1675
      %v1701 = vpack.c.b16 %v1678, %v1677
      %v1702 = vpack.c.b16 %v1680, %v1679
      %v1703 = vpack.c.b16 %v1682, %v1681
      %v1704 = vpack.c.b16 %v1684, %v1683
      %v1705 = vpack.c.b16 %v1686, %v1685
      %v1706 = vpack.c.b16 %v1688, %v1687
      %v1707 = vpack.c.b16 %v1690, %v1689
      %v1708 = vpack.c.b16 %v1692, %v1691
      %v1741 = vunpack.c.l.b16 %v1613
      %v1742 = vunpack.c.l.b16 %v1614
      %v1743 = vunpack.c.l.b16 %v1615
      %v1744 = vunpack.c.l.b16 %v1616
      %v1745 = vunpack.c.l.b16 %v1617
      %v1746 = vunpack.c.l.b16 %v1618
      %v1747 = vunpack.c.l.b16 %v1619
      %v1748 = vunpack.c.l.b16 %v1620
      %v1749 = vunpack.c.l.b16 %v1621
      %v1750 = vunpack.c.l.b16 %v1622
      %v1751 = vunpack.c.l.b16 %v1623
      %v1752 = vunpack.c.l.b16 %v1624
      %v1753 = vunpack.c.l.b16 %v1625
      %v1754 = vunpack.c.l.b16 %v1626
      %v1755 = vunpack.c.l.b16 %v1627
      %v1756 = vunpack.c.l.b16 %v1628
      %v1757 = vpack.c.b16 %v1742, %v1741
      %v1758 = vpack.c.b16 %v1744, %v1743
      %v1759 = vpack.c.b16 %v1746, %v1745
      %v1760 = vpack.c.b16 %v1748, %v1747
      %v1761 = vpack.c.b16 %v1750, %v1749
      %v1762 = vpack.c.b16 %v1752, %v1751
      %v1763 = vpack.c.b16 %v1754, %v1753
      %v1764 = vpack.c.b16 %v1756, %v1755
      %1773 = vmatpush.bf16.msra.mxu0 %v1764
      %1774 = vmatpush.bf16.msra.mxu0 %v1763
      %1775 = vmatpush.bf16.msra.mxu0 %v1762
      %1776 = vmatpush.bf16.msra.mxu0 %v1761
      %1777 = vmatpush.bf16.msra.mxu0 %v1760
      %1778 = vmatpush.bf16.msra.mxu0 %v1759
      %1779 = vmatpush.bf16.msra.mxu0 %v1758
      %1780 = vmatpush.bf16.msra.mxu0 %v1757
      %1781 = vmatmul.bf16.gmra.mxu0 %v1693
      %v1782 = vpop.f32.mrf.mxu0
      %v1783 = vadd.f32 0.0, %v1782
      %v1784 = vpop.f32.mrf.mxu0
      %v1785 = vadd.f32 0.0, %v1784
      %1786 = vmatmul.bf16.gmra.mxu0 %v1694
      %v1787 = vpop.f32.mrf.mxu0
      %v1788 = vadd.f32 0.0, %v1787
      %v1789 = vpop.f32.mrf.mxu0
      %v1790 = vadd.f32 0.0, %v1789
      %1791 = vmatmul.bf16.gmra.mxu0 %v1695
      %v1792 = vpop.f32.mrf.mxu0
      %v1793 = vadd.f32 0.0, %v1792
      %v1794 = vpop.f32.mrf.mxu0
      %v1795 = vadd.f32 0.0, %v1794
      %1796 = vmatmul.bf16.gmra.mxu0 %v1696
      %v1797 = vpop.f32.mrf.mxu0
      %v1798 = vadd.f32 0.0, %v1797
      %v1799 = vpop.f32.mrf.mxu0
      %v1800 = vadd.f32 0.0, %v1799
      %1801 = vmatmul.bf16.gmra.mxu0 %v1697
      %v1802 = vpop.f32.mrf.mxu0
      %v1803 = vadd.f32 0.0, %v1802
      %v1804 = vpop.f32.mrf.mxu0
      %v1805 = vadd.f32 0.0, %v1804
      %1806 = vmatmul.bf16.gmra.mxu0 %v1698
      %v1807 = vpop.f32.mrf.mxu0
      %v1808 = vadd.f32 0.0, %v1807
      %v1809 = vpop.f32.mrf.mxu0
      %v1810 = vadd.f32 0.0, %v1809
      %1811 = vmatmul.bf16.gmra.mxu0 %v1699
      %v1812 = vpop.f32.mrf.mxu0
      %v1813 = vadd.f32 0.0, %v1812
      %v1814 = vpop.f32.mrf.mxu0
      %v1815 = vadd.f32 0.0, %v1814
      %1816 = vmatmul.bf16.gmra.mxu0 %v1700
      %v1817 = vpop.f32.mrf.mxu0
      %v1818 = vadd.f32 0.0, %v1817
      %v1819 = vpop.f32.mrf.mxu0
      %v1820 = vadd.f32 0.0, %v1819
      %1821 = vmatmul.bf16.gmra.mxu0 %v1701
      %v1822 = vpop.f32.mrf.mxu0
      %v1823 = vadd.f32 0.0, %v1822
      %v1824 = vpop.f32.mrf.mxu0
      %v1825 = vadd.f32 0.0, %v1824
      %1826 = vmatmul.bf16.gmra.mxu0 %v1702
      %v1827 = vpop.f32.mrf.mxu0
      %v1828 = vadd.f32 0.0, %v1827
      %v1829 = vpop.f32.mrf.mxu0
      %v1830 = vadd.f32 0.0, %v1829
      %1831 = vmatmul.bf16.gmra.mxu0 %v1703
      %v1832 = vpop.f32.mrf.mxu0
      %v1833 = vadd.f32 0.0, %v1832
      %v1834 = vpop.f32.mrf.mxu0
      %v1835 = vadd.f32 0.0, %v1834
      %1836 = vmatmul.bf16.gmra.mxu0 %v1704
      %v1837 = vpop.f32.mrf.mxu0
      %v1838 = vadd.f32 0.0, %v1837
      %v1839 = vpop.f32.mrf.mxu0
      %v1840 = vadd.f32 0.0, %v1839
      %1841 = vmatmul.bf16.gmra.mxu0 %v1705
      %v1842 = vpop.f32.mrf.mxu0
      %v1843 = vadd.f32 0.0, %v1842
      %v1844 = vpop.f32.mrf.mxu0
      %v1845 = vadd.f32 0.0, %v1844
      %1846 = vmatmul.bf16.gmra.mxu0 %v1706
      %v1847 = vpop.f32.mrf.mxu0
      %v1848 = vadd.f32 0.0, %v1847
      %v1849 = vpop.f32.mrf.mxu0
      %v1850 = vadd.f32 0.0, %v1849
      %1851 = vmatmul.bf16.gmra.mxu0 %v1707
      %v1852 = vpop.f32.mrf.mxu0
      %v1853 = vadd.f32 0.0, %v1852
      %v1854 = vpop.f32.mrf.mxu0
      %v1855 = vadd.f32 0.0, %v1854
      %1856 = vmatmul.bf16.gmra.mxu0 %v1708
      %v1857 = vpop.f32.mrf.mxu0
      %v1858 = vadd.f32 0.0, %v1857
      %v1859 = vpop.f32.mrf.mxu0
      %v1860 = vadd.f32 0.0, %v1859
      %1861 = vdwg.mxu0
      %v1862 = vadd.f32 %v1547, %v1783
      %v1863 = vadd.f32 %v1548, %v1785
      %v1864 = vadd.f32 %v1549, %v1788
      %v1865 = vadd.f32 %v1550, %v1790
      %v1866 = vadd.f32 %v1551, %v1793
      %v1867 = vadd.f32 %v1552, %v1795
      %v1868 = vadd.f32 %v1553, %v1798
      %v1869 = vadd.f32 %v1554, %v1800
      %v1870 = vadd.f32 %v1555, %v1803
      %v1871 = vadd.f32 %v1556, %v1805
      %v1872 = vadd.f32 %v1557, %v1808
      %v1873 = vadd.f32 %v1558, %v1810
      %v1874 = vadd.f32 %v1559, %v1813
      %v1875 = vadd.f32 %v1560, %v1815
      %v1876 = vadd.f32 %v1561, %v1818
      %v1877 = vadd.f32 %v1562, %v1820
      %v1878 = vadd.f32 %v1563, %v1823
      %v1879 = vadd.f32 %v1564, %v1825
      %v1880 = vadd.f32 %v1565, %v1828
      %v1881 = vadd.f32 %v1566, %v1830
      %v1882 = vadd.f32 %v1567, %v1833
      %v1883 = vadd.f32 %v1568, %v1835
      %v1884 = vadd.f32 %v1569, %v1838
      %v1885 = vadd.f32 %v1570, %v1840
      %v1886 = vadd.f32 %v1571, %v1843
      %v1887 = vadd.f32 %v1572, %v1845
      %v1888 = vadd.f32 %v1573, %v1848
      %v1889 = vadd.f32 %v1574, %v1850
      %v1890 = vadd.f32 %v1575, %v1853
      %v1891 = vadd.f32 %v1576, %v1855
      %v1892 = vadd.f32 %v1577, %v1858
      %v1893 = vadd.f32 %v1578, %v1860
      %v1894 = vld [vmem:[%s1579] sm:$0xf]
      %v1895 = vld [vmem:[%s1579 + $0x4] sm:$0xf]
      %v1896 = vld [vmem:[%s1579 + $0x8] sm:$0x1]
      %v1897 = vld [vmem:[%s1579 + $0xc] sm:$0xf]
      %v1898 = vld [vmem:[%s1579 + $0x10] sm:$0xf]
      %v1899 = vld [vmem:[%s1579 + $0x14] sm:$0x1]
      %v1900 = vld [vmem:[%s1579 + $0x18] sm:$0xf]
      %v1901 = vld [vmem:[%s1579 + $0x1c] sm:$0xf]
      %v1902 = vld [vmem:[%s1579 + $0x20] sm:$0x1]
      %v1903 = vld [vmem:[%s1579 + $0x24] sm:$0xf]
      %v1904 = vld [vmem:[%s1579 + $0x28] sm:$0xf]
      %v1905 = vld [vmem:[%s1579 + $0x2c] sm:$0x1]
      %v1906 = vld [vmem:[%s1579 + $0x30] sm:$0xf]
      %v1907 = vld [vmem:[%s1579 + $0x34] sm:$0xf]
      %v1908 = vld [vmem:[%s1579 + $0x38] sm:$0x1]
      %v1909 = vld [vmem:[%s1579 + $0x3c] sm:$0xf]
      %v1910 = vld [vmem:[%s1579 + $0x40] sm:$0xf]
      %v1911 = vld [vmem:[%s1579 + $0x44] sm:$0x1]
      %v1912 = vld [vmem:[%s1579 + $0x48] sm:$0xf]
      %v1913 = vld [vmem:[%s1579 + $0x4c] sm:$0xf]
      %v1914 = vld [vmem:[%s1579 + $0x50] sm:$0x1]
      %v1915 = vld [vmem:[%s1579 + $0x54] sm:$0xf]
      %v1916 = vld [vmem:[%s1579 + $0x58] sm:$0xf]
      %v1917 = vld [vmem:[%s1579 + $0x5c] sm:$0x1]
      %v1918 = vld [vmem:[%s1579 + $0x60] sm:$0xf]
      %v1919 = vld [vmem:[%s1579 + $0x64] sm:$0xf]
      %v1920 = vld [vmem:[%s1579 + $0x68] sm:$0x1]
      %v1921 = vld [vmem:[%s1579 + $0x6c] sm:$0xf]
      %v1922 = vld [vmem:[%s1579 + $0x70] sm:$0xf]
      %v1923 = vld [vmem:[%s1579 + $0x74] sm:$0x1]
      %v1924 = vld [vmem:[%s1579 + $0x78] sm:$0xf]
      %v1925 = vld [vmem:[%s1579 + $0x7c] sm:$0xf]
      %v1926 = vld [vmem:[%s1579 + $0x80] sm:$0x1]
      %v1927 = vld [vmem:[%s1579 + $0x84] sm:$0xf]
      %v1928 = vld [vmem:[%s1579 + $0x88] sm:$0xf]
      %v1929 = vld [vmem:[%s1579 + $0x8c] sm:$0x1]
      %v1930 = vld [vmem:[%s1579 + $0x90] sm:$0xf]
      %v1931 = vld [vmem:[%s1579 + $0x94] sm:$0xf]
      %v1932 = vld [vmem:[%s1579 + $0x98] sm:$0x1]
      %v1933 = vld [vmem:[%s1579 + $0x9c] sm:$0xf]
      %v1934 = vld [vmem:[%s1579 + $0xa0] sm:$0xf]
      %v1935 = vld [vmem:[%s1579 + $0xa4] sm:$0x1]
      %v1936 = vld [vmem:[%s1579 + $0xa8] sm:$0xf]
      %v1937 = vld [vmem:[%s1579 + $0xac] sm:$0xf]
      %v1938 = vld [vmem:[%s1579 + $0xb0] sm:$0x1]
      %v1939 = vld [vmem:[%s1579 + $0xb4] sm:$0xf]
      %v1940 = vld [vmem:[%s1579 + $0xb8] sm:$0xf]
      %v1941 = vld [vmem:[%s1579 + $0xbc] sm:$0x1]
      %v1943 = vshrl.u32 %v1894, 16
      %v1945 = vrot.slane %v1943, 4
      %v1946 = vshll.u32 %v1894, 16
      %v1948 = vrot.slane %v1946, 5
      %v1949 = vor.u32 %v1945, %v1948
      %v1950 = vrot.slane %v1949, 4
      %v1952 = vshll.u32 %v1895, 16
      %v1954 = vrot.slane %v1952, 5
      %v1955 = vsel %vm330, %v1950, %v1954
      %v1956 = vshrl.u32 %v1895, 16
      %v1958 = vrot.slane %v1956, 4
      %v1959 = vor.u32 %v1958, %v1954
      %v1960 = vrot.slane %v1959, 4
      %v1962 = vshll.u32 %v1896, 16
      %v1964 = vrot.slane %v1962, 5
      %v1965 = vsel %vm330, %v1960, %v1964
      %v1967 = vshrl.u32 %v1897, 16
      %v1969 = vrot.slane %v1967, 4
      %v1970 = vshll.u32 %v1897, 16
      %v1972 = vrot.slane %v1970, 5
      %v1973 = vor.u32 %v1969, %v1972
      %v1974 = vrot.slane %v1973, 4
      %v1976 = vshll.u32 %v1898, 16
      %v1978 = vrot.slane %v1976, 5
      %v1979 = vsel %vm330, %v1974, %v1978
      %v1980 = vshrl.u32 %v1898, 16
      %v1982 = vrot.slane %v1980, 4
      %v1983 = vor.u32 %v1982, %v1978
      %v1984 = vrot.slane %v1983, 4
      %v1986 = vshll.u32 %v1899, 16
      %v1988 = vrot.slane %v1986, 5
      %v1989 = vsel %vm330, %v1984, %v1988
      %v1991 = vshrl.u32 %v1900, 16
      %v1993 = vrot.slane %v1991, 4
      %v1994 = vshll.u32 %v1900, 16
      %v1996 = vrot.slane %v1994, 5
      %v1997 = vor.u32 %v1993, %v1996
      %v1998 = vrot.slane %v1997, 4
      %v2000 = vshll.u32 %v1901, 16
      %v2002 = vrot.slane %v2000, 5
      %v2003 = vsel %vm330, %v1998, %v2002
      %v2004 = vshrl.u32 %v1901, 16
      %v2006 = vrot.slane %v2004, 4
      %v2007 = vor.u32 %v2006, %v2002
      %v2008 = vrot.slane %v2007, 4
      %v2010 = vshll.u32 %v1902, 16
      %v2012 = vrot.slane %v2010, 5
      %v2013 = vsel %vm330, %v2008, %v2012
      %v2015 = vshrl.u32 %v1903, 16
      %v2017 = vrot.slane %v2015, 4
      %v2018 = vshll.u32 %v1903, 16
      %v2020 = vrot.slane %v2018, 5
      %v2021 = vor.u32 %v2017, %v2020
      %v2022 = vrot.slane %v2021, 4
      %v2024 = vshll.u32 %v1904, 16
      %v2026 = vrot.slane %v2024, 5
      %v2027 = vsel %vm330, %v2022, %v2026
      %v2028 = vshrl.u32 %v1904, 16
      %v2030 = vrot.slane %v2028, 4
      %v2031 = vor.u32 %v2030, %v2026
      %v2032 = vrot.slane %v2031, 4
      %v2034 = vshll.u32 %v1905, 16
      %v2036 = vrot.slane %v2034, 5
      %v2037 = vsel %vm330, %v2032, %v2036
      %v2039 = vshrl.u32 %v1906, 16
      %v2041 = vrot.slane %v2039, 4
      %v2042 = vshll.u32 %v1906, 16
      %v2044 = vrot.slane %v2042, 5
      %v2045 = vor.u32 %v2041, %v2044
      %v2046 = vrot.slane %v2045, 4
      %v2048 = vshll.u32 %v1907, 16
      %v2050 = vrot.slane %v2048, 5
      %v2051 = vsel %vm330, %v2046, %v2050
      %v2052 = vshrl.u32 %v1907, 16
      %v2054 = vrot.slane %v2052, 4
      %v2055 = vor.u32 %v2054, %v2050
      %v2056 = vrot.slane %v2055, 4
      %v2058 = vshll.u32 %v1908, 16
      %v2060 = vrot.slane %v2058, 5
      %v2061 = vsel %vm330, %v2056, %v2060
      %v2063 = vshrl.u32 %v1909, 16
      %v2065 = vrot.slane %v2063, 4
      %v2066 = vshll.u32 %v1909, 16
      %v2068 = vrot.slane %v2066, 5
      %v2069 = vor.u32 %v2065, %v2068
      %v2070 = vrot.slane %v2069, 4
      %v2072 = vshll.u32 %v1910, 16
      %v2074 = vrot.slane %v2072, 5
      %v2075 = vsel %vm330, %v2070, %v2074
      %v2076 = vshrl.u32 %v1910, 16
      %v2078 = vrot.slane %v2076, 4
      %v2079 = vor.u32 %v2078, %v2074
      %v2080 = vrot.slane %v2079, 4
      %v2082 = vshll.u32 %v1911, 16
      %v2084 = vrot.slane %v2082, 5
      %v2085 = vsel %vm330, %v2080, %v2084
      %v2087 = vshrl.u32 %v1912, 16
      %v2089 = vrot.slane %v2087, 4
      %v2090 = vshll.u32 %v1912, 16
      %v2092 = vrot.slane %v2090, 5
      %v2093 = vor.u32 %v2089, %v2092
      %v2094 = vrot.slane %v2093, 4
      %v2096 = vshll.u32 %v1913, 16
      %v2098 = vrot.slane %v2096, 5
      %v2099 = vsel %vm330, %v2094, %v2098
      %v2100 = vshrl.u32 %v1913, 16
      %v2102 = vrot.slane %v2100, 4
      %v2103 = vor.u32 %v2102, %v2098
      %v2104 = vrot.slane %v2103, 4
      %v2106 = vshll.u32 %v1914, 16
      %v2108 = vrot.slane %v2106, 5
      %v2109 = vsel %vm330, %v2104, %v2108
      %v2111 = vshrl.u32 %v1915, 16
      %v2113 = vrot.slane %v2111, 4
      %v2114 = vshll.u32 %v1915, 16
      %v2116 = vrot.slane %v2114, 5
      %v2117 = vor.u32 %v2113, %v2116
      %v2118 = vrot.slane %v2117, 4
      %v2120 = vshll.u32 %v1916, 16
      %v2122 = vrot.slane %v2120, 5
      %v2123 = vsel %vm330, %v2118, %v2122
      %v2124 = vshrl.u32 %v1916, 16
      %v2126 = vrot.slane %v2124, 4
      %v2127 = vor.u32 %v2126, %v2122
      %v2128 = vrot.slane %v2127, 4
      %v2130 = vshll.u32 %v1917, 16
      %v2132 = vrot.slane %v2130, 5
      %v2133 = vsel %vm330, %v2128, %v2132
      %v2135 = vshrl.u32 %v1918, 16
      %v2137 = vrot.slane %v2135, 4
      %v2138 = vshll.u32 %v1918, 16
      %v2140 = vrot.slane %v2138, 5
      %v2141 = vor.u32 %v2137, %v2140
      %v2142 = vrot.slane %v2141, 4
      %v2144 = vshll.u32 %v1919, 16
      %v2146 = vrot.slane %v2144, 5
      %v2147 = vsel %vm330, %v2142, %v2146
      %v2148 = vshrl.u32 %v1919, 16
      %v2150 = vrot.slane %v2148, 4
      %v2151 = vor.u32 %v2150, %v2146
      %v2152 = vrot.slane %v2151, 4
      %v2154 = vshll.u32 %v1920, 16
      %v2156 = vrot.slane %v2154, 5
      %v2157 = vsel %vm330, %v2152, %v2156
      %v2159 = vshrl.u32 %v1921, 16
      %v2161 = vrot.slane %v2159, 4
      %v2162 = vshll.u32 %v1921, 16
      %v2164 = vrot.slane %v2162, 5
      %v2165 = vor.u32 %v2161, %v2164
      %v2166 = vrot.slane %v2165, 4
      %v2168 = vshll.u32 %v1922, 16
      %v2170 = vrot.slane %v2168, 5
      %v2171 = vsel %vm330, %v2166, %v2170
      %v2172 = vshrl.u32 %v1922, 16
      %v2174 = vrot.slane %v2172, 4
      %v2175 = vor.u32 %v2174, %v2170
      %v2176 = vrot.slane %v2175, 4
      %v2178 = vshll.u32 %v1923, 16
      %v2180 = vrot.slane %v2178, 5
      %v2181 = vsel %vm330, %v2176, %v2180
      %v2183 = vshrl.u32 %v1924, 16
      %v2185 = vrot.slane %v2183, 4
      %v2186 = vshll.u32 %v1924, 16
      %v2188 = vrot.slane %v2186, 5
      %v2189 = vor.u32 %v2185, %v2188
      %v2190 = vrot.slane %v2189, 4
      %v2192 = vshll.u32 %v1925, 16
      %v2194 = vrot.slane %v2192, 5
      %v2195 = vsel %vm330, %v2190, %v2194
      %v2196 = vshrl.u32 %v1925, 16
      %v2198 = vrot.slane %v2196, 4
      %v2199 = vor.u32 %v2198, %v2194
      %v2200 = vrot.slane %v2199, 4
      %v2202 = vshll.u32 %v1926, 16
      %v2204 = vrot.slane %v2202, 5
      %v2205 = vsel %vm330, %v2200, %v2204
      %v2207 = vshrl.u32 %v1927, 16
      %v2209 = vrot.slane %v2207, 4
      %v2210 = vshll.u32 %v1927, 16
      %v2212 = vrot.slane %v2210, 5
      %v2213 = vor.u32 %v2209, %v2212
      %v2214 = vrot.slane %v2213, 4
      %v2216 = vshll.u32 %v1928, 16
      %v2218 = vrot.slane %v2216, 5
      %v2219 = vsel %vm330, %v2214, %v2218
      %v2220 = vshrl.u32 %v1928, 16
      %v2222 = vrot.slane %v2220, 4
      %v2223 = vor.u32 %v2222, %v2218
      %v2224 = vrot.slane %v2223, 4
      %v2226 = vshll.u32 %v1929, 16
      %v2228 = vrot.slane %v2226, 5
      %v2229 = vsel %vm330, %v2224, %v2228
      %v2231 = vshrl.u32 %v1930, 16
      %v2233 = vrot.slane %v2231, 4
      %v2234 = vshll.u32 %v1930, 16
      %v2236 = vrot.slane %v2234, 5
      %v2237 = vor.u32 %v2233, %v2236
      %v2238 = vrot.slane %v2237, 4
      %v2240 = vshll.u32 %v1931, 16
      %v2242 = vrot.slane %v2240, 5
      %v2243 = vsel %vm330, %v2238, %v2242
      %v2244 = vshrl.u32 %v1931, 16
      %v2246 = vrot.slane %v2244, 4
      %v2247 = vor.u32 %v2246, %v2242
      %v2248 = vrot.slane %v2247, 4
      %v2250 = vshll.u32 %v1932, 16
      %v2252 = vrot.slane %v2250, 5
      %v2253 = vsel %vm330, %v2248, %v2252
      %v2255 = vshrl.u32 %v1933, 16
      %v2257 = vrot.slane %v2255, 4
      %v2258 = vshll.u32 %v1933, 16
      %v2260 = vrot.slane %v2258, 5
      %v2261 = vor.u32 %v2257, %v2260
      %v2262 = vrot.slane %v2261, 4
      %v2264 = vshll.u32 %v1934, 16
      %v2266 = vrot.slane %v2264, 5
      %v2267 = vsel %vm330, %v2262, %v2266
      %v2268 = vshrl.u32 %v1934, 16
      %v2270 = vrot.slane %v2268, 4
      %v2271 = vor.u32 %v2270, %v2266
      %v2272 = vrot.slane %v2271, 4
      %v2274 = vshll.u32 %v1935, 16
      %v2276 = vrot.slane %v2274, 5
      %v2277 = vsel %vm330, %v2272, %v2276
      %v2279 = vshrl.u32 %v1936, 16
      %v2281 = vrot.slane %v2279, 4
      %v2282 = vshll.u32 %v1936, 16
      %v2284 = vrot.slane %v2282, 5
      %v2285 = vor.u32 %v2281, %v2284
      %v2286 = vrot.slane %v2285, 4
      %v2288 = vshll.u32 %v1937, 16
      %v2290 = vrot.slane %v2288, 5
      %v2291 = vsel %vm330, %v2286, %v2290
      %v2292 = vshrl.u32 %v1937, 16
      %v2294 = vrot.slane %v2292, 4
      %v2295 = vor.u32 %v2294, %v2290
      %v2296 = vrot.slane %v2295, 4
      %v2298 = vshll.u32 %v1938, 16
      %v2300 = vrot.slane %v2298, 5
      %v2301 = vsel %vm330, %v2296, %v2300
      %v2303 = vshrl.u32 %v1939, 16
      %v2305 = vrot.slane %v2303, 4
      %v2306 = vshll.u32 %v1939, 16
      %v2308 = vrot.slane %v2306, 5
      %v2309 = vor.u32 %v2305, %v2308
      %v2310 = vrot.slane %v2309, 4
      %v2312 = vshll.u32 %v1940, 16
      %v2314 = vrot.slane %v2312, 5
      %v2315 = vsel %vm330, %v2310, %v2314
      %v2316 = vshrl.u32 %v1940, 16
      %v2318 = vrot.slane %v2316, 4
      %v2319 = vor.u32 %v2318, %v2314
      %v2320 = vrot.slane %v2319, 4
      %v2322 = vshll.u32 %v1941, 16
      %v2324 = vrot.slane %v2322, 5
      %v2325 = vsel %vm330, %v2320, %v2324
      %s2326 = scalar_lea.vmem %s1, 256
      %v2327 = vld [vmem:[%s2326] sm:$0xf]
      %v2328 = vld [vmem:[%s2326 + $0x4] sm:$0xf]
      %v2329 = vld [vmem:[%s2326 + $0x8] sm:$0xf]
      %v2330 = vld [vmem:[%s2326 + $0xc] sm:$0xf]
      %v2331 = vld [vmem:[%s2326 + $0x10] sm:$0xf]
      %v2332 = vld [vmem:[%s2326 + $0x14] sm:$0xf]
      %v2333 = vld [vmem:[%s2326 + $0x18] sm:$0xf]
      %v2334 = vld [vmem:[%s2326 + $0x1c] sm:$0xf]
      %v2335 = vld [vmem:[%s2326 + $0x20] sm:$0xf]
      %v2336 = vld [vmem:[%s2326 + $0x24] sm:$0xf]
      %v2337 = vld [vmem:[%s2326 + $0x28] sm:$0xf]
      %v2338 = vld [vmem:[%s2326 + $0x2c] sm:$0xf]
      %v2339 = vld [vmem:[%s2326 + $0x30] sm:$0xf]
      %v2340 = vld [vmem:[%s2326 + $0x34] sm:$0xf]
      %v2341 = vld [vmem:[%s2326 + $0x38] sm:$0xf]
      %v2342 = vld [vmem:[%s2326 + $0x3c] sm:$0xf]
      %v2343 = vunpack.c.l.b16 %v1955
      %v2344 = vunpack.c.l.b16 %v1965
      %v2345 = vunpack.c.l.b16 %v1979
      %v2346 = vunpack.c.l.b16 %v1989
      %v2347 = vunpack.c.l.b16 %v2003
      %v2348 = vunpack.c.l.b16 %v2013
      %v2349 = vunpack.c.l.b16 %v2027
      %v2350 = vunpack.c.l.b16 %v2037
      %v2351 = vunpack.c.l.b16 %v2051
      %v2352 = vunpack.c.l.b16 %v2061
      %v2353 = vunpack.c.l.b16 %v2075
      %v2354 = vunpack.c.l.b16 %v2085
      %v2355 = vunpack.c.l.b16 %v2099
      %v2356 = vunpack.c.l.b16 %v2109
      %v2357 = vunpack.c.l.b16 %v2123
      %v2358 = vunpack.c.l.b16 %v2133
      %v2359 = vunpack.c.l.b16 %v2147
      %v2360 = vunpack.c.l.b16 %v2157
      %v2361 = vunpack.c.l.b16 %v2171
      %v2362 = vunpack.c.l.b16 %v2181
      %v2363 = vunpack.c.l.b16 %v2195
      %v2364 = vunpack.c.l.b16 %v2205
      %v2365 = vunpack.c.l.b16 %v2219
      %v2366 = vunpack.c.l.b16 %v2229
      %v2367 = vunpack.c.l.b16 %v2243
      %v2368 = vunpack.c.l.b16 %v2253
      %v2369 = vunpack.c.l.b16 %v2267
      %v2370 = vunpack.c.l.b16 %v2277
      %v2371 = vunpack.c.l.b16 %v2291
      %v2372 = vunpack.c.l.b16 %v2301
      %v2373 = vunpack.c.l.b16 %v2315
      %v2374 = vunpack.c.l.b16 %v2325
      %v2375 = vpack.c.b16 %v2344, %v2343
      %v2376 = vpack.c.b16 %v2346, %v2345
      %v2377 = vpack.c.b16 %v2348, %v2347
      %v2378 = vpack.c.b16 %v2350, %v2349
      %v2379 = vpack.c.b16 %v2352, %v2351
      %v2380 = vpack.c.b16 %v2354, %v2353
      %v2381 = vpack.c.b16 %v2356, %v2355
      %v2382 = vpack.c.b16 %v2358, %v2357
      %v2383 = vpack.c.b16 %v2360, %v2359
      %v2384 = vpack.c.b16 %v2362, %v2361
      %v2385 = vpack.c.b16 %v2364, %v2363
      %v2386 = vpack.c.b16 %v2366, %v2365
      %v2387 = vpack.c.b16 %v2368, %v2367
      %v2388 = vpack.c.b16 %v2370, %v2369
      %v2389 = vpack.c.b16 %v2372, %v2371
      %v2390 = vpack.c.b16 %v2374, %v2373
      %v2423 = vunpack.c.l.b16 %v2327
      %v2424 = vunpack.c.l.b16 %v2328
      %v2425 = vunpack.c.l.b16 %v2329
      %v2426 = vunpack.c.l.b16 %v2330
      %v2427 = vunpack.c.l.b16 %v2331
      %v2428 = vunpack.c.l.b16 %v2332
      %v2429 = vunpack.c.l.b16 %v2333
      %v2430 = vunpack.c.l.b16 %v2334
      %v2431 = vunpack.c.l.b16 %v2335
      %v2432 = vunpack.c.l.b16 %v2336
      %v2433 = vunpack.c.l.b16 %v2337
      %v2434 = vunpack.c.l.b16 %v2338
      %v2435 = vunpack.c.l.b16 %v2339
      %v2436 = vunpack.c.l.b16 %v2340
      %v2437 = vunpack.c.l.b16 %v2341
      %v2438 = vunpack.c.l.b16 %v2342
      %v2439 = vpack.c.b16 %v2424, %v2423
      %v2440 = vpack.c.b16 %v2426, %v2425
      %v2441 = vpack.c.b16 %v2428, %v2427
      %v2442 = vpack.c.b16 %v2430, %v2429
      %v2443 = vpack.c.b16 %v2432, %v2431
      %v2444 = vpack.c.b16 %v2434, %v2433
      %v2445 = vpack.c.b16 %v2436, %v2435
      %v2446 = vpack.c.b16 %v2438, %v2437
      %2455 = vmatpush.bf16.msra.mxu0 %v2446
      %2456 = vmatpush.bf16.msra.mxu0 %v2445
      %2457 = vmatpush.bf16.msra.mxu0 %v2444
      %2458 = vmatpush.bf16.msra.mxu0 %v2443
      %2459 = vmatpush.bf16.msra.mxu0 %v2442
      %2460 = vmatpush.bf16.msra.mxu0 %v2441
      %2461 = vmatpush.bf16.msra.mxu0 %v2440
      %2462 = vmatpush.bf16.msra.mxu0 %v2439
      %2463 = vmatmul.bf16.gmra.mxu0 %v2375
      %v2464 = vpop.f32.mrf.mxu0
      %v2465 = vadd.f32 0.0, %v2464
      %v2466 = vpop.f32.mrf.mxu0
      %v2467 = vadd.f32 0.0, %v2466
      %2468 = vmatmul.bf16.gmra.mxu0 %v2376
      %v2469 = vpop.f32.mrf.mxu0
      %v2470 = vadd.f32 0.0, %v2469
      %v2471 = vpop.f32.mrf.mxu0
      %v2472 = vadd.f32 0.0, %v2471
      %2473 = vmatmul.bf16.gmra.mxu0 %v2377
      %v2474 = vpop.f32.mrf.mxu0
      %v2475 = vadd.f32 0.0, %v2474
      %v2476 = vpop.f32.mrf.mxu0
      %v2477 = vadd.f32 0.0, %v2476
      %2478 = vmatmul.bf16.gmra.mxu0 %v2378
      %v2479 = vpop.f32.mrf.mxu0
      %v2480 = vadd.f32 0.0, %v2479
      %v2481 = vpop.f32.mrf.mxu0
      %v2482 = vadd.f32 0.0, %v2481
      %2483 = vmatmul.bf16.gmra.mxu0 %v2379
      %v2484 = vpop.f32.mrf.mxu0
      %v2485 = vadd.f32 0.0, %v2484
      %v2486 = vpop.f32.mrf.mxu0
      %v2487 = vadd.f32 0.0, %v2486
      %2488 = vmatmul.bf16.gmra.mxu0 %v2380
      %v2489 = vpop.f32.mrf.mxu0
      %v2490 = vadd.f32 0.0, %v2489
      %v2491 = vpop.f32.mrf.mxu0
      %v2492 = vadd.f32 0.0, %v2491
      %2493 = vmatmul.bf16.gmra.mxu0 %v2381
      %v2494 = vpop.f32.mrf.mxu0
      %v2495 = vadd.f32 0.0, %v2494
      %v2496 = vpop.f32.mrf.mxu0
      %v2497 = vadd.f32 0.0, %v2496
      %2498 = vmatmul.bf16.gmra.mxu0 %v2382
      %v2499 = vpop.f32.mrf.mxu0
      %v2500 = vadd.f32 0.0, %v2499
      %v2501 = vpop.f32.mrf.mxu0
      %v2502 = vadd.f32 0.0, %v2501
      %2503 = vmatmul.bf16.gmra.mxu0 %v2383
      %v2504 = vpop.f32.mrf.mxu0
      %v2505 = vadd.f32 0.0, %v2504
      %v2506 = vpop.f32.mrf.mxu0
      %v2507 = vadd.f32 0.0, %v2506
      %2508 = vmatmul.bf16.gmra.mxu0 %v2384
      %v2509 = vpop.f32.mrf.mxu0
      %v2510 = vadd.f32 0.0, %v2509
      %v2511 = vpop.f32.mrf.mxu0
      %v2512 = vadd.f32 0.0, %v2511
      %2513 = vmatmul.bf16.gmra.mxu0 %v2385
      %v2514 = vpop.f32.mrf.mxu0
      %v2515 = vadd.f32 0.0, %v2514
      %v2516 = vpop.f32.mrf.mxu0
      %v2517 = vadd.f32 0.0, %v2516
      %2518 = vmatmul.bf16.gmra.mxu0 %v2386
      %v2519 = vpop.f32.mrf.mxu0
      %v2520 = vadd.f32 0.0, %v2519
      %v2521 = vpop.f32.mrf.mxu0
      %v2522 = vadd.f32 0.0, %v2521
      %2523 = vmatmul.bf16.gmra.mxu0 %v2387
      %v2524 = vpop.f32.mrf.mxu0
      %v2525 = vadd.f32 0.0, %v2524
      %v2526 = vpop.f32.mrf.mxu0
      %v2527 = vadd.f32 0.0, %v2526
      %2528 = vmatmul.bf16.gmra.mxu0 %v2388
      %v2529 = vpop.f32.mrf.mxu0
      %v2530 = vadd.f32 0.0, %v2529
      %v2531 = vpop.f32.mrf.mxu0
      %v2532 = vadd.f32 0.0, %v2531
      %2533 = vmatmul.bf16.gmra.mxu0 %v2389
      %v2534 = vpop.f32.mrf.mxu0
      %v2535 = vadd.f32 0.0, %v2534
      %v2536 = vpop.f32.mrf.mxu0
      %v2537 = vadd.f32 0.0, %v2536
      %2538 = vmatmul.bf16.gmra.mxu0 %v2390
      %v2539 = vpop.f32.mrf.mxu0
      %v2540 = vadd.f32 0.0, %v2539
      %v2541 = vpop.f32.mrf.mxu0
      %v2542 = vadd.f32 0.0, %v2541
      %2543 = vdwg.mxu0
      %v2544 = vadd.f32 %v1862, %v2465
      %v2545 = vadd.f32 %v1863, %v2467
      %v2546 = vadd.f32 %v1864, %v2470
      %v2547 = vadd.f32 %v1865, %v2472
      %v2548 = vadd.f32 %v1866, %v2475
      %v2549 = vadd.f32 %v1867, %v2477
      %v2550 = vadd.f32 %v1868, %v2480
      %v2551 = vadd.f32 %v1869, %v2482
      %v2552 = vadd.f32 %v1870, %v2485
      %v2553 = vadd.f32 %v1871, %v2487
      %v2554 = vadd.f32 %v1872, %v2490
      %v2555 = vadd.f32 %v1873, %v2492
      %v2556 = vadd.f32 %v1874, %v2495
      %v2557 = vadd.f32 %v1875, %v2497
      %v2558 = vadd.f32 %v1876, %v2500
      %v2559 = vadd.f32 %v1877, %v2502
      %v2560 = vadd.f32 %v1878, %v2505
      %v2561 = vadd.f32 %v1879, %v2507
      %v2562 = vadd.f32 %v1880, %v2510
      %v2563 = vadd.f32 %v1881, %v2512
      %v2564 = vadd.f32 %v1882, %v2515
      %v2565 = vadd.f32 %v1883, %v2517
      %v2566 = vadd.f32 %v1884, %v2520
      %v2567 = vadd.f32 %v1885, %v2522
      %v2568 = vadd.f32 %v1886, %v2525
      %v2569 = vadd.f32 %v1887, %v2527
      %v2570 = vadd.f32 %v1888, %v2530
      %v2571 = vadd.f32 %v1889, %v2532
      %v2572 = vadd.f32 %v1890, %v2535
      %v2573 = vadd.f32 %v1891, %v2537
      %v2574 = vadd.f32 %v1892, %v2540
      %v2575 = vadd.f32 %v1893, %v2542
      %v2576 = vld [vmem:[%s1579] sm:$0xe]
      %v2577 = vld [vmem:[%s1579 + $0xc] sm:$0xe]
      %v2578 = vld [vmem:[%s1579 + $0x18] sm:$0xe]
      %v2579 = vld [vmem:[%s1579 + $0x24] sm:$0xe]
      %v2580 = vld [vmem:[%s1579 + $0x30] sm:$0xe]
      %v2581 = vld [vmem:[%s1579 + $0x3c] sm:$0xe]
      %v2582 = vld [vmem:[%s1579 + $0x48] sm:$0xe]
      %v2583 = vld [vmem:[%s1579 + $0x54] sm:$0xe]
      %v2584 = vld [vmem:[%s1579 + $0x60] sm:$0xe]
      %v2585 = vld [vmem:[%s1579 + $0x6c] sm:$0xe]
      %v2586 = vld [vmem:[%s1579 + $0x78] sm:$0xe]
      %v2587 = vld [vmem:[%s1579 + $0x84] sm:$0xe]
      %v2588 = vld [vmem:[%s1579 + $0x90] sm:$0xe]
      %v2589 = vld [vmem:[%s1579 + $0x9c] sm:$0xe]
      %v2590 = vld [vmem:[%s1579 + $0xa8] sm:$0xe]
      %v2591 = vld [vmem:[%s1579 + $0xb4] sm:$0xe]
      %v2640 = vrot.slane %v2576, 5
      %v2641 = vrot.slane %v2640, 4
      %v2642 = vrot.slane %v1895, 5
      %v2643 = vsel %vm1216, %v2641, %v2642
      %v2644 = vrot.slane %v2642, 4
      %v2645 = vrot.slane %v1896, 5
      %v2646 = vsel %vm1216, %v2644, %v2645
      %v2647 = vrot.slane %v2577, 5
      %v2648 = vrot.slane %v2647, 4
      %v2649 = vrot.slane %v1898, 5
      %v2650 = vsel %vm1216, %v2648, %v2649
      %v2651 = vrot.slane %v2649, 4
      %v2652 = vrot.slane %v1899, 5
      %v2653 = vsel %vm1216, %v2651, %v2652
      %v2654 = vrot.slane %v2578, 5
      %v2655 = vrot.slane %v2654, 4
      %v2656 = vrot.slane %v1901, 5
      %v2657 = vsel %vm1216, %v2655, %v2656
      %v2658 = vrot.slane %v2656, 4
      %v2659 = vrot.slane %v1902, 5
      %v2660 = vsel %vm1216, %v2658, %v2659
      %v2661 = vrot.slane %v2579, 5
      %v2662 = vrot.slane %v2661, 4
      %v2663 = vrot.slane %v1904, 5
      %v2664 = vsel %vm1216, %v2662, %v2663
      %v2665 = vrot.slane %v2663, 4
      %v2666 = vrot.slane %v1905, 5
      %v2667 = vsel %vm1216, %v2665, %v2666
      %v2668 = vrot.slane %v2580, 5
      %v2669 = vrot.slane %v2668, 4
      %v2670 = vrot.slane %v1907, 5
      %v2671 = vsel %vm1216, %v2669, %v2670
      %v2672 = vrot.slane %v2670, 4
      %v2673 = vrot.slane %v1908, 5
      %v2674 = vsel %vm1216, %v2672, %v2673
      %v2675 = vrot.slane %v2581, 5
      %v2676 = vrot.slane %v2675, 4
      %v2677 = vrot.slane %v1910, 5
      %v2678 = vsel %vm1216, %v2676, %v2677
      %v2679 = vrot.slane %v2677, 4
      %v2680 = vrot.slane %v1911, 5
      %v2681 = vsel %vm1216, %v2679, %v2680
      %v2682 = vrot.slane %v2582, 5
      %v2683 = vrot.slane %v2682, 4
      %v2684 = vrot.slane %v1913, 5
      %v2685 = vsel %vm1216, %v2683, %v2684
      %v2686 = vrot.slane %v2684, 4
      %v2687 = vrot.slane %v1914, 5
      %v2688 = vsel %vm1216, %v2686, %v2687
      %v2689 = vrot.slane %v2583, 5
      %v2690 = vrot.slane %v2689, 4
      %v2691 = vrot.slane %v1916, 5
      %v2692 = vsel %vm1216, %v2690, %v2691
      %v2693 = vrot.slane %v2691, 4
      %v2694 = vrot.slane %v1917, 5
      %v2695 = vsel %vm1216, %v2693, %v2694
      %v2696 = vrot.slane %v2584, 5
      %v2697 = vrot.slane %v2696, 4
      %v2698 = vrot.slane %v1919, 5
      %v2699 = vsel %vm1216, %v2697, %v2698
      %v2700 = vrot.slane %v2698, 4
      %v2701 = vrot.slane %v1920, 5
      %v2702 = vsel %vm1216, %v2700, %v2701
      %v2703 = vrot.slane %v2585, 5
      %v2704 = vrot.slane %v2703, 4
      %v2705 = vrot.slane %v1922, 5
      %v2706 = vsel %vm1216, %v2704, %v2705
      %v2707 = vrot.slane %v2705, 4
      %v2708 = vrot.slane %v1923, 5
      %v2709 = vsel %vm1216, %v2707, %v2708
      %v2710 = vrot.slane %v2586, 5
      %v2711 = vrot.slane %v2710, 4
      %v2712 = vrot.slane %v1925, 5
      %v2713 = vsel %vm1216, %v2711, %v2712
      %v2714 = vrot.slane %v2712, 4
      %v2715 = vrot.slane %v1926, 5
      %v2716 = vsel %vm1216, %v2714, %v2715
      %v2717 = vrot.slane %v2587, 5
      %v2718 = vrot.slane %v2717, 4
      %v2719 = vrot.slane %v1928, 5
      %v2720 = vsel %vm1216, %v2718, %v2719
      %v2721 = vrot.slane %v2719, 4
      %v2722 = vrot.slane %v1929, 5
      %v2723 = vsel %vm1216, %v2721, %v2722
      %v2724 = vrot.slane %v2588, 5
      %v2725 = vrot.slane %v2724, 4
      %v2726 = vrot.slane %v1931, 5
      %v2727 = vsel %vm1216, %v2725, %v2726
      %v2728 = vrot.slane %v2726, 4
      %v2729 = vrot.slane %v1932, 5
      %v2730 = vsel %vm1216, %v2728, %v2729
      %v2731 = vrot.slane %v2589, 5
      %v2732 = vrot.slane %v2731, 4
      %v2733 = vrot.slane %v1934, 5
      %v2734 = vsel %vm1216, %v2732, %v2733
      %v2735 = vrot.slane %v2733, 4
      %v2736 = vrot.slane %v1935, 5
      %v2737 = vsel %vm1216, %v2735, %v2736
      %v2738 = vrot.slane %v2590, 5
      %v2739 = vrot.slane %v2738, 4
      %v2740 = vrot.slane %v1937, 5
      %v2741 = vsel %vm1216, %v2739, %v2740
      %v2742 = vrot.slane %v2740, 4
      %v2743 = vrot.slane %v1938, 5
      %v2744 = vsel %vm1216, %v2742, %v2743
      %v2745 = vrot.slane %v2591, 5
      %v2746 = vrot.slane %v2745, 4
      %v2747 = vrot.slane %v1940, 5
      %v2748 = vsel %vm1216, %v2746, %v2747
      %v2749 = vrot.slane %v2747, 4
      %v2750 = vrot.slane %v1941, 5
      %v2751 = vsel %vm1216, %v2749, %v2750
      %s2752 = scalar_lea.vmem %s1, 320
      %v2753 = vld [vmem:[%s2752] sm:$0xf]
      %v2754 = vld [vmem:[%s2752 + $0x4] sm:$0xf]
      %v2755 = vld [vmem:[%s2752 + $0x8] sm:$0xf]
      %v2756 = vld [vmem:[%s2752 + $0xc] sm:$0xf]
      %v2757 = vld [vmem:[%s2752 + $0x10] sm:$0xf]
      %v2758 = vld [vmem:[%s2752 + $0x14] sm:$0xf]
      %v2759 = vld [vmem:[%s2752 + $0x18] sm:$0xf]
      %v2760 = vld [vmem:[%s2752 + $0x1c] sm:$0xf]
      %v2761 = vld [vmem:[%s2752 + $0x20] sm:$0xf]
      %v2762 = vld [vmem:[%s2752 + $0x24] sm:$0xf]
      %v2763 = vld [vmem:[%s2752 + $0x28] sm:$0xf]
      %v2764 = vld [vmem:[%s2752 + $0x2c] sm:$0xf]
      %v2765 = vld [vmem:[%s2752 + $0x30] sm:$0xf]
      %v2766 = vld [vmem:[%s2752 + $0x34] sm:$0xf]
      %v2767 = vld [vmem:[%s2752 + $0x38] sm:$0xf]
      %v2768 = vld [vmem:[%s2752 + $0x3c] sm:$0xf]
      %v2769 = vunpack.c.l.b16 %v2643
      %v2770 = vunpack.c.l.b16 %v2646
      %v2771 = vunpack.c.l.b16 %v2650
      %v2772 = vunpack.c.l.b16 %v2653
      %v2773 = vunpack.c.l.b16 %v2657
      %v2774 = vunpack.c.l.b16 %v2660
      %v2775 = vunpack.c.l.b16 %v2664
      %v2776 = vunpack.c.l.b16 %v2667
      %v2777 = vunpack.c.l.b16 %v2671
      %v2778 = vunpack.c.l.b16 %v2674
      %v2779 = vunpack.c.l.b16 %v2678
      %v2780 = vunpack.c.l.b16 %v2681
      %v2781 = vunpack.c.l.b16 %v2685
      %v2782 = vunpack.c.l.b16 %v2688
      %v2783 = vunpack.c.l.b16 %v2692
      %v2784 = vunpack.c.l.b16 %v2695
      %v2785 = vunpack.c.l.b16 %v2699
      %v2786 = vunpack.c.l.b16 %v2702
      %v2787 = vunpack.c.l.b16 %v2706
      %v2788 = vunpack.c.l.b16 %v2709
      %v2789 = vunpack.c.l.b16 %v2713
      %v2790 = vunpack.c.l.b16 %v2716
      %v2791 = vunpack.c.l.b16 %v2720
      %v2792 = vunpack.c.l.b16 %v2723
      %v2793 = vunpack.c.l.b16 %v2727
      %v2794 = vunpack.c.l.b16 %v2730
      %v2795 = vunpack.c.l.b16 %v2734
      %v2796 = vunpack.c.l.b16 %v2737
      %v2797 = vunpack.c.l.b16 %v2741
      %v2798 = vunpack.c.l.b16 %v2744
      %v2799 = vunpack.c.l.b16 %v2748
      %v2800 = vunpack.c.l.b16 %v2751
      %v2801 = vpack.c.b16 %v2770, %v2769
      %v2802 = vpack.c.b16 %v2772, %v2771
      %v2803 = vpack.c.b16 %v2774, %v2773
      %v2804 = vpack.c.b16 %v2776, %v2775
      %v2805 = vpack.c.b16 %v2778, %v2777
      %v2806 = vpack.c.b16 %v2780, %v2779
      %v2807 = vpack.c.b16 %v2782, %v2781
      %v2808 = vpack.c.b16 %v2784, %v2783
      %v2809 = vpack.c.b16 %v2786, %v2785
      %v2810 = vpack.c.b16 %v2788, %v2787
      %v2811 = vpack.c.b16 %v2790, %v2789
      %v2812 = vpack.c.b16 %v2792, %v2791
      %v2813 = vpack.c.b16 %v2794, %v2793
      %v2814 = vpack.c.b16 %v2796, %v2795
      %v2815 = vpack.c.b16 %v2798, %v2797
      %v2816 = vpack.c.b16 %v2800, %v2799
      %v2849 = vunpack.c.l.b16 %v2753
      %v2850 = vunpack.c.l.b16 %v2754
      %v2851 = vunpack.c.l.b16 %v2755
      %v2852 = vunpack.c.l.b16 %v2756
      %v2853 = vunpack.c.l.b16 %v2757
      %v2854 = vunpack.c.l.b16 %v2758
      %v2855 = vunpack.c.l.b16 %v2759
      %v2856 = vunpack.c.l.b16 %v2760
      %v2857 = vunpack.c.l.b16 %v2761
      %v2858 = vunpack.c.l.b16 %v2762
      %v2859 = vunpack.c.l.b16 %v2763
      %v2860 = vunpack.c.l.b16 %v2764
      %v2861 = vunpack.c.l.b16 %v2765
      %v2862 = vunpack.c.l.b16 %v2766
      %v2863 = vunpack.c.l.b16 %v2767
      %v2864 = vunpack.c.l.b16 %v2768
      %v2865 = vpack.c.b16 %v2850, %v2849
      %v2866 = vpack.c.b16 %v2852, %v2851
      %v2867 = vpack.c.b16 %v2854, %v2853
      %v2868 = vpack.c.b16 %v2856, %v2855
      %v2869 = vpack.c.b16 %v2858, %v2857
      %v2870 = vpack.c.b16 %v2860, %v2859
      %v2871 = vpack.c.b16 %v2862, %v2861
      %v2872 = vpack.c.b16 %v2864, %v2863
      %2881 = vmatpush.bf16.msra.mxu0 %v2872
      %2882 = vmatpush.bf16.msra.mxu0 %v2871
      %2883 = vmatpush.bf16.msra.mxu0 %v2870
      %2884 = vmatpush.bf16.msra.mxu0 %v2869
      %2885 = vmatpush.bf16.msra.mxu0 %v2868
      %2886 = vmatpush.bf16.msra.mxu0 %v2867
      %2887 = vmatpush.bf16.msra.mxu0 %v2866
      %2888 = vmatpush.bf16.msra.mxu0 %v2865
      %2889 = vmatmul.bf16.gmra.mxu0 %v2801
      %v2890 = vpop.f32.mrf.mxu0
      %v2891 = vadd.f32 0.0, %v2890
      %v2892 = vpop.f32.mrf.mxu0
      %v2893 = vadd.f32 0.0, %v2892
      %2894 = vmatmul.bf16.gmra.mxu0 %v2802
      %v2895 = vpop.f32.mrf.mxu0
      %v2896 = vadd.f32 0.0, %v2895
      %v2897 = vpop.f32.mrf.mxu0
      %v2898 = vadd.f32 0.0, %v2897
      %2899 = vmatmul.bf16.gmra.mxu0 %v2803
      %v2900 = vpop.f32.mrf.mxu0
      %v2901 = vadd.f32 0.0, %v2900
      %v2902 = vpop.f32.mrf.mxu0
      %v2903 = vadd.f32 0.0, %v2902
      %2904 = vmatmul.bf16.gmra.mxu0 %v2804
      %v2905 = vpop.f32.mrf.mxu0
      %v2906 = vadd.f32 0.0, %v2905
      %v2907 = vpop.f32.mrf.mxu0
      %v2908 = vadd.f32 0.0, %v2907
      %2909 = vmatmul.bf16.gmra.mxu0 %v2805
      %v2910 = vpop.f32.mrf.mxu0
      %v2911 = vadd.f32 0.0, %v2910
      %v2912 = vpop.f32.mrf.mxu0
      %v2913 = vadd.f32 0.0, %v2912
      %2914 = vmatmul.bf16.gmra.mxu0 %v2806
      %v2915 = vpop.f32.mrf.mxu0
      %v2916 = vadd.f32 0.0, %v2915
      %v2917 = vpop.f32.mrf.mxu0
      %v2918 = vadd.f32 0.0, %v2917
      %2919 = vmatmul.bf16.gmra.mxu0 %v2807
      %v2920 = vpop.f32.mrf.mxu0
      %v2921 = vadd.f32 0.0, %v2920
      %v2922 = vpop.f32.mrf.mxu0
      %v2923 = vadd.f32 0.0, %v2922
      %2924 = vmatmul.bf16.gmra.mxu0 %v2808
      %v2925 = vpop.f32.mrf.mxu0
      %v2926 = vadd.f32 0.0, %v2925
      %v2927 = vpop.f32.mrf.mxu0
      %v2928 = vadd.f32 0.0, %v2927
      %2929 = vmatmul.bf16.gmra.mxu0 %v2809
      %v2930 = vpop.f32.mrf.mxu0
      %v2931 = vadd.f32 0.0, %v2930
      %v2932 = vpop.f32.mrf.mxu0
      %v2933 = vadd.f32 0.0, %v2932
      %2934 = vmatmul.bf16.gmra.mxu0 %v2810
      %v2935 = vpop.f32.mrf.mxu0
      %v2936 = vadd.f32 0.0, %v2935
      %v2937 = vpop.f32.mrf.mxu0
      %v2938 = vadd.f32 0.0, %v2937
      %2939 = vmatmul.bf16.gmra.mxu0 %v2811
      %v2940 = vpop.f32.mrf.mxu0
      %v2941 = vadd.f32 0.0, %v2940
      %v2942 = vpop.f32.mrf.mxu0
      %v2943 = vadd.f32 0.0, %v2942
      %2944 = vmatmul.bf16.gmra.mxu0 %v2812
      %v2945 = vpop.f32.mrf.mxu0
      %v2946 = vadd.f32 0.0, %v2945
      %v2947 = vpop.f32.mrf.mxu0
      %v2948 = vadd.f32 0.0, %v2947
      %2949 = vmatmul.bf16.gmra.mxu0 %v2813
      %v2950 = vpop.f32.mrf.mxu0
      %v2951 = vadd.f32 0.0, %v2950
      %v2952 = vpop.f32.mrf.mxu0
      %v2953 = vadd.f32 0.0, %v2952
      %2954 = vmatmul.bf16.gmra.mxu0 %v2814
      %v2955 = vpop.f32.mrf.mxu0
      %v2956 = vadd.f32 0.0, %v2955
      %v2957 = vpop.f32.mrf.mxu0
      %v2958 = vadd.f32 0.0, %v2957
      %2959 = vmatmul.bf16.gmra.mxu0 %v2815
      %v2960 = vpop.f32.mrf.mxu0
      %v2961 = vadd.f32 0.0, %v2960
      %v2962 = vpop.f32.mrf.mxu0
      %v2963 = vadd.f32 0.0, %v2962
      %2964 = vmatmul.bf16.gmra.mxu0 %v2816
      %v2965 = vpop.f32.mrf.mxu0
      %v2966 = vadd.f32 0.0, %v2965
      %v2967 = vpop.f32.mrf.mxu0
      %v2968 = vadd.f32 0.0, %v2967
      %2969 = vdwg.mxu0
      %v2970 = vadd.f32 %v2544, %v2891
      %v2971 = vadd.f32 %v2545, %v2893
      %v2972 = vadd.f32 %v2546, %v2896
      %v2973 = vadd.f32 %v2547, %v2898
      %v2974 = vadd.f32 %v2548, %v2901
      %v2975 = vadd.f32 %v2549, %v2903
      %v2976 = vadd.f32 %v2550, %v2906
      %v2977 = vadd.f32 %v2551, %v2908
      %v2978 = vadd.f32 %v2552, %v2911
      %v2979 = vadd.f32 %v2553, %v2913
      %v2980 = vadd.f32 %v2554, %v2916
      %v2981 = vadd.f32 %v2555, %v2918
      %v2982 = vadd.f32 %v2556, %v2921
      %v2983 = vadd.f32 %v2557, %v2923
      %v2984 = vadd.f32 %v2558, %v2926
      %v2985 = vadd.f32 %v2559, %v2928
      %v2986 = vadd.f32 %v2560, %v2931
      %v2987 = vadd.f32 %v2561, %v2933
      %v2988 = vadd.f32 %v2562, %v2936
      %v2989 = vadd.f32 %v2563, %v2938
      %v2990 = vadd.f32 %v2564, %v2941
      %v2991 = vadd.f32 %v2565, %v2943
      %v2992 = vadd.f32 %v2566, %v2946
      %v2993 = vadd.f32 %v2567, %v2948
      %v2994 = vadd.f32 %v2568, %v2951
      %v2995 = vadd.f32 %v2569, %v2953
      %v2996 = vadd.f32 %v2570, %v2956
      %v2997 = vadd.f32 %v2571, %v2958
      %v2998 = vadd.f32 %v2572, %v2961
      %v2999 = vadd.f32 %v2573, %v2963
      %v3000 = vadd.f32 %v2574, %v2966
      %v3001 = vadd.f32 %v2575, %v2968
      %s3002 = scalar_lea.vmem %s233, 24
      %v3003 = vld [vmem:[%s3002] sm:$0xf]
      %v3004 = vld [vmem:[%s3002 + $0x4] sm:$0xf]
      %v3005 = vld [vmem:[%s3002 + $0xc] sm:$0xf]
      %v3006 = vld [vmem:[%s3002 + $0x10] sm:$0xf]
      %v3007 = vld [vmem:[%s3002 + $0x18] sm:$0xf]
      %v3008 = vld [vmem:[%s3002 + $0x1c] sm:$0xf]
      %v3009 = vld [vmem:[%s3002 + $0x24] sm:$0xf]
      %v3010 = vld [vmem:[%s3002 + $0x28] sm:$0xf]
      %v3011 = vld [vmem:[%s3002 + $0x30] sm:$0xf]
      %v3012 = vld [vmem:[%s3002 + $0x34] sm:$0xf]
      %v3013 = vld [vmem:[%s3002 + $0x3c] sm:$0xf]
      %v3014 = vld [vmem:[%s3002 + $0x40] sm:$0xf]
      %v3015 = vld [vmem:[%s3002 + $0x48] sm:$0xf]
      %v3016 = vld [vmem:[%s3002 + $0x4c] sm:$0xf]
      %v3017 = vld [vmem:[%s3002 + $0x54] sm:$0xf]
      %v3018 = vld [vmem:[%s3002 + $0x58] sm:$0xf]
      %v3019 = vld [vmem:[%s3002 + $0x60] sm:$0xf]
      %v3020 = vld [vmem:[%s3002 + $0x64] sm:$0xf]
      %v3021 = vld [vmem:[%s3002 + $0x6c] sm:$0xf]
      %v3022 = vld [vmem:[%s3002 + $0x70] sm:$0xf]
      %v3023 = vld [vmem:[%s3002 + $0x78] sm:$0xf]
      %v3024 = vld [vmem:[%s3002 + $0x7c] sm:$0xf]
      %v3025 = vld [vmem:[%s3002 + $0x84] sm:$0xf]
      %v3026 = vld [vmem:[%s3002 + $0x88] sm:$0xf]
      %v3027 = vld [vmem:[%s3002 + $0x90] sm:$0xf]
      %v3028 = vld [vmem:[%s3002 + $0x94] sm:$0xf]
      %v3029 = vld [vmem:[%s3002 + $0x9c] sm:$0xf]
      %v3030 = vld [vmem:[%s3002 + $0xa0] sm:$0xf]
      %v3031 = vld [vmem:[%s3002 + $0xa8] sm:$0xf]
      %v3032 = vld [vmem:[%s3002 + $0xac] sm:$0xf]
      %v3033 = vld [vmem:[%s3002 + $0xb4] sm:$0xf]
      %v3034 = vld [vmem:[%s3002 + $0xb8] sm:$0xf]
      %s3035 = scalar_lea.vmem %s1, 384
      %v3036 = vld [vmem:[%s3035] sm:$0xf]
      %v3037 = vld [vmem:[%s3035 + $0x4] sm:$0xf]
      %v3038 = vld [vmem:[%s3035 + $0x8] sm:$0xf]
      %v3039 = vld [vmem:[%s3035 + $0xc] sm:$0xf]
      %v3040 = vld [vmem:[%s3035 + $0x10] sm:$0xf]
      %v3041 = vld [vmem:[%s3035 + $0x14] sm:$0xf]
      %v3042 = vld [vmem:[%s3035 + $0x18] sm:$0xf]
      %v3043 = vld [vmem:[%s3035 + $0x1c] sm:$0xf]
      %v3044 = vld [vmem:[%s3035 + $0x20] sm:$0xf]
      %v3045 = vld [vmem:[%s3035 + $0x24] sm:$0xf]
      %v3046 = vld [vmem:[%s3035 + $0x28] sm:$0xf]
      %v3047 = vld [vmem:[%s3035 + $0x2c] sm:$0xf]
      %v3048 = vld [vmem:[%s3035 + $0x30] sm:$0xf]
      %v3049 = vld [vmem:[%s3035 + $0x34] sm:$0xf]
      %v3050 = vld [vmem:[%s3035 + $0x38] sm:$0xf]
      %v3051 = vld [vmem:[%s3035 + $0x3c] sm:$0xf]
      %v3084 = vunpack.c.l.b16 %v3003
      %v3085 = vunpack.c.l.b16 %v3004
      %v3086 = vunpack.c.l.b16 %v3005
      %v3087 = vunpack.c.l.b16 %v3006
      %v3088 = vunpack.c.l.b16 %v3007
      %v3089 = vunpack.c.l.b16 %v3008
      %v3090 = vunpack.c.l.b16 %v3009
      %v3091 = vunpack.c.l.b16 %v3010
      %v3092 = vunpack.c.l.b16 %v3011
      %v3093 = vunpack.c.l.b16 %v3012
      %v3094 = vunpack.c.l.b16 %v3013
      %v3095 = vunpack.c.l.b16 %v3014
      %v3096 = vunpack.c.l.b16 %v3015
      %v3097 = vunpack.c.l.b16 %v3016
      %v3098 = vunpack.c.l.b16 %v3017
      %v3099 = vunpack.c.l.b16 %v3018
      %v3100 = vunpack.c.l.b16 %v3019
      %v3101 = vunpack.c.l.b16 %v3020
      %v3102 = vunpack.c.l.b16 %v3021
      %v3103 = vunpack.c.l.b16 %v3022
      %v3104 = vunpack.c.l.b16 %v3023
      %v3105 = vunpack.c.l.b16 %v3024
      %v3106 = vunpack.c.l.b16 %v3025
      %v3107 = vunpack.c.l.b16 %v3026
      %v3108 = vunpack.c.l.b16 %v3027
      %v3109 = vunpack.c.l.b16 %v3028
      %v3110 = vunpack.c.l.b16 %v3029
      %v3111 = vunpack.c.l.b16 %v3030
      %v3112 = vunpack.c.l.b16 %v3031
      %v3113 = vunpack.c.l.b16 %v3032
      %v3114 = vunpack.c.l.b16 %v3033
      %v3115 = vunpack.c.l.b16 %v3034
      %v3116 = vpack.c.b16 %v3085, %v3084
      %v3117 = vpack.c.b16 %v3087, %v3086
      %v3118 = vpack.c.b16 %v3089, %v3088
      %v3119 = vpack.c.b16 %v3091, %v3090
      %v3120 = vpack.c.b16 %v3093, %v3092
      %v3121 = vpack.c.b16 %v3095, %v3094
      %v3122 = vpack.c.b16 %v3097, %v3096
      %v3123 = vpack.c.b16 %v3099, %v3098
      %v3124 = vpack.c.b16 %v3101, %v3100
      %v3125 = vpack.c.b16 %v3103, %v3102
      %v3126 = vpack.c.b16 %v3105, %v3104
      %v3127 = vpack.c.b16 %v3107, %v3106
      %v3128 = vpack.c.b16 %v3109, %v3108
      %v3129 = vpack.c.b16 %v3111, %v3110
      %v3130 = vpack.c.b16 %v3113, %v3112
      %v3131 = vpack.c.b16 %v3115, %v3114
      %v3164 = vunpack.c.l.b16 %v3036
      %v3165 = vunpack.c.l.b16 %v3037
      %v3166 = vunpack.c.l.b16 %v3038
      %v3167 = vunpack.c.l.b16 %v3039
      %v3168 = vunpack.c.l.b16 %v3040
      %v3169 = vunpack.c.l.b16 %v3041
      %v3170 = vunpack.c.l.b16 %v3042
      %v3171 = vunpack.c.l.b16 %v3043
      %v3172 = vunpack.c.l.b16 %v3044
      %v3173 = vunpack.c.l.b16 %v3045
      %v3174 = vunpack.c.l.b16 %v3046
      %v3175 = vunpack.c.l.b16 %v3047
      %v3176 = vunpack.c.l.b16 %v3048
      %v3177 = vunpack.c.l.b16 %v3049
      %v3178 = vunpack.c.l.b16 %v3050
      %v3179 = vunpack.c.l.b16 %v3051
      %v3180 = vpack.c.b16 %v3165, %v3164
      %v3181 = vpack.c.b16 %v3167, %v3166
      %v3182 = vpack.c.b16 %v3169, %v3168
      %v3183 = vpack.c.b16 %v3171, %v3170
      %v3184 = vpack.c.b16 %v3173, %v3172
      %v3185 = vpack.c.b16 %v3175, %v3174
      %v3186 = vpack.c.b16 %v3177, %v3176
      %v3187 = vpack.c.b16 %v3179, %v3178
      %3196 = vmatpush.bf16.msra.mxu0 %v3187
      %3197 = vmatpush.bf16.msra.mxu0 %v3186
      %3198 = vmatpush.bf16.msra.mxu0 %v3185
      %3199 = vmatpush.bf16.msra.mxu0 %v3184
      %3200 = vmatpush.bf16.msra.mxu0 %v3183
      %3201 = vmatpush.bf16.msra.mxu0 %v3182
      %3202 = vmatpush.bf16.msra.mxu0 %v3181
      %3203 = vmatpush.bf16.msra.mxu0 %v3180
      %3204 = vmatmul.bf16.gmra.mxu0 %v3116
      %v3205 = vpop.f32.mrf.mxu0
      %v3206 = vadd.f32 0.0, %v3205
      %v3207 = vpop.f32.mrf.mxu0
      %v3208 = vadd.f32 0.0, %v3207
      %3209 = vmatmul.bf16.gmra.mxu0 %v3117
      %v3210 = vpop.f32.mrf.mxu0
      %v3211 = vadd.f32 0.0, %v3210
      %v3212 = vpop.f32.mrf.mxu0
      %v3213 = vadd.f32 0.0, %v3212
      %3214 = vmatmul.bf16.gmra.mxu0 %v3118
      %v3215 = vpop.f32.mrf.mxu0
      %v3216 = vadd.f32 0.0, %v3215
      %v3217 = vpop.f32.mrf.mxu0
      %v3218 = vadd.f32 0.0, %v3217
      %3219 = vmatmul.bf16.gmra.mxu0 %v3119
      %v3220 = vpop.f32.mrf.mxu0
      %v3221 = vadd.f32 0.0, %v3220
      %v3222 = vpop.f32.mrf.mxu0
      %v3223 = vadd.f32 0.0, %v3222
      %3224 = vmatmul.bf16.gmra.mxu0 %v3120
      %v3225 = vpop.f32.mrf.mxu0
      %v3226 = vadd.f32 0.0, %v3225
      %v3227 = vpop.f32.mrf.mxu0
      %v3228 = vadd.f32 0.0, %v3227
      %3229 = vmatmul.bf16.gmra.mxu0 %v3121
      %v3230 = vpop.f32.mrf.mxu0
      %v3231 = vadd.f32 0.0, %v3230
      %v3232 = vpop.f32.mrf.mxu0
      %v3233 = vadd.f32 0.0, %v3232
      %3234 = vmatmul.bf16.gmra.mxu0 %v3122
      %v3235 = vpop.f32.mrf.mxu0
      %v3236 = vadd.f32 0.0, %v3235
      %v3237 = vpop.f32.mrf.mxu0
      %v3238 = vadd.f32 0.0, %v3237
      %3239 = vmatmul.bf16.gmra.mxu0 %v3123
      %v3240 = vpop.f32.mrf.mxu0
      %v3241 = vadd.f32 0.0, %v3240
      %v3242 = vpop.f32.mrf.mxu0
      %v3243 = vadd.f32 0.0, %v3242
      %3244 = vmatmul.bf16.gmra.mxu0 %v3124
      %v3245 = vpop.f32.mrf.mxu0
      %v3246 = vadd.f32 0.0, %v3245
      %v3247 = vpop.f32.mrf.mxu0
      %v3248 = vadd.f32 0.0, %v3247
      %3249 = vmatmul.bf16.gmra.mxu0 %v3125
      %v3250 = vpop.f32.mrf.mxu0
      %v3251 = vadd.f32 0.0, %v3250
      %v3252 = vpop.f32.mrf.mxu0
      %v3253 = vadd.f32 0.0, %v3252
      %3254 = vmatmul.bf16.gmra.mxu0 %v3126
      %v3255 = vpop.f32.mrf.mxu0
      %v3256 = vadd.f32 0.0, %v3255
      %v3257 = vpop.f32.mrf.mxu0
      %v3258 = vadd.f32 0.0, %v3257
      %3259 = vmatmul.bf16.gmra.mxu0 %v3127
      %v3260 = vpop.f32.mrf.mxu0
      %v3261 = vadd.f32 0.0, %v3260
      %v3262 = vpop.f32.mrf.mxu0
      %v3263 = vadd.f32 0.0, %v3262
      %3264 = vmatmul.bf16.gmra.mxu0 %v3128
      %v3265 = vpop.f32.mrf.mxu0
      %v3266 = vadd.f32 0.0, %v3265
      %v3267 = vpop.f32.mrf.mxu0
      %v3268 = vadd.f32 0.0, %v3267
      %3269 = vmatmul.bf16.gmra.mxu0 %v3129
      %v3270 = vpop.f32.mrf.mxu0
      %v3271 = vadd.f32 0.0, %v3270
      %v3272 = vpop.f32.mrf.mxu0
      %v3273 = vadd.f32 0.0, %v3272
      %3274 = vmatmul.bf16.gmra.mxu0 %v3130
      %v3275 = vpop.f32.mrf.mxu0
      %v3276 = vadd.f32 0.0, %v3275
      %v3277 = vpop.f32.mrf.mxu0
      %v3278 = vadd.f32 0.0, %v3277
      %3279 = vmatmul.bf16.gmra.mxu0 %v3131
      %v3280 = vpop.f32.mrf.mxu0
      %v3281 = vadd.f32 0.0, %v3280
      %v3282 = vpop.f32.mrf.mxu0
      %v3283 = vadd.f32 0.0, %v3282
      %3284 = vdwg.mxu0
      %v3285 = vadd.f32 %v2970, %v3206
      %v3286 = vadd.f32 %v2971, %v3208
      %v3287 = vadd.f32 %v2972, %v3211
      %v3288 = vadd.f32 %v2973, %v3213
      %v3289 = vadd.f32 %v2974, %v3216
      %v3290 = vadd.f32 %v2975, %v3218
      %v3291 = vadd.f32 %v2976, %v3221
      %v3292 = vadd.f32 %v2977, %v3223
      %v3293 = vadd.f32 %v2978, %v3226
      %v3294 = vadd.f32 %v2979, %v3228
      %v3295 = vadd.f32 %v2980, %v3231
      %v3296 = vadd.f32 %v2981, %v3233
      %v3297 = vadd.f32 %v2982, %v3236
      %v3298 = vadd.f32 %v2983, %v3238
      %v3299 = vadd.f32 %v2984, %v3241
      %v3300 = vadd.f32 %v2985, %v3243
      %v3301 = vadd.f32 %v2986, %v3246
      %v3302 = vadd.f32 %v2987, %v3248
      %v3303 = vadd.f32 %v2988, %v3251
      %v3304 = vadd.f32 %v2989, %v3253
      %v3305 = vadd.f32 %v2990, %v3256
      %v3306 = vadd.f32 %v2991, %v3258
      %v3307 = vadd.f32 %v2992, %v3261
      %v3308 = vadd.f32 %v2993, %v3263
      %v3309 = vadd.f32 %v2994, %v3266
      %v3310 = vadd.f32 %v2995, %v3268
      %v3311 = vadd.f32 %v2996, %v3271
      %v3312 = vadd.f32 %v2997, %v3273
      %v3313 = vadd.f32 %v2998, %v3276
      %v3314 = vadd.f32 %v2999, %v3278
      %v3315 = vadd.f32 %v3000, %v3281
      %v3316 = vadd.f32 %v3001, %v3283
      %v3317 = vld [vmem:[%s3002] sm:$0xf]
      %v3318 = vld [vmem:[%s3002 + $0x4] sm:$0xf]
      %v3319 = vld [vmem:[%s3002 + $0x8] sm:$0x1]
      %v3320 = vld [vmem:[%s3002 + $0xc] sm:$0xf]
      %v3321 = vld [vmem:[%s3002 + $0x10] sm:$0xf]
      %v3322 = vld [vmem:[%s3002 + $0x14] sm:$0x1]
      %v3323 = vld [vmem:[%s3002 + $0x18] sm:$0xf]
      %v3324 = vld [vmem:[%s3002 + $0x1c] sm:$0xf]
      %v3325 = vld [vmem:[%s3002 + $0x20] sm:$0x1]
      %v3326 = vld [vmem:[%s3002 + $0x24] sm:$0xf]
      %v3327 = vld [vmem:[%s3002 + $0x28] sm:$0xf]
      %v3328 = vld [vmem:[%s3002 + $0x2c] sm:$0x1]
      %v3329 = vld [vmem:[%s3002 + $0x30] sm:$0xf]
      %v3330 = vld [vmem:[%s3002 + $0x34] sm:$0xf]
      %v3331 = vld [vmem:[%s3002 + $0x38] sm:$0x1]
      %v3332 = vld [vmem:[%s3002 + $0x3c] sm:$0xf]
      %v3333 = vld [vmem:[%s3002 + $0x40] sm:$0xf]
      %v3334 = vld [vmem:[%s3002 + $0x44] sm:$0x1]
      %v3335 = vld [vmem:[%s3002 + $0x48] sm:$0xf]
      %v3336 = vld [vmem:[%s3002 + $0x4c] sm:$0xf]
      %v3337 = vld [vmem:[%s3002 + $0x50] sm:$0x1]
      %v3338 = vld [vmem:[%s3002 + $0x54] sm:$0xf]
      %v3339 = vld [vmem:[%s3002 + $0x58] sm:$0xf]
      %v3340 = vld [vmem:[%s3002 + $0x5c] sm:$0x1]
      %v3341 = vld [vmem:[%s3002 + $0x60] sm:$0xf]
      %v3342 = vld [vmem:[%s3002 + $0x64] sm:$0xf]
      %v3343 = vld [vmem:[%s3002 + $0x68] sm:$0x1]
      %v3344 = vld [vmem:[%s3002 + $0x6c] sm:$0xf]
      %v3345 = vld [vmem:[%s3002 + $0x70] sm:$0xf]
      %v3346 = vld [vmem:[%s3002 + $0x74] sm:$0x1]
      %v3347 = vld [vmem:[%s3002 + $0x78] sm:$0xf]
      %v3348 = vld [vmem:[%s3002 + $0x7c] sm:$0xf]
      %v3349 = vld [vmem:[%s3002 + $0x80] sm:$0x1]
      %v3350 = vld [vmem:[%s3002 + $0x84] sm:$0xf]
      %v3351 = vld [vmem:[%s3002 + $0x88] sm:$0xf]
      %v3352 = vld [vmem:[%s3002 + $0x8c] sm:$0x1]
      %v3353 = vld [vmem:[%s3002 + $0x90] sm:$0xf]
      %v3354 = vld [vmem:[%s3002 + $0x94] sm:$0xf]
      %v3355 = vld [vmem:[%s3002 + $0x98] sm:$0x1]
      %v3356 = vld [vmem:[%s3002 + $0x9c] sm:$0xf]
      %v3357 = vld [vmem:[%s3002 + $0xa0] sm:$0xf]
      %v3358 = vld [vmem:[%s3002 + $0xa4] sm:$0x1]
      %v3359 = vld [vmem:[%s3002 + $0xa8] sm:$0xf]
      %v3360 = vld [vmem:[%s3002 + $0xac] sm:$0xf]
      %v3361 = vld [vmem:[%s3002 + $0xb0] sm:$0x1]
      %v3362 = vld [vmem:[%s3002 + $0xb4] sm:$0xf]
      %v3363 = vld [vmem:[%s3002 + $0xb8] sm:$0xf]
      %v3364 = vld [vmem:[%s3002 + $0xbc] sm:$0x1]
      %v3366 = vshrl.u32 %v3317, 16
      %v3368 = vrot.slane %v3366, 4
      %v3369 = vshll.u32 %v3317, 16
      %v3371 = vrot.slane %v3369, 5
      %v3372 = vor.u32 %v3368, %v3371
      %v3373 = vrot.slane %v3372, 4
      %v3375 = vshll.u32 %v3318, 16
      %v3377 = vrot.slane %v3375, 5
      %v3378 = vsel %vm330, %v3373, %v3377
      %v3379 = vshrl.u32 %v3318, 16
      %v3381 = vrot.slane %v3379, 4
      %v3382 = vor.u32 %v3381, %v3377
      %v3383 = vrot.slane %v3382, 4
      %v3385 = vshll.u32 %v3319, 16
      %v3387 = vrot.slane %v3385, 5
      %v3388 = vsel %vm330, %v3383, %v3387
      %v3390 = vshrl.u32 %v3320, 16
      %v3392 = vrot.slane %v3390, 4
      %v3393 = vshll.u32 %v3320, 16
      %v3395 = vrot.slane %v3393, 5
      %v3396 = vor.u32 %v3392, %v3395
      %v3397 = vrot.slane %v3396, 4
      %v3399 = vshll.u32 %v3321, 16
      %v3401 = vrot.slane %v3399, 5
      %v3402 = vsel %vm330, %v3397, %v3401
      %v3403 = vshrl.u32 %v3321, 16
      %v3405 = vrot.slane %v3403, 4
      %v3406 = vor.u32 %v3405, %v3401
      %v3407 = vrot.slane %v3406, 4
      %v3409 = vshll.u32 %v3322, 16
      %v3411 = vrot.slane %v3409, 5
      %v3412 = vsel %vm330, %v3407, %v3411
      %v3414 = vshrl.u32 %v3323, 16
      %v3416 = vrot.slane %v3414, 4
      %v3417 = vshll.u32 %v3323, 16
      %v3419 = vrot.slane %v3417, 5
      %v3420 = vor.u32 %v3416, %v3419
      %v3421 = vrot.slane %v3420, 4
      %v3423 = vshll.u32 %v3324, 16
      %v3425 = vrot.slane %v3423, 5
      %v3426 = vsel %vm330, %v3421, %v3425
      %v3427 = vshrl.u32 %v3324, 16
      %v3429 = vrot.slane %v3427, 4
      %v3430 = vor.u32 %v3429, %v3425
      %v3431 = vrot.slane %v3430, 4
      %v3433 = vshll.u32 %v3325, 16
      %v3435 = vrot.slane %v3433, 5
      %v3436 = vsel %vm330, %v3431, %v3435
      %v3438 = vshrl.u32 %v3326, 16
      %v3440 = vrot.slane %v3438, 4
      %v3441 = vshll.u32 %v3326, 16
      %v3443 = vrot.slane %v3441, 5
      %v3444 = vor.u32 %v3440, %v3443
      %v3445 = vrot.slane %v3444, 4
      %v3447 = vshll.u32 %v3327, 16
      %v3449 = vrot.slane %v3447, 5
      %v3450 = vsel %vm330, %v3445, %v3449
      %v3451 = vshrl.u32 %v3327, 16
      %v3453 = vrot.slane %v3451, 4
      %v3454 = vor.u32 %v3453, %v3449
      %v3455 = vrot.slane %v3454, 4
      %v3457 = vshll.u32 %v3328, 16
      %v3459 = vrot.slane %v3457, 5
      %v3460 = vsel %vm330, %v3455, %v3459
      %v3462 = vshrl.u32 %v3329, 16
      %v3464 = vrot.slane %v3462, 4
      %v3465 = vshll.u32 %v3329, 16
      %v3467 = vrot.slane %v3465, 5
      %v3468 = vor.u32 %v3464, %v3467
      %v3469 = vrot.slane %v3468, 4
      %v3471 = vshll.u32 %v3330, 16
      %v3473 = vrot.slane %v3471, 5
      %v3474 = vsel %vm330, %v3469, %v3473
      %v3475 = vshrl.u32 %v3330, 16
      %v3477 = vrot.slane %v3475, 4
      %v3478 = vor.u32 %v3477, %v3473
      %v3479 = vrot.slane %v3478, 4
      %v3481 = vshll.u32 %v3331, 16
      %v3483 = vrot.slane %v3481, 5
      %v3484 = vsel %vm330, %v3479, %v3483
      %v3486 = vshrl.u32 %v3332, 16
      %v3488 = vrot.slane %v3486, 4
      %v3489 = vshll.u32 %v3332, 16
      %v3491 = vrot.slane %v3489, 5
      %v3492 = vor.u32 %v3488, %v3491
      %v3493 = vrot.slane %v3492, 4
      %v3495 = vshll.u32 %v3333, 16
      %v3497 = vrot.slane %v3495, 5
      %v3498 = vsel %vm330, %v3493, %v3497
      %v3499 = vshrl.u32 %v3333, 16
      %v3501 = vrot.slane %v3499, 4
      %v3502 = vor.u32 %v3501, %v3497
      %v3503 = vrot.slane %v3502, 4
      %v3505 = vshll.u32 %v3334, 16
      %v3507 = vrot.slane %v3505, 5
      %v3508 = vsel %vm330, %v3503, %v3507
      %v3510 = vshrl.u32 %v3335, 16
      %v3512 = vrot.slane %v3510, 4
      %v3513 = vshll.u32 %v3335, 16
      %v3515 = vrot.slane %v3513, 5
      %v3516 = vor.u32 %v3512, %v3515
      %v3517 = vrot.slane %v3516, 4
      %v3519 = vshll.u32 %v3336, 16
      %v3521 = vrot.slane %v3519, 5
      %v3522 = vsel %vm330, %v3517, %v3521
      %v3523 = vshrl.u32 %v3336, 16
      %v3525 = vrot.slane %v3523, 4
      %v3526 = vor.u32 %v3525, %v3521
      %v3527 = vrot.slane %v3526, 4
      %v3529 = vshll.u32 %v3337, 16
      %v3531 = vrot.slane %v3529, 5
      %v3532 = vsel %vm330, %v3527, %v3531
      %v3534 = vshrl.u32 %v3338, 16
      %v3536 = vrot.slane %v3534, 4
      %v3537 = vshll.u32 %v3338, 16
      %v3539 = vrot.slane %v3537, 5
      %v3540 = vor.u32 %v3536, %v3539
      %v3541 = vrot.slane %v3540, 4
      %v3543 = vshll.u32 %v3339, 16
      %v3545 = vrot.slane %v3543, 5
      %v3546 = vsel %vm330, %v3541, %v3545
      %v3547 = vshrl.u32 %v3339, 16
      %v3549 = vrot.slane %v3547, 4
      %v3550 = vor.u32 %v3549, %v3545
      %v3551 = vrot.slane %v3550, 4
      %v3553 = vshll.u32 %v3340, 16
      %v3555 = vrot.slane %v3553, 5
      %v3556 = vsel %vm330, %v3551, %v3555
      %v3558 = vshrl.u32 %v3341, 16
      %v3560 = vrot.slane %v3558, 4
      %v3561 = vshll.u32 %v3341, 16
      %v3563 = vrot.slane %v3561, 5
      %v3564 = vor.u32 %v3560, %v3563
      %v3565 = vrot.slane %v3564, 4
      %v3567 = vshll.u32 %v3342, 16
      %v3569 = vrot.slane %v3567, 5
      %v3570 = vsel %vm330, %v3565, %v3569
      %v3571 = vshrl.u32 %v3342, 16
      %v3573 = vrot.slane %v3571, 4
      %v3574 = vor.u32 %v3573, %v3569
      %v3575 = vrot.slane %v3574, 4
      %v3577 = vshll.u32 %v3343, 16
      %v3579 = vrot.slane %v3577, 5
      %v3580 = vsel %vm330, %v3575, %v3579
      %v3582 = vshrl.u32 %v3344, 16
      %v3584 = vrot.slane %v3582, 4
      %v3585 = vshll.u32 %v3344, 16
      %v3587 = vrot.slane %v3585, 5
      %v3588 = vor.u32 %v3584, %v3587
      %v3589 = vrot.slane %v3588, 4
      %v3591 = vshll.u32 %v3345, 16
      %v3593 = vrot.slane %v3591, 5
      %v3594 = vsel %vm330, %v3589, %v3593
      %v3595 = vshrl.u32 %v3345, 16
      %v3597 = vrot.slane %v3595, 4
      %v3598 = vor.u32 %v3597, %v3593
      %v3599 = vrot.slane %v3598, 4
      %v3601 = vshll.u32 %v3346, 16
      %v3603 = vrot.slane %v3601, 5
      %v3604 = vsel %vm330, %v3599, %v3603
      %v3606 = vshrl.u32 %v3347, 16
      %v3608 = vrot.slane %v3606, 4
      %v3609 = vshll.u32 %v3347, 16
      %v3611 = vrot.slane %v3609, 5
      %v3612 = vor.u32 %v3608, %v3611
      %v3613 = vrot.slane %v3612, 4
      %v3615 = vshll.u32 %v3348, 16
      %v3617 = vrot.slane %v3615, 5
      %v3618 = vsel %vm330, %v3613, %v3617
      %v3619 = vshrl.u32 %v3348, 16
      %v3621 = vrot.slane %v3619, 4
      %v3622 = vor.u32 %v3621, %v3617
      %v3623 = vrot.slane %v3622, 4
      %v3625 = vshll.u32 %v3349, 16
      %v3627 = vrot.slane %v3625, 5
      %v3628 = vsel %vm330, %v3623, %v3627
      %v3630 = vshrl.u32 %v3350, 16
      %v3632 = vrot.slane %v3630, 4
      %v3633 = vshll.u32 %v3350, 16
      %v3635 = vrot.slane %v3633, 5
      %v3636 = vor.u32 %v3632, %v3635
      %v3637 = vrot.slane %v3636, 4
      %v3639 = vshll.u32 %v3351, 16
      %v3641 = vrot.slane %v3639, 5
      %v3642 = vsel %vm330, %v3637, %v3641
      %v3643 = vshrl.u32 %v3351, 16
      %v3645 = vrot.slane %v3643, 4
      %v3646 = vor.u32 %v3645, %v3641
      %v3647 = vrot.slane %v3646, 4
      %v3649 = vshll.u32 %v3352, 16
      %v3651 = vrot.slane %v3649, 5
      %v3652 = vsel %vm330, %v3647, %v3651
      %v3654 = vshrl.u32 %v3353, 16
      %v3656 = vrot.slane %v3654, 4
      %v3657 = vshll.u32 %v3353, 16
      %v3659 = vrot.slane %v3657, 5
      %v3660 = vor.u32 %v3656, %v3659
      %v3661 = vrot.slane %v3660, 4
      %v3663 = vshll.u32 %v3354, 16
      %v3665 = vrot.slane %v3663, 5
      %v3666 = vsel %vm330, %v3661, %v3665
      %v3667 = vshrl.u32 %v3354, 16
      %v3669 = vrot.slane %v3667, 4
      %v3670 = vor.u32 %v3669, %v3665
      %v3671 = vrot.slane %v3670, 4
      %v3673 = vshll.u32 %v3355, 16
      %v3675 = vrot.slane %v3673, 5
      %v3676 = vsel %vm330, %v3671, %v3675
      %v3678 = vshrl.u32 %v3356, 16
      %v3680 = vrot.slane %v3678, 4
      %v3681 = vshll.u32 %v3356, 16
      %v3683 = vrot.slane %v3681, 5
      %v3684 = vor.u32 %v3680, %v3683
      %v3685 = vrot.slane %v3684, 4
      %v3687 = vshll.u32 %v3357, 16
      %v3689 = vrot.slane %v3687, 5
      %v3690 = vsel %vm330, %v3685, %v3689
      %v3691 = vshrl.u32 %v3357, 16
      %v3693 = vrot.slane %v3691, 4
      %v3694 = vor.u32 %v3693, %v3689
      %v3695 = vrot.slane %v3694, 4
      %v3697 = vshll.u32 %v3358, 16
      %v3699 = vrot.slane %v3697, 5
      %v3700 = vsel %vm330, %v3695, %v3699
      %v3702 = vshrl.u32 %v3359, 16
      %v3704 = vrot.slane %v3702, 4
      %v3705 = vshll.u32 %v3359, 16
      %v3707 = vrot.slane %v3705, 5
      %v3708 = vor.u32 %v3704, %v3707
      %v3709 = vrot.slane %v3708, 4
      %v3711 = vshll.u32 %v3360, 16
      %v3713 = vrot.slane %v3711, 5
      %v3714 = vsel %vm330, %v3709, %v3713
      %v3715 = vshrl.u32 %v3360, 16
      %v3717 = vrot.slane %v3715, 4
      %v3718 = vor.u32 %v3717, %v3713
      %v3719 = vrot.slane %v3718, 4
      %v3721 = vshll.u32 %v3361, 16
      %v3723 = vrot.slane %v3721, 5
      %v3724 = vsel %vm330, %v3719, %v3723
      %v3726 = vshrl.u32 %v3362, 16
      %v3728 = vrot.slane %v3726, 4
      %v3729 = vshll.u32 %v3362, 16
      %v3731 = vrot.slane %v3729, 5
      %v3732 = vor.u32 %v3728, %v3731
      %v3733 = vrot.slane %v3732, 4
      %v3735 = vshll.u32 %v3363, 16
      %v3737 = vrot.slane %v3735, 5
      %v3738 = vsel %vm330, %v3733, %v3737
      %v3739 = vshrl.u32 %v3363, 16
      %v3741 = vrot.slane %v3739, 4
      %v3742 = vor.u32 %v3741, %v3737
      %v3743 = vrot.slane %v3742, 4
      %v3745 = vshll.u32 %v3364, 16
      %v3747 = vrot.slane %v3745, 5
      %v3748 = vsel %vm330, %v3743, %v3747
      %s3749 = scalar_lea.vmem %s1, 448
      %v3750 = vld [vmem:[%s3749] sm:$0xf]
      %v3751 = vld [vmem:[%s3749 + $0x4] sm:$0xf]
      %v3752 = vld [vmem:[%s3749 + $0x8] sm:$0xf]
      %v3753 = vld [vmem:[%s3749 + $0xc] sm:$0xf]
      %v3754 = vld [vmem:[%s3749 + $0x10] sm:$0xf]
      %v3755 = vld [vmem:[%s3749 + $0x14] sm:$0xf]
      %v3756 = vld [vmem:[%s3749 + $0x18] sm:$0xf]
      %v3757 = vld [vmem:[%s3749 + $0x1c] sm:$0xf]
      %v3758 = vld [vmem:[%s3749 + $0x20] sm:$0xf]
      %v3759 = vld [vmem:[%s3749 + $0x24] sm:$0xf]
      %v3760 = vld [vmem:[%s3749 + $0x28] sm:$0xf]
      %v3761 = vld [vmem:[%s3749 + $0x2c] sm:$0xf]
      %v3762 = vld [vmem:[%s3749 + $0x30] sm:$0xf]
      %v3763 = vld [vmem:[%s3749 + $0x34] sm:$0xf]
      %v3764 = vld [vmem:[%s3749 + $0x38] sm:$0xf]
      %v3765 = vld [vmem:[%s3749 + $0x3c] sm:$0xf]
      %v3766 = vunpack.c.l.b16 %v3378
      %v3767 = vunpack.c.l.b16 %v3388
      %v3768 = vunpack.c.l.b16 %v3402
      %v3769 = vunpack.c.l.b16 %v3412
      %v3770 = vunpack.c.l.b16 %v3426
      %v3771 = vunpack.c.l.b16 %v3436
      %v3772 = vunpack.c.l.b16 %v3450
      %v3773 = vunpack.c.l.b16 %v3460
      %v3774 = vunpack.c.l.b16 %v3474
      %v3775 = vunpack.c.l.b16 %v3484
      %v3776 = vunpack.c.l.b16 %v3498
      %v3777 = vunpack.c.l.b16 %v3508
      %v3778 = vunpack.c.l.b16 %v3522
      %v3779 = vunpack.c.l.b16 %v3532
      %v3780 = vunpack.c.l.b16 %v3546
      %v3781 = vunpack.c.l.b16 %v3556
      %v3782 = vunpack.c.l.b16 %v3570
      %v3783 = vunpack.c.l.b16 %v3580
      %v3784 = vunpack.c.l.b16 %v3594
      %v3785 = vunpack.c.l.b16 %v3604
      %v3786 = vunpack.c.l.b16 %v3618
      %v3787 = vunpack.c.l.b16 %v3628
      %v3788 = vunpack.c.l.b16 %v3642
      %v3789 = vunpack.c.l.b16 %v3652
      %v3790 = vunpack.c.l.b16 %v3666
      %v3791 = vunpack.c.l.b16 %v3676
      %v3792 = vunpack.c.l.b16 %v3690
      %v3793 = vunpack.c.l.b16 %v3700
      %v3794 = vunpack.c.l.b16 %v3714
      %v3795 = vunpack.c.l.b16 %v3724
      %v3796 = vunpack.c.l.b16 %v3738
      %v3797 = vunpack.c.l.b16 %v3748
      %v3798 = vpack.c.b16 %v3767, %v3766
      %v3799 = vpack.c.b16 %v3769, %v3768
      %v3800 = vpack.c.b16 %v3771, %v3770
      %v3801 = vpack.c.b16 %v3773, %v3772
      %v3802 = vpack.c.b16 %v3775, %v3774
      %v3803 = vpack.c.b16 %v3777, %v3776
      %v3804 = vpack.c.b16 %v3779, %v3778
      %v3805 = vpack.c.b16 %v3781, %v3780
      %v3806 = vpack.c.b16 %v3783, %v3782
      %v3807 = vpack.c.b16 %v3785, %v3784
      %v3808 = vpack.c.b16 %v3787, %v3786
      %v3809 = vpack.c.b16 %v3789, %v3788
      %v3810 = vpack.c.b16 %v3791, %v3790
      %v3811 = vpack.c.b16 %v3793, %v3792
      %v3812 = vpack.c.b16 %v3795, %v3794
      %v3813 = vpack.c.b16 %v3797, %v3796
      %v3846 = vunpack.c.l.b16 %v3750
      %v3847 = vunpack.c.l.b16 %v3751
      %v3848 = vunpack.c.l.b16 %v3752
      %v3849 = vunpack.c.l.b16 %v3753
      %v3850 = vunpack.c.l.b16 %v3754
      %v3851 = vunpack.c.l.b16 %v3755
      %v3852 = vunpack.c.l.b16 %v3756
      %v3853 = vunpack.c.l.b16 %v3757
      %v3854 = vunpack.c.l.b16 %v3758
      %v3855 = vunpack.c.l.b16 %v3759
      %v3856 = vunpack.c.l.b16 %v3760
      %v3857 = vunpack.c.l.b16 %v3761
      %v3858 = vunpack.c.l.b16 %v3762
      %v3859 = vunpack.c.l.b16 %v3763
      %v3860 = vunpack.c.l.b16 %v3764
      %v3861 = vunpack.c.l.b16 %v3765
      %v3862 = vpack.c.b16 %v3847, %v3846
      %v3863 = vpack.c.b16 %v3849, %v3848
      %v3864 = vpack.c.b16 %v3851, %v3850
      %v3865 = vpack.c.b16 %v3853, %v3852
      %v3866 = vpack.c.b16 %v3855, %v3854
      %v3867 = vpack.c.b16 %v3857, %v3856
      %v3868 = vpack.c.b16 %v3859, %v3858
      %v3869 = vpack.c.b16 %v3861, %v3860
      %3878 = vmatpush.bf16.msra.mxu0 %v3869
      %3879 = vmatpush.bf16.msra.mxu0 %v3868
      %3880 = vmatpush.bf16.msra.mxu0 %v3867
      %3881 = vmatpush.bf16.msra.mxu0 %v3866
      %3882 = vmatpush.bf16.msra.mxu0 %v3865
      %3883 = vmatpush.bf16.msra.mxu0 %v3864
      %3884 = vmatpush.bf16.msra.mxu0 %v3863
      %3885 = vmatpush.bf16.msra.mxu0 %v3862
      %3886 = vmatmul.bf16.gmra.mxu0 %v3798
      %v3887 = vpop.f32.mrf.mxu0
      %v3888 = vadd.f32 0.0, %v3887
      %v3889 = vpop.f32.mrf.mxu0
      %v3890 = vadd.f32 0.0, %v3889
      %3891 = vmatmul.bf16.gmra.mxu0 %v3799
      %v3892 = vpop.f32.mrf.mxu0
      %v3893 = vadd.f32 0.0, %v3892
      %v3894 = vpop.f32.mrf.mxu0
      %v3895 = vadd.f32 0.0, %v3894
      %3896 = vmatmul.bf16.gmra.mxu0 %v3800
      %v3897 = vpop.f32.mrf.mxu0
      %v3898 = vadd.f32 0.0, %v3897
      %v3899 = vpop.f32.mrf.mxu0
      %v3900 = vadd.f32 0.0, %v3899
      %3901 = vmatmul.bf16.gmra.mxu0 %v3801
      %v3902 = vpop.f32.mrf.mxu0
      %v3903 = vadd.f32 0.0, %v3902
      %v3904 = vpop.f32.mrf.mxu0
      %v3905 = vadd.f32 0.0, %v3904
      %3906 = vmatmul.bf16.gmra.mxu0 %v3802
      %v3907 = vpop.f32.mrf.mxu0
      %v3908 = vadd.f32 0.0, %v3907
      %v3909 = vpop.f32.mrf.mxu0
      %v3910 = vadd.f32 0.0, %v3909
      %3911 = vmatmul.bf16.gmra.mxu0 %v3803
      %v3912 = vpop.f32.mrf.mxu0
      %v3913 = vadd.f32 0.0, %v3912
      %v3914 = vpop.f32.mrf.mxu0
      %v3915 = vadd.f32 0.0, %v3914
      %3916 = vmatmul.bf16.gmra.mxu0 %v3804
      %v3917 = vpop.f32.mrf.mxu0
      %v3918 = vadd.f32 0.0, %v3917
      %v3919 = vpop.f32.mrf.mxu0
      %v3920 = vadd.f32 0.0, %v3919
      %3921 = vmatmul.bf16.gmra.mxu0 %v3805
      %v3922 = vpop.f32.mrf.mxu0
      %v3923 = vadd.f32 0.0, %v3922
      %v3924 = vpop.f32.mrf.mxu0
      %v3925 = vadd.f32 0.0, %v3924
      %3926 = vmatmul.bf16.gmra.mxu0 %v3806
      %v3927 = vpop.f32.mrf.mxu0
      %v3928 = vadd.f32 0.0, %v3927
      %v3929 = vpop.f32.mrf.mxu0
      %v3930 = vadd.f32 0.0, %v3929
      %3931 = vmatmul.bf16.gmra.mxu0 %v3807
      %v3932 = vpop.f32.mrf.mxu0
      %v3933 = vadd.f32 0.0, %v3932
      %v3934 = vpop.f32.mrf.mxu0
      %v3935 = vadd.f32 0.0, %v3934
      %3936 = vmatmul.bf16.gmra.mxu0 %v3808
      %v3937 = vpop.f32.mrf.mxu0
      %v3938 = vadd.f32 0.0, %v3937
      %v3939 = vpop.f32.mrf.mxu0
      %v3940 = vadd.f32 0.0, %v3939
      %3941 = vmatmul.bf16.gmra.mxu0 %v3809
      %v3942 = vpop.f32.mrf.mxu0
      %v3943 = vadd.f32 0.0, %v3942
      %v3944 = vpop.f32.mrf.mxu0
      %v3945 = vadd.f32 0.0, %v3944
      %3946 = vmatmul.bf16.gmra.mxu0 %v3810
      %v3947 = vpop.f32.mrf.mxu0
      %v3948 = vadd.f32 0.0, %v3947
      %v3949 = vpop.f32.mrf.mxu0
      %v3950 = vadd.f32 0.0, %v3949
      %3951 = vmatmul.bf16.gmra.mxu0 %v3811
      %v3952 = vpop.f32.mrf.mxu0
      %v3953 = vadd.f32 0.0, %v3952
      %v3954 = vpop.f32.mrf.mxu0
      %v3955 = vadd.f32 0.0, %v3954
      %3956 = vmatmul.bf16.gmra.mxu0 %v3812
      %v3957 = vpop.f32.mrf.mxu0
      %v3958 = vadd.f32 0.0, %v3957
      %v3959 = vpop.f32.mrf.mxu0
      %v3960 = vadd.f32 0.0, %v3959
      %3961 = vmatmul.bf16.gmra.mxu0 %v3813
      %v3962 = vpop.f32.mrf.mxu0
      %v3963 = vadd.f32 0.0, %v3962
      %v3964 = vpop.f32.mrf.mxu0
      %v3965 = vadd.f32 0.0, %v3964
      %3966 = vdwg.mxu0
      %v3967 = vadd.f32 %v3285, %v3888
      %v3968 = vadd.f32 %v3286, %v3890
      %v3969 = vadd.f32 %v3287, %v3893
      %v3970 = vadd.f32 %v3288, %v3895
      %v3971 = vadd.f32 %v3289, %v3898
      %v3972 = vadd.f32 %v3290, %v3900
      %v3973 = vadd.f32 %v3291, %v3903
      %v3974 = vadd.f32 %v3292, %v3905
      %v3975 = vadd.f32 %v3293, %v3908
      %v3976 = vadd.f32 %v3294, %v3910
      %v3977 = vadd.f32 %v3295, %v3913
      %v3978 = vadd.f32 %v3296, %v3915
      %v3979 = vadd.f32 %v3297, %v3918
      %v3980 = vadd.f32 %v3298, %v3920
      %v3981 = vadd.f32 %v3299, %v3923
      %v3982 = vadd.f32 %v3300, %v3925
      %v3983 = vadd.f32 %v3301, %v3928
      %v3984 = vadd.f32 %v3302, %v3930
      %v3985 = vadd.f32 %v3303, %v3933
      %v3986 = vadd.f32 %v3304, %v3935
      %v3987 = vadd.f32 %v3305, %v3938
      %v3988 = vadd.f32 %v3306, %v3940
      %v3989 = vadd.f32 %v3307, %v3943
      %v3990 = vadd.f32 %v3308, %v3945
      %v3991 = vadd.f32 %v3309, %v3948
      %v3992 = vadd.f32 %v3310, %v3950
      %v3993 = vadd.f32 %v3311, %v3953
      %v3994 = vadd.f32 %v3312, %v3955
      %v3995 = vadd.f32 %v3313, %v3958
      %v3996 = vadd.f32 %v3314, %v3960
      %v3997 = vadd.f32 %v3315, %v3963
      %v3998 = vadd.f32 %v3316, %v3965
      %v3999 = vld [vmem:[%s3002] sm:$0xe]
      %v4000 = vld [vmem:[%s3002 + $0xc] sm:$0xe]
      %v4001 = vld [vmem:[%s3002 + $0x18] sm:$0xe]
      %v4002 = vld [vmem:[%s3002 + $0x24] sm:$0xe]
      %v4003 = vld [vmem:[%s3002 + $0x30] sm:$0xe]
      %v4004 = vld [vmem:[%s3002 + $0x3c] sm:$0xe]
      %v4005 = vld [vmem:[%s3002 + $0x48] sm:$0xe]
      %v4006 = vld [vmem:[%s3002 + $0x54] sm:$0xe]
      %v4007 = vld [vmem:[%s3002 + $0x60] sm:$0xe]
      %v4008 = vld [vmem:[%s3002 + $0x6c] sm:$0xe]
      %v4009 = vld [vmem:[%s3002 + $0x78] sm:$0xe]
      %v4010 = vld [vmem:[%s3002 + $0x84] sm:$0xe]
      %v4011 = vld [vmem:[%s3002 + $0x90] sm:$0xe]
      %v4012 = vld [vmem:[%s3002 + $0x9c] sm:$0xe]
      %v4013 = vld [vmem:[%s3002 + $0xa8] sm:$0xe]
      %v4014 = vld [vmem:[%s3002 + $0xb4] sm:$0xe]
      %v4063 = vrot.slane %v3999, 5
      %v4064 = vrot.slane %v4063, 4
      %v4065 = vrot.slane %v3318, 5
      %v4066 = vsel %vm1216, %v4064, %v4065
      %v4067 = vrot.slane %v4065, 4
      %v4068 = vrot.slane %v3319, 5
      %v4069 = vsel %vm1216, %v4067, %v4068
      %v4070 = vrot.slane %v4000, 5
      %v4071 = vrot.slane %v4070, 4
      %v4072 = vrot.slane %v3321, 5
      %v4073 = vsel %vm1216, %v4071, %v4072
      %v4074 = vrot.slane %v4072, 4
      %v4075 = vrot.slane %v3322, 5
      %v4076 = vsel %vm1216, %v4074, %v4075
      %v4077 = vrot.slane %v4001, 5
      %v4078 = vrot.slane %v4077, 4
      %v4079 = vrot.slane %v3324, 5
      %v4080 = vsel %vm1216, %v4078, %v4079
      %v4081 = vrot.slane %v4079, 4
      %v4082 = vrot.slane %v3325, 5
      %v4083 = vsel %vm1216, %v4081, %v4082
      %v4084 = vrot.slane %v4002, 5
      %v4085 = vrot.slane %v4084, 4
      %v4086 = vrot.slane %v3327, 5
      %v4087 = vsel %vm1216, %v4085, %v4086
      %v4088 = vrot.slane %v4086, 4
      %v4089 = vrot.slane %v3328, 5
      %v4090 = vsel %vm1216, %v4088, %v4089
      %v4091 = vrot.slane %v4003, 5
      %v4092 = vrot.slane %v4091, 4
      %v4093 = vrot.slane %v3330, 5
      %v4094 = vsel %vm1216, %v4092, %v4093
      %v4095 = vrot.slane %v4093, 4
      %v4096 = vrot.slane %v3331, 5
      %v4097 = vsel %vm1216, %v4095, %v4096
      %v4098 = vrot.slane %v4004, 5
      %v4099 = vrot.slane %v4098, 4
      %v4100 = vrot.slane %v3333, 5
      %v4101 = vsel %vm1216, %v4099, %v4100
      %v4102 = vrot.slane %v4100, 4
      %v4103 = vrot.slane %v3334, 5
      %v4104 = vsel %vm1216, %v4102, %v4103
      %v4105 = vrot.slane %v4005, 5
      %v4106 = vrot.slane %v4105, 4
      %v4107 = vrot.slane %v3336, 5
      %v4108 = vsel %vm1216, %v4106, %v4107
      %v4109 = vrot.slane %v4107, 4
      %v4110 = vrot.slane %v3337, 5
      %v4111 = vsel %vm1216, %v4109, %v4110
      %v4112 = vrot.slane %v4006, 5
      %v4113 = vrot.slane %v4112, 4
      %v4114 = vrot.slane %v3339, 5
      %v4115 = vsel %vm1216, %v4113, %v4114
      %v4116 = vrot.slane %v4114, 4
      %v4117 = vrot.slane %v3340, 5
      %v4118 = vsel %vm1216, %v4116, %v4117
      %v4119 = vrot.slane %v4007, 5
      %v4120 = vrot.slane %v4119, 4
      %v4121 = vrot.slane %v3342, 5
      %v4122 = vsel %vm1216, %v4120, %v4121
      %v4123 = vrot.slane %v4121, 4
      %v4124 = vrot.slane %v3343, 5
      %v4125 = vsel %vm1216, %v4123, %v4124
      %v4126 = vrot.slane %v4008, 5
      %v4127 = vrot.slane %v4126, 4
      %v4128 = vrot.slane %v3345, 5
      %v4129 = vsel %vm1216, %v4127, %v4128
      %v4130 = vrot.slane %v4128, 4
      %v4131 = vrot.slane %v3346, 5
      %v4132 = vsel %vm1216, %v4130, %v4131
      %v4133 = vrot.slane %v4009, 5
      %v4134 = vrot.slane %v4133, 4
      %v4135 = vrot.slane %v3348, 5
      %v4136 = vsel %vm1216, %v4134, %v4135
      %v4137 = vrot.slane %v4135, 4
      %v4138 = vrot.slane %v3349, 5
      %v4139 = vsel %vm1216, %v4137, %v4138
      %v4140 = vrot.slane %v4010, 5
      %v4141 = vrot.slane %v4140, 4
      %v4142 = vrot.slane %v3351, 5
      %v4143 = vsel %vm1216, %v4141, %v4142
      %v4144 = vrot.slane %v4142, 4
      %v4145 = vrot.slane %v3352, 5
      %v4146 = vsel %vm1216, %v4144, %v4145
      %v4147 = vrot.slane %v4011, 5
      %v4148 = vrot.slane %v4147, 4
      %v4149 = vrot.slane %v3354, 5
      %v4150 = vsel %vm1216, %v4148, %v4149
      %v4151 = vrot.slane %v4149, 4
      %v4152 = vrot.slane %v3355, 5
      %v4153 = vsel %vm1216, %v4151, %v4152
      %v4154 = vrot.slane %v4012, 5
      %v4155 = vrot.slane %v4154, 4
      %v4156 = vrot.slane %v3357, 5
      %v4157 = vsel %vm1216, %v4155, %v4156
      %v4158 = vrot.slane %v4156, 4
      %v4159 = vrot.slane %v3358, 5
      %v4160 = vsel %vm1216, %v4158, %v4159
      %v4161 = vrot.slane %v4013, 5
      %v4162 = vrot.slane %v4161, 4
      %v4163 = vrot.slane %v3360, 5
      %v4164 = vsel %vm1216, %v4162, %v4163
      %v4165 = vrot.slane %v4163, 4
      %v4166 = vrot.slane %v3361, 5
      %v4167 = vsel %vm1216, %v4165, %v4166
      %v4168 = vrot.slane %v4014, 5
      %v4169 = vrot.slane %v4168, 4
      %v4170 = vrot.slane %v3363, 5
      %v4171 = vsel %vm1216, %v4169, %v4170
      %v4172 = vrot.slane %v4170, 4
      %v4173 = vrot.slane %v3364, 5
      %v4174 = vsel %vm1216, %v4172, %v4173
      %s4175 = scalar_lea.vmem %s1, 512
      %v4176 = vld [vmem:[%s4175] sm:$0xf]
      %v4177 = vld [vmem:[%s4175 + $0x4] sm:$0xf]
      %v4178 = vld [vmem:[%s4175 + $0x8] sm:$0xf]
      %v4179 = vld [vmem:[%s4175 + $0xc] sm:$0xf]
      %v4180 = vld [vmem:[%s4175 + $0x10] sm:$0xf]
      %v4181 = vld [vmem:[%s4175 + $0x14] sm:$0xf]
      %v4182 = vld [vmem:[%s4175 + $0x18] sm:$0xf]
      %v4183 = vld [vmem:[%s4175 + $0x1c] sm:$0xf]
      %v4184 = vld [vmem:[%s4175 + $0x20] sm:$0xf]
      %v4185 = vld [vmem:[%s4175 + $0x24] sm:$0xf]
      %v4186 = vld [vmem:[%s4175 + $0x28] sm:$0xf]
      %v4187 = vld [vmem:[%s4175 + $0x2c] sm:$0xf]
      %v4188 = vld [vmem:[%s4175 + $0x30] sm:$0xf]
      %v4189 = vld [vmem:[%s4175 + $0x34] sm:$0xf]
      %v4190 = vld [vmem:[%s4175 + $0x38] sm:$0xf]
      %v4191 = vld [vmem:[%s4175 + $0x3c] sm:$0xf]
      %v4192 = vunpack.c.l.b16 %v4066
      %v4193 = vunpack.c.l.b16 %v4069
      %v4194 = vunpack.c.l.b16 %v4073
      %v4195 = vunpack.c.l.b16 %v4076
      %v4196 = vunpack.c.l.b16 %v4080
      %v4197 = vunpack.c.l.b16 %v4083
      %v4198 = vunpack.c.l.b16 %v4087
      %v4199 = vunpack.c.l.b16 %v4090
      %v4200 = vunpack.c.l.b16 %v4094
      %v4201 = vunpack.c.l.b16 %v4097
      %v4202 = vunpack.c.l.b16 %v4101
      %v4203 = vunpack.c.l.b16 %v4104
      %v4204 = vunpack.c.l.b16 %v4108
      %v4205 = vunpack.c.l.b16 %v4111
      %v4206 = vunpack.c.l.b16 %v4115
      %v4207 = vunpack.c.l.b16 %v4118
      %v4208 = vunpack.c.l.b16 %v4122
      %v4209 = vunpack.c.l.b16 %v4125
      %v4210 = vunpack.c.l.b16 %v4129
      %v4211 = vunpack.c.l.b16 %v4132
      %v4212 = vunpack.c.l.b16 %v4136
      %v4213 = vunpack.c.l.b16 %v4139
      %v4214 = vunpack.c.l.b16 %v4143
      %v4215 = vunpack.c.l.b16 %v4146
      %v4216 = vunpack.c.l.b16 %v4150
      %v4217 = vunpack.c.l.b16 %v4153
      %v4218 = vunpack.c.l.b16 %v4157
      %v4219 = vunpack.c.l.b16 %v4160
      %v4220 = vunpack.c.l.b16 %v4164
      %v4221 = vunpack.c.l.b16 %v4167
      %v4222 = vunpack.c.l.b16 %v4171
      %v4223 = vunpack.c.l.b16 %v4174
      %v4224 = vpack.c.b16 %v4193, %v4192
      %v4225 = vpack.c.b16 %v4195, %v4194
      %v4226 = vpack.c.b16 %v4197, %v4196
      %v4227 = vpack.c.b16 %v4199, %v4198
      %v4228 = vpack.c.b16 %v4201, %v4200
      %v4229 = vpack.c.b16 %v4203, %v4202
      %v4230 = vpack.c.b16 %v4205, %v4204
      %v4231 = vpack.c.b16 %v4207, %v4206
      %v4232 = vpack.c.b16 %v4209, %v4208
      %v4233 = vpack.c.b16 %v4211, %v4210
      %v4234 = vpack.c.b16 %v4213, %v4212
      %v4235 = vpack.c.b16 %v4215, %v4214
      %v4236 = vpack.c.b16 %v4217, %v4216
      %v4237 = vpack.c.b16 %v4219, %v4218
      %v4238 = vpack.c.b16 %v4221, %v4220
      %v4239 = vpack.c.b16 %v4223, %v4222
      %v4272 = vunpack.c.l.b16 %v4176
      %v4273 = vunpack.c.l.b16 %v4177
      %v4274 = vunpack.c.l.b16 %v4178
      %v4275 = vunpack.c.l.b16 %v4179
      %v4276 = vunpack.c.l.b16 %v4180
      %v4277 = vunpack.c.l.b16 %v4181
      %v4278 = vunpack.c.l.b16 %v4182
      %v4279 = vunpack.c.l.b16 %v4183
      %v4280 = vunpack.c.l.b16 %v4184
      %v4281 = vunpack.c.l.b16 %v4185
      %v4282 = vunpack.c.l.b16 %v4186
      %v4283 = vunpack.c.l.b16 %v4187
      %v4284 = vunpack.c.l.b16 %v4188
      %v4285 = vunpack.c.l.b16 %v4189
      %v4286 = vunpack.c.l.b16 %v4190
      %v4287 = vunpack.c.l.b16 %v4191
      %v4288 = vpack.c.b16 %v4273, %v4272
      %v4289 = vpack.c.b16 %v4275, %v4274
      %v4290 = vpack.c.b16 %v4277, %v4276
      %v4291 = vpack.c.b16 %v4279, %v4278
      %v4292 = vpack.c.b16 %v4281, %v4280
      %v4293 = vpack.c.b16 %v4283, %v4282
      %v4294 = vpack.c.b16 %v4285, %v4284
      %v4295 = vpack.c.b16 %v4287, %v4286
      %4304 = vmatpush.bf16.msra.mxu0 %v4295
      %4305 = vmatpush.bf16.msra.mxu0 %v4294
      %4306 = vmatpush.bf16.msra.mxu0 %v4293
      %4307 = vmatpush.bf16.msra.mxu0 %v4292
      %4308 = vmatpush.bf16.msra.mxu0 %v4291
      %4309 = vmatpush.bf16.msra.mxu0 %v4290
      %4310 = vmatpush.bf16.msra.mxu0 %v4289
      %4311 = vmatpush.bf16.msra.mxu0 %v4288
      %4312 = vmatmul.bf16.gmra.mxu0 %v4224
      %v4313 = vpop.f32.mrf.mxu0
      %v4314 = vadd.f32 0.0, %v4313
      %v4315 = vpop.f32.mrf.mxu0
      %v4316 = vadd.f32 0.0, %v4315
      %4317 = vmatmul.bf16.gmra.mxu0 %v4225
      %v4318 = vpop.f32.mrf.mxu0
      %v4319 = vadd.f32 0.0, %v4318
      %v4320 = vpop.f32.mrf.mxu0
      %v4321 = vadd.f32 0.0, %v4320
      %4322 = vmatmul.bf16.gmra.mxu0 %v4226
      %v4323 = vpop.f32.mrf.mxu0
      %v4324 = vadd.f32 0.0, %v4323
      %v4325 = vpop.f32.mrf.mxu0
      %v4326 = vadd.f32 0.0, %v4325
      %4327 = vmatmul.bf16.gmra.mxu0 %v4227
      %v4328 = vpop.f32.mrf.mxu0
      %v4329 = vadd.f32 0.0, %v4328
      %v4330 = vpop.f32.mrf.mxu0
      %v4331 = vadd.f32 0.0, %v4330
      %4332 = vmatmul.bf16.gmra.mxu0 %v4228
      %v4333 = vpop.f32.mrf.mxu0
      %v4334 = vadd.f32 0.0, %v4333
      %v4335 = vpop.f32.mrf.mxu0
      %v4336 = vadd.f32 0.0, %v4335
      %4337 = vmatmul.bf16.gmra.mxu0 %v4229
      %v4338 = vpop.f32.mrf.mxu0
      %v4339 = vadd.f32 0.0, %v4338
      %v4340 = vpop.f32.mrf.mxu0
      %v4341 = vadd.f32 0.0, %v4340
      %4342 = vmatmul.bf16.gmra.mxu0 %v4230
      %v4343 = vpop.f32.mrf.mxu0
      %v4344 = vadd.f32 0.0, %v4343
      %v4345 = vpop.f32.mrf.mxu0
      %v4346 = vadd.f32 0.0, %v4345
      %4347 = vmatmul.bf16.gmra.mxu0 %v4231
      %v4348 = vpop.f32.mrf.mxu0
      %v4349 = vadd.f32 0.0, %v4348
      %v4350 = vpop.f32.mrf.mxu0
      %v4351 = vadd.f32 0.0, %v4350
      %4352 = vmatmul.bf16.gmra.mxu0 %v4232
      %v4353 = vpop.f32.mrf.mxu0
      %v4354 = vadd.f32 0.0, %v4353
      %v4355 = vpop.f32.mrf.mxu0
      %v4356 = vadd.f32 0.0, %v4355
      %4357 = vmatmul.bf16.gmra.mxu0 %v4233
      %v4358 = vpop.f32.mrf.mxu0
      %v4359 = vadd.f32 0.0, %v4358
      %v4360 = vpop.f32.mrf.mxu0
      %v4361 = vadd.f32 0.0, %v4360
      %4362 = vmatmul.bf16.gmra.mxu0 %v4234
      %v4363 = vpop.f32.mrf.mxu0
      %v4364 = vadd.f32 0.0, %v4363
      %v4365 = vpop.f32.mrf.mxu0
      %v4366 = vadd.f32 0.0, %v4365
      %4367 = vmatmul.bf16.gmra.mxu0 %v4235
      %v4368 = vpop.f32.mrf.mxu0
      %v4369 = vadd.f32 0.0, %v4368
      %v4370 = vpop.f32.mrf.mxu0
      %v4371 = vadd.f32 0.0, %v4370
      %4372 = vmatmul.bf16.gmra.mxu0 %v4236
      %v4373 = vpop.f32.mrf.mxu0
      %v4374 = vadd.f32 0.0, %v4373
      %v4375 = vpop.f32.mrf.mxu0
      %v4376 = vadd.f32 0.0, %v4375
      %4377 = vmatmul.bf16.gmra.mxu0 %v4237
      %v4378 = vpop.f32.mrf.mxu0
      %v4379 = vadd.f32 0.0, %v4378
      %v4380 = vpop.f32.mrf.mxu0
      %v4381 = vadd.f32 0.0, %v4380
      %4382 = vmatmul.bf16.gmra.mxu0 %v4238
      %v4383 = vpop.f32.mrf.mxu0
      %v4384 = vadd.f32 0.0, %v4383
      %v4385 = vpop.f32.mrf.mxu0
      %v4386 = vadd.f32 0.0, %v4385
      %4387 = vmatmul.bf16.gmra.mxu0 %v4239
      %v4388 = vpop.f32.mrf.mxu0
      %v4389 = vadd.f32 0.0, %v4388
      %v4390 = vpop.f32.mrf.mxu0
      %v4391 = vadd.f32 0.0, %v4390
      %4392 = vdwg.mxu0
      %v4393 = vadd.f32 %v3967, %v4314
      %v4394 = vadd.f32 %v3968, %v4316
      %v4395 = vadd.f32 %v3969, %v4319
      %v4396 = vadd.f32 %v3970, %v4321
      %v4397 = vadd.f32 %v3971, %v4324
      %v4398 = vadd.f32 %v3972, %v4326
      %v4399 = vadd.f32 %v3973, %v4329
      %v4400 = vadd.f32 %v3974, %v4331
      %v4401 = vadd.f32 %v3975, %v4334
      %v4402 = vadd.f32 %v3976, %v4336
      %v4403 = vadd.f32 %v3977, %v4339
      %v4404 = vadd.f32 %v3978, %v4341
      %v4405 = vadd.f32 %v3979, %v4344
      %v4406 = vadd.f32 %v3980, %v4346
      %v4407 = vadd.f32 %v3981, %v4349
      %v4408 = vadd.f32 %v3982, %v4351
      %v4409 = vadd.f32 %v3983, %v4354
      %v4410 = vadd.f32 %v3984, %v4356
      %v4411 = vadd.f32 %v3985, %v4359
      %v4412 = vadd.f32 %v3986, %v4361
      %v4413 = vadd.f32 %v3987, %v4364
      %v4414 = vadd.f32 %v3988, %v4366
      %v4415 = vadd.f32 %v3989, %v4369
      %v4416 = vadd.f32 %v3990, %v4371
      %v4417 = vadd.f32 %v3991, %v4374
      %v4418 = vadd.f32 %v3992, %v4376
      %v4419 = vadd.f32 %v3993, %v4379
      %v4420 = vadd.f32 %v3994, %v4381
      %v4421 = vadd.f32 %v3995, %v4384
      %v4422 = vadd.f32 %v3996, %v4386
      %v4423 = vadd.f32 %v3997, %v4389
      %v4424 = vadd.f32 %v3998, %v4391
      %v4441 = vunpack.c.l.b16 %v248
      %v4442 = vunpack.c.l.b16 %v249
      %v4443 = vunpack.c.l.b16 %v250
      %v4444 = vunpack.c.l.b16 %v251
      %v4445 = vunpack.c.l.b16 %v252
      %v4446 = vunpack.c.l.b16 %v253
      %v4447 = vunpack.c.l.b16 %v254
      %v4448 = vunpack.c.l.b16 %v255
      %v4449 = vunpack.c.l.b16 %v256
      %v4450 = vunpack.c.l.b16 %v257
      %v4451 = vunpack.c.l.b16 %v258
      %v4452 = vunpack.c.l.b16 %v259
      %v4453 = vunpack.c.l.b16 %v260
      %v4454 = vunpack.c.l.b16 %v261
      %v4455 = vunpack.c.l.b16 %v262
      %v4456 = vunpack.c.l.b16 %v263
      %v4457 = vpack.c.b16 %v4442, %v4441
      %v4458 = vpack.c.b16 %v4444, %v4443
      %v4459 = vpack.c.b16 %v4446, %v4445
      %v4460 = vpack.c.b16 %v4448, %v4447
      %v4461 = vpack.c.b16 %v4450, %v4449
      %v4462 = vpack.c.b16 %v4452, %v4451
      %v4463 = vpack.c.b16 %v4454, %v4453
      %v4464 = vpack.c.b16 %v4456, %v4455
      %4473 = vmatpush.bf16.msra.mxu0 %v4464
      %4474 = vmatpush.bf16.msra.mxu0 %v4463
      %4475 = vmatpush.bf16.msra.mxu0 %v4462
      %4476 = vmatpush.bf16.msra.mxu0 %v4461
      %4477 = vmatpush.bf16.msra.mxu0 %v4460
      %4478 = vmatpush.bf16.msra.mxu0 %v4459
      %4479 = vmatpush.bf16.msra.mxu0 %v4458
      %4480 = vmatpush.bf16.msra.mxu0 %v4457
      %4481 = vmatmul.bf16.gmra.mxu0 %v2375
      %v4482 = vpop.f32.mrf.mxu0
      %v4483 = vadd.f32 0.0, %v4482
      %v4484 = vpop.f32.mrf.mxu0
      %v4485 = vadd.f32 0.0, %v4484
      %4486 = vmatmul.bf16.gmra.mxu0 %v2376
      %v4487 = vpop.f32.mrf.mxu0
      %v4488 = vadd.f32 0.0, %v4487
      %v4489 = vpop.f32.mrf.mxu0
      %v4490 = vadd.f32 0.0, %v4489
      %4491 = vmatmul.bf16.gmra.mxu0 %v2377
      %v4492 = vpop.f32.mrf.mxu0
      %v4493 = vadd.f32 0.0, %v4492
      %v4494 = vpop.f32.mrf.mxu0
      %v4495 = vadd.f32 0.0, %v4494
      %4496 = vmatmul.bf16.gmra.mxu0 %v2378
      %v4497 = vpop.f32.mrf.mxu0
      %v4498 = vadd.f32 0.0, %v4497
      %v4499 = vpop.f32.mrf.mxu0
      %v4500 = vadd.f32 0.0, %v4499
      %4501 = vmatmul.bf16.gmra.mxu0 %v2379
      %v4502 = vpop.f32.mrf.mxu0
      %v4503 = vadd.f32 0.0, %v4502
      %v4504 = vpop.f32.mrf.mxu0
      %v4505 = vadd.f32 0.0, %v4504
      %4506 = vmatmul.bf16.gmra.mxu0 %v2380
      %v4507 = vpop.f32.mrf.mxu0
      %v4508 = vadd.f32 0.0, %v4507
      %v4509 = vpop.f32.mrf.mxu0
      %v4510 = vadd.f32 0.0, %v4509
      %4511 = vmatmul.bf16.gmra.mxu0 %v2381
      %v4512 = vpop.f32.mrf.mxu0
      %v4513 = vadd.f32 0.0, %v4512
      %v4514 = vpop.f32.mrf.mxu0
      %v4515 = vadd.f32 0.0, %v4514
      %4516 = vmatmul.bf16.gmra.mxu0 %v2382
      %v4517 = vpop.f32.mrf.mxu0
      %v4518 = vadd.f32 0.0, %v4517
      %v4519 = vpop.f32.mrf.mxu0
      %v4520 = vadd.f32 0.0, %v4519
      %4521 = vmatmul.bf16.gmra.mxu0 %v2383
      %v4522 = vpop.f32.mrf.mxu0
      %v4523 = vadd.f32 0.0, %v4522
      %v4524 = vpop.f32.mrf.mxu0
      %v4525 = vadd.f32 0.0, %v4524
      %4526 = vmatmul.bf16.gmra.mxu0 %v2384
      %v4527 = vpop.f32.mrf.mxu0
      %v4528 = vadd.f32 0.0, %v4527
      %v4529 = vpop.f32.mrf.mxu0
      %v4530 = vadd.f32 0.0, %v4529
      %4531 = vmatmul.bf16.gmra.mxu0 %v2385
      %v4532 = vpop.f32.mrf.mxu0
      %v4533 = vadd.f32 0.0, %v4532
      %v4534 = vpop.f32.mrf.mxu0
      %v4535 = vadd.f32 0.0, %v4534
      %4536 = vmatmul.bf16.gmra.mxu0 %v2386
      %v4537 = vpop.f32.mrf.mxu0
      %v4538 = vadd.f32 0.0, %v4537
      %v4539 = vpop.f32.mrf.mxu0
      %v4540 = vadd.f32 0.0, %v4539
      %4541 = vmatmul.bf16.gmra.mxu0 %v2387
      %v4542 = vpop.f32.mrf.mxu0
      %v4543 = vadd.f32 0.0, %v4542
      %v4544 = vpop.f32.mrf.mxu0
      %v4545 = vadd.f32 0.0, %v4544
      %4546 = vmatmul.bf16.gmra.mxu0 %v2388
      %v4547 = vpop.f32.mrf.mxu0
      %v4548 = vadd.f32 0.0, %v4547
      %v4549 = vpop.f32.mrf.mxu0
      %v4550 = vadd.f32 0.0, %v4549
      %4551 = vmatmul.bf16.gmra.mxu0 %v2389
      %v4552 = vpop.f32.mrf.mxu0
      %v4553 = vadd.f32 0.0, %v4552
      %v4554 = vpop.f32.mrf.mxu0
      %v4555 = vadd.f32 0.0, %v4554
      %4556 = vmatmul.bf16.gmra.mxu0 %v2390
      %v4557 = vpop.f32.mrf.mxu0
      %v4558 = vadd.f32 0.0, %v4557
      %v4559 = vpop.f32.mrf.mxu0
      %v4560 = vadd.f32 0.0, %v4559
      %4561 = vdwg.mxu0
      %v4562 = vadd.f32 %v4393, %v4394
      %v4563 = vadd.f32 %v4562, %v4395
      %v4564 = vadd.f32 %v4563, %v4396
      %v4565 = vadd.f32 %v4564, %v4397
      %v4566 = vadd.f32 %v4565, %v4398
      %v4567 = vadd.f32 %v4566, %v4399
      %v4568 = vadd.f32 %v4567, %v4400
      %v4569 = vadd.f32 %v4568, %v4401
      %v4570 = vadd.f32 %v4569, %v4402
      %v4571 = vadd.f32 %v4570, %v4403
      %v4572 = vadd.f32 %v4571, %v4404
      %v4573 = vadd.f32 %v4572, %v4405
      %v4574 = vadd.f32 %v4573, %v4406
      %v4575 = vadd.f32 %v4574, %v4407
      %v4576 = vadd.f32 %v4575, %v4408
      %v4577 = vadd.f32 %v4576, %v4409
      %v4578 = vadd.f32 %v4577, %v4410
      %v4579 = vadd.f32 %v4578, %v4411
      %v4580 = vadd.f32 %v4579, %v4412
      %v4581 = vadd.f32 %v4580, %v4413
      %v4582 = vadd.f32 %v4581, %v4414
      %v4583 = vadd.f32 %v4582, %v4415
      %v4584 = vadd.f32 %v4583, %v4416
      %v4585 = vadd.f32 %v4584, %v4417
      %v4586 = vadd.f32 %v4585, %v4418
      %v4587 = vadd.f32 %v4586, %v4419
      %v4588 = vadd.f32 %v4587, %v4420
      %v4589 = vadd.f32 %v4588, %v4421
      %v4590 = vadd.f32 %v4589, %v4422
      %v4591 = vadd.f32 %v4590, %v4423
      %v4592 = vadd.f32 %v4591, %v4424
      %v4593 = vrot.slane %v4592, 4
      %v4594 = vadd.f32 %v4592, %v4593
      %v4595 = vrot.slane %v4594, 2
      %v4596 = vadd.f32 %v4594, %v4595
      %v4597 = vrot.slane %v4596, 1
      %v4598 = vadd.f32 %v4596, %v4597
      %v4599 = vadd.f32 %v4598, 0.0
      %v4600 = vmul.f32 %v4393, %v4393
      %v4601 = vmul.f32 %v4394, %v4394
      %v4602 = vmul.f32 %v4395, %v4395
      %v4603 = vmul.f32 %v4396, %v4396
      %v4604 = vmul.f32 %v4397, %v4397
      %v4605 = vmul.f32 %v4398, %v4398
      %v4606 = vmul.f32 %v4399, %v4399
      %v4607 = vmul.f32 %v4400, %v4400
      %v4608 = vmul.f32 %v4401, %v4401
      %v4609 = vmul.f32 %v4402, %v4402
      %v4610 = vmul.f32 %v4403, %v4403
      %v4611 = vmul.f32 %v4404, %v4404
      %v4612 = vmul.f32 %v4405, %v4405
      %v4613 = vmul.f32 %v4406, %v4406
      %v4614 = vmul.f32 %v4407, %v4407
      %v4615 = vmul.f32 %v4408, %v4408
      %v4616 = vmul.f32 %v4409, %v4409
      %v4617 = vmul.f32 %v4410, %v4410
      %v4618 = vmul.f32 %v4411, %v4411
      %v4619 = vmul.f32 %v4412, %v4412
      %v4620 = vmul.f32 %v4413, %v4413
      %v4621 = vmul.f32 %v4414, %v4414
      %v4622 = vmul.f32 %v4415, %v4415
      %v4623 = vmul.f32 %v4416, %v4416
      %v4624 = vmul.f32 %v4417, %v4417
      %v4625 = vmul.f32 %v4418, %v4418
      %v4626 = vmul.f32 %v4419, %v4419
      %v4627 = vmul.f32 %v4420, %v4420
      %v4628 = vmul.f32 %v4421, %v4421
      %v4629 = vmul.f32 %v4422, %v4422
      %v4630 = vmul.f32 %v4423, %v4423
      %v4631 = vmul.f32 %v4424, %v4424
      %v4632 = vadd.f32 %v4600, %v4601
      %v4633 = vadd.f32 %v4632, %v4602
      %v4634 = vadd.f32 %v4633, %v4603
      %v4635 = vadd.f32 %v4634, %v4604
      %v4636 = vadd.f32 %v4635, %v4605
      %v4637 = vadd.f32 %v4636, %v4606
      %v4638 = vadd.f32 %v4637, %v4607
      %v4639 = vadd.f32 %v4638, %v4608
      %v4640 = vadd.f32 %v4639, %v4609
      %v4641 = vadd.f32 %v4640, %v4610
      %v4642 = vadd.f32 %v4641, %v4611
      %v4643 = vadd.f32 %v4642, %v4612
      %v4644 = vadd.f32 %v4643, %v4613
      %v4645 = vadd.f32 %v4644, %v4614
      %v4646 = vadd.f32 %v4645, %v4615
      %v4647 = vadd.f32 %v4646, %v4616
      %v4648 = vadd.f32 %v4647, %v4617
      %v4649 = vadd.f32 %v4648, %v4618
      %v4650 = vadd.f32 %v4649, %v4619
      %v4651 = vadd.f32 %v4650, %v4620
      %v4652 = vadd.f32 %v4651, %v4621
      %v4653 = vadd.f32 %v4652, %v4622
      %v4654 = vadd.f32 %v4653, %v4623
      %v4655 = vadd.f32 %v4654, %v4624
      %v4656 = vadd.f32 %v4655, %v4625
      %v4657 = vadd.f32 %v4656, %v4626
      %v4658 = vadd.f32 %v4657, %v4627
      %v4659 = vadd.f32 %v4658, %v4628
      %v4660 = vadd.f32 %v4659, %v4629
      %v4661 = vadd.f32 %v4660, %v4630
      %v4662 = vadd.f32 %v4661, %v4631
      %v4663 = vrot.slane %v4662, 4
      %v4664 = vadd.f32 %v4662, %v4663
      %v4665 = vrot.slane %v4664, 2
      %v4666 = vadd.f32 %v4664, %v4665
      %v4667 = vrot.slane %v4666, 1
      %v4668 = vadd.f32 %v4666, %v4667
      %v4669 = vadd.f32 %v4668, 0.0
      %v4670 = vadd.f32 %v4483, %v4485
      %v4671 = vadd.f32 %v4670, %v4488
      %v4672 = vadd.f32 %v4671, %v4490
      %v4673 = vadd.f32 %v4672, %v4493
      %v4674 = vadd.f32 %v4673, %v4495
      %v4675 = vadd.f32 %v4674, %v4498
      %v4676 = vadd.f32 %v4675, %v4500
      %v4677 = vadd.f32 %v4676, %v4503
      %v4678 = vadd.f32 %v4677, %v4505
      %v4679 = vadd.f32 %v4678, %v4508
      %v4680 = vadd.f32 %v4679, %v4510
      %v4681 = vadd.f32 %v4680, %v4513
      %v4682 = vadd.f32 %v4681, %v4515
      %v4683 = vadd.f32 %v4682, %v4518
      %v4684 = vadd.f32 %v4683, %v4520
      %v4685 = vadd.f32 %v4684, %v4523
      %v4686 = vadd.f32 %v4685, %v4525
      %v4687 = vadd.f32 %v4686, %v4528
      %v4688 = vadd.f32 %v4687, %v4530
      %v4689 = vadd.f32 %v4688, %v4533
      %v4690 = vadd.f32 %v4689, %v4535
      %v4691 = vadd.f32 %v4690, %v4538
      %v4692 = vadd.f32 %v4691, %v4540
      %v4693 = vadd.f32 %v4692, %v4543
      %v4694 = vadd.f32 %v4693, %v4545
      %v4695 = vadd.f32 %v4694, %v4548
      %v4696 = vadd.f32 %v4695, %v4550
      %v4697 = vadd.f32 %v4696, %v4553
      %v4698 = vadd.f32 %v4697, %v4555
      %v4699 = vadd.f32 %v4698, %v4558
      %v4700 = vadd.f32 %v4699, %v4560
      %v4701 = vrot.slane %v4700, 4
      %v4702 = vadd.f32 %v4700, %v4701
      %v4703 = vrot.slane %v4702, 2
      %v4704 = vadd.f32 %v4702, %v4703
      %v4705 = vrot.slane %v4704, 1
      %v4706 = vadd.f32 %v4704, %v4705
      %v4707 = vadd.f32 %v4706, 0.0
      %v4708 = vmul.f32 %v4483, %v4483
      %v4709 = vmul.f32 %v4485, %v4485
      %v4710 = vmul.f32 %v4488, %v4488
      %v4711 = vmul.f32 %v4490, %v4490
      %v4712 = vmul.f32 %v4493, %v4493
      %v4713 = vmul.f32 %v4495, %v4495
      %v4714 = vmul.f32 %v4498, %v4498
      %v4715 = vmul.f32 %v4500, %v4500
      %v4716 = vmul.f32 %v4503, %v4503
      %v4717 = vmul.f32 %v4505, %v4505
      %v4718 = vmul.f32 %v4508, %v4508
      %v4719 = vmul.f32 %v4510, %v4510
      %v4720 = vmul.f32 %v4513, %v4513
      %v4721 = vmul.f32 %v4515, %v4515
      %v4722 = vmul.f32 %v4518, %v4518
      %v4723 = vmul.f32 %v4520, %v4520
      %v4724 = vmul.f32 %v4523, %v4523
      %v4725 = vmul.f32 %v4525, %v4525
      %v4726 = vmul.f32 %v4528, %v4528
      %v4727 = vmul.f32 %v4530, %v4530
      %v4728 = vmul.f32 %v4533, %v4533
      %v4729 = vmul.f32 %v4535, %v4535
      %v4730 = vmul.f32 %v4538, %v4538
      %v4731 = vmul.f32 %v4540, %v4540
      %v4732 = vmul.f32 %v4543, %v4543
      %v4733 = vmul.f32 %v4545, %v4545
      %v4734 = vmul.f32 %v4548, %v4548
      %v4735 = vmul.f32 %v4550, %v4550
      %v4736 = vmul.f32 %v4553, %v4553
      %v4737 = vmul.f32 %v4555, %v4555
      %v4738 = vmul.f32 %v4558, %v4558
      %v4739 = vmul.f32 %v4560, %v4560
      %v4740 = vadd.f32 %v4708, %v4709
      %v4741 = vadd.f32 %v4740, %v4710
      %v4742 = vadd.f32 %v4741, %v4711
      %v4743 = vadd.f32 %v4742, %v4712
      %v4744 = vadd.f32 %v4743, %v4713
      %v4745 = vadd.f32 %v4744, %v4714
      %v4746 = vadd.f32 %v4745, %v4715
      %v4747 = vadd.f32 %v4746, %v4716
      %v4748 = vadd.f32 %v4747, %v4717
      %v4749 = vadd.f32 %v4748, %v4718
      %v4750 = vadd.f32 %v4749, %v4719
      %v4751 = vadd.f32 %v4750, %v4720
      %v4752 = vadd.f32 %v4751, %v4721
      %v4753 = vadd.f32 %v4752, %v4722
      %v4754 = vadd.f32 %v4753, %v4723
      %v4755 = vadd.f32 %v4754, %v4724
      %v4756 = vadd.f32 %v4755, %v4725
      %v4757 = vadd.f32 %v4756, %v4726
      %v4758 = vadd.f32 %v4757, %v4727
      %v4759 = vadd.f32 %v4758, %v4728
      %v4760 = vadd.f32 %v4759, %v4729
      %v4761 = vadd.f32 %v4760, %v4730
      %v4762 = vadd.f32 %v4761, %v4731
      %v4763 = vadd.f32 %v4762, %v4732
      %v4764 = vadd.f32 %v4763, %v4733
      %v4765 = vadd.f32 %v4764, %v4734
      %v4766 = vadd.f32 %v4765, %v4735
      %v4767 = vadd.f32 %v4766, %v4736
      %v4768 = vadd.f32 %v4767, %v4737
      %v4769 = vadd.f32 %v4768, %v4738
      %v4770 = vadd.f32 %v4769, %v4739
      %v4771 = vrot.slane %v4770, 4
      %v4772 = vadd.f32 %v4770, %v4771
      %v4773 = vrot.slane %v4772, 2
      %v4774 = vadd.f32 %v4772, %v4773
      %v4775 = vrot.slane %v4774, 1
      %v4776 = vadd.f32 %v4774, %v4775
      %v4777 = vadd.f32 %v4776, 0.0
      %v4778 = vpack.c.bf16 %v4393, %v4393
      %v4779 = vpack.c.bf16 %v4394, %v4394
      %v4780 = vpack.c.bf16 %v4395, %v4395
      %v4781 = vpack.c.bf16 %v4396, %v4396
      %v4782 = vpack.c.bf16 %v4397, %v4397
      %v4783 = vpack.c.bf16 %v4398, %v4398
      %v4784 = vpack.c.bf16 %v4399, %v4399
      %v4785 = vpack.c.bf16 %v4400, %v4400
      %v4786 = vpack.c.bf16 %v4401, %v4401
      %v4787 = vpack.c.bf16 %v4402, %v4402
      %v4788 = vpack.c.bf16 %v4403, %v4403
      %v4789 = vpack.c.bf16 %v4404, %v4404
      %v4790 = vpack.c.bf16 %v4405, %v4405
      %v4791 = vpack.c.bf16 %v4406, %v4406
      %v4792 = vpack.c.bf16 %v4407, %v4407
      %v4793 = vpack.c.bf16 %v4408, %v4408
      %v4794 = vpack.c.bf16 %v4409, %v4409
      %v4795 = vpack.c.bf16 %v4410, %v4410
      %v4796 = vpack.c.bf16 %v4411, %v4411
      %v4797 = vpack.c.bf16 %v4412, %v4412
      %v4798 = vpack.c.bf16 %v4413, %v4413
      %v4799 = vpack.c.bf16 %v4414, %v4414
      %v4800 = vpack.c.bf16 %v4415, %v4415
      %v4801 = vpack.c.bf16 %v4416, %v4416
      %v4802 = vpack.c.bf16 %v4417, %v4417
      %v4803 = vpack.c.bf16 %v4418, %v4418
      %v4804 = vpack.c.bf16 %v4419, %v4419
      %v4805 = vpack.c.bf16 %v4420, %v4420
      %v4806 = vpack.c.bf16 %v4421, %v4421
      %v4807 = vpack.c.bf16 %v4422, %v4422
      %v4808 = vpack.c.bf16 %v4423, %v4423
      %v4809 = vpack.c.bf16 %v4424, %v4424
      %4810 = vst [vmem:[%s238] sm:$0xf] %v4778
      %4811 = vst [vmem:[%s238 + $0x4] sm:$0xf] %v4779
      %4812 = vst [vmem:[%s238 + $0x8] sm:$0xf] %v4780
      %4813 = vst [vmem:[%s238 + $0xc] sm:$0xf] %v4781
      %4814 = vst [vmem:[%s238 + $0x10] sm:$0xf] %v4782
      %4815 = vst [vmem:[%s238 + $0x14] sm:$0xf] %v4783
      %4816 = vst [vmem:[%s238 + $0x18] sm:$0xf] %v4784
      %4817 = vst [vmem:[%s238 + $0x1c] sm:$0xf] %v4785
      %4818 = vst [vmem:[%s238 + $0x20] sm:$0xf] %v4786
      %4819 = vst [vmem:[%s238 + $0x24] sm:$0xf] %v4787
      %4820 = vst [vmem:[%s238 + $0x28] sm:$0xf] %v4788
      %4821 = vst [vmem:[%s238 + $0x2c] sm:$0xf] %v4789
      %4822 = vst [vmem:[%s238 + $0x30] sm:$0xf] %v4790
      %4823 = vst [vmem:[%s238 + $0x34] sm:$0xf] %v4791
      %4824 = vst [vmem:[%s238 + $0x38] sm:$0xf] %v4792
      %4825 = vst [vmem:[%s238 + $0x3c] sm:$0xf] %v4793
      %4826 = vst [vmem:[%s238 + $0x40] sm:$0xf] %v4794
      %4827 = vst [vmem:[%s238 + $0x44] sm:$0xf] %v4795
      %4828 = vst [vmem:[%s238 + $0x48] sm:$0xf] %v4796
      %4829 = vst [vmem:[%s238 + $0x4c] sm:$0xf] %v4797
      %4830 = vst [vmem:[%s238 + $0x50] sm:$0xf] %v4798
      %4831 = vst [vmem:[%s238 + $0x54] sm:$0xf] %v4799
      %4832 = vst [vmem:[%s238 + $0x58] sm:$0xf] %v4800
      %4833 = vst [vmem:[%s238 + $0x5c] sm:$0xf] %v4801
      %4834 = vst [vmem:[%s238 + $0x60] sm:$0xf] %v4802
      %4835 = vst [vmem:[%s238 + $0x64] sm:$0xf] %v4803
      %4836 = vst [vmem:[%s238 + $0x68] sm:$0xf] %v4804
      %4837 = vst [vmem:[%s238 + $0x6c] sm:$0xf] %v4805
      %4838 = vst [vmem:[%s238 + $0x70] sm:$0xf] %v4806
      %4839 = vst [vmem:[%s238 + $0x74] sm:$0xf] %v4807
      %4840 = vst [vmem:[%s238 + $0x78] sm:$0xf] %v4808
      %4841 = vst [vmem:[%s238 + $0x7c] sm:$0xf] %v4809
      %v4842 = vpack.c.bf16 %v4483, %v4483
      %v4843 = vpack.c.bf16 %v4485, %v4485
      %v4844 = vpack.c.bf16 %v4488, %v4488
      %v4845 = vpack.c.bf16 %v4490, %v4490
      %v4846 = vpack.c.bf16 %v4493, %v4493
      %v4847 = vpack.c.bf16 %v4495, %v4495
      %v4848 = vpack.c.bf16 %v4498, %v4498
      %v4849 = vpack.c.bf16 %v4500, %v4500
      %v4850 = vpack.c.bf16 %v4503, %v4503
      %v4851 = vpack.c.bf16 %v4505, %v4505
      %v4852 = vpack.c.bf16 %v4508, %v4508
      %v4853 = vpack.c.bf16 %v4510, %v4510
      %v4854 = vpack.c.bf16 %v4513, %v4513
      %v4855 = vpack.c.bf16 %v4515, %v4515
      %v4856 = vpack.c.bf16 %v4518, %v4518
      %v4857 = vpack.c.bf16 %v4520, %v4520
      %v4858 = vpack.c.bf16 %v4523, %v4523
      %v4859 = vpack.c.bf16 %v4525, %v4525
      %v4860 = vpack.c.bf16 %v4528, %v4528
      %v4861 = vpack.c.bf16 %v4530, %v4530
      %v4862 = vpack.c.bf16 %v4533, %v4533
      %v4863 = vpack.c.bf16 %v4535, %v4535
      %v4864 = vpack.c.bf16 %v4538, %v4538
      %v4865 = vpack.c.bf16 %v4540, %v4540
      %v4866 = vpack.c.bf16 %v4543, %v4543
      %v4867 = vpack.c.bf16 %v4545, %v4545
      %v4868 = vpack.c.bf16 %v4548, %v4548
      %v4869 = vpack.c.bf16 %v4550, %v4550
      %v4870 = vpack.c.bf16 %v4553, %v4553
      %v4871 = vpack.c.bf16 %v4555, %v4555
      %v4872 = vpack.c.bf16 %v4558, %v4558
      %v4873 = vpack.c.bf16 %v4560, %v4560
      %4874 = vst [vmem:[%s243] sm:$0xf] %v4842
      %4875 = vst [vmem:[%s243 + $0x4] sm:$0xf] %v4843
      %4876 = vst [vmem:[%s243 + $0x8] sm:$0xf] %v4844
      %4877 = vst [vmem:[%s243 + $0xc] sm:$0xf] %v4845
      %4878 = vst [vmem:[%s243 + $0x10] sm:$0xf] %v4846
      %4879 = vst [vmem:[%s243 + $0x14] sm:$0xf] %v4847
      %4880 = vst [vmem:[%s243 + $0x18] sm:$0xf] %v4848
      %4881 = vst [vmem:[%s243 + $0x1c] sm:$0xf] %v4849
      %4882 = vst [vmem:[%s243 + $0x20] sm:$0xf] %v4850
      %4883 = vst [vmem:[%s243 + $0x24] sm:$0xf] %v4851
      %4884 = vst [vmem:[%s243 + $0x28] sm:$0xf] %v4852
      %4885 = vst [vmem:[%s243 + $0x2c] sm:$0xf] %v4853
      %4886 = vst [vmem:[%s243 + $0x30] sm:$0xf] %v4854
      %4887 = vst [vmem:[%s243 + $0x34] sm:$0xf] %v4855
      %4888 = vst [vmem:[%s243 + $0x38] sm:$0xf] %v4856
      %4889 = vst [vmem:[%s243 + $0x3c] sm:$0xf] %v4857
      %4890 = vst [vmem:[%s243 + $0x40] sm:$0xf] %v4858
      %4891 = vst [vmem:[%s243 + $0x44] sm:$0xf] %v4859
      %4892 = vst [vmem:[%s243 + $0x48] sm:$0xf] %v4860
      %4893 = vst [vmem:[%s243 + $0x4c] sm:$0xf] %v4861
      %4894 = vst [vmem:[%s243 + $0x50] sm:$0xf] %v4862
      %4895 = vst [vmem:[%s243 + $0x54] sm:$0xf] %v4863
      %4896 = vst [vmem:[%s243 + $0x58] sm:$0xf] %v4864
      %4897 = vst [vmem:[%s243 + $0x5c] sm:$0xf] %v4865
      %4898 = vst [vmem:[%s243 + $0x60] sm:$0xf] %v4866
      %4899 = vst [vmem:[%s243 + $0x64] sm:$0xf] %v4867
      %4900 = vst [vmem:[%s243 + $0x68] sm:$0xf] %v4868
      %4901 = vst [vmem:[%s243 + $0x6c] sm:$0xf] %v4869
      %4902 = vst [vmem:[%s243 + $0x70] sm:$0xf] %v4870
      %4903 = vst [vmem:[%s243 + $0x74] sm:$0xf] %v4871
      %4904 = vst [vmem:[%s243 + $0x78] sm:$0xf] %v4872
      %4905 = vst [vmem:[%s243 + $0x7c] sm:$0xf] %v4873
      %4906 = vst [vmem:[%s247] sm:$0x1] %v4599
      %4907 = vst [vmem:[%s247 + $0x1] sm:$0x1] %v4669
      %4908 = vst [vmem:[%s247 + $0x2] sm:$0x1] %v4707
      %4909 = vst [vmem:[%s247 + $0x3] sm:$0x1] %v4777
      %p4910 = scmp.lt.s32.totalorder %s17, 1
      %s4911 = scalar_select %p4910, %s17, 1
      %s4912 = smul.addr %s4911, 32
      %s4913 = smul.addr %s4912, 4
      %s4914 = scalar_lea.vmem %s3, %s4913
      %p4915 = scmp.lt.s32.totalorder %s17, 1
      %s4916 = scalar_select %p4915, %s17, 1
      %s4917 = smul.addr %s4916, 32
      %s4918 = smul.addr %s4917, 4
      %s4919 = scalar_lea.vmem %s4, %s4918
      %p4920 = scmp.lt.s32.totalorder %s17, 1
      %s4921 = scalar_select %p4920, %s17, 1
      %s4922 = smul.addr %s4921, 4
      %s4923 = scalar_lea.vmem %s5, %s4922
      // Predicated region
      $region33: #{basic_block_forward.4} parent=31 // pred_check
        %p4924 = pneg %p103
      $region34: #{basic_block_forward.4} parent=31 // pred_check_branch
        %4926 = sbr.rel (%p4924) target = $region36
      $region35: #{basic_block_forward.4} parent=31 // pred_region
        _
      $region36: #{basic_block_forward.4} parent=31 // pred_fallthru
        _
      // Predicated region
      $region37: #{basic_block_forward.4} parent=31 // pred_check
        %p4927 = pneg %p129
      $region38: #{basic_block_forward.4} parent=31 // pred_check_branch
        %4929 = sbr.rel (%p4927) target = $region40
      $region39: #{basic_block_forward.4} parent=31 // pred_region
        _
      $region40: #{basic_block_forward.4} parent=31 // pred_fallthru
        _
      // Predicated region
      $region41: #{basic_block_forward.4} parent=31 // pred_check
        %p4930 = pneg %p155
      $region42: #{basic_block_forward.4} parent=31 // pred_check_branch
        %4932 = sbr.rel (%p4930) target = $region44
      $region43: #{basic_block_forward.4} parent=31 // pred_region
        _
      $region44: #{basic_block_forward.4} parent=31 // pred_fallthru
        _
    $region32: #{basic_block_forward.4} parent=5 // pred_fallthru
      _
    %p4933 = scmp.le.s32.totalorder 2, %s12
    // Predicated region
    $region45: #{basic_block_forward.4} parent=5 // pred_check
      %p4934 = pneg %p4933
    $region46: #{basic_block_forward.4} parent=5 // pred_check_branch
      %4936 = sbr.rel (%p4934) target = $region48
    $region47: #{basic_block_forward.4} parent=5 // pred_region
      %s4937 = ssub.s32 %s12, 2
      // Predicated region
      $region49: #{basic_block_forward.4} parent=47 // pred_check
        %p4938 = pneg %p109
      $region50: #{basic_block_forward.4} parent=47 // pred_check_branch
        %4940 = sbr.rel (%p4938) target = $region52
      $region51: #{basic_block_forward.4} parent=47 // pred_region
        %p4941 = scmp.lt.s32.totalorder %s18, 1
        %s4942 = scalar_select %p4941, %s18, 1
        %s4943 = smul.addr %s4942, 32
        %s4944 = smul.addr %s4943, 4
        %s4945 = scalar_lea.vmem %s3, %s4944
      $region52: #{basic_block_forward.4} parent=47 // pred_fallthru
        _
      // Predicated region
      $region53: #{basic_block_forward.4} parent=47 // pred_check
        %p4946 = pneg %p135
      $region54: #{basic_block_forward.4} parent=47 // pred_check_branch
        %4948 = sbr.rel (%p4946) target = $region56
      $region55: #{basic_block_forward.4} parent=47 // pred_region
        %p4949 = scmp.lt.s32.totalorder %s18, 1
        %s4950 = scalar_select %p4949, %s18, 1
        %s4951 = smul.addr %s4950, 32
        %s4952 = smul.addr %s4951, 4
        %s4953 = scalar_lea.vmem %s4, %s4952
      $region56: #{basic_block_forward.4} parent=47 // pred_fallthru
        _
      // Predicated region
      $region57: #{basic_block_forward.4} parent=47 // pred_check
        %p4954 = pneg %p161
      $region58: #{basic_block_forward.4} parent=47 // pred_check_branch
        %4956 = sbr.rel (%p4954) target = $region60
      $region59: #{basic_block_forward.4} parent=47 // pred_region
        %p4957 = scmp.lt.s32.totalorder %s18, 1
        %s4958 = scalar_select %p4957, %s18, 1
        %s4959 = smul.addr %s4958, 4
        %s4960 = scalar_lea.vmem %s5, %s4959
      $region60: #{basic_block_forward.4} parent=47 // pred_fallthru
        _
    $region48: #{basic_block_forward.4} parent=5 // pred_fallthru
      _
  $region6: #{basic_block_forward.4} parent=0 // loop_footer
    %s16 = sadd.s32 1, %s12
  $region7: #{basic_block_forward.4} parent=0 // loop_footer_branch
    %11 = sbr.rel target = $region3
  $region8: #{basic_block_forward.4} parent=0 // loop_exit
    _

</llo_original>
